<compile_context>
chip_gen: v7x
topology: tpu7x:2x2x1
jax: 0.10.0
libtpu: 0.0.40
codegen_flags: <defaults>
</compile_context>

<pallas_src>
import jax
import jax.numpy as jnp
from jax import lax
from jax.experimental import pallas as pl
from jax.experimental.pallas import tpu as pltpu


# ------------------------------ fused kernel --------------------------------


def fused_classifier_kernel(x_ref, w1_ref, b1_ref, w2_ref, b2_ref, wl_ref, bl_ref,
                            o_ref, h1f_scr, h1_scr, feat_scr):
    # x_ref  : (BT, 28, 28, 1)  one batch tile, NHWC
    # w1_ref : (9, 32)          conv1 taps (kh*3+kw, cout), cin==1 squeezed
    # b1_ref : (1, 32)
    # w2_ref : (9, 32, 64)      conv2 taps (kh*3+kw, cin, cout)
    # b2_ref : (1, 64)
    # wl_ref : (1600, 128)      linear weight, rows in (h, w, c) order, cols 0-padded
    # bl_ref : (1, 128)
    # o_ref  : (1, BT, 128)     lane-dense padded logits
    # h1f_scr: (176, 32)        pooled conv1 map, row-major flat (h*13 + w, c)
    # h1_scr : (13, 13, 32)     pooled conv1 map (column-store staging)
    # feat_scr:(BT, 1600)       flattened conv2 features for the whole tile
    BT = x_ref.shape[0]
    H, W = x_ref.shape[1], x_ref.shape[2]
    C1 = w1_ref.shape[1]
    C2 = w2_ref.shape[2]
    OH1, OW1 = H - 2, W - 2            # 26, 26
    PH1, PW1 = OH1 // 2, OW1 // 2      # 13, 13
    OH2, OW2 = PH1 - 2, PW1 - 2        # 11, 11
    PH2, PW2 = OH2 // 2, OW2 // 2      # 5, 5
    M2 = OH2 * PW1                     # 143: conv2 rows in "wide-flat" (oh*13 + w) form
    NFLAT = PH1 * PW1                  # 169

    # Padding rows of the flat buffer only ever feed the unused "wide" rows of
    # the conv2 accumulator; zero them once so they never hold junk.
    h1f_scr[NFLAT:, :] = jnp.zeros((h1f_scr.shape[0] - NFLAT, C1), jnp.float32)

    b1 = b1_ref[...]                   # (1, 32) hoisted out of the image loop
    b2 = b2_ref[...]                   # (1, 64)

    for i in range(BT):                # small static tile, fully unrolled
        # ---- conv1 (Cin=1): 9-tap VPU stencil, bias + ReLU fused ------------
        # TODO(synk): for very large batches, putting batch on the lane dim would
        # lift conv1's VPU lane utilization; not worth it at these batch sizes.
        xi = x_ref[i]                                        # (28, 28, 1)
        acc1 = jnp.zeros((OH1, OW1, C1), jnp.float32)
        for kh in range(3):
            for kw in range(3):
                acc1 = acc1 + xi[kh:kh + OH1, kw:kw + OW1, :] * w1_ref[kh * 3 + kw]
        y1 = jnp.maximum(acc1 + b1, 0.0)                     # (26, 26, 32)

        # ---- maxpool1 2x2: H-pool on leading row pairs, W-pool per column ---
        yh = jnp.stack(
            [jnp.maximum(y1[2 * r], y1[2 * r + 1]) for r in range(PH1)], axis=0
        )                                                    # (13, 26, 32)
        for pw in range(PW1):
            h1_scr[:, pw, :] = jnp.maximum(yh[:, 2 * pw, :], yh[:, 2 * pw + 1, :])
        # Repack row-major flat so every conv2 tap lhs is one contiguous slice.
        for r in range(PH1):
            h1f_scr[r * PW1:(r + 1) * PW1, :] = h1_scr[r]

        # ---- conv2: 9 MXU matmuls of (143, 32) @ (32, 64) -------------------
        # Wide-flat trick: acc2 row r = oh*13 + ow holds output (oh, ow) for
        # ow < 11; tap (kh, kw) reads the contiguous slice starting at
        # kh*13 + kw.  Rows with ow in {11, 12} are junk and never read.
        acc2 = jnp.zeros((M2, C2), jnp.float32)
        for kh in range(3):
            for kw in range(3):
                lhs = h1f_scr[kh * PW1 + kw:kh * PW1 + kw + M2, :]   # (143, 32)
                acc2 = acc2 + jnp.dot(lhs, w2_ref[kh * 3 + kw],
                                      preferred_element_type=jnp.float32)
        y2 = jnp.maximum(acc2 + b2, 0.0)                     # (143, 64)

        # ---- maxpool2 2x2, writing straight into the flattened feature row --
        for ph in range(PH2):
            top = y2[(2 * ph) * PW1:(2 * ph + 1) * PW1, :]           # (13, 64)
            bot = y2[(2 * ph + 1) * PW1:(2 * ph + 2) * PW1, :]       # (13, 64)
            blk = jnp.maximum(top, bot)                              # (13, 64)
            for pw in range(PW2):
                v = jnp.maximum(blk[2 * pw], blk[2 * pw + 1])        # (64,)
                off = (ph * PW2 + pw) * C2                           # (h, w, c) order
                feat_scr[i, off:off + C2] = v

    # ---- linear for the whole tile: one (BT, 1600) @ (1600, 128) MXU matmul -
    logits = jnp.dot(feat_scr[...], wl_ref[...], preferred_element_type=jnp.float32)
    o_ref[0] = logits + bl_ref[...]


# ------------------------------- wrapper -------------------------------------


def _pick_batch_tile(n):
    # Prefer an even number of grid steps (v7x has 2 TensorCores), then the
    # largest tile that divides the batch.
    for bt in (8, 4, 2, 1):
        if n % bt == 0 and (n // bt) % 2 == 0:
            return bt
    for bt in (8, 4, 2, 1):
        if n % bt == 0:
            return bt
    return 1


def classifier_forward(x_nchw, p):
    n = x_nchw.shape[0]
    x = jnp.transpose(x_nchw, (0, 2, 3, 1)).astype(jnp.float32)      # NHWC (n,28,28,1)

    # One-time weight layout prep (off the hot path).
    w1 = jnp.transpose(p["w1"], (2, 3, 1, 0)).reshape(9, 32)         # (tap, cout)
    b1 = p["b1"].reshape(1, 32)
    w2 = jnp.transpose(p["w2"], (2, 3, 1, 0)).reshape(9, 32, 64)     # (tap, cin, cout)
    b2 = p["b2"].reshape(1, 64)
    # PyTorch flatten order is (c, h, w); our features are (h, w, c) -> permute
    # the classifier rows once and zero-pad outputs to a lane-dense 128.
    wl = jnp.transpose(p["wl"].reshape(10, 64, 5, 5), (2, 3, 1, 0)).reshape(1600, 10)
    wl = jnp.pad(wl, ((0, 0), (0, 118)))
    bl = jnp.pad(p["bl"], (0, 118)).reshape(1, 128)

    bt = _pick_batch_tile(n)
    steps = n // bt

    out = pl.pallas_call(
        fused_classifier_kernel,
        out_shape=jax.ShapeDtypeStruct((steps, bt, 128), jnp.float32),
        grid_spec=pltpu.PrefetchScalarGridSpec(
            num_scalar_prefetch=0,
            grid=(steps,),
            in_specs=[
                pl.BlockSpec((bt, 28, 28, 1), lambda s: (s, 0, 0, 0)),
                pl.BlockSpec((9, 32), lambda s: (0, 0)),
                pl.BlockSpec((1, 32), lambda s: (0, 0)),
                pl.BlockSpec((9, 32, 64), lambda s: (0, 0, 0)),
                pl.BlockSpec((1, 64), lambda s: (0, 0)),
                pl.BlockSpec((1600, 128), lambda s: (0, 0)),
                pl.BlockSpec((1, 128), lambda s: (0, 0)),
            ],
            out_specs=pl.BlockSpec((1, bt, 128), lambda s: (s, 0, 0)),
            scratch_shapes=[
                pltpu.VMEM((176, 32), jnp.float32),    # h1 flat (169 rows + pad)
                pltpu.VMEM((13, 13, 32), jnp.float32), # h1 column-store staging
                pltpu.VMEM((bt, 1600), jnp.float32),   # flattened features
            ],
        ),
        compiler_params=pltpu.CompilerParams(dimension_semantics=("parallel",)),
    )(x, w1, b1, w2, b2, wl, bl)

    return out.reshape(n, 128)[:, :10]


# --------------------------- reference / setup -------------------------------


def init_params(key):
    ks = jax.random.split(key, 6)
    return dict(
        w1=jax.random.normal(ks[0], (32, 1, 3, 3), jnp.float32) * 0.1,
        b1=jax.random.normal(ks[1], (32,), jnp.float32) * 0.1,
        w2=jax.random.normal(ks[2], (64, 32, 3, 3), jnp.float32) * 0.05,
        b2=jax.random.normal(ks[3], (64,), jnp.float32) * 0.05,
        wl=jax.random.normal(ks[4], (10, 1600), jnp.float32) * 0.02,
        bl=jax.random.normal(ks[5], (10,), jnp.float32) * 0.02,
    )


def reference_forward(x_nchw, p):
    hi = lax.Precision.HIGHEST
    y = lax.conv_general_dilated(x_nchw, p["w1"], (1, 1), "VALID",
                                 dimension_numbers=("NCHW", "OIHW", "NCHW"),
                                 precision=hi)
    y = jnp.maximum(y + p["b1"][None, :, None, None], 0.0)
    y = lax.reduce_window(y, -jnp.inf, lax.max, (1, 1, 2, 2), (1, 1, 2, 2), "VALID")
    y = lax.conv_general_dilated(y, p["w2"], (1, 1), "VALID",
                                 dimension_numbers=("NCHW", "OIHW", "NCHW"),
                                 precision=hi)
    y = jnp.maximum(y + p["b2"][None, :, None, None], 0.0)
    y = lax.reduce_window(y, -jnp.inf, lax.max, (1, 1, 2, 2), (1, 1, 2, 2), "VALID")
    y = y.reshape(y.shape[0], -1)
    return jnp.dot(y, p["wl"].T, precision=hi) + p["bl"]


if __name__ == "__main__":
    key = jax.random.PRNGKey(0)
    kx, kp = jax.random.split(key)
    params = init_params(kp)
    x = jax.random.normal(kx, (2, 1, 28, 28), jnp.float32)   # NCHW, as in PyTorch

    fwd = jax.jit(classifier_forward)
    out = jax.block_until_ready(fwd(x, params))
    assert out.shape == (2, 10), out.shape

    ref = reference_forward(x, params)
    assert jnp.allclose(out, ref, rtol=1e-2, atol=1e-2), \
        float(jnp.max(jnp.abs(out - ref)))

    print("KERNEL_OK")
</pallas_src>

<mosaic_0001>
module attributes {stable_mosaic.version = 11 : i64} {
  func.func @fused_classifier_kernel(%arg0: i32, %arg1: memref<1x28x28x1xf32, #tpu.memory_space<vmem>>, %arg2: memref<9x32xf32, #tpu.memory_space<vmem>>, %arg3: memref<1x32xf32, #tpu.memory_space<vmem>>, %arg4: memref<9x32x64xf32, #tpu.memory_space<vmem>>, %arg5: memref<1x64xf32, #tpu.memory_space<vmem>>, %arg6: memref<1600x128xf32, #tpu.memory_space<vmem>>, %arg7: memref<1x128xf32, #tpu.memory_space<vmem>>, %arg8: memref<1x1x128xf32, #tpu.memory_space<vmem>>, %arg9: memref<176x32xf32, #tpu.memory_space<vmem>>, %arg10: memref<13x13x32xf32, #tpu.memory_space<vmem>>, %arg11: memref<1x1600xf32, #tpu.memory_space<vmem>>) attributes {dimension_semantics = [#tpu.dimension_semantics<parallel>], iteration_bounds = array<i64: 2>, scalar_prefetch = 0 : i64, scratch_operands = 3 : i64, tpu.core_type = #tpu.core_type<tc>, window_params = [{transform_indices = @transform_0, window_bounds = array<i64: 1, 28, 28, 1>}, {pipeline_mode = #tpu.pipeline_mode<synchronous>, transform_indices = @transform_1, window_bounds = array<i64: 9, 32>}, {pipeline_mode = #tpu.pipeline_mode<synchronous>, transform_indices = @transform_2, window_bounds = array<i64: 1, 32>}, {pipeline_mode = #tpu.pipeline_mode<synchronous>, transform_indices = @transform_3, window_bounds = array<i64: 9, 32, 64>}, {pipeline_mode = #tpu.pipeline_mode<synchronous>, transform_indices = @transform_4, window_bounds = array<i64: 1, 64>}, {pipeline_mode = #tpu.pipeline_mode<synchronous>, transform_indices = @transform_5, window_bounds = array<i64: 1600, 128>}, {pipeline_mode = #tpu.pipeline_mode<synchronous>, transform_indices = @transform_6, window_bounds = array<i64: 1, 128>}, {transform_indices = @transform_7, window_bounds = array<i64: 1, 1, 128>}]} {
    %cst = arith.constant 0.000000e+00 : f32
    %0 = vector.broadcast %cst : f32 to vector<7x32xf32>
    %c169 = arith.constant 169 : index
    %c0 = arith.constant 0 : index
    %1 = vector.load %arg9[%c169, %c0] : memref<176x32xf32, #tpu.memory_space<vmem>>, vector<7x32xf32>
    tpu.vector_store %arg9[%c169, %c0], %0 {strides = array<i32>} : memref<176x32xf32, #tpu.memory_space<vmem>>, vector<7x32xf32>,
    %c0_0 = arith.constant 0 : index
    %c0_1 = arith.constant 0 : index
    %2 = vector.load %arg3[%c0_0, %c0_1] : memref<1x32xf32, #tpu.memory_space<vmem>>, vector<1x32xf32>
    %c0_2 = arith.constant 0 : index
    %c0_3 = arith.constant 0 : index
    %3 = vector.load %arg5[%c0_2, %c0_3] : memref<1x64xf32, #tpu.memory_space<vmem>>, vector<1x64xf32>
    %c0_4 = arith.constant 0 : index
    %c0_5 = arith.constant 0 : index
    %c0_6 = arith.constant 0 : index
    %c0_7 = arith.constant 0 : index
    %4 = vector.load %arg1[%c0_4, %c0_5, %c0_6, %c0_7] : memref<1x28x28x1xf32, #tpu.memory_space<vmem>>, vector<1x28x28x1xf32>
    %5 = vector.shape_cast %4 : vector<1x28x28x1xf32> to vector<28x28x1xf32>
    %cst_8 = arith.constant 0.000000e+00 : f32
    %6 = vector.broadcast %cst_8 : f32 to vector<26x26x32xf32>
    %7 = vector.extract_strided_slice %5 {offsets = [0, 0, 0], sizes = [26, 26, 1], strides = [1, 1, 1]} : vector<28x28x1xf32> to vector<26x26x1xf32>
    %c0_9 = arith.constant 0 : index
    %c0_10 = arith.constant 0 : index
    %8 = vector.load %arg2[%c0_9, %c0_10] : memref<9x32xf32, #tpu.memory_space<vmem>>, vector<1x32xf32>
    %9 = vector.shape_cast %8 : vector<1x32xf32> to vector<32xf32>
    %10 = vector.shape_cast %9 : vector<32xf32> to vector<1x1x32xf32>
    %11 = vector.broadcast %7 : vector<26x26x1xf32> to vector<26x26x32xf32>
    %12 = vector.broadcast %10 : vector<1x1x32xf32> to vector<26x26x32xf32>
    %13 = arith.mulf %11, %12 : vector<26x26x32xf32>
    %14 = arith.addf %6, %13 : vector<26x26x32xf32>
    %15 = vector.extract_strided_slice %5 {offsets = [0, 1, 0], sizes = [26, 26, 1], strides = [1, 1, 1]} : vector<28x28x1xf32> to vector<26x26x1xf32>
    %c1 = arith.constant 1 : index
    %c0_11 = arith.constant 0 : index
    %16 = vector.load %arg2[%c1, %c0_11] : memref<9x32xf32, #tpu.memory_space<vmem>>, vector<1x32xf32>
    %17 = vector.shape_cast %16 : vector<1x32xf32> to vector<32xf32>
    %18 = vector.shape_cast %17 : vector<32xf32> to vector<1x1x32xf32>
    %19 = vector.broadcast %15 : vector<26x26x1xf32> to vector<26x26x32xf32>
    %20 = vector.broadcast %18 : vector<1x1x32xf32> to vector<26x26x32xf32>
    %21 = arith.mulf %19, %20 : vector<26x26x32xf32>
    %22 = arith.addf %14, %21 : vector<26x26x32xf32>
    %23 = vector.extract_strided_slice %5 {offsets = [0, 2, 0], sizes = [26, 26, 1], strides = [1, 1, 1]} : vector<28x28x1xf32> to vector<26x26x1xf32>
    %c2 = arith.constant 2 : index
    %c0_12 = arith.constant 0 : index
    %24 = vector.load %arg2[%c2, %c0_12] : memref<9x32xf32, #tpu.memory_space<vmem>>, vector<1x32xf32>
    %25 = vector.shape_cast %24 : vector<1x32xf32> to vector<32xf32>
    %26 = vector.shape_cast %25 : vector<32xf32> to vector<1x1x32xf32>
    %27 = vector.broadcast %23 : vector<26x26x1xf32> to vector<26x26x32xf32>
    %28 = vector.broadcast %26 : vector<1x1x32xf32> to vector<26x26x32xf32>
    %29 = arith.mulf %27, %28 : vector<26x26x32xf32>
    %30 = arith.addf %22, %29 : vector<26x26x32xf32>
    %31 = vector.extract_strided_slice %5 {offsets = [1, 0, 0], sizes = [26, 26, 1], strides = [1, 1, 1]} : vector<28x28x1xf32> to vector<26x26x1xf32>
    %c3 = arith.constant 3 : index
    %c0_13 = arith.constant 0 : index
    %32 = vector.load %arg2[%c3, %c0_13] : memref<9x32xf32, #tpu.memory_space<vmem>>, vector<1x32xf32>
    %33 = vector.shape_cast %32 : vector<1x32xf32> to vector<32xf32>
    %34 = vector.shape_cast %33 : vector<32xf32> to vector<1x1x32xf32>
    %35 = vector.broadcast %31 : vector<26x26x1xf32> to vector<26x26x32xf32>
    %36 = vector.broadcast %34 : vector<1x1x32xf32> to vector<26x26x32xf32>
    %37 = arith.mulf %35, %36 : vector<26x26x32xf32>
    %38 = arith.addf %30, %37 : vector<26x26x32xf32>
    %39 = vector.extract_strided_slice %5 {offsets = [1, 1, 0], sizes = [26, 26, 1], strides = [1, 1, 1]} : vector<28x28x1xf32> to vector<26x26x1xf32>
    %c4 = arith.constant 4 : index
    %c0_14 = arith.constant 0 : index
    %40 = vector.load %arg2[%c4, %c0_14] : memref<9x32xf32, #tpu.memory_space<vmem>>, vector<1x32xf32>
    %41 = vector.shape_cast %40 : vector<1x32xf32> to vector<32xf32>
    %42 = vector.shape_cast %41 : vector<32xf32> to vector<1x1x32xf32>
    %43 = vector.broadcast %39 : vector<26x26x1xf32> to vector<26x26x32xf32>
    %44 = vector.broadcast %42 : vector<1x1x32xf32> to vector<26x26x32xf32>
    %45 = arith.mulf %43, %44 : vector<26x26x32xf32>
    %46 = arith.addf %38, %45 : vector<26x26x32xf32>
    %47 = vector.extract_strided_slice %5 {offsets = [1, 2, 0], sizes = [26, 26, 1], strides = [1, 1, 1]} : vector<28x28x1xf32> to vector<26x26x1xf32>
    %c5 = arith.constant 5 : index
    %c0_15 = arith.constant 0 : index
    %48 = vector.load %arg2[%c5, %c0_15] : memref<9x32xf32, #tpu.memory_space<vmem>>, vector<1x32xf32>
    %49 = vector.shape_cast %48 : vector<1x32xf32> to vector<32xf32>
    %50 = vector.shape_cast %49 : vector<32xf32> to vector<1x1x32xf32>
    %51 = vector.broadcast %47 : vector<26x26x1xf32> to vector<26x26x32xf32>
    %52 = vector.broadcast %50 : vector<1x1x32xf32> to vector<26x26x32xf32>
    %53 = arith.mulf %51, %52 : vector<26x26x32xf32>
    %54 = arith.addf %46, %53 : vector<26x26x32xf32>
    %55 = vector.extract_strided_slice %5 {offsets = [2, 0, 0], sizes = [26, 26, 1], strides = [1, 1, 1]} : vector<28x28x1xf32> to vector<26x26x1xf32>
    %c6 = arith.constant 6 : index
    %c0_16 = arith.constant 0 : index
    %56 = vector.load %arg2[%c6, %c0_16] : memref<9x32xf32, #tpu.memory_space<vmem>>, vector<1x32xf32>
    %57 = vector.shape_cast %56 : vector<1x32xf32> to vector<32xf32>
    %58 = vector.shape_cast %57 : vector<32xf32> to vector<1x1x32xf32>
    %59 = vector.broadcast %55 : vector<26x26x1xf32> to vector<26x26x32xf32>
    %60 = vector.broadcast %58 : vector<1x1x32xf32> to vector<26x26x32xf32>
    %61 = arith.mulf %59, %60 : vector<26x26x32xf32>
    %62 = arith.addf %54, %61 : vector<26x26x32xf32>
    %63 = vector.extract_strided_slice %5 {offsets = [2, 1, 0], sizes = [26, 26, 1], strides = [1, 1, 1]} : vector<28x28x1xf32> to vector<26x26x1xf32>
    %c7 = arith.constant 7 : index
    %c0_17 = arith.constant 0 : index
    %64 = vector.load %arg2[%c7, %c0_17] : memref<9x32xf32, #tpu.memory_space<vmem>>, vector<1x32xf32>
    %65 = vector.shape_cast %64 : vector<1x32xf32> to vector<32xf32>
    %66 = vector.shape_cast %65 : vector<32xf32> to vector<1x1x32xf32>
    %67 = vector.broadcast %63 : vector<26x26x1xf32> to vector<26x26x32xf32>
    %68 = vector.broadcast %66 : vector<1x1x32xf32> to vector<26x26x32xf32>
    %69 = arith.mulf %67, %68 : vector<26x26x32xf32>
    %70 = arith.addf %62, %69 : vector<26x26x32xf32>
    %71 = vector.extract_strided_slice %5 {offsets = [2, 2, 0], sizes = [26, 26, 1], strides = [1, 1, 1]} : vector<28x28x1xf32> to vector<26x26x1xf32>
    %c8 = arith.constant 8 : index
    %c0_18 = arith.constant 0 : index
    %72 = vector.load %arg2[%c8, %c0_18] : memref<9x32xf32, #tpu.memory_space<vmem>>, vector<1x32xf32>
    %73 = vector.shape_cast %72 : vector<1x32xf32> to vector<32xf32>
    %74 = vector.shape_cast %73 : vector<32xf32> to vector<1x1x32xf32>
    %75 = vector.broadcast %71 : vector<26x26x1xf32> to vector<26x26x32xf32>
    %76 = vector.broadcast %74 : vector<1x1x32xf32> to vector<26x26x32xf32>
    %77 = arith.mulf %75, %76 : vector<26x26x32xf32>
    %78 = arith.addf %70, %77 : vector<26x26x32xf32>
    %79 = vector.shape_cast %2 : vector<1x32xf32> to vector<1x1x32xf32>
    %80 = vector.broadcast %79 : vector<1x1x32xf32> to vector<26x26x32xf32>
    %81 = arith.addf %78, %80 : vector<26x26x32xf32>
    %cst_19 = arith.constant 0.000000e+00 : f32
    %82 = vector.broadcast %cst_19 : f32 to vector<26x26x32xf32>
    %83 = arith.maximumf %81, %82 : vector<26x26x32xf32>
    %84 = vector.extract_strided_slice %83 {offsets = [0, 0, 0], sizes = [1, 26, 32], strides = [1, 1, 1]} : vector<26x26x32xf32> to vector<1x26x32xf32>
    %85 = vector.shape_cast %84 : vector<1x26x32xf32> to vector<26x32xf32>
    %86 = vector.extract_strided_slice %83 {offsets = [1, 0, 0], sizes = [1, 26, 32], strides = [1, 1, 1]} : vector<26x26x32xf32> to vector<1x26x32xf32>
    %87 = vector.shape_cast %86 : vector<1x26x32xf32> to vector<26x32xf32>
    %88 = arith.maximumf %85, %87 : vector<26x32xf32>
    %89 = vector.extract_strided_slice %83 {offsets = [2, 0, 0], sizes = [1, 26, 32], strides = [1, 1, 1]} : vector<26x26x32xf32> to vector<1x26x32xf32>
    %90 = vector.shape_cast %89 : vector<1x26x32xf32> to vector<26x32xf32>
    %91 = vector.extract_strided_slice %83 {offsets = [3, 0, 0], sizes = [1, 26, 32], strides = [1, 1, 1]} : vector<26x26x32xf32> to vector<1x26x32xf32>
    %92 = vector.shape_cast %91 : vector<1x26x32xf32> to vector<26x32xf32>
    %93 = arith.maximumf %90, %92 : vector<26x32xf32>
    %94 = vector.extract_strided_slice %83 {offsets = [4, 0, 0], sizes = [1, 26, 32], strides = [1, 1, 1]} : vector<26x26x32xf32> to vector<1x26x32xf32>
    %95 = vector.shape_cast %94 : vector<1x26x32xf32> to vector<26x32xf32>
    %96 = vector.extract_strided_slice %83 {offsets = [5, 0, 0], sizes = [1, 26, 32], strides = [1, 1, 1]} : vector<26x26x32xf32> to vector<1x26x32xf32>
    %97 = vector.shape_cast %96 : vector<1x26x32xf32> to vector<26x32xf32>
    %98 = arith.maximumf %95, %97 : vector<26x32xf32>
    %99 = vector.extract_strided_slice %83 {offsets = [6, 0, 0], sizes = [1, 26, 32], strides = [1, 1, 1]} : vector<26x26x32xf32> to vector<1x26x32xf32>
    %100 = vector.shape_cast %99 : vector<1x26x32xf32> to vector<26x32xf32>
    %101 = vector.extract_strided_slice %83 {offsets = [7, 0, 0], sizes = [1, 26, 32], strides = [1, 1, 1]} : vector<26x26x32xf32> to vector<1x26x32xf32>
    %102 = vector.shape_cast %101 : vector<1x26x32xf32> to vector<26x32xf32>
    %103 = arith.maximumf %100, %102 : vector<26x32xf32>
    %104 = vector.extract_strided_slice %83 {offsets = [8, 0, 0], sizes = [1, 26, 32], strides = [1, 1, 1]} : vector<26x26x32xf32> to vector<1x26x32xf32>
    %105 = vector.shape_cast %104 : vector<1x26x32xf32> to vector<26x32xf32>
    %106 = vector.extract_strided_slice %83 {offsets = [9, 0, 0], sizes = [1, 26, 32], strides = [1, 1, 1]} : vector<26x26x32xf32> to vector<1x26x32xf32>
    %107 = vector.shape_cast %106 : vector<1x26x32xf32> to vector<26x32xf32>
    %108 = arith.maximumf %105, %107 : vector<26x32xf32>
    %109 = vector.extract_strided_slice %83 {offsets = [10, 0, 0], sizes = [1, 26, 32], strides = [1, 1, 1]} : vector<26x26x32xf32> to vector<1x26x32xf32>
    %110 = vector.shape_cast %109 : vector<1x26x32xf32> to vector<26x32xf32>
    %111 = vector.extract_strided_slice %83 {offsets = [11, 0, 0], sizes = [1, 26, 32], strides = [1, 1, 1]} : vector<26x26x32xf32> to vector<1x26x32xf32>
    %112 = vector.shape_cast %111 : vector<1x26x32xf32> to vector<26x32xf32>
    %113 = arith.maximumf %110, %112 : vector<26x32xf32>
    %114 = vector.extract_strided_slice %83 {offsets = [12, 0, 0], sizes = [1, 26, 32], strides = [1, 1, 1]} : vector<26x26x32xf32> to vector<1x26x32xf32>
    %115 = vector.shape_cast %114 : vector<1x26x32xf32> to vector<26x32xf32>
    %116 = vector.extract_strided_slice %83 {offsets = [13, 0, 0], sizes = [1, 26, 32], strides = [1, 1, 1]} : vector<26x26x32xf32> to vector<1x26x32xf32>
    %117 = vector.shape_cast %116 : vector<1x26x32xf32> to vector<26x32xf32>
    %118 = arith.maximumf %115, %117 : vector<26x32xf32>
    %119 = vector.extract_strided_slice %83 {offsets = [14, 0, 0], sizes = [1, 26, 32], strides = [1, 1, 1]} : vector<26x26x32xf32> to vector<1x26x32xf32>
    %120 = vector.shape_cast %119 : vector<1x26x32xf32> to vector<26x32xf32>
    %121 = vector.extract_strided_slice %83 {offsets = [15, 0, 0], sizes = [1, 26, 32], strides = [1, 1, 1]} : vector<26x26x32xf32> to vector<1x26x32xf32>
    %122 = vector.shape_cast %121 : vector<1x26x32xf32> to vector<26x32xf32>
    %123 = arith.maximumf %120, %122 : vector<26x32xf32>
    %124 = vector.extract_strided_slice %83 {offsets = [16, 0, 0], sizes = [1, 26, 32], strides = [1, 1, 1]} : vector<26x26x32xf32> to vector<1x26x32xf32>
    %125 = vector.shape_cast %124 : vector<1x26x32xf32> to vector<26x32xf32>
    %126 = vector.extract_strided_slice %83 {offsets = [17, 0, 0], sizes = [1, 26, 32], strides = [1, 1, 1]} : vector<26x26x32xf32> to vector<1x26x32xf32>
    %127 = vector.shape_cast %126 : vector<1x26x32xf32> to vector<26x32xf32>
    %128 = arith.maximumf %125, %127 : vector<26x32xf32>
    %129 = vector.extract_strided_slice %83 {offsets = [18, 0, 0], sizes = [1, 26, 32], strides = [1, 1, 1]} : vector<26x26x32xf32> to vector<1x26x32xf32>
    %130 = vector.shape_cast %129 : vector<1x26x32xf32> to vector<26x32xf32>
    %131 = vector.extract_strided_slice %83 {offsets = [19, 0, 0], sizes = [1, 26, 32], strides = [1, 1, 1]} : vector<26x26x32xf32> to vector<1x26x32xf32>
    %132 = vector.shape_cast %131 : vector<1x26x32xf32> to vector<26x32xf32>
    %133 = arith.maximumf %130, %132 : vector<26x32xf32>
    %134 = vector.extract_strided_slice %83 {offsets = [20, 0, 0], sizes = [1, 26, 32], strides = [1, 1, 1]} : vector<26x26x32xf32> to vector<1x26x32xf32>
    %135 = vector.shape_cast %134 : vector<1x26x32xf32> to vector<26x32xf32>
    %136 = vector.extract_strided_slice %83 {offsets = [21, 0, 0], sizes = [1, 26, 32], strides = [1, 1, 1]} : vector<26x26x32xf32> to vector<1x26x32xf32>
    %137 = vector.shape_cast %136 : vector<1x26x32xf32> to vector<26x32xf32>
    %138 = arith.maximumf %135, %137 : vector<26x32xf32>
    %139 = vector.extract_strided_slice %83 {offsets = [22, 0, 0], sizes = [1, 26, 32], strides = [1, 1, 1]} : vector<26x26x32xf32> to vector<1x26x32xf32>
    %140 = vector.shape_cast %139 : vector<1x26x32xf32> to vector<26x32xf32>
    %141 = vector.extract_strided_slice %83 {offsets = [23, 0, 0], sizes = [1, 26, 32], strides = [1, 1, 1]} : vector<26x26x32xf32> to vector<1x26x32xf32>
    %142 = vector.shape_cast %141 : vector<1x26x32xf32> to vector<26x32xf32>
    %143 = arith.maximumf %140, %142 : vector<26x32xf32>
    %144 = vector.extract_strided_slice %83 {offsets = [24, 0, 0], sizes = [1, 26, 32], strides = [1, 1, 1]} : vector<26x26x32xf32> to vector<1x26x32xf32>
    %145 = vector.shape_cast %144 : vector<1x26x32xf32> to vector<26x32xf32>
    %146 = vector.extract_strided_slice %83 {offsets = [25, 0, 0], sizes = [1, 26, 32], strides = [1, 1, 1]} : vector<26x26x32xf32> to vector<1x26x32xf32>
    %147 = vector.shape_cast %146 : vector<1x26x32xf32> to vector<26x32xf32>
    %148 = arith.maximumf %145, %147 : vector<26x32xf32>
    %149 = vector.shape_cast %88 : vector<26x32xf32> to vector<1x26x32xf32>
    %150 = vector.shape_cast %93 : vector<26x32xf32> to vector<1x26x32xf32>
    %151 = vector.shape_cast %98 : vector<26x32xf32> to vector<1x26x32xf32>
    %152 = vector.shape_cast %103 : vector<26x32xf32> to vector<1x26x32xf32>
    %153 = vector.shape_cast %108 : vector<26x32xf32> to vector<1x26x32xf32>
    %154 = vector.shape_cast %113 : vector<26x32xf32> to vector<1x26x32xf32>
    %155 = vector.shape_cast %118 : vector<26x32xf32> to vector<1x26x32xf32>
    %156 = vector.shape_cast %123 : vector<26x32xf32> to vector<1x26x32xf32>
    %157 = vector.shape_cast %128 : vector<26x32xf32> to vector<1x26x32xf32>
    %158 = vector.shape_cast %133 : vector<26x32xf32> to vector<1x26x32xf32>
    %159 = vector.shape_cast %138 : vector<26x32xf32> to vector<1x26x32xf32>
    %160 = vector.shape_cast %143 : vector<26x32xf32> to vector<1x26x32xf32>
    %161 = vector.shape_cast %148 : vector<26x32xf32> to vector<1x26x32xf32>
    %162 = tpu.concatenate %149, %150, %151, %152, %153, %154, %155, %156, %157, %158, %159, %160, %161 in 0 : vector<1x26x32xf32>, vector<1x26x32xf32>, vector<1x26x32xf32>, vector<1x26x32xf32>, vector<1x26x32xf32>, vector<1x26x32xf32>, vector<1x26x32xf32>, vector<1x26x32xf32>, vector<1x26x32xf32>, vector<1x26x32xf32>, vector<1x26x32xf32>, vector<1x26x32xf32>, vector<1x26x32xf32> -> vector<13x26x32xf32>
    %163 = vector.extract_strided_slice %162 {offsets = [0, 0, 0], sizes = [13, 1, 32], strides = [1, 1, 1]} : vector<13x26x32xf32> to vector<13x1x32xf32>
    %164 = vector.shape_cast %163 : vector<13x1x32xf32> to vector<13x32xf32>
    %165 = vector.extract_strided_slice %162 {offsets = [0, 1, 0], sizes = [13, 1, 32], strides = [1, 1, 1]} : vector<13x26x32xf32> to vector<13x1x32xf32>
    %166 = vector.shape_cast %165 : vector<13x1x32xf32> to vector<13x32xf32>
    %167 = arith.maximumf %164, %166 : vector<13x32xf32>
    %c0_20 = arith.constant 0 : index
    %c0_21 = arith.constant 0 : index
    %c0_22 = arith.constant 0 : index
    %168 = vector.load %arg10[%c0_20, %c0_21, %c0_22] : memref<13x13x32xf32, #tpu.memory_space<vmem>>, vector<13x1x32xf32>
    %169 = vector.shape_cast %168 : vector<13x1x32xf32> to vector<13x32xf32>
    %170 = vector.shape_cast %167 : vector<13x32xf32> to vector<13x1x32xf32>
    tpu.vector_store %arg10[%c0_20, %c0_21, %c0_22], %170 {strides = array<i32>} : memref<13x13x32xf32, #tpu.memory_space<vmem>>, vector<13x1x32xf32>,
    %171 = vector.extract_strided_slice %162 {offsets = [0, 2, 0], sizes = [13, 1, 32], strides = [1, 1, 1]} : vector<13x26x32xf32> to vector<13x1x32xf32>
    %172 = vector.shape_cast %171 : vector<13x1x32xf32> to vector<13x32xf32>
    %173 = vector.extract_strided_slice %162 {offsets = [0, 3, 0], sizes = [13, 1, 32], strides = [1, 1, 1]} : vector<13x26x32xf32> to vector<13x1x32xf32>
    %174 = vector.shape_cast %173 : vector<13x1x32xf32> to vector<13x32xf32>
    %175 = arith.maximumf %172, %174 : vector<13x32xf32>
    %c0_23 = arith.constant 0 : index
    %c1_24 = arith.constant 1 : index
    %c0_25 = arith.constant 0 : index
    %176 = vector.load %arg10[%c0_23, %c1_24, %c0_25] : memref<13x13x32xf32, #tpu.memory_space<vmem>>, vector<13x1x32xf32>
    %177 = vector.shape_cast %176 : vector<13x1x32xf32> to vector<13x32xf32>
    %178 = vector.shape_cast %175 : vector<13x32xf32> to vector<13x1x32xf32>
    tpu.vector_store %arg10[%c0_23, %c1_24, %c0_25], %178 {strides = array<i32>} : memref<13x13x32xf32, #tpu.memory_space<vmem>>, vector<13x1x32xf32>,
    %179 = vector.extract_strided_slice %162 {offsets = [0, 4, 0], sizes = [13, 1, 32], strides = [1, 1, 1]} : vector<13x26x32xf32> to vector<13x1x32xf32>
    %180 = vector.shape_cast %179 : vector<13x1x32xf32> to vector<13x32xf32>
    %181 = vector.extract_strided_slice %162 {offsets = [0, 5, 0], sizes = [13, 1, 32], strides = [1, 1, 1]} : vector<13x26x32xf32> to vector<13x1x32xf32>
    %182 = vector.shape_cast %181 : vector<13x1x32xf32> to vector<13x32xf32>
    %183 = arith.maximumf %180, %182 : vector<13x32xf32>
    %c0_26 = arith.constant 0 : index
    %c2_27 = arith.constant 2 : index
    %c0_28 = arith.constant 0 : index
    %184 = vector.load %arg10[%c0_26, %c2_27, %c0_28] : memref<13x13x32xf32, #tpu.memory_space<vmem>>, vector<13x1x32xf32>
    %185 = vector.shape_cast %184 : vector<13x1x32xf32> to vector<13x32xf32>
    %186 = vector.shape_cast %183 : vector<13x32xf32> to vector<13x1x32xf32>
    tpu.vector_store %arg10[%c0_26, %c2_27, %c0_28], %186 {strides = array<i32>} : memref<13x13x32xf32, #tpu.memory_space<vmem>>, vector<13x1x32xf32>,
    %187 = vector.extract_strided_slice %162 {offsets = [0, 6, 0], sizes = [13, 1, 32], strides = [1, 1, 1]} : vector<13x26x32xf32> to vector<13x1x32xf32>
    %188 = vector.shape_cast %187 : vector<13x1x32xf32> to vector<13x32xf32>
    %189 = vector.extract_strided_slice %162 {offsets = [0, 7, 0], sizes = [13, 1, 32], strides = [1, 1, 1]} : vector<13x26x32xf32> to vector<13x1x32xf32>
    %190 = vector.shape_cast %189 : vector<13x1x32xf32> to vector<13x32xf32>
    %191 = arith.maximumf %188, %190 : vector<13x32xf32>
    %c0_29 = arith.constant 0 : index
    %c3_30 = arith.constant 3 : index
    %c0_31 = arith.constant 0 : index
    %192 = vector.load %arg10[%c0_29, %c3_30, %c0_31] : memref<13x13x32xf32, #tpu.memory_space<vmem>>, vector<13x1x32xf32>
    %193 = vector.shape_cast %192 : vector<13x1x32xf32> to vector<13x32xf32>
    %194 = vector.shape_cast %191 : vector<13x32xf32> to vector<13x1x32xf32>
    tpu.vector_store %arg10[%c0_29, %c3_30, %c0_31], %194 {strides = array<i32>} : memref<13x13x32xf32, #tpu.memory_space<vmem>>, vector<13x1x32xf32>,
    %195 = vector.extract_strided_slice %162 {offsets = [0, 8, 0], sizes = [13, 1, 32], strides = [1, 1, 1]} : vector<13x26x32xf32> to vector<13x1x32xf32>
    %196 = vector.shape_cast %195 : vector<13x1x32xf32> to vector<13x32xf32>
    %197 = vector.extract_strided_slice %162 {offsets = [0, 9, 0], sizes = [13, 1, 32], strides = [1, 1, 1]} : vector<13x26x32xf32> to vector<13x1x32xf32>
    %198 = vector.shape_cast %197 : vector<13x1x32xf32> to vector<13x32xf32>
    %199 = arith.maximumf %196, %198 : vector<13x32xf32>
    %c0_32 = arith.constant 0 : index
    %c4_33 = arith.constant 4 : index
    %c0_34 = arith.constant 0 : index
    %200 = vector.load %arg10[%c0_32, %c4_33, %c0_34] : memref<13x13x32xf32, #tpu.memory_space<vmem>>, vector<13x1x32xf32>
    %201 = vector.shape_cast %200 : vector<13x1x32xf32> to vector<13x32xf32>
    %202 = vector.shape_cast %199 : vector<13x32xf32> to vector<13x1x32xf32>
    tpu.vector_store %arg10[%c0_32, %c4_33, %c0_34], %202 {strides = array<i32>} : memref<13x13x32xf32, #tpu.memory_space<vmem>>, vector<13x1x32xf32>,
    %203 = vector.extract_strided_slice %162 {offsets = [0, 10, 0], sizes = [13, 1, 32], strides = [1, 1, 1]} : vector<13x26x32xf32> to vector<13x1x32xf32>
    %204 = vector.shape_cast %203 : vector<13x1x32xf32> to vector<13x32xf32>
    %205 = vector.extract_strided_slice %162 {offsets = [0, 11, 0], sizes = [13, 1, 32], strides = [1, 1, 1]} : vector<13x26x32xf32> to vector<13x1x32xf32>
    %206 = vector.shape_cast %205 : vector<13x1x32xf32> to vector<13x32xf32>
    %207 = arith.maximumf %204, %206 : vector<13x32xf32>
    %c0_35 = arith.constant 0 : index
    %c5_36 = arith.constant 5 : index
    %c0_37 = arith.constant 0 : index
    %208 = vector.load %arg10[%c0_35, %c5_36, %c0_37] : memref<13x13x32xf32, #tpu.memory_space<vmem>>, vector<13x1x32xf32>
    %209 = vector.shape_cast %208 : vector<13x1x32xf32> to vector<13x32xf32>
    %210 = vector.shape_cast %207 : vector<13x32xf32> to vector<13x1x32xf32>
    tpu.vector_store %arg10[%c0_35, %c5_36, %c0_37], %210 {strides = array<i32>} : memref<13x13x32xf32, #tpu.memory_space<vmem>>, vector<13x1x32xf32>,
    %211 = vector.extract_strided_slice %162 {offsets = [0, 12, 0], sizes = [13, 1, 32], strides = [1, 1, 1]} : vector<13x26x32xf32> to vector<13x1x32xf32>
    %212 = vector.shape_cast %211 : vector<13x1x32xf32> to vector<13x32xf32>
    %213 = vector.extract_strided_slice %162 {offsets = [0, 13, 0], sizes = [13, 1, 32], strides = [1, 1, 1]} : vector<13x26x32xf32> to vector<13x1x32xf32>
    %214 = vector.shape_cast %213 : vector<13x1x32xf32> to vector<13x32xf32>
    %215 = arith.maximumf %212, %214 : vector<13x32xf32>
    %c0_38 = arith.constant 0 : index
    %c6_39 = arith.constant 6 : index
    %c0_40 = arith.constant 0 : index
    %216 = vector.load %arg10[%c0_38, %c6_39, %c0_40] : memref<13x13x32xf32, #tpu.memory_space<vmem>>, vector<13x1x32xf32>
    %217 = vector.shape_cast %216 : vector<13x1x32xf32> to vector<13x32xf32>
    %218 = vector.shape_cast %215 : vector<13x32xf32> to vector<13x1x32xf32>
    tpu.vector_store %arg10[%c0_38, %c6_39, %c0_40], %218 {strides = array<i32>} : memref<13x13x32xf32, #tpu.memory_space<vmem>>, vector<13x1x32xf32>,
    %219 = vector.extract_strided_slice %162 {offsets = [0, 14, 0], sizes = [13, 1, 32], strides = [1, 1, 1]} : vector<13x26x32xf32> to vector<13x1x32xf32>
    %220 = vector.shape_cast %219 : vector<13x1x32xf32> to vector<13x32xf32>
    %221 = vector.extract_strided_slice %162 {offsets = [0, 15, 0], sizes = [13, 1, 32], strides = [1, 1, 1]} : vector<13x26x32xf32> to vector<13x1x32xf32>
    %222 = vector.shape_cast %221 : vector<13x1x32xf32> to vector<13x32xf32>
    %223 = arith.maximumf %220, %222 : vector<13x32xf32>
    %c0_41 = arith.constant 0 : index
    %c7_42 = arith.constant 7 : index
    %c0_43 = arith.constant 0 : index
    %224 = vector.load %arg10[%c0_41, %c7_42, %c0_43] : memref<13x13x32xf32, #tpu.memory_space<vmem>>, vector<13x1x32xf32>
    %225 = vector.shape_cast %224 : vector<13x1x32xf32> to vector<13x32xf32>
    %226 = vector.shape_cast %223 : vector<13x32xf32> to vector<13x1x32xf32>
    tpu.vector_store %arg10[%c0_41, %c7_42, %c0_43], %226 {strides = array<i32>} : memref<13x13x32xf32, #tpu.memory_space<vmem>>, vector<13x1x32xf32>,
    %227 = vector.extract_strided_slice %162 {offsets = [0, 16, 0], sizes = [13, 1, 32], strides = [1, 1, 1]} : vector<13x26x32xf32> to vector<13x1x32xf32>
    %228 = vector.shape_cast %227 : vector<13x1x32xf32> to vector<13x32xf32>
    %229 = vector.extract_strided_slice %162 {offsets = [0, 17, 0], sizes = [13, 1, 32], strides = [1, 1, 1]} : vector<13x26x32xf32> to vector<13x1x32xf32>
    %230 = vector.shape_cast %229 : vector<13x1x32xf32> to vector<13x32xf32>
    %231 = arith.maximumf %228, %230 : vector<13x32xf32>
    %c0_44 = arith.constant 0 : index
    %c8_45 = arith.constant 8 : index
    %c0_46 = arith.constant 0 : index
    %232 = vector.load %arg10[%c0_44, %c8_45, %c0_46] : memref<13x13x32xf32, #tpu.memory_space<vmem>>, vector<13x1x32xf32>
    %233 = vector.shape_cast %232 : vector<13x1x32xf32> to vector<13x32xf32>
    %234 = vector.shape_cast %231 : vector<13x32xf32> to vector<13x1x32xf32>
    tpu.vector_store %arg10[%c0_44, %c8_45, %c0_46], %234 {strides = array<i32>} : memref<13x13x32xf32, #tpu.memory_space<vmem>>, vector<13x1x32xf32>,
    %235 = vector.extract_strided_slice %162 {offsets = [0, 18, 0], sizes = [13, 1, 32], strides = [1, 1, 1]} : vector<13x26x32xf32> to vector<13x1x32xf32>
    %236 = vector.shape_cast %235 : vector<13x1x32xf32> to vector<13x32xf32>
    %237 = vector.extract_strided_slice %162 {offsets = [0, 19, 0], sizes = [13, 1, 32], strides = [1, 1, 1]} : vector<13x26x32xf32> to vector<13x1x32xf32>
    %238 = vector.shape_cast %237 : vector<13x1x32xf32> to vector<13x32xf32>
    %239 = arith.maximumf %236, %238 : vector<13x32xf32>
    %c0_47 = arith.constant 0 : index
    %c9 = arith.constant 9 : index
    %c0_48 = arith.constant 0 : index
    %240 = vector.load %arg10[%c0_47, %c9, %c0_48] : memref<13x13x32xf32, #tpu.memory_space<vmem>>, vector<13x1x32xf32>
    %241 = vector.shape_cast %240 : vector<13x1x32xf32> to vector<13x32xf32>
    %242 = vector.shape_cast %239 : vector<13x32xf32> to vector<13x1x32xf32>
    tpu.vector_store %arg10[%c0_47, %c9, %c0_48], %242 {strides = array<i32>} : memref<13x13x32xf32, #tpu.memory_space<vmem>>, vector<13x1x32xf32>,
    %243 = vector.extract_strided_slice %162 {offsets = [0, 20, 0], sizes = [13, 1, 32], strides = [1, 1, 1]} : vector<13x26x32xf32> to vector<13x1x32xf32>
    %244 = vector.shape_cast %243 : vector<13x1x32xf32> to vector<13x32xf32>
    %245 = vector.extract_strided_slice %162 {offsets = [0, 21, 0], sizes = [13, 1, 32], strides = [1, 1, 1]} : vector<13x26x32xf32> to vector<13x1x32xf32>
    %246 = vector.shape_cast %245 : vector<13x1x32xf32> to vector<13x32xf32>
    %247 = arith.maximumf %244, %246 : vector<13x32xf32>
    %c0_49 = arith.constant 0 : index
    %c10 = arith.constant 10 : index
    %c0_50 = arith.constant 0 : index
    %248 = vector.load %arg10[%c0_49, %c10, %c0_50] : memref<13x13x32xf32, #tpu.memory_space<vmem>>, vector<13x1x32xf32>
    %249 = vector.shape_cast %248 : vector<13x1x32xf32> to vector<13x32xf32>
    %250 = vector.shape_cast %247 : vector<13x32xf32> to vector<13x1x32xf32>
    tpu.vector_store %arg10[%c0_49, %c10, %c0_50], %250 {strides = array<i32>} : memref<13x13x32xf32, #tpu.memory_space<vmem>>, vector<13x1x32xf32>,
    %251 = vector.extract_strided_slice %162 {offsets = [0, 22, 0], sizes = [13, 1, 32], strides = [1, 1, 1]} : vector<13x26x32xf32> to vector<13x1x32xf32>
    %252 = vector.shape_cast %251 : vector<13x1x32xf32> to vector<13x32xf32>
    %253 = vector.extract_strided_slice %162 {offsets = [0, 23, 0], sizes = [13, 1, 32], strides = [1, 1, 1]} : vector<13x26x32xf32> to vector<13x1x32xf32>
    %254 = vector.shape_cast %253 : vector<13x1x32xf32> to vector<13x32xf32>
    %255 = arith.maximumf %252, %254 : vector<13x32xf32>
    %c0_51 = arith.constant 0 : index
    %c11 = arith.constant 11 : index
    %c0_52 = arith.constant 0 : index
    %256 = vector.load %arg10[%c0_51, %c11, %c0_52] : memref<13x13x32xf32, #tpu.memory_space<vmem>>, vector<13x1x32xf32>
    %257 = vector.shape_cast %256 : vector<13x1x32xf32> to vector<13x32xf32>
    %258 = vector.shape_cast %255 : vector<13x32xf32> to vector<13x1x32xf32>
    tpu.vector_store %arg10[%c0_51, %c11, %c0_52], %258 {strides = array<i32>} : memref<13x13x32xf32, #tpu.memory_space<vmem>>, vector<13x1x32xf32>,
    %259 = vector.extract_strided_slice %162 {offsets = [0, 24, 0], sizes = [13, 1, 32], strides = [1, 1, 1]} : vector<13x26x32xf32> to vector<13x1x32xf32>
    %260 = vector.shape_cast %259 : vector<13x1x32xf32> to vector<13x32xf32>
    %261 = vector.extract_strided_slice %162 {offsets = [0, 25, 0], sizes = [13, 1, 32], strides = [1, 1, 1]} : vector<13x26x32xf32> to vector<13x1x32xf32>
    %262 = vector.shape_cast %261 : vector<13x1x32xf32> to vector<13x32xf32>
    %263 = arith.maximumf %260, %262 : vector<13x32xf32>
    %c0_53 = arith.constant 0 : index
    %c12 = arith.constant 12 : index
    %c0_54 = arith.constant 0 : index
    %264 = vector.load %arg10[%c0_53, %c12, %c0_54] : memref<13x13x32xf32, #tpu.memory_space<vmem>>, vector<13x1x32xf32>
    %265 = vector.shape_cast %264 : vector<13x1x32xf32> to vector<13x32xf32>
    %266 = vector.shape_cast %263 : vector<13x32xf32> to vector<13x1x32xf32>
    tpu.vector_store %arg10[%c0_53, %c12, %c0_54], %266 {strides = array<i32>} : memref<13x13x32xf32, #tpu.memory_space<vmem>>, vector<13x1x32xf32>,
    %c0_55 = arith.constant 0 : index
    %c0_56 = arith.constant 0 : index
    %c0_57 = arith.constant 0 : index
    %267 = vector.load %arg10[%c0_55, %c0_56, %c0_57] : memref<13x13x32xf32, #tpu.memory_space<vmem>>, vector<1x13x32xf32>
    %268 = vector.shape_cast %267 : vector<1x13x32xf32> to vector<13x32xf32>
    %c0_58 = arith.constant 0 : index
    %c0_59 = arith.constant 0 : index
    %269 = vector.load %arg9[%c0_58, %c0_59] : memref<176x32xf32, #tpu.memory_space<vmem>>, vector<13x32xf32>
    tpu.vector_store %arg9[%c0_58, %c0_59], %268 {strides = array<i32>} : memref<176x32xf32, #tpu.memory_space<vmem>>, vector<13x32xf32>,
    %c1_60 = arith.constant 1 : index
    %c0_61 = arith.constant 0 : index
    %c0_62 = arith.constant 0 : index
    %270 = vector.load %arg10[%c1_60, %c0_61, %c0_62] : memref<13x13x32xf32, #tpu.memory_space<vmem>>, vector<1x13x32xf32>
    %271 = vector.shape_cast %270 : vector<1x13x32xf32> to vector<13x32xf32>
    %c13 = arith.constant 13 : index
    %c0_63 = arith.constant 0 : index
    %272 = vector.load %arg9[%c13, %c0_63] : memref<176x32xf32, #tpu.memory_space<vmem>>, vector<13x32xf32>
    tpu.vector_store %arg9[%c13, %c0_63], %271 {strides = array<i32>} : memref<176x32xf32, #tpu.memory_space<vmem>>, vector<13x32xf32>,
    %c2_64 = arith.constant 2 : index
    %c0_65 = arith.constant 0 : index
    %c0_66 = arith.constant 0 : index
    %273 = vector.load %arg10[%c2_64, %c0_65, %c0_66] : memref<13x13x32xf32, #tpu.memory_space<vmem>>, vector<1x13x32xf32>
    %274 = vector.shape_cast %273 : vector<1x13x32xf32> to vector<13x32xf32>
    %c26 = arith.constant 26 : index
    %c0_67 = arith.constant 0 : index
    %275 = vector.load %arg9[%c26, %c0_67] : memref<176x32xf32, #tpu.memory_space<vmem>>, vector<13x32xf32>
    tpu.vector_store %arg9[%c26, %c0_67], %274 {strides = array<i32>} : memref<176x32xf32, #tpu.memory_space<vmem>>, vector<13x32xf32>,
    %c3_68 = arith.constant 3 : index
    %c0_69 = arith.constant 0 : index
    %c0_70 = arith.constant 0 : index
    %276 = vector.load %arg10[%c3_68, %c0_69, %c0_70] : memref<13x13x32xf32, #tpu.memory_space<vmem>>, vector<1x13x32xf32>
    %277 = vector.shape_cast %276 : vector<1x13x32xf32> to vector<13x32xf32>
    %c39 = arith.constant 39 : index
    %c0_71 = arith.constant 0 : index
    %278 = vector.load %arg9[%c39, %c0_71] : memref<176x32xf32, #tpu.memory_space<vmem>>, vector<13x32xf32>
    tpu.vector_store %arg9[%c39, %c0_71], %277 {strides = array<i32>} : memref<176x32xf32, #tpu.memory_space<vmem>>, vector<13x32xf32>,
    %c4_72 = arith.constant 4 : index
    %c0_73 = arith.constant 0 : index
    %c0_74 = arith.constant 0 : index
    %279 = vector.load %arg10[%c4_72, %c0_73, %c0_74] : memref<13x13x32xf32, #tpu.memory_space<vmem>>, vector<1x13x32xf32>
    %280 = vector.shape_cast %279 : vector<1x13x32xf32> to vector<13x32xf32>
    %c52 = arith.constant 52 : index
    %c0_75 = arith.constant 0 : index
    %281 = vector.load %arg9[%c52, %c0_75] : memref<176x32xf32, #tpu.memory_space<vmem>>, vector<13x32xf32>
    tpu.vector_store %arg9[%c52, %c0_75], %280 {strides = array<i32>} : memref<176x32xf32, #tpu.memory_space<vmem>>, vector<13x32xf32>,
    %c5_76 = arith.constant 5 : index
    %c0_77 = arith.constant 0 : index
    %c0_78 = arith.constant 0 : index
    %282 = vector.load %arg10[%c5_76, %c0_77, %c0_78] : memref<13x13x32xf32, #tpu.memory_space<vmem>>, vector<1x13x32xf32>
    %283 = vector.shape_cast %282 : vector<1x13x32xf32> to vector<13x32xf32>
    %c65 = arith.constant 65 : index
    %c0_79 = arith.constant 0 : index
    %284 = vector.load %arg9[%c65, %c0_79] : memref<176x32xf32, #tpu.memory_space<vmem>>, vector<13x32xf32>
    tpu.vector_store %arg9[%c65, %c0_79], %283 {strides = array<i32>} : memref<176x32xf32, #tpu.memory_space<vmem>>, vector<13x32xf32>,
    %c6_80 = arith.constant 6 : index
    %c0_81 = arith.constant 0 : index
    %c0_82 = arith.constant 0 : index
    %285 = vector.load %arg10[%c6_80, %c0_81, %c0_82] : memref<13x13x32xf32, #tpu.memory_space<vmem>>, vector<1x13x32xf32>
    %286 = vector.shape_cast %285 : vector<1x13x32xf32> to vector<13x32xf32>
    %c78 = arith.constant 78 : index
    %c0_83 = arith.constant 0 : index
    %287 = vector.load %arg9[%c78, %c0_83] : memref<176x32xf32, #tpu.memory_space<vmem>>, vector<13x32xf32>
    tpu.vector_store %arg9[%c78, %c0_83], %286 {strides = array<i32>} : memref<176x32xf32, #tpu.memory_space<vmem>>, vector<13x32xf32>,
    %c7_84 = arith.constant 7 : index
    %c0_85 = arith.constant 0 : index
    %c0_86 = arith.constant 0 : index
    %288 = vector.load %arg10[%c7_84, %c0_85, %c0_86] : memref<13x13x32xf32, #tpu.memory_space<vmem>>, vector<1x13x32xf32>
    %289 = vector.shape_cast %288 : vector<1x13x32xf32> to vector<13x32xf32>
    %c91 = arith.constant 91 : index
    %c0_87 = arith.constant 0 : index
    %290 = vector.load %arg9[%c91, %c0_87] : memref<176x32xf32, #tpu.memory_space<vmem>>, vector<13x32xf32>
    tpu.vector_store %arg9[%c91, %c0_87], %289 {strides = array<i32>} : memref<176x32xf32, #tpu.memory_space<vmem>>, vector<13x32xf32>,
    %c8_88 = arith.constant 8 : index
    %c0_89 = arith.constant 0 : index
    %c0_90 = arith.constant 0 : index
    %291 = vector.load %arg10[%c8_88, %c0_89, %c0_90] : memref<13x13x32xf32, #tpu.memory_space<vmem>>, vector<1x13x32xf32>
    %292 = vector.shape_cast %291 : vector<1x13x32xf32> to vector<13x32xf32>
    %c104 = arith.constant 104 : index
    %c0_91 = arith.constant 0 : index
    %293 = vector.load %arg9[%c104, %c0_91] : memref<176x32xf32, #tpu.memory_space<vmem>>, vector<13x32xf32>
    tpu.vector_store %arg9[%c104, %c0_91], %292 {strides = array<i32>} : memref<176x32xf32, #tpu.memory_space<vmem>>, vector<13x32xf32>,
    %c9_92 = arith.constant 9 : index
    %c0_93 = arith.constant 0 : index
    %c0_94 = arith.constant 0 : index
    %294 = vector.load %arg10[%c9_92, %c0_93, %c0_94] : memref<13x13x32xf32, #tpu.memory_space<vmem>>, vector<1x13x32xf32>
    %295 = vector.shape_cast %294 : vector<1x13x32xf32> to vector<13x32xf32>
    %c117 = arith.constant 117 : index
    %c0_95 = arith.constant 0 : index
    %296 = vector.load %arg9[%c117, %c0_95] : memref<176x32xf32, #tpu.memory_space<vmem>>, vector<13x32xf32>
    tpu.vector_store %arg9[%c117, %c0_95], %295 {strides = array<i32>} : memref<176x32xf32, #tpu.memory_space<vmem>>, vector<13x32xf32>,
    %c10_96 = arith.constant 10 : index
    %c0_97 = arith.constant 0 : index
    %c0_98 = arith.constant 0 : index
    %297 = vector.load %arg10[%c10_96, %c0_97, %c0_98] : memref<13x13x32xf32, #tpu.memory_space<vmem>>, vector<1x13x32xf32>
    %298 = vector.shape_cast %297 : vector<1x13x32xf32> to vector<13x32xf32>
    %c130 = arith.constant 130 : index
    %c0_99 = arith.constant 0 : index
    %299 = vector.load %arg9[%c130, %c0_99] : memref<176x32xf32, #tpu.memory_space<vmem>>, vector<13x32xf32>
    tpu.vector_store %arg9[%c130, %c0_99], %298 {strides = array<i32>} : memref<176x32xf32, #tpu.memory_space<vmem>>, vector<13x32xf32>,
    %c11_100 = arith.constant 11 : index
    %c0_101 = arith.constant 0 : index
    %c0_102 = arith.constant 0 : index
    %300 = vector.load %arg10[%c11_100, %c0_101, %c0_102] : memref<13x13x32xf32, #tpu.memory_space<vmem>>, vector<1x13x32xf32>
    %301 = vector.shape_cast %300 : vector<1x13x32xf32> to vector<13x32xf32>
    %c143 = arith.constant 143 : index
    %c0_103 = arith.constant 0 : index
    %302 = vector.load %arg9[%c143, %c0_103] : memref<176x32xf32, #tpu.memory_space<vmem>>, vector<13x32xf32>
    tpu.vector_store %arg9[%c143, %c0_103], %301 {strides = array<i32>} : memref<176x32xf32, #tpu.memory_space<vmem>>, vector<13x32xf32>,
    %c12_104 = arith.constant 12 : index
    %c0_105 = arith.constant 0 : index
    %c0_106 = arith.constant 0 : index
    %303 = vector.load %arg10[%c12_104, %c0_105, %c0_106] : memref<13x13x32xf32, #tpu.memory_space<vmem>>, vector<1x13x32xf32>
    %304 = vector.shape_cast %303 : vector<1x13x32xf32> to vector<13x32xf32>
    %c156 = arith.constant 156 : index
    %c0_107 = arith.constant 0 : index
    %305 = vector.load %arg9[%c156, %c0_107] : memref<176x32xf32, #tpu.memory_space<vmem>>, vector<13x32xf32>
    tpu.vector_store %arg9[%c156, %c0_107], %304 {strides = array<i32>} : memref<176x32xf32, #tpu.memory_space<vmem>>, vector<13x32xf32>,
    %cst_108 = arith.constant 0.000000e+00 : f32
    %306 = vector.broadcast %cst_108 : f32 to vector<143x64xf32>
    %c0_109 = arith.constant 0 : index
    %c0_110 = arith.constant 0 : index
    %307 = vector.load %arg9[%c0_109, %c0_110] : memref<176x32xf32, #tpu.memory_space<vmem>>, vector<143x32xf32>
    %c0_111 = arith.constant 0 : index
    %c0_112 = arith.constant 0 : index
    %c0_113 = arith.constant 0 : index
    %308 = vector.load %arg4[%c0_111, %c0_112, %c0_113] : memref<9x32x64xf32, #tpu.memory_space<vmem>>, vector<1x32x64xf32>
    %309 = vector.shape_cast %308 : vector<1x32x64xf32> to vector<32x64xf32>
    %cst_114 = arith.constant dense<0.000000e+00> : vector<143x64xf32>
    %310 = tpu.matmul %307, %309, %cst_114 {dimension_numbers = #tpu.dot_dimension_numbers<[1], [0], [0], [1], [0, 0, 1, 1], [], []>} : vector<143x32xf32>, vector<32x64xf32>, vector<143x64xf32> -> vector<143x64xf32>
    %311 = arith.addf %306, %310 : vector<143x64xf32>
    %c1_115 = arith.constant 1 : index
    %c0_116 = arith.constant 0 : index
    %312 = vector.load %arg9[%c1_115, %c0_116] : memref<176x32xf32, #tpu.memory_space<vmem>>, vector<143x32xf32>
    %c1_117 = arith.constant 1 : index
    %c0_118 = arith.constant 0 : index
    %c0_119 = arith.constant 0 : index
    %313 = vector.load %arg4[%c1_117, %c0_118, %c0_119] : memref<9x32x64xf32, #tpu.memory_space<vmem>>, vector<1x32x64xf32>
    %314 = vector.shape_cast %313 : vector<1x32x64xf32> to vector<32x64xf32>
    %cst_120 = arith.constant dense<0.000000e+00> : vector<143x64xf32>
    %315 = tpu.matmul %312, %314, %cst_120 {dimension_numbers = #tpu.dot_dimension_numbers<[1], [0], [0], [1], [0, 0, 1, 1], [], []>} : vector<143x32xf32>, vector<32x64xf32>, vector<143x64xf32> -> vector<143x64xf32>
    %316 = arith.addf %311, %315 : vector<143x64xf32>
    %c2_121 = arith.constant 2 : index
    %c0_122 = arith.constant 0 : index
    %317 = vector.load %arg9[%c2_121, %c0_122] : memref<176x32xf32, #tpu.memory_space<vmem>>, vector<143x32xf32>
    %c2_123 = arith.constant 2 : index
    %c0_124 = arith.constant 0 : index
    %c0_125 = arith.constant 0 : index
    %318 = vector.load %arg4[%c2_123, %c0_124, %c0_125] : memref<9x32x64xf32, #tpu.memory_space<vmem>>, vector<1x32x64xf32>
    %319 = vector.shape_cast %318 : vector<1x32x64xf32> to vector<32x64xf32>
    %cst_126 = arith.constant dense<0.000000e+00> : vector<143x64xf32>
    %320 = tpu.matmul %317, %319, %cst_126 {dimension_numbers = #tpu.dot_dimension_numbers<[1], [0], [0], [1], [0, 0, 1, 1], [], []>} : vector<143x32xf32>, vector<32x64xf32>, vector<143x64xf32> -> vector<143x64xf32>
    %321 = arith.addf %316, %320 : vector<143x64xf32>
    %c13_127 = arith.constant 13 : index
    %c0_128 = arith.constant 0 : index
    %322 = vector.load %arg9[%c13_127, %c0_128] : memref<176x32xf32, #tpu.memory_space<vmem>>, vector<143x32xf32>
    %c3_129 = arith.constant 3 : index
    %c0_130 = arith.constant 0 : index
    %c0_131 = arith.constant 0 : index
    %323 = vector.load %arg4[%c3_129, %c0_130, %c0_131] : memref<9x32x64xf32, #tpu.memory_space<vmem>>, vector<1x32x64xf32>
    %324 = vector.shape_cast %323 : vector<1x32x64xf32> to vector<32x64xf32>
    %cst_132 = arith.constant dense<0.000000e+00> : vector<143x64xf32>
    %325 = tpu.matmul %322, %324, %cst_132 {dimension_numbers = #tpu.dot_dimension_numbers<[1], [0], [0], [1], [0, 0, 1, 1], [], []>} : vector<143x32xf32>, vector<32x64xf32>, vector<143x64xf32> -> vector<143x64xf32>
    %326 = arith.addf %321, %325 : vector<143x64xf32>
    %c14 = arith.constant 14 : index
    %c0_133 = arith.constant 0 : index
    %327 = vector.load %arg9[%c14, %c0_133] : memref<176x32xf32, #tpu.memory_space<vmem>>, vector<143x32xf32>
    %c4_134 = arith.constant 4 : index
    %c0_135 = arith.constant 0 : index
    %c0_136 = arith.constant 0 : index
    %328 = vector.load %arg4[%c4_134, %c0_135, %c0_136] : memref<9x32x64xf32, #tpu.memory_space<vmem>>, vector<1x32x64xf32>
    %329 = vector.shape_cast %328 : vector<1x32x64xf32> to vector<32x64xf32>
    %cst_137 = arith.constant dense<0.000000e+00> : vector<143x64xf32>
    %330 = tpu.matmul %327, %329, %cst_137 {dimension_numbers = #tpu.dot_dimension_numbers<[1], [0], [0], [1], [0, 0, 1, 1], [], []>} : vector<143x32xf32>, vector<32x64xf32>, vector<143x64xf32> -> vector<143x64xf32>
    %331 = arith.addf %326, %330 : vector<143x64xf32>
    %c15 = arith.constant 15 : index
    %c0_138 = arith.constant 0 : index
    %332 = vector.load %arg9[%c15, %c0_138] : memref<176x32xf32, #tpu.memory_space<vmem>>, vector<143x32xf32>
    %c5_139 = arith.constant 5 : index
    %c0_140 = arith.constant 0 : index
    %c0_141 = arith.constant 0 : index
    %333 = vector.load %arg4[%c5_139, %c0_140, %c0_141] : memref<9x32x64xf32, #tpu.memory_space<vmem>>, vector<1x32x64xf32>
    %334 = vector.shape_cast %333 : vector<1x32x64xf32> to vector<32x64xf32>
    %cst_142 = arith.constant dense<0.000000e+00> : vector<143x64xf32>
    %335 = tpu.matmul %332, %334, %cst_142 {dimension_numbers = #tpu.dot_dimension_numbers<[1], [0], [0], [1], [0, 0, 1, 1], [], []>} : vector<143x32xf32>, vector<32x64xf32>, vector<143x64xf32> -> vector<143x64xf32>
    %336 = arith.addf %331, %335 : vector<143x64xf32>
    %c26_143 = arith.constant 26 : index
    %c0_144 = arith.constant 0 : index
    %337 = vector.load %arg9[%c26_143, %c0_144] : memref<176x32xf32, #tpu.memory_space<vmem>>, vector<143x32xf32>
    %c6_145 = arith.constant 6 : index
    %c0_146 = arith.constant 0 : index
    %c0_147 = arith.constant 0 : index
    %338 = vector.load %arg4[%c6_145, %c0_146, %c0_147] : memref<9x32x64xf32, #tpu.memory_space<vmem>>, vector<1x32x64xf32>
    %339 = vector.shape_cast %338 : vector<1x32x64xf32> to vector<32x64xf32>
    %cst_148 = arith.constant dense<0.000000e+00> : vector<143x64xf32>
    %340 = tpu.matmul %337, %339, %cst_148 {dimension_numbers = #tpu.dot_dimension_numbers<[1], [0], [0], [1], [0, 0, 1, 1], [], []>} : vector<143x32xf32>, vector<32x64xf32>, vector<143x64xf32> -> vector<143x64xf32>
    %341 = arith.addf %336, %340 : vector<143x64xf32>
    %c27 = arith.constant 27 : index
    %c0_149 = arith.constant 0 : index
    %342 = vector.load %arg9[%c27, %c0_149] : memref<176x32xf32, #tpu.memory_space<vmem>>, vector<143x32xf32>
    %c7_150 = arith.constant 7 : index
    %c0_151 = arith.constant 0 : index
    %c0_152 = arith.constant 0 : index
    %343 = vector.load %arg4[%c7_150, %c0_151, %c0_152] : memref<9x32x64xf32, #tpu.memory_space<vmem>>, vector<1x32x64xf32>
    %344 = vector.shape_cast %343 : vector<1x32x64xf32> to vector<32x64xf32>
    %cst_153 = arith.constant dense<0.000000e+00> : vector<143x64xf32>
    %345 = tpu.matmul %342, %344, %cst_153 {dimension_numbers = #tpu.dot_dimension_numbers<[1], [0], [0], [1], [0, 0, 1, 1], [], []>} : vector<143x32xf32>, vector<32x64xf32>, vector<143x64xf32> -> vector<143x64xf32>
    %346 = arith.addf %341, %345 : vector<143x64xf32>
    %c28 = arith.constant 28 : index
    %c0_154 = arith.constant 0 : index
    %347 = vector.load %arg9[%c28, %c0_154] : memref<176x32xf32, #tpu.memory_space<vmem>>, vector<143x32xf32>
    %c8_155 = arith.constant 8 : index
    %c0_156 = arith.constant 0 : index
    %c0_157 = arith.constant 0 : index
    %348 = vector.load %arg4[%c8_155, %c0_156, %c0_157] : memref<9x32x64xf32, #tpu.memory_space<vmem>>, vector<1x32x64xf32>
    %349 = vector.shape_cast %348 : vector<1x32x64xf32> to vector<32x64xf32>
    %cst_158 = arith.constant dense<0.000000e+00> : vector<143x64xf32>
    %350 = tpu.matmul %347, %349, %cst_158 {dimension_numbers = #tpu.dot_dimension_numbers<[1], [0], [0], [1], [0, 0, 1, 1], [], []>} : vector<143x32xf32>, vector<32x64xf32>, vector<143x64xf32> -> vector<143x64xf32>
    %351 = arith.addf %346, %350 : vector<143x64xf32>
    %352 = vector.broadcast %3 : vector<1x64xf32> to vector<143x64xf32>
    %353 = arith.addf %351, %352 : vector<143x64xf32>
    %cst_159 = arith.constant 0.000000e+00 : f32
    %354 = vector.broadcast %cst_159 : f32 to vector<143x64xf32>
    %355 = arith.maximumf %353, %354 : vector<143x64xf32>
    %356 = vector.extract_strided_slice %355 {offsets = [0, 0], sizes = [13, 64], strides = [1, 1]} : vector<143x64xf32> to vector<13x64xf32>
    %357 = vector.extract_strided_slice %355 {offsets = [13, 0], sizes = [13, 64], strides = [1, 1]} : vector<143x64xf32> to vector<13x64xf32>
    %358 = arith.maximumf %356, %357 : vector<13x64xf32>
    %359 = vector.extract_strided_slice %358 {offsets = [0, 0], sizes = [1, 64], strides = [1, 1]} : vector<13x64xf32> to vector<1x64xf32>
    %360 = vector.shape_cast %359 : vector<1x64xf32> to vector<64xf32>
    %361 = vector.extract_strided_slice %358 {offsets = [1, 0], sizes = [1, 64], strides = [1, 1]} : vector<13x64xf32> to vector<1x64xf32>
    %362 = vector.shape_cast %361 : vector<1x64xf32> to vector<64xf32>
    %363 = arith.maximumf %360, %362 : vector<64xf32>
    %c0_160 = arith.constant 0 : index
    %c0_161 = arith.constant 0 : index
    %364 = vector.load %arg11[%c0_160, %c0_161] : memref<1x1600xf32, #tpu.memory_space<vmem>>, vector<1x64xf32>
    %365 = vector.shape_cast %364 : vector<1x64xf32> to vector<64xf32>
    %366 = vector.shape_cast %363 : vector<64xf32> to vector<1x64xf32>
    tpu.vector_store %arg11[%c0_160, %c0_161], %366 {strides = array<i32>} : memref<1x1600xf32, #tpu.memory_space<vmem>>, vector<1x64xf32>,
    %367 = vector.extract_strided_slice %358 {offsets = [2, 0], sizes = [1, 64], strides = [1, 1]} : vector<13x64xf32> to vector<1x64xf32>
    %368 = vector.shape_cast %367 : vector<1x64xf32> to vector<64xf32>
    %369 = vector.extract_strided_slice %358 {offsets = [3, 0], sizes = [1, 64], strides = [1, 1]} : vector<13x64xf32> to vector<1x64xf32>
    %370 = vector.shape_cast %369 : vector<1x64xf32> to vector<64xf32>
    %371 = arith.maximumf %368, %370 : vector<64xf32>
    %c0_162 = arith.constant 0 : index
    %c64 = arith.constant 64 : index
    %372 = vector.load %arg11[%c0_162, %c64] : memref<1x1600xf32, #tpu.memory_space<vmem>>, vector<1x64xf32>
    %373 = vector.shape_cast %372 : vector<1x64xf32> to vector<64xf32>
    %374 = vector.shape_cast %371 : vector<64xf32> to vector<1x64xf32>
    tpu.vector_store %arg11[%c0_162, %c64], %374 {strides = array<i32>} : memref<1x1600xf32, #tpu.memory_space<vmem>>, vector<1x64xf32>,
    %375 = vector.extract_strided_slice %358 {offsets = [4, 0], sizes = [1, 64], strides = [1, 1]} : vector<13x64xf32> to vector<1x64xf32>
    %376 = vector.shape_cast %375 : vector<1x64xf32> to vector<64xf32>
    %377 = vector.extract_strided_slice %358 {offsets = [5, 0], sizes = [1, 64], strides = [1, 1]} : vector<13x64xf32> to vector<1x64xf32>
    %378 = vector.shape_cast %377 : vector<1x64xf32> to vector<64xf32>
    %379 = arith.maximumf %376, %378 : vector<64xf32>
    %c0_163 = arith.constant 0 : index
    %c128 = arith.constant 128 : index
    %380 = vector.load %arg11[%c0_163, %c128] : memref<1x1600xf32, #tpu.memory_space<vmem>>, vector<1x64xf32>
    %381 = vector.shape_cast %380 : vector<1x64xf32> to vector<64xf32>
    %382 = vector.shape_cast %379 : vector<64xf32> to vector<1x64xf32>
    tpu.vector_store %arg11[%c0_163, %c128], %382 {strides = array<i32>} : memref<1x1600xf32, #tpu.memory_space<vmem>>, vector<1x64xf32>,
    %383 = vector.extract_strided_slice %358 {offsets = [6, 0], sizes = [1, 64], strides = [1, 1]} : vector<13x64xf32> to vector<1x64xf32>
    %384 = vector.shape_cast %383 : vector<1x64xf32> to vector<64xf32>
    %385 = vector.extract_strided_slice %358 {offsets = [7, 0], sizes = [1, 64], strides = [1, 1]} : vector<13x64xf32> to vector<1x64xf32>
    %386 = vector.shape_cast %385 : vector<1x64xf32> to vector<64xf32>
    %387 = arith.maximumf %384, %386 : vector<64xf32>
    %c0_164 = arith.constant 0 : index
    %c192 = arith.constant 192 : index
    %388 = vector.load %arg11[%c0_164, %c192] : memref<1x1600xf32, #tpu.memory_space<vmem>>, vector<1x64xf32>
    %389 = vector.shape_cast %388 : vector<1x64xf32> to vector<64xf32>
    %390 = vector.shape_cast %387 : vector<64xf32> to vector<1x64xf32>
    tpu.vector_store %arg11[%c0_164, %c192], %390 {strides = array<i32>} : memref<1x1600xf32, #tpu.memory_space<vmem>>, vector<1x64xf32>,
    %391 = vector.extract_strided_slice %358 {offsets = [8, 0], sizes = [1, 64], strides = [1, 1]} : vector<13x64xf32> to vector<1x64xf32>
    %392 = vector.shape_cast %391 : vector<1x64xf32> to vector<64xf32>
    %393 = vector.extract_strided_slice %358 {offsets = [9, 0], sizes = [1, 64], strides = [1, 1]} : vector<13x64xf32> to vector<1x64xf32>
    %394 = vector.shape_cast %393 : vector<1x64xf32> to vector<64xf32>
    %395 = arith.maximumf %392, %394 : vector<64xf32>
    %c0_165 = arith.constant 0 : index
    %c256 = arith.constant 256 : index
    %396 = vector.load %arg11[%c0_165, %c256] : memref<1x1600xf32, #tpu.memory_space<vmem>>, vector<1x64xf32>
    %397 = vector.shape_cast %396 : vector<1x64xf32> to vector<64xf32>
    %398 = vector.shape_cast %395 : vector<64xf32> to vector<1x64xf32>
    tpu.vector_store %arg11[%c0_165, %c256], %398 {strides = array<i32>} : memref<1x1600xf32, #tpu.memory_space<vmem>>, vector<1x64xf32>,
    %399 = vector.extract_strided_slice %355 {offsets = [26, 0], sizes = [13, 64], strides = [1, 1]} : vector<143x64xf32> to vector<13x64xf32>
    %400 = vector.extract_strided_slice %355 {offsets = [39, 0], sizes = [13, 64], strides = [1, 1]} : vector<143x64xf32> to vector<13x64xf32>
    %401 = arith.maximumf %399, %400 : vector<13x64xf32>
    %402 = vector.extract_strided_slice %401 {offsets = [0, 0], sizes = [1, 64], strides = [1, 1]} : vector<13x64xf32> to vector<1x64xf32>
    %403 = vector.shape_cast %402 : vector<1x64xf32> to vector<64xf32>
    %404 = vector.extract_strided_slice %401 {offsets = [1, 0], sizes = [1, 64], strides = [1, 1]} : vector<13x64xf32> to vector<1x64xf32>
    %405 = vector.shape_cast %404 : vector<1x64xf32> to vector<64xf32>
    %406 = arith.maximumf %403, %405 : vector<64xf32>
    %c0_166 = arith.constant 0 : index
    %c320 = arith.constant 320 : index
    %407 = vector.load %arg11[%c0_166, %c320] : memref<1x1600xf32, #tpu.memory_space<vmem>>, vector<1x64xf32>
    %408 = vector.shape_cast %407 : vector<1x64xf32> to vector<64xf32>
    %409 = vector.shape_cast %406 : vector<64xf32> to vector<1x64xf32>
    tpu.vector_store %arg11[%c0_166, %c320], %409 {strides = array<i32>} : memref<1x1600xf32, #tpu.memory_space<vmem>>, vector<1x64xf32>,
    %410 = vector.extract_strided_slice %401 {offsets = [2, 0], sizes = [1, 64], strides = [1, 1]} : vector<13x64xf32> to vector<1x64xf32>
    %411 = vector.shape_cast %410 : vector<1x64xf32> to vector<64xf32>
    %412 = vector.extract_strided_slice %401 {offsets = [3, 0], sizes = [1, 64], strides = [1, 1]} : vector<13x64xf32> to vector<1x64xf32>
    %413 = vector.shape_cast %412 : vector<1x64xf32> to vector<64xf32>
    %414 = arith.maximumf %411, %413 : vector<64xf32>
    %c0_167 = arith.constant 0 : index
    %c384 = arith.constant 384 : index
    %415 = vector.load %arg11[%c0_167, %c384] : memref<1x1600xf32, #tpu.memory_space<vmem>>, vector<1x64xf32>
    %416 = vector.shape_cast %415 : vector<1x64xf32> to vector<64xf32>
    %417 = vector.shape_cast %414 : vector<64xf32> to vector<1x64xf32>
    tpu.vector_store %arg11[%c0_167, %c384], %417 {strides = array<i32>} : memref<1x1600xf32, #tpu.memory_space<vmem>>, vector<1x64xf32>,
    %418 = vector.extract_strided_slice %401 {offsets = [4, 0], sizes = [1, 64], strides = [1, 1]} : vector<13x64xf32> to vector<1x64xf32>
    %419 = vector.shape_cast %418 : vector<1x64xf32> to vector<64xf32>
    %420 = vector.extract_strided_slice %401 {offsets = [5, 0], sizes = [1, 64], strides = [1, 1]} : vector<13x64xf32> to vector<1x64xf32>
    %421 = vector.shape_cast %420 : vector<1x64xf32> to vector<64xf32>
    %422 = arith.maximumf %419, %421 : vector<64xf32>
    %c0_168 = arith.constant 0 : index
    %c448 = arith.constant 448 : index
    %423 = vector.load %arg11[%c0_168, %c448] : memref<1x1600xf32, #tpu.memory_space<vmem>>, vector<1x64xf32>
    %424 = vector.shape_cast %423 : vector<1x64xf32> to vector<64xf32>
    %425 = vector.shape_cast %422 : vector<64xf32> to vector<1x64xf32>
    tpu.vector_store %arg11[%c0_168, %c448], %425 {strides = array<i32>} : memref<1x1600xf32, #tpu.memory_space<vmem>>, vector<1x64xf32>,
    %426 = vector.extract_strided_slice %401 {offsets = [6, 0], sizes = [1, 64], strides = [1, 1]} : vector<13x64xf32> to vector<1x64xf32>
    %427 = vector.shape_cast %426 : vector<1x64xf32> to vector<64xf32>
    %428 = vector.extract_strided_slice %401 {offsets = [7, 0], sizes = [1, 64], strides = [1, 1]} : vector<13x64xf32> to vector<1x64xf32>
    %429 = vector.shape_cast %428 : vector<1x64xf32> to vector<64xf32>
    %430 = arith.maximumf %427, %429 : vector<64xf32>
    %c0_169 = arith.constant 0 : index
    %c512 = arith.constant 512 : index
    %431 = vector.load %arg11[%c0_169, %c512] : memref<1x1600xf32, #tpu.memory_space<vmem>>, vector<1x64xf32>
    %432 = vector.shape_cast %431 : vector<1x64xf32> to vector<64xf32>
    %433 = vector.shape_cast %430 : vector<64xf32> to vector<1x64xf32>
    tpu.vector_store %arg11[%c0_169, %c512], %433 {strides = array<i32>} : memref<1x1600xf32, #tpu.memory_space<vmem>>, vector<1x64xf32>,
    %434 = vector.extract_strided_slice %401 {offsets = [8, 0], sizes = [1, 64], strides = [1, 1]} : vector<13x64xf32> to vector<1x64xf32>
    %435 = vector.shape_cast %434 : vector<1x64xf32> to vector<64xf32>
    %436 = vector.extract_strided_slice %401 {offsets = [9, 0], sizes = [1, 64], strides = [1, 1]} : vector<13x64xf32> to vector<1x64xf32>
    %437 = vector.shape_cast %436 : vector<1x64xf32> to vector<64xf32>
    %438 = arith.maximumf %435, %437 : vector<64xf32>
    %c0_170 = arith.constant 0 : index
    %c576 = arith.constant 576 : index
    %439 = vector.load %arg11[%c0_170, %c576] : memref<1x1600xf32, #tpu.memory_space<vmem>>, vector<1x64xf32>
    %440 = vector.shape_cast %439 : vector<1x64xf32> to vector<64xf32>
    %441 = vector.shape_cast %438 : vector<64xf32> to vector<1x64xf32>
    tpu.vector_store %arg11[%c0_170, %c576], %441 {strides = array<i32>} : memref<1x1600xf32, #tpu.memory_space<vmem>>, vector<1x64xf32>,
    %442 = vector.extract_strided_slice %355 {offsets = [52, 0], sizes = [13, 64], strides = [1, 1]} : vector<143x64xf32> to vector<13x64xf32>
    %443 = vector.extract_strided_slice %355 {offsets = [65, 0], sizes = [13, 64], strides = [1, 1]} : vector<143x64xf32> to vector<13x64xf32>
    %444 = arith.maximumf %442, %443 : vector<13x64xf32>
    %445 = vector.extract_strided_slice %444 {offsets = [0, 0], sizes = [1, 64], strides = [1, 1]} : vector<13x64xf32> to vector<1x64xf32>
    %446 = vector.shape_cast %445 : vector<1x64xf32> to vector<64xf32>
    %447 = vector.extract_strided_slice %444 {offsets = [1, 0], sizes = [1, 64], strides = [1, 1]} : vector<13x64xf32> to vector<1x64xf32>
    %448 = vector.shape_cast %447 : vector<1x64xf32> to vector<64xf32>
    %449 = arith.maximumf %446, %448 : vector<64xf32>
    %c0_171 = arith.constant 0 : index
    %c640 = arith.constant 640 : index
    %450 = vector.load %arg11[%c0_171, %c640] : memref<1x1600xf32, #tpu.memory_space<vmem>>, vector<1x64xf32>
    %451 = vector.shape_cast %450 : vector<1x64xf32> to vector<64xf32>
    %452 = vector.shape_cast %449 : vector<64xf32> to vector<1x64xf32>
    tpu.vector_store %arg11[%c0_171, %c640], %452 {strides = array<i32>} : memref<1x1600xf32, #tpu.memory_space<vmem>>, vector<1x64xf32>,
    %453 = vector.extract_strided_slice %444 {offsets = [2, 0], sizes = [1, 64], strides = [1, 1]} : vector<13x64xf32> to vector<1x64xf32>
    %454 = vector.shape_cast %453 : vector<1x64xf32> to vector<64xf32>
    %455 = vector.extract_strided_slice %444 {offsets = [3, 0], sizes = [1, 64], strides = [1, 1]} : vector<13x64xf32> to vector<1x64xf32>
    %456 = vector.shape_cast %455 : vector<1x64xf32> to vector<64xf32>
    %457 = arith.maximumf %454, %456 : vector<64xf32>
    %c0_172 = arith.constant 0 : index
    %c704 = arith.constant 704 : index
    %458 = vector.load %arg11[%c0_172, %c704] : memref<1x1600xf32, #tpu.memory_space<vmem>>, vector<1x64xf32>
    %459 = vector.shape_cast %458 : vector<1x64xf32> to vector<64xf32>
    %460 = vector.shape_cast %457 : vector<64xf32> to vector<1x64xf32>
    tpu.vector_store %arg11[%c0_172, %c704], %460 {strides = array<i32>} : memref<1x1600xf32, #tpu.memory_space<vmem>>, vector<1x64xf32>,
    %461 = vector.extract_strided_slice %444 {offsets = [4, 0], sizes = [1, 64], strides = [1, 1]} : vector<13x64xf32> to vector<1x64xf32>
    %462 = vector.shape_cast %461 : vector<1x64xf32> to vector<64xf32>
    %463 = vector.extract_strided_slice %444 {offsets = [5, 0], sizes = [1, 64], strides = [1, 1]} : vector<13x64xf32> to vector<1x64xf32>
    %464 = vector.shape_cast %463 : vector<1x64xf32> to vector<64xf32>
    %465 = arith.maximumf %462, %464 : vector<64xf32>
    %c0_173 = arith.constant 0 : index
    %c768 = arith.constant 768 : index
    %466 = vector.load %arg11[%c0_173, %c768] : memref<1x1600xf32, #tpu.memory_space<vmem>>, vector<1x64xf32>
    %467 = vector.shape_cast %466 : vector<1x64xf32> to vector<64xf32>
    %468 = vector.shape_cast %465 : vector<64xf32> to vector<1x64xf32>
    tpu.vector_store %arg11[%c0_173, %c768], %468 {strides = array<i32>} : memref<1x1600xf32, #tpu.memory_space<vmem>>, vector<1x64xf32>,
    %469 = vector.extract_strided_slice %444 {offsets = [6, 0], sizes = [1, 64], strides = [1, 1]} : vector<13x64xf32> to vector<1x64xf32>
    %470 = vector.shape_cast %469 : vector<1x64xf32> to vector<64xf32>
    %471 = vector.extract_strided_slice %444 {offsets = [7, 0], sizes = [1, 64], strides = [1, 1]} : vector<13x64xf32> to vector<1x64xf32>
    %472 = vector.shape_cast %471 : vector<1x64xf32> to vector<64xf32>
    %473 = arith.maximumf %470, %472 : vector<64xf32>
    %c0_174 = arith.constant 0 : index
    %c832 = arith.constant 832 : index
    %474 = vector.load %arg11[%c0_174, %c832] : memref<1x1600xf32, #tpu.memory_space<vmem>>, vector<1x64xf32>
    %475 = vector.shape_cast %474 : vector<1x64xf32> to vector<64xf32>
    %476 = vector.shape_cast %473 : vector<64xf32> to vector<1x64xf32>
    tpu.vector_store %arg11[%c0_174, %c832], %476 {strides = array<i32>} : memref<1x1600xf32, #tpu.memory_space<vmem>>, vector<1x64xf32>,
    %477 = vector.extract_strided_slice %444 {offsets = [8, 0], sizes = [1, 64], strides = [1, 1]} : vector<13x64xf32> to vector<1x64xf32>
    %478 = vector.shape_cast %477 : vector<1x64xf32> to vector<64xf32>
    %479 = vector.extract_strided_slice %444 {offsets = [9, 0], sizes = [1, 64], strides = [1, 1]} : vector<13x64xf32> to vector<1x64xf32>
    %480 = vector.shape_cast %479 : vector<1x64xf32> to vector<64xf32>
    %481 = arith.maximumf %478, %480 : vector<64xf32>
    %c0_175 = arith.constant 0 : index
    %c896 = arith.constant 896 : index
    %482 = vector.load %arg11[%c0_175, %c896] : memref<1x1600xf32, #tpu.memory_space<vmem>>, vector<1x64xf32>
    %483 = vector.shape_cast %482 : vector<1x64xf32> to vector<64xf32>
    %484 = vector.shape_cast %481 : vector<64xf32> to vector<1x64xf32>
    tpu.vector_store %arg11[%c0_175, %c896], %484 {strides = array<i32>} : memref<1x1600xf32, #tpu.memory_space<vmem>>, vector<1x64xf32>,
    %485 = vector.extract_strided_slice %355 {offsets = [78, 0], sizes = [13, 64], strides = [1, 1]} : vector<143x64xf32> to vector<13x64xf32>
    %486 = vector.extract_strided_slice %355 {offsets = [91, 0], sizes = [13, 64], strides = [1, 1]} : vector<143x64xf32> to vector<13x64xf32>
    %487 = arith.maximumf %485, %486 : vector<13x64xf32>
    %488 = vector.extract_strided_slice %487 {offsets = [0, 0], sizes = [1, 64], strides = [1, 1]} : vector<13x64xf32> to vector<1x64xf32>
    %489 = vector.shape_cast %488 : vector<1x64xf32> to vector<64xf32>
    %490 = vector.extract_strided_slice %487 {offsets = [1, 0], sizes = [1, 64], strides = [1, 1]} : vector<13x64xf32> to vector<1x64xf32>
    %491 = vector.shape_cast %490 : vector<1x64xf32> to vector<64xf32>
    %492 = arith.maximumf %489, %491 : vector<64xf32>
    %c0_176 = arith.constant 0 : index
    %c960 = arith.constant 960 : index
    %493 = vector.load %arg11[%c0_176, %c960] : memref<1x1600xf32, #tpu.memory_space<vmem>>, vector<1x64xf32>
    %494 = vector.shape_cast %493 : vector<1x64xf32> to vector<64xf32>
    %495 = vector.shape_cast %492 : vector<64xf32> to vector<1x64xf32>
    tpu.vector_store %arg11[%c0_176, %c960], %495 {strides = array<i32>} : memref<1x1600xf32, #tpu.memory_space<vmem>>, vector<1x64xf32>,
    %496 = vector.extract_strided_slice %487 {offsets = [2, 0], sizes = [1, 64], strides = [1, 1]} : vector<13x64xf32> to vector<1x64xf32>
    %497 = vector.shape_cast %496 : vector<1x64xf32> to vector<64xf32>
    %498 = vector.extract_strided_slice %487 {offsets = [3, 0], sizes = [1, 64], strides = [1, 1]} : vector<13x64xf32> to vector<1x64xf32>
    %499 = vector.shape_cast %498 : vector<1x64xf32> to vector<64xf32>
    %500 = arith.maximumf %497, %499 : vector<64xf32>
    %c0_177 = arith.constant 0 : index
    %c1024 = arith.constant 1024 : index
    %501 = vector.load %arg11[%c0_177, %c1024] : memref<1x1600xf32, #tpu.memory_space<vmem>>, vector<1x64xf32>
    %502 = vector.shape_cast %501 : vector<1x64xf32> to vector<64xf32>
    %503 = vector.shape_cast %500 : vector<64xf32> to vector<1x64xf32>
    tpu.vector_store %arg11[%c0_177, %c1024], %503 {strides = array<i32>} : memref<1x1600xf32, #tpu.memory_space<vmem>>, vector<1x64xf32>,
    %504 = vector.extract_strided_slice %487 {offsets = [4, 0], sizes = [1, 64], strides = [1, 1]} : vector<13x64xf32> to vector<1x64xf32>
    %505 = vector.shape_cast %504 : vector<1x64xf32> to vector<64xf32>
    %506 = vector.extract_strided_slice %487 {offsets = [5, 0], sizes = [1, 64], strides = [1, 1]} : vector<13x64xf32> to vector<1x64xf32>
    %507 = vector.shape_cast %506 : vector<1x64xf32> to vector<64xf32>
    %508 = arith.maximumf %505, %507 : vector<64xf32>
    %c0_178 = arith.constant 0 : index
    %c1088 = arith.constant 1088 : index
    %509 = vector.load %arg11[%c0_178, %c1088] : memref<1x1600xf32, #tpu.memory_space<vmem>>, vector<1x64xf32>
    %510 = vector.shape_cast %509 : vector<1x64xf32> to vector<64xf32>
    %511 = vector.shape_cast %508 : vector<64xf32> to vector<1x64xf32>
    tpu.vector_store %arg11[%c0_178, %c1088], %511 {strides = array<i32>} : memref<1x1600xf32, #tpu.memory_space<vmem>>, vector<1x64xf32>,
    %512 = vector.extract_strided_slice %487 {offsets = [6, 0], sizes = [1, 64], strides = [1, 1]} : vector<13x64xf32> to vector<1x64xf32>
    %513 = vector.shape_cast %512 : vector<1x64xf32> to vector<64xf32>
    %514 = vector.extract_strided_slice %487 {offsets = [7, 0], sizes = [1, 64], strides = [1, 1]} : vector<13x64xf32> to vector<1x64xf32>
    %515 = vector.shape_cast %514 : vector<1x64xf32> to vector<64xf32>
    %516 = arith.maximumf %513, %515 : vector<64xf32>
    %c0_179 = arith.constant 0 : index
    %c1152 = arith.constant 1152 : index
    %517 = vector.load %arg11[%c0_179, %c1152] : memref<1x1600xf32, #tpu.memory_space<vmem>>, vector<1x64xf32>
    %518 = vector.shape_cast %517 : vector<1x64xf32> to vector<64xf32>
    %519 = vector.shape_cast %516 : vector<64xf32> to vector<1x64xf32>
    tpu.vector_store %arg11[%c0_179, %c1152], %519 {strides = array<i32>} : memref<1x1600xf32, #tpu.memory_space<vmem>>, vector<1x64xf32>,
    %520 = vector.extract_strided_slice %487 {offsets = [8, 0], sizes = [1, 64], strides = [1, 1]} : vector<13x64xf32> to vector<1x64xf32>
    %521 = vector.shape_cast %520 : vector<1x64xf32> to vector<64xf32>
    %522 = vector.extract_strided_slice %487 {offsets = [9, 0], sizes = [1, 64], strides = [1, 1]} : vector<13x64xf32> to vector<1x64xf32>
    %523 = vector.shape_cast %522 : vector<1x64xf32> to vector<64xf32>
    %524 = arith.maximumf %521, %523 : vector<64xf32>
    %c0_180 = arith.constant 0 : index
    %c1216 = arith.constant 1216 : index
    %525 = vector.load %arg11[%c0_180, %c1216] : memref<1x1600xf32, #tpu.memory_space<vmem>>, vector<1x64xf32>
    %526 = vector.shape_cast %525 : vector<1x64xf32> to vector<64xf32>
    %527 = vector.shape_cast %524 : vector<64xf32> to vector<1x64xf32>
    tpu.vector_store %arg11[%c0_180, %c1216], %527 {strides = array<i32>} : memref<1x1600xf32, #tpu.memory_space<vmem>>, vector<1x64xf32>,
    %528 = vector.extract_strided_slice %355 {offsets = [104, 0], sizes = [13, 64], strides = [1, 1]} : vector<143x64xf32> to vector<13x64xf32>
    %529 = vector.extract_strided_slice %355 {offsets = [117, 0], sizes = [13, 64], strides = [1, 1]} : vector<143x64xf32> to vector<13x64xf32>
    %530 = arith.maximumf %528, %529 : vector<13x64xf32>
    %531 = vector.extract_strided_slice %530 {offsets = [0, 0], sizes = [1, 64], strides = [1, 1]} : vector<13x64xf32> to vector<1x64xf32>
    %532 = vector.shape_cast %531 : vector<1x64xf32> to vector<64xf32>
    %533 = vector.extract_strided_slice %530 {offsets = [1, 0], sizes = [1, 64], strides = [1, 1]} : vector<13x64xf32> to vector<1x64xf32>
    %534 = vector.shape_cast %533 : vector<1x64xf32> to vector<64xf32>
    %535 = arith.maximumf %532, %534 : vector<64xf32>
    %c0_181 = arith.constant 0 : index
    %c1280 = arith.constant 1280 : index
    %536 = vector.load %arg11[%c0_181, %c1280] : memref<1x1600xf32, #tpu.memory_space<vmem>>, vector<1x64xf32>
    %537 = vector.shape_cast %536 : vector<1x64xf32> to vector<64xf32>
    %538 = vector.shape_cast %535 : vector<64xf32> to vector<1x64xf32>
    tpu.vector_store %arg11[%c0_181, %c1280], %538 {strides = array<i32>} : memref<1x1600xf32, #tpu.memory_space<vmem>>, vector<1x64xf32>,
    %539 = vector.extract_strided_slice %530 {offsets = [2, 0], sizes = [1, 64], strides = [1, 1]} : vector<13x64xf32> to vector<1x64xf32>
    %540 = vector.shape_cast %539 : vector<1x64xf32> to vector<64xf32>
    %541 = vector.extract_strided_slice %530 {offsets = [3, 0], sizes = [1, 64], strides = [1, 1]} : vector<13x64xf32> to vector<1x64xf32>
    %542 = vector.shape_cast %541 : vector<1x64xf32> to vector<64xf32>
    %543 = arith.maximumf %540, %542 : vector<64xf32>
    %c0_182 = arith.constant 0 : index
    %c1344 = arith.constant 1344 : index
    %544 = vector.load %arg11[%c0_182, %c1344] : memref<1x1600xf32, #tpu.memory_space<vmem>>, vector<1x64xf32>
    %545 = vector.shape_cast %544 : vector<1x64xf32> to vector<64xf32>
    %546 = vector.shape_cast %543 : vector<64xf32> to vector<1x64xf32>
    tpu.vector_store %arg11[%c0_182, %c1344], %546 {strides = array<i32>} : memref<1x1600xf32, #tpu.memory_space<vmem>>, vector<1x64xf32>,
    %547 = vector.extract_strided_slice %530 {offsets = [4, 0], sizes = [1, 64], strides = [1, 1]} : vector<13x64xf32> to vector<1x64xf32>
    %548 = vector.shape_cast %547 : vector<1x64xf32> to vector<64xf32>
    %549 = vector.extract_strided_slice %530 {offsets = [5, 0], sizes = [1, 64], strides = [1, 1]} : vector<13x64xf32> to vector<1x64xf32>
    %550 = vector.shape_cast %549 : vector<1x64xf32> to vector<64xf32>
    %551 = arith.maximumf %548, %550 : vector<64xf32>
    %c0_183 = arith.constant 0 : index
    %c1408 = arith.constant 1408 : index
    %552 = vector.load %arg11[%c0_183, %c1408] : memref<1x1600xf32, #tpu.memory_space<vmem>>, vector<1x64xf32>
    %553 = vector.shape_cast %552 : vector<1x64xf32> to vector<64xf32>
    %554 = vector.shape_cast %551 : vector<64xf32> to vector<1x64xf32>
    tpu.vector_store %arg11[%c0_183, %c1408], %554 {strides = array<i32>} : memref<1x1600xf32, #tpu.memory_space<vmem>>, vector<1x64xf32>,
    %555 = vector.extract_strided_slice %530 {offsets = [6, 0], sizes = [1, 64], strides = [1, 1]} : vector<13x64xf32> to vector<1x64xf32>
    %556 = vector.shape_cast %555 : vector<1x64xf32> to vector<64xf32>
    %557 = vector.extract_strided_slice %530 {offsets = [7, 0], sizes = [1, 64], strides = [1, 1]} : vector<13x64xf32> to vector<1x64xf32>
    %558 = vector.shape_cast %557 : vector<1x64xf32> to vector<64xf32>
    %559 = arith.maximumf %556, %558 : vector<64xf32>
    %c0_184 = arith.constant 0 : index
    %c1472 = arith.constant 1472 : index
    %560 = vector.load %arg11[%c0_184, %c1472] : memref<1x1600xf32, #tpu.memory_space<vmem>>, vector<1x64xf32>
    %561 = vector.shape_cast %560 : vector<1x64xf32> to vector<64xf32>
    %562 = vector.shape_cast %559 : vector<64xf32> to vector<1x64xf32>
    tpu.vector_store %arg11[%c0_184, %c1472], %562 {strides = array<i32>} : memref<1x1600xf32, #tpu.memory_space<vmem>>, vector<1x64xf32>,
    %563 = vector.extract_strided_slice %530 {offsets = [8, 0], sizes = [1, 64], strides = [1, 1]} : vector<13x64xf32> to vector<1x64xf32>
    %564 = vector.shape_cast %563 : vector<1x64xf32> to vector<64xf32>
    %565 = vector.extract_strided_slice %530 {offsets = [9, 0], sizes = [1, 64], strides = [1, 1]} : vector<13x64xf32> to vector<1x64xf32>
    %566 = vector.shape_cast %565 : vector<1x64xf32> to vector<64xf32>
    %567 = arith.maximumf %564, %566 : vector<64xf32>
    %c0_185 = arith.constant 0 : index
    %c1536 = arith.constant 1536 : index
    %568 = vector.load %arg11[%c0_185, %c1536] : memref<1x1600xf32, #tpu.memory_space<vmem>>, vector<1x64xf32>
    %569 = vector.shape_cast %568 : vector<1x64xf32> to vector<64xf32>
    %570 = vector.shape_cast %567 : vector<64xf32> to vector<1x64xf32>
    tpu.vector_store %arg11[%c0_185, %c1536], %570 {strides = array<i32>} : memref<1x1600xf32, #tpu.memory_space<vmem>>, vector<1x64xf32>,
    %c0_186 = arith.constant 0 : index
    %c0_187 = arith.constant 0 : index
    %571 = vector.load %arg11[%c0_186, %c0_187] : memref<1x1600xf32, #tpu.memory_space<vmem>>, vector<1x1600xf32>
    %c0_188 = arith.constant 0 : index
    %c0_189 = arith.constant 0 : index
    %572 = vector.load %arg6[%c0_188, %c0_189] : memref<1600x128xf32, #tpu.memory_space<vmem>>, vector<1600x128xf32>
    %cst_190 = arith.constant dense<0.000000e+00> : vector<1x128xf32>
    %573 = tpu.matmul %571, %572, %cst_190 {dimension_numbers = #tpu.dot_dimension_numbers<[1], [0], [0], [1], [0, 0, 1, 1], [], []>} : vector<1x1600xf32>, vector<1600x128xf32>, vector<1x128xf32> -> vector<1x128xf32>
    %c0_191 = arith.constant 0 : index
    %c0_192 = arith.constant 0 : index
    %574 = vector.load %arg7[%c0_191, %c0_192] : memref<1x128xf32, #tpu.memory_space<vmem>>, vector<1x128xf32>
    %575 = arith.addf %573, %574 : vector<1x128xf32>
    %c0_193 = arith.constant 0 : index
    %c0_194 = arith.constant 0 : index
    %c0_195 = arith.constant 0 : index
    %576 = vector.load %arg8[%c0_193, %c0_194, %c0_195] : memref<1x1x128xf32, #tpu.memory_space<vmem>>, vector<1x1x128xf32>
    %577 = vector.shape_cast %576 : vector<1x1x128xf32> to vector<1x128xf32>
    %578 = vector.shape_cast %575 : vector<1x128xf32> to vector<1x1x128xf32>
    tpu.vector_store %arg8[%c0_193, %c0_194, %c0_195], %578 {strides = array<i32>} : memref<1x1x128xf32, #tpu.memory_space<vmem>>, vector<1x1x128xf32>,
    return
  }
  func.func @transform_0(%arg0: i32) -> (i32, i32, i32, i32) {
    %c0_i32 = arith.constant 0 : i32
    %c0_i32_0 = arith.constant 0 : i32
    %c0_i32_1 = arith.constant 0 : i32
    %c0_i32_2 = arith.constant 0 : i32
    return %arg0, %c0_i32, %c0_i32_0, %c0_i32_1 : i32, i32, i32, i32
  }
  func.func @transform_1(%arg0: i32) -> (i32, i32) {
    %c0_i32 = arith.constant 0 : i32
    %c0_i32_0 = arith.constant 0 : i32
    %c0_i32_1 = arith.constant 0 : i32
    return %c0_i32, %c0_i32_0 : i32, i32
  }
  func.func @transform_2(%arg0: i32) -> (i32, i32) {
    %c0_i32 = arith.constant 0 : i32
    %c0_i32_0 = arith.constant 0 : i32
    %c0_i32_1 = arith.constant 0 : i32
    return %c0_i32, %c0_i32_0 : i32, i32
  }
  func.func @transform_3(%arg0: i32) -> (i32, i32, i32) {
    %c0_i32 = arith.constant 0 : i32
    %c0_i32_0 = arith.constant 0 : i32
    %c0_i32_1 = arith.constant 0 : i32
    %c0_i32_2 = arith.constant 0 : i32
    return %c0_i32, %c0_i32_0, %c0_i32_1 : i32, i32, i32
  }
  func.func @transform_4(%arg0: i32) -> (i32, i32) {
    %c0_i32 = arith.constant 0 : i32
    %c0_i32_0 = arith.constant 0 : i32
    %c0_i32_1 = arith.constant 0 : i32
    return %c0_i32, %c0_i32_0 : i32, i32
  }
  func.func @transform_5(%arg0: i32) -> (i32, i32) {
    %c0_i32 = arith.constant 0 : i32
    %c0_i32_0 = arith.constant 0 : i32
    %c0_i32_1 = arith.constant 0 : i32
    return %c0_i32, %c0_i32_0 : i32, i32
  }
  func.func @transform_6(%arg0: i32) -> (i32, i32) {
    %c0_i32 = arith.constant 0 : i32
    %c0_i32_0 = arith.constant 0 : i32
    %c0_i32_1 = arith.constant 0 : i32
    return %c0_i32, %c0_i32_0 : i32, i32
  }
  func.func @transform_7(%arg0: i32) -> (i32, i32, i32) {
    %c0_i32 = arith.constant 0 : i32
    %c0_i32_0 = arith.constant 0 : i32
    %c0_i32_1 = arith.constant 0 : i32
    return %arg0, %c0_i32, %c0_i32_0 : i32, i32, i32
  }
}

</mosaic_0001>

<llo_original>
// kernel: classifier_forward.1
$region0: #{classifier_forward.1}
  #allocation0 [shape = 'u32[]', space=smem, size = 0x4, offset = 0x4, fixed_abs, tag = 'smem constant byte address 0x4 - core index']
  #allocation1 [shape = 'u32[144,128]{1,0:T(1,128)}', space=vmem, size = 0x12000, scoped, tag = 'internal scratch']
  #allocation2 [shape = 'f32[176,32]{1,0:T(8,128)}', space=vmem, size = 0x16000, scoped, tag = 'scratch operand']
  #allocation3 [shape = 'f32[13,13,32]{2,1,0:T(8,128)}', space=vmem, size = 0x1a000, scoped, tag = 'scratch operand']
  #allocation4 [shape = 'f32[1,1600]{1,0:T(1,128)}', space=vmem, size = 0x1a00, scoped, tag = 'scratch operand']
  %s0 = inlined_call_operand.vmem [shape: f32[2,28,28,1], index: 0, kind: input, shape index: {}]
  %s1 = inlined_call_operand.vmem [shape: f32[9,32], index: 1, kind: input, shape index: {}]
  %s2 = inlined_call_operand.vmem [shape: f32[1,32], index: 2, kind: input, shape index: {}]
  %s3 = inlined_call_operand.vmem [shape: f32[9,32,64], index: 3, kind: input, shape index: {}]
  %s4 = inlined_call_operand.vmem [shape: f32[1,64], index: 4, kind: input, shape index: {}]
  %s5 = inlined_call_operand.vmem [shape: f32[1600,128], index: 5, kind: input, shape index: {}]
  %s6 = inlined_call_operand.vmem [shape: f32[1,128], index: 6, kind: input, shape index: {}]
  %s7 = inlined_call_operand.hbm [shape: f32[2,1,128], index: 7, kind: output, shape index: {}]
  %s8 = sld [smem:[#allocation0]]
  $region61: #{classifier_forward.1} parent=0
    _
  %s10 = ssub.s32 1, %s8
  %s11 = scalar_select 0, %s10, %s8
  $region1: #{classifier_forward.1} parent=0
    #allocation5 [shape = 'u8[1024]{0}', space=vmem, size = 0x400, scoped, tag = 'output window, operand 0']
    #allocation6 [shape = 's32[2]{0}', space=sflag, size = 0x8, scoped, tag = 'scoped memory for classifier_forward.1']
    %12 = vsyncpa [#allocation6], 0
    %s13 = scalar_lea.sflag [#allocation6], 1
    %14 = vsyncpa %s13, 0
    loop: start=0, step=1, limit=4
    $region2: #{classifier_forward.1} parent=1 // loop_pre_header
      _
    $region3: #{classifier_forward.1} parent=1 // loop_header
      %s16 = sphi 0, %s20
      %p17 = scmp.ge.s32.totalorder %s16, 4
      %s26 = sphi 0, %s28
      %s29 = sphi 0, %s26
      %s30 = sphi 0, %s29
      %s46 = sphi 0, %s30
      %s50 = sphi 0, %s50
      %s52 = sphi 0, %s50
      %s53 = sphi 0, %s52
      %s67 = sphi 0, %s53
      %s71 = sphi 0, %s71
      %s73 = sphi 0, %s71
      %s74 = sphi 0, %s73
      %s88 = sphi 0, %s74
      %s92 = sphi 0, %s92
      %s94 = sphi 0, %s92
      %s95 = sphi 0, %s94
      %s109 = sphi 0, %s95
      %s113 = sphi 0, %s113
      %s115 = sphi 0, %s113
      %s116 = sphi 0, %s115
      %s130 = sphi 0, %s116
      %s134 = sphi 0, %s134
      %s136 = sphi 0, %s134
      %s137 = sphi 0, %s136
      %s151 = sphi 0, %s137
      %s155 = sphi 0, %s155
      %s157 = sphi 0, %s155
      %s158 = sphi 0, %s157
      %s172 = sphi 0, %s158
      %s178 = sphi 0, %s180
      %s181 = sphi 0, %s178
      %s182 = sphi 0, %s181
      %s198 = sphi 0, %s182
    $region4: #{classifier_forward.1} parent=1 // loop_header_branch
      %19 = sbr.rel (%p17) target = $region8
    $region5: #{classifier_forward.1} parent=1 // loop_body
      %s21 = ssub.s32 %s16, 1
      %s22 = ssub.s32 %s16, 2
      %s23 = sadd.s32 %s16, 1
      %s24 = ssub.s32 %s16, %s23
      %p25 = scmp.eq.s32.totalorder %s24, 0
      %s27 = sadd.s32 %s26, 1
      %s28 = scalar_select %p25, %s26, %s27
      %p31 = pneg %p25
      %p32 = scmp.eq.s32.totalorder %s16, 1
      %p33 = por %p31, %p32
      %p34 = scmp.ne.s32.totalorder %s26, %s29
      %p35 = scmp.eq.s32.totalorder %s16, 0
      %p36 = por %p34, %p35
      %p37 = scmp.ne.s32.totalorder %s26, %s29
      %p38 = scmp.eq.s32.totalorder %s21, 1
      %p39 = por %p37, %p38
      %p40 = scmp.ne.s32.totalorder %s29, %s30
      %p41 = scmp.eq.s32.totalorder %s21, 0
      %p42 = por %p40, %p41
      %p43 = scmp.ne.s32.totalorder %s29, %s30
      %p44 = scmp.eq.s32.totalorder %s22, 1
      %p45 = por %p43, %p44
      %p47 = scmp.ne.s32.totalorder %s30, %s46
      %p48 = scmp.eq.s32.totalorder %s22, 0
      %p49 = por %p47, %p48
      %s51 = sadd.s32 %s50, 1
      %p54 = scmp.eq.s32.totalorder %s16, 1
      %p55 = scmp.ne.s32.totalorder %s50, %s52
      %p56 = scmp.eq.s32.totalorder %s16, 0
      %p57 = por %p55, %p56
      %p58 = scmp.ne.s32.totalorder %s50, %s52
      %p59 = scmp.eq.s32.totalorder %s21, 1
      %p60 = por %p58, %p59
      %p61 = scmp.ne.s32.totalorder %s52, %s53
      %p62 = scmp.eq.s32.totalorder %s21, 0
      %p63 = por %p61, %p62
      %p64 = scmp.ne.s32.totalorder %s52, %s53
      %p65 = scmp.eq.s32.totalorder %s22, 1
      %p66 = por %p64, %p65
      %p68 = scmp.ne.s32.totalorder %s53, %s67
      %p69 = scmp.eq.s32.totalorder %s22, 0
      %p70 = por %p68, %p69
      %s72 = sadd.s32 %s71, 1
      %p75 = scmp.eq.s32.totalorder %s16, 1
      %p76 = scmp.ne.s32.totalorder %s71, %s73
      %p77 = scmp.eq.s32.totalorder %s16, 0
      %p78 = por %p76, %p77
      %p79 = scmp.ne.s32.totalorder %s71, %s73
      %p80 = scmp.eq.s32.totalorder %s21, 1
      %p81 = por %p79, %p80
      %p82 = scmp.ne.s32.totalorder %s73, %s74
      %p83 = scmp.eq.s32.totalorder %s21, 0
      %p84 = por %p82, %p83
      %p85 = scmp.ne.s32.totalorder %s73, %s74
      %p86 = scmp.eq.s32.totalorder %s22, 1
      %p87 = por %p85, %p86
      %p89 = scmp.ne.s32.totalorder %s74, %s88
      %p90 = scmp.eq.s32.totalorder %s22, 0
      %p91 = por %p89, %p90
      %s93 = sadd.s32 %s92, 1
      %p96 = scmp.eq.s32.totalorder %s16, 1
      %p97 = scmp.ne.s32.totalorder %s92, %s94
      %p98 = scmp.eq.s32.totalorder %s16, 0
      %p99 = por %p97, %p98
      %p100 = scmp.ne.s32.totalorder %s92, %s94
      %p101 = scmp.eq.s32.totalorder %s21, 1
      %p102 = por %p100, %p101
      %p103 = scmp.ne.s32.totalorder %s94, %s95
      %p104 = scmp.eq.s32.totalorder %s21, 0
      %p105 = por %p103, %p104
      %p106 = scmp.ne.s32.totalorder %s94, %s95
      %p107 = scmp.eq.s32.totalorder %s22, 1
      %p108 = por %p106, %p107
      %p110 = scmp.ne.s32.totalorder %s95, %s109
      %p111 = scmp.eq.s32.totalorder %s22, 0
      %p112 = por %p110, %p111
      %s114 = sadd.s32 %s113, 1
      %p117 = scmp.eq.s32.totalorder %s16, 1
      %p118 = scmp.ne.s32.totalorder %s113, %s115
      %p119 = scmp.eq.s32.totalorder %s16, 0
      %p120 = por %p118, %p119
      %p121 = scmp.ne.s32.totalorder %s113, %s115
      %p122 = scmp.eq.s32.totalorder %s21, 1
      %p123 = por %p121, %p122
      %p124 = scmp.ne.s32.totalorder %s115, %s116
      %p125 = scmp.eq.s32.totalorder %s21, 0
      %p126 = por %p124, %p125
      %p127 = scmp.ne.s32.totalorder %s115, %s116
      %p128 = scmp.eq.s32.totalorder %s22, 1
      %p129 = por %p127, %p128
      %p131 = scmp.ne.s32.totalorder %s116, %s130
      %p132 = scmp.eq.s32.totalorder %s22, 0
      %p133 = por %p131, %p132
      %s135 = sadd.s32 %s134, 1
      %p138 = scmp.eq.s32.totalorder %s16, 1
      %p139 = scmp.ne.s32.totalorder %s134, %s136
      %p140 = scmp.eq.s32.totalorder %s16, 0
      %p141 = por %p139, %p140
      %p142 = scmp.ne.s32.totalorder %s134, %s136
      %p143 = scmp.eq.s32.totalorder %s21, 1
      %p144 = por %p142, %p143
      %p145 = scmp.ne.s32.totalorder %s136, %s137
      %p146 = scmp.eq.s32.totalorder %s21, 0
      %p147 = por %p145, %p146
      %p148 = scmp.ne.s32.totalorder %s136, %s137
      %p149 = scmp.eq.s32.totalorder %s22, 1
      %p150 = por %p148, %p149
      %p152 = scmp.ne.s32.totalorder %s137, %s151
      %p153 = scmp.eq.s32.totalorder %s22, 0
      %p154 = por %p152, %p153
      %s156 = sadd.s32 %s155, 1
      %p159 = scmp.eq.s32.totalorder %s16, 1
      %p160 = scmp.ne.s32.totalorder %s155, %s157
      %p161 = scmp.eq.s32.totalorder %s16, 0
      %p162 = por %p160, %p161
      %p163 = scmp.ne.s32.totalorder %s155, %s157
      %p164 = scmp.eq.s32.totalorder %s21, 1
      %p165 = por %p163, %p164
      %p166 = scmp.ne.s32.totalorder %s157, %s158
      %p167 = scmp.eq.s32.totalorder %s21, 0
      %p168 = por %p166, %p167
      %p169 = scmp.ne.s32.totalorder %s157, %s158
      %p170 = scmp.eq.s32.totalorder %s22, 1
      %p171 = por %p169, %p170
      %p173 = scmp.ne.s32.totalorder %s158, %s172
      %p174 = scmp.eq.s32.totalorder %s22, 0
      %p175 = por %p173, %p174
      %s176 = ssub.s32 %s16, %s23
      %p177 = scmp.eq.s32.totalorder %s176, 0
      %s179 = sadd.s32 %s178, 1
      %s180 = scalar_select %p177, %s178, %s179
      %p183 = pneg %p177
      %p184 = scmp.eq.s32.totalorder %s16, 1
      %p185 = por %p183, %p184
      %p186 = scmp.ne.s32.totalorder %s178, %s181
      %p187 = scmp.eq.s32.totalorder %s16, 0
      %p188 = por %p186, %p187
      %p189 = scmp.ne.s32.totalorder %s178, %s181
      %p190 = scmp.eq.s32.totalorder %s21, 1
      %p191 = por %p189, %p190
      %p192 = scmp.ne.s32.totalorder %s181, %s182
      %p193 = scmp.eq.s32.totalorder %s21, 0
      %p194 = por %p192, %p193
      %p195 = scmp.ne.s32.totalorder %s181, %s182
      %p196 = scmp.eq.s32.totalorder %s22, 1
      %p197 = por %p195, %p196
      %p199 = scmp.ne.s32.totalorder %s182, %s198
      %p200 = scmp.eq.s32.totalorder %s22, 0
      %p201 = por %p199, %p200
      %p202 = scmp.le.s32.totalorder 1, %s16
      %p203 = scmp.lt.s32.totalorder %s16, 3
      %p204 = pnand %p202, %p203
      %p205 = pneg %p204
      // Predicated region
      $region9: #{classifier_forward.1} parent=5 // pred_check
        _
      $region10: #{classifier_forward.1} parent=5 // pred_check_branch
        %207 = sbr.rel (%p204) target = $region12
      $region11: #{classifier_forward.1} parent=5 // pred_region
        %s208 = ssub.s32 %s16, 1
        // Predicated region
        $region13: #{classifier_forward.1} parent=11 // pred_check
          %p209 = pneg %p63
        $region14: #{classifier_forward.1} parent=11 // pred_check_branch
          %211 = sbr.rel (%p209) target = $region16
        $region15: #{classifier_forward.1} parent=11 // pred_region
          _
        $region16: #{classifier_forward.1} parent=11 // pred_fallthru
          _
        // Predicated region
        $region17: #{classifier_forward.1} parent=11 // pred_check
          %p212 = pneg %p84
        $region18: #{classifier_forward.1} parent=11 // pred_check_branch
          %214 = sbr.rel (%p212) target = $region20
        $region19: #{classifier_forward.1} parent=11 // pred_region
          _
        $region20: #{classifier_forward.1} parent=11 // pred_fallthru
          _
        // Predicated region
        $region21: #{classifier_forward.1} parent=11 // pred_check
          %p215 = pneg %p105
        $region22: #{classifier_forward.1} parent=11 // pred_check_branch
          %217 = sbr.rel (%p215) target = $region24
        $region23: #{classifier_forward.1} parent=11 // pred_region
          _
        $region24: #{classifier_forward.1} parent=11 // pred_fallthru
          _
        // Predicated region
        $region25: #{classifier_forward.1} parent=11 // pred_check
          %p218 = pneg %p126
        $region26: #{classifier_forward.1} parent=11 // pred_check_branch
          %220 = sbr.rel (%p218) target = $region28
        $region27: #{classifier_forward.1} parent=11 // pred_region
          _
        $region28: #{classifier_forward.1} parent=11 // pred_fallthru
          _
        // Predicated region
        $region29: #{classifier_forward.1} parent=11 // pred_check
          %p221 = pneg %p147
        $region30: #{classifier_forward.1} parent=11 // pred_check_branch
          %223 = sbr.rel (%p221) target = $region32
        $region31: #{classifier_forward.1} parent=11 // pred_region
          _
        $region32: #{classifier_forward.1} parent=11 // pred_fallthru
          _
        // Predicated region
        $region33: #{classifier_forward.1} parent=11 // pred_check
          %p224 = pneg %p168
        $region34: #{classifier_forward.1} parent=11 // pred_check_branch
          %226 = sbr.rel (%p224) target = $region36
        $region35: #{classifier_forward.1} parent=11 // pred_region
          _
        $region36: #{classifier_forward.1} parent=11 // pred_fallthru
          _
      $region12: #{classifier_forward.1} parent=5 // pred_fallthru
        _
      %p227 = scmp.lt.s32.totalorder %s16, 2
      // Predicated region
      $region37: #{classifier_forward.1} parent=5 // pred_check
        %p228 = pneg %p227
      $region38: #{classifier_forward.1} parent=5 // pred_check_branch
        %230 = sbr.rel (%p228) target = $region40
      $region39: #{classifier_forward.1} parent=5 // pred_region
        // Predicated region
        $region41: #{classifier_forward.1} parent=39 // pred_check
          %p231 = pneg %p36
        $region42: #{classifier_forward.1} parent=39 // pred_check_branch
          %233 = sbr.rel (%p231) target = $region44
        $region43: #{classifier_forward.1} parent=39 // pred_region
          %p234 = scmp.lt.s32.totalorder %s16, 1
          %s235 = scalar_select %p234, %s16, 1
          %s236 = smul.addr %s235, 112
          %s237 = smul.addr %s236, 8
          %s238 = scalar_lea.vmem %s0, %s237
        $region44: #{classifier_forward.1} parent=39 // pred_fallthru
          _
      $region40: #{classifier_forward.1} parent=5 // pred_fallthru
        _
      %p239 = scmp.le.s32.totalorder 1, %s16
      %p240 = scmp.lt.s32.totalorder %s16, 3
      %p241 = pnand %p239, %p240
      %p242 = pneg %p241
      // Predicated region
      $region45: #{classifier_forward.1} parent=5 // pred_check
        _
      $region46: #{classifier_forward.1} parent=5 // pred_check_branch
        %244 = sbr.rel (%p241) target = $region48
      $region47: #{classifier_forward.1} parent=5 // pred_region
        %s245 = ssub.s32 %s16, 1
        %p246 = scmp.lt.s32.totalorder %s21, 1
        %s247 = scalar_select %p246, %s21, 1
        %s248 = smul.addr %s247, 112
        %s249 = smul.addr %s248, 8
        %s250 = scalar_lea.vmem %s0, %s249
        %p251 = pneg %p42
        %p252 = pneg %p39
        %p253 = pneg %p63
        %p254 = pneg %p60
        %p255 = pneg %p84
        %p256 = pneg %p81
        %p257 = pneg %p105
        %p258 = pneg %p102
        %p259 = pneg %p126
        %p260 = pneg %p123
        %p261 = pneg %p147
        %p262 = pneg %p144
        %p263 = pneg %p168
        %p264 = pneg %p165
        %p265 = pneg %p194
        %p266 = pneg %p191
        %s267 = sand.u32 %s181, 1
        %s268 = scalar_lea.sflag [#allocation6], %s267
        %s269 = sand.u32 %s181, 1
        %s270 = scalar_lea.vmem [#allocation5], %s269
        %p271 = scmp.lt.s32.totalorder %s21, 1
        %s272 = scalar_select %p271, %s21, 1
        %s273 = smul.addr %s272, 112
        %s274 = smul.addr %s273, 8
        %s275 = scalar_lea.vmem %s0, %s274
        %vm276 = vcmask 260096
        %277 = vst.msk [vmem:[#allocation2 + $0xa9] sm:$0x7f] %vm276, 0.0
        %v278 = vld [vmem:[%s2] sm:$0x1]
        %v279 = vld [vmem:[%s4] sm:$0x1]
        %v280 = vld [vmem:[%s275] sm:$0xff]
        %v281 = vld [vmem:[%s275 + $0x8] sm:$0xff]
        %v282 = vld [vmem:[%s275 + $0x10] sm:$0xff]
        %v283 = vld [vmem:[%s275 + $0x18] sm:$0xf]
        %v284 = vld [vmem:[%s275 + $0x20] sm:$0xff]
        %v285 = vld [vmem:[%s275 + $0x28] sm:$0xff]
        %v286 = vld [vmem:[%s275 + $0x30] sm:$0xff]
        %v287 = vld [vmem:[%s275 + $0x38] sm:$0xf]
        %v288 = vld [vmem:[%s275 + $0x40] sm:$0xff]
        %v289 = vld [vmem:[%s275 + $0x48] sm:$0xff]
        %v290 = vld [vmem:[%s275 + $0x50] sm:$0xff]
        %v291 = vld [vmem:[%s275 + $0x58] sm:$0xf]
        %v292 = vld [vmem:[%s275 + $0x60] sm:$0xff]
        %v293 = vld [vmem:[%s275 + $0x68] sm:$0xff]
        %v294 = vld [vmem:[%s275 + $0x70] sm:$0xff]
        %v295 = vld [vmem:[%s275 + $0x78] sm:$0xf]
        %v296 = vld [vmem:[%s275 + $0x80] sm:$0xff]
        %v297 = vld [vmem:[%s275 + $0x88] sm:$0xff]
        %v298 = vld [vmem:[%s275 + $0x90] sm:$0xff]
        %v299 = vld [vmem:[%s275 + $0x98] sm:$0xf]
        %v300 = vld [vmem:[%s275 + $0xa0] sm:$0xff]
        %v301 = vld [vmem:[%s275 + $0xa8] sm:$0xff]
        %v302 = vld [vmem:[%s275 + $0xb0] sm:$0xff]
        %v303 = vld [vmem:[%s275 + $0xb8] sm:$0xf]
        %v304 = vld [vmem:[%s275 + $0xc0] sm:$0xff]
        %v305 = vld [vmem:[%s275 + $0xc8] sm:$0xff]
        %v306 = vld [vmem:[%s275 + $0xd0] sm:$0xff]
        %v307 = vld [vmem:[%s275 + $0xd8] sm:$0xf]
        %v308 = vld [vmem:[%s275 + $0xe0] sm:$0xff]
        %v309 = vld [vmem:[%s275 + $0xe8] sm:$0xff]
        %v310 = vld [vmem:[%s275 + $0xf0] sm:$0xff]
        %v311 = vld [vmem:[%s275 + $0xf8] sm:$0xf]
        %v312 = vld [vmem:[%s275 + $0x100] sm:$0xff]
        %v313 = vld [vmem:[%s275 + $0x108] sm:$0xff]
        %v314 = vld [vmem:[%s275 + $0x110] sm:$0xff]
        %v315 = vld [vmem:[%s275 + $0x118] sm:$0xf]
        %v316 = vld [vmem:[%s275 + $0x120] sm:$0xff]
        %v317 = vld [vmem:[%s275 + $0x128] sm:$0xff]
        %v318 = vld [vmem:[%s275 + $0x130] sm:$0xff]
        %v319 = vld [vmem:[%s275 + $0x138] sm:$0xf]
        %v320 = vld [vmem:[%s275 + $0x140] sm:$0xff]
        %v321 = vld [vmem:[%s275 + $0x148] sm:$0xff]
        %v322 = vld [vmem:[%s275 + $0x150] sm:$0xff]
        %v323 = vld [vmem:[%s275 + $0x158] sm:$0xf]
        %v324 = vld [vmem:[%s275 + $0x160] sm:$0xff]
        %v325 = vld [vmem:[%s275 + $0x168] sm:$0xff]
        %v326 = vld [vmem:[%s275 + $0x170] sm:$0xff]
        %v327 = vld [vmem:[%s275 + $0x178] sm:$0xf]
        %v328 = vld [vmem:[%s275 + $0x180] sm:$0xff]
        %v329 = vld [vmem:[%s275 + $0x188] sm:$0xff]
        %v330 = vld [vmem:[%s275 + $0x190] sm:$0xff]
        %v331 = vld [vmem:[%s275 + $0x198] sm:$0xf]
        %v332 = vld [vmem:[%s275 + $0x1a0] sm:$0xff]
        %v333 = vld [vmem:[%s275 + $0x1a8] sm:$0xff]
        %v334 = vld [vmem:[%s275 + $0x1b0] sm:$0xff]
        %v335 = vld [vmem:[%s275 + $0x1b8] sm:$0xf]
        %v336 = vld [vmem:[%s275 + $0x1c0] sm:$0xff]
        %v337 = vld [vmem:[%s275 + $0x1c8] sm:$0xff]
        %v338 = vld [vmem:[%s275 + $0x1d0] sm:$0xff]
        %v339 = vld [vmem:[%s275 + $0x1d8] sm:$0xf]
        %v340 = vld [vmem:[%s275 + $0x1e0] sm:$0xff]
        %v341 = vld [vmem:[%s275 + $0x1e8] sm:$0xff]
        %v342 = vld [vmem:[%s275 + $0x1f0] sm:$0xff]
        %v343 = vld [vmem:[%s275 + $0x1f8] sm:$0xf]
        %v344 = vld [vmem:[%s275 + $0x200] sm:$0xff]
        %v345 = vld [vmem:[%s275 + $0x208] sm:$0xff]
        %v346 = vld [vmem:[%s275 + $0x210] sm:$0xff]
        %v347 = vld [vmem:[%s275 + $0x218] sm:$0xf]
        %v348 = vld [vmem:[%s275 + $0x220] sm:$0xff]
        %v349 = vld [vmem:[%s275 + $0x228] sm:$0xff]
        %v350 = vld [vmem:[%s275 + $0x230] sm:$0xff]
        %v351 = vld [vmem:[%s275 + $0x238] sm:$0xf]
        %v352 = vld [vmem:[%s275 + $0x240] sm:$0xff]
        %v353 = vld [vmem:[%s275 + $0x248] sm:$0xff]
        %v354 = vld [vmem:[%s275 + $0x250] sm:$0xff]
        %v355 = vld [vmem:[%s275 + $0x258] sm:$0xf]
        %v356 = vld [vmem:[%s275 + $0x260] sm:$0xff]
        %v357 = vld [vmem:[%s275 + $0x268] sm:$0xff]
        %v358 = vld [vmem:[%s275 + $0x270] sm:$0xff]
        %v359 = vld [vmem:[%s275 + $0x278] sm:$0xf]
        %v360 = vld [vmem:[%s275 + $0x280] sm:$0xff]
        %v361 = vld [vmem:[%s275 + $0x288] sm:$0xff]
        %v362 = vld [vmem:[%s275 + $0x290] sm:$0xff]
        %v363 = vld [vmem:[%s275 + $0x298] sm:$0xf]
        %v364 = vld [vmem:[%s275 + $0x2a0] sm:$0xff]
        %v365 = vld [vmem:[%s275 + $0x2a8] sm:$0xff]
        %v366 = vld [vmem:[%s275 + $0x2b0] sm:$0xff]
        %v367 = vld [vmem:[%s275 + $0x2b8] sm:$0xf]
        %v368 = vld [vmem:[%s275 + $0x2c0] sm:$0xff]
        %v369 = vld [vmem:[%s275 + $0x2c8] sm:$0xff]
        %v370 = vld [vmem:[%s275 + $0x2d0] sm:$0xff]
        %v371 = vld [vmem:[%s275 + $0x2d8] sm:$0xf]
        %v372 = vld [vmem:[%s275 + $0x2e0] sm:$0xff]
        %v373 = vld [vmem:[%s275 + $0x2e8] sm:$0xff]
        %v374 = vld [vmem:[%s275 + $0x2f0] sm:$0xff]
        %v375 = vld [vmem:[%s275 + $0x2f8] sm:$0xf]
        %v376 = vld [vmem:[%s275 + $0x300] sm:$0xff]
        %v377 = vld [vmem:[%s275 + $0x308] sm:$0xff]
        %v378 = vld [vmem:[%s275 + $0x310] sm:$0xff]
        %v379 = vld [vmem:[%s275 + $0x318] sm:$0xf]
        %v380 = vld [vmem:[%s275 + $0x320] sm:$0xff]
        %v381 = vld [vmem:[%s275 + $0x328] sm:$0xff]
        %v382 = vld [vmem:[%s275 + $0x330] sm:$0xff]
        %v383 = vld [vmem:[%s275 + $0x338] sm:$0xf]
        %v384 = vld [vmem:[%s275 + $0x340] sm:$0xff]
        %v385 = vld [vmem:[%s275 + $0x348] sm:$0xff]
        %v386 = vld [vmem:[%s275 + $0x350] sm:$0xff]
        %v387 = vld [vmem:[%s275 + $0x358] sm:$0xf]
        %v388 = vld [vmem:[%s275 + $0x360] sm:$0xff]
        %v389 = vld [vmem:[%s275 + $0x368] sm:$0xff]
        %v390 = vld [vmem:[%s275 + $0x370] sm:$0xff]
        %v391 = vld [vmem:[%s275 + $0x378] sm:$0xf]
        %v392 = vld [vmem:[%s1] sm:$0x1]
        %394 = vset.pattern.permute.xlu0 0
        %395 = vperm.xlu0 %394, %v280
        %v396 = vpop.permute.xlu0 %395
        %399 = vset.pattern.permute.xlu0 0
        %400 = vperm.xlu0 %399, %v281
        %v401 = vpop.permute.xlu0 %400
        %404 = vset.pattern.permute.xlu0 0
        %405 = vperm.xlu0 %404, %v282
        %v406 = vpop.permute.xlu0 %405
        %409 = vset.pattern.permute.xlu0 0
        %410 = vperm.xlu0 %409, %v283
        %v411 = vpop.permute.xlu0 %410
        %414 = vset.pattern.permute.xlu0 0
        %415 = vperm.xlu0 %414, %v284
        %v416 = vpop.permute.xlu0 %415
        %419 = vset.pattern.permute.xlu0 0
        %420 = vperm.xlu0 %419, %v285
        %v421 = vpop.permute.xlu0 %420
        %424 = vset.pattern.permute.xlu0 0
        %425 = vperm.xlu0 %424, %v286
        %v426 = vpop.permute.xlu0 %425
        %429 = vset.pattern.permute.xlu0 0
        %430 = vperm.xlu0 %429, %v287
        %v431 = vpop.permute.xlu0 %430
        %434 = vset.pattern.permute.xlu0 0
        %435 = vperm.xlu0 %434, %v288
        %v436 = vpop.permute.xlu0 %435
        %439 = vset.pattern.permute.xlu0 0
        %440 = vperm.xlu0 %439, %v289
        %v441 = vpop.permute.xlu0 %440
        %444 = vset.pattern.permute.xlu0 0
        %445 = vperm.xlu0 %444, %v290
        %v446 = vpop.permute.xlu0 %445
        %449 = vset.pattern.permute.xlu0 0
        %450 = vperm.xlu0 %449, %v291
        %v451 = vpop.permute.xlu0 %450
        %454 = vset.pattern.permute.xlu0 0
        %455 = vperm.xlu0 %454, %v292
        %v456 = vpop.permute.xlu0 %455
        %459 = vset.pattern.permute.xlu0 0
        %460 = vperm.xlu0 %459, %v293
        %v461 = vpop.permute.xlu0 %460
        %464 = vset.pattern.permute.xlu0 0
        %465 = vperm.xlu0 %464, %v294
        %v466 = vpop.permute.xlu0 %465
        %469 = vset.pattern.permute.xlu0 0
        %470 = vperm.xlu0 %469, %v295
        %v471 = vpop.permute.xlu0 %470
        %474 = vset.pattern.permute.xlu0 0
        %475 = vperm.xlu0 %474, %v296
        %v476 = vpop.permute.xlu0 %475
        %479 = vset.pattern.permute.xlu0 0
        %480 = vperm.xlu0 %479, %v297
        %v481 = vpop.permute.xlu0 %480
        %484 = vset.pattern.permute.xlu0 0
        %485 = vperm.xlu0 %484, %v298
        %v486 = vpop.permute.xlu0 %485
        %489 = vset.pattern.permute.xlu0 0
        %490 = vperm.xlu0 %489, %v299
        %v491 = vpop.permute.xlu0 %490
        %494 = vset.pattern.permute.xlu0 0
        %495 = vperm.xlu0 %494, %v300
        %v496 = vpop.permute.xlu0 %495
        %499 = vset.pattern.permute.xlu0 0
        %500 = vperm.xlu0 %499, %v301
        %v501 = vpop.permute.xlu0 %500
        %504 = vset.pattern.permute.xlu0 0
        %505 = vperm.xlu0 %504, %v302
        %v506 = vpop.permute.xlu0 %505
        %509 = vset.pattern.permute.xlu0 0
        %510 = vperm.xlu0 %509, %v303
        %v511 = vpop.permute.xlu0 %510
        %514 = vset.pattern.permute.xlu0 0
        %515 = vperm.xlu0 %514, %v304
        %v516 = vpop.permute.xlu0 %515
        %519 = vset.pattern.permute.xlu0 0
        %520 = vperm.xlu0 %519, %v305
        %v521 = vpop.permute.xlu0 %520
        %524 = vset.pattern.permute.xlu0 0
        %525 = vperm.xlu0 %524, %v306
        %v526 = vpop.permute.xlu0 %525
        %529 = vset.pattern.permute.xlu0 0
        %530 = vperm.xlu0 %529, %v307
        %v531 = vpop.permute.xlu0 %530
        %534 = vset.pattern.permute.xlu0 0
        %535 = vperm.xlu0 %534, %v308
        %v536 = vpop.permute.xlu0 %535
        %539 = vset.pattern.permute.xlu0 0
        %540 = vperm.xlu0 %539, %v309
        %v541 = vpop.permute.xlu0 %540
        %544 = vset.pattern.permute.xlu0 0
        %545 = vperm.xlu0 %544, %v310
        %v546 = vpop.permute.xlu0 %545
        %549 = vset.pattern.permute.xlu0 0
        %550 = vperm.xlu0 %549, %v311
        %v551 = vpop.permute.xlu0 %550
        %554 = vset.pattern.permute.xlu0 0
        %555 = vperm.xlu0 %554, %v312
        %v556 = vpop.permute.xlu0 %555
        %559 = vset.pattern.permute.xlu0 0
        %560 = vperm.xlu0 %559, %v313
        %v561 = vpop.permute.xlu0 %560
        %564 = vset.pattern.permute.xlu0 0
        %565 = vperm.xlu0 %564, %v314
        %v566 = vpop.permute.xlu0 %565
        %569 = vset.pattern.permute.xlu0 0
        %570 = vperm.xlu0 %569, %v315
        %v571 = vpop.permute.xlu0 %570
        %574 = vset.pattern.permute.xlu0 0
        %575 = vperm.xlu0 %574, %v316
        %v576 = vpop.permute.xlu0 %575
        %579 = vset.pattern.permute.xlu0 0
        %580 = vperm.xlu0 %579, %v317
        %v581 = vpop.permute.xlu0 %580
        %584 = vset.pattern.permute.xlu0 0
        %585 = vperm.xlu0 %584, %v318
        %v586 = vpop.permute.xlu0 %585
        %589 = vset.pattern.permute.xlu0 0
        %590 = vperm.xlu0 %589, %v319
        %v591 = vpop.permute.xlu0 %590
        %594 = vset.pattern.permute.xlu0 0
        %595 = vperm.xlu0 %594, %v320
        %v596 = vpop.permute.xlu0 %595
        %599 = vset.pattern.permute.xlu0 0
        %600 = vperm.xlu0 %599, %v321
        %v601 = vpop.permute.xlu0 %600
        %604 = vset.pattern.permute.xlu0 0
        %605 = vperm.xlu0 %604, %v322
        %v606 = vpop.permute.xlu0 %605
        %609 = vset.pattern.permute.xlu0 0
        %610 = vperm.xlu0 %609, %v323
        %v611 = vpop.permute.xlu0 %610
        %614 = vset.pattern.permute.xlu0 0
        %615 = vperm.xlu0 %614, %v324
        %v616 = vpop.permute.xlu0 %615
        %619 = vset.pattern.permute.xlu0 0
        %620 = vperm.xlu0 %619, %v325
        %v621 = vpop.permute.xlu0 %620
        %624 = vset.pattern.permute.xlu0 0
        %625 = vperm.xlu0 %624, %v326
        %v626 = vpop.permute.xlu0 %625
        %629 = vset.pattern.permute.xlu0 0
        %630 = vperm.xlu0 %629, %v327
        %v631 = vpop.permute.xlu0 %630
        %634 = vset.pattern.permute.xlu0 0
        %635 = vperm.xlu0 %634, %v328
        %v636 = vpop.permute.xlu0 %635
        %639 = vset.pattern.permute.xlu0 0
        %640 = vperm.xlu0 %639, %v329
        %v641 = vpop.permute.xlu0 %640
        %644 = vset.pattern.permute.xlu0 0
        %645 = vperm.xlu0 %644, %v330
        %v646 = vpop.permute.xlu0 %645
        %649 = vset.pattern.permute.xlu0 0
        %650 = vperm.xlu0 %649, %v331
        %v651 = vpop.permute.xlu0 %650
        %654 = vset.pattern.permute.xlu0 0
        %655 = vperm.xlu0 %654, %v332
        %v656 = vpop.permute.xlu0 %655
        %659 = vset.pattern.permute.xlu0 0
        %660 = vperm.xlu0 %659, %v333
        %v661 = vpop.permute.xlu0 %660
        %664 = vset.pattern.permute.xlu0 0
        %665 = vperm.xlu0 %664, %v334
        %v666 = vpop.permute.xlu0 %665
        %669 = vset.pattern.permute.xlu0 0
        %670 = vperm.xlu0 %669, %v335
        %v671 = vpop.permute.xlu0 %670
        %674 = vset.pattern.permute.xlu0 0
        %675 = vperm.xlu0 %674, %v336
        %v676 = vpop.permute.xlu0 %675
        %679 = vset.pattern.permute.xlu0 0
        %680 = vperm.xlu0 %679, %v337
        %v681 = vpop.permute.xlu0 %680
        %684 = vset.pattern.permute.xlu0 0
        %685 = vperm.xlu0 %684, %v338
        %v686 = vpop.permute.xlu0 %685
        %689 = vset.pattern.permute.xlu0 0
        %690 = vperm.xlu0 %689, %v339
        %v691 = vpop.permute.xlu0 %690
        %694 = vset.pattern.permute.xlu0 0
        %695 = vperm.xlu0 %694, %v340
        %v696 = vpop.permute.xlu0 %695
        %699 = vset.pattern.permute.xlu0 0
        %700 = vperm.xlu0 %699, %v341
        %v701 = vpop.permute.xlu0 %700
        %704 = vset.pattern.permute.xlu0 0
        %705 = vperm.xlu0 %704, %v342
        %v706 = vpop.permute.xlu0 %705
        %709 = vset.pattern.permute.xlu0 0
        %710 = vperm.xlu0 %709, %v343
        %v711 = vpop.permute.xlu0 %710
        %714 = vset.pattern.permute.xlu0 0
        %715 = vperm.xlu0 %714, %v344
        %v716 = vpop.permute.xlu0 %715
        %719 = vset.pattern.permute.xlu0 0
        %720 = vperm.xlu0 %719, %v345
        %v721 = vpop.permute.xlu0 %720
        %724 = vset.pattern.permute.xlu0 0
        %725 = vperm.xlu0 %724, %v346
        %v726 = vpop.permute.xlu0 %725
        %729 = vset.pattern.permute.xlu0 0
        %730 = vperm.xlu0 %729, %v347
        %v731 = vpop.permute.xlu0 %730
        %734 = vset.pattern.permute.xlu0 0
        %735 = vperm.xlu0 %734, %v348
        %v736 = vpop.permute.xlu0 %735
        %739 = vset.pattern.permute.xlu0 0
        %740 = vperm.xlu0 %739, %v349
        %v741 = vpop.permute.xlu0 %740
        %744 = vset.pattern.permute.xlu0 0
        %745 = vperm.xlu0 %744, %v350
        %v746 = vpop.permute.xlu0 %745
        %749 = vset.pattern.permute.xlu0 0
        %750 = vperm.xlu0 %749, %v351
        %v751 = vpop.permute.xlu0 %750
        %754 = vset.pattern.permute.xlu0 0
        %755 = vperm.xlu0 %754, %v352
        %v756 = vpop.permute.xlu0 %755
        %759 = vset.pattern.permute.xlu0 0
        %760 = vperm.xlu0 %759, %v353
        %v761 = vpop.permute.xlu0 %760
        %764 = vset.pattern.permute.xlu0 0
        %765 = vperm.xlu0 %764, %v354
        %v766 = vpop.permute.xlu0 %765
        %769 = vset.pattern.permute.xlu0 0
        %770 = vperm.xlu0 %769, %v355
        %v771 = vpop.permute.xlu0 %770
        %774 = vset.pattern.permute.xlu0 0
        %775 = vperm.xlu0 %774, %v356
        %v776 = vpop.permute.xlu0 %775
        %779 = vset.pattern.permute.xlu0 0
        %780 = vperm.xlu0 %779, %v357
        %v781 = vpop.permute.xlu0 %780
        %784 = vset.pattern.permute.xlu0 0
        %785 = vperm.xlu0 %784, %v358
        %v786 = vpop.permute.xlu0 %785
        %789 = vset.pattern.permute.xlu0 0
        %790 = vperm.xlu0 %789, %v359
        %v791 = vpop.permute.xlu0 %790
        %794 = vset.pattern.permute.xlu0 0
        %795 = vperm.xlu0 %794, %v360
        %v796 = vpop.permute.xlu0 %795
        %799 = vset.pattern.permute.xlu0 0
        %800 = vperm.xlu0 %799, %v361
        %v801 = vpop.permute.xlu0 %800
        %804 = vset.pattern.permute.xlu0 0
        %805 = vperm.xlu0 %804, %v362
        %v806 = vpop.permute.xlu0 %805
        %809 = vset.pattern.permute.xlu0 0
        %810 = vperm.xlu0 %809, %v363
        %v811 = vpop.permute.xlu0 %810
        %814 = vset.pattern.permute.xlu0 0
        %815 = vperm.xlu0 %814, %v364
        %v816 = vpop.permute.xlu0 %815
        %819 = vset.pattern.permute.xlu0 0
        %820 = vperm.xlu0 %819, %v365
        %v821 = vpop.permute.xlu0 %820
        %824 = vset.pattern.permute.xlu0 0
        %825 = vperm.xlu0 %824, %v366
        %v826 = vpop.permute.xlu0 %825
        %829 = vset.pattern.permute.xlu0 0
        %830 = vperm.xlu0 %829, %v367
        %v831 = vpop.permute.xlu0 %830
        %834 = vset.pattern.permute.xlu0 0
        %835 = vperm.xlu0 %834, %v368
        %v836 = vpop.permute.xlu0 %835
        %839 = vset.pattern.permute.xlu0 0
        %840 = vperm.xlu0 %839, %v369
        %v841 = vpop.permute.xlu0 %840
        %844 = vset.pattern.permute.xlu0 0
        %845 = vperm.xlu0 %844, %v370
        %v846 = vpop.permute.xlu0 %845
        %849 = vset.pattern.permute.xlu0 0
        %850 = vperm.xlu0 %849, %v371
        %v851 = vpop.permute.xlu0 %850
        %854 = vset.pattern.permute.xlu0 0
        %855 = vperm.xlu0 %854, %v372
        %v856 = vpop.permute.xlu0 %855
        %859 = vset.pattern.permute.xlu0 0
        %860 = vperm.xlu0 %859, %v373
        %v861 = vpop.permute.xlu0 %860
        %864 = vset.pattern.permute.xlu0 0
        %865 = vperm.xlu0 %864, %v374
        %v866 = vpop.permute.xlu0 %865
        %869 = vset.pattern.permute.xlu0 0
        %870 = vperm.xlu0 %869, %v375
        %v871 = vpop.permute.xlu0 %870
        %874 = vset.pattern.permute.xlu0 0
        %875 = vperm.xlu0 %874, %v376
        %v876 = vpop.permute.xlu0 %875
        %879 = vset.pattern.permute.xlu0 0
        %880 = vperm.xlu0 %879, %v377
        %v881 = vpop.permute.xlu0 %880
        %884 = vset.pattern.permute.xlu0 0
        %885 = vperm.xlu0 %884, %v378
        %v886 = vpop.permute.xlu0 %885
        %889 = vset.pattern.permute.xlu0 0
        %890 = vperm.xlu0 %889, %v379
        %v891 = vpop.permute.xlu0 %890
        %894 = vset.pattern.permute.xlu0 0
        %895 = vperm.xlu0 %894, %v380
        %v896 = vpop.permute.xlu0 %895
        %899 = vset.pattern.permute.xlu0 0
        %900 = vperm.xlu0 %899, %v381
        %v901 = vpop.permute.xlu0 %900
        %904 = vset.pattern.permute.xlu0 0
        %905 = vperm.xlu0 %904, %v382
        %v906 = vpop.permute.xlu0 %905
        %909 = vset.pattern.permute.xlu0 0
        %910 = vperm.xlu0 %909, %v383
        %v911 = vpop.permute.xlu0 %910
        %v913 = vlaneseq
        %v914 = vshrl.u32 %v913, 7
        %v915 = vsub.s32 0, %v914
        %v916 = vrot.slane %v392, %v915
        %v917 = vmul.f32 %v396, %v916
        %v918 = vmul.f32 %v401, %v916
        %v919 = vmul.f32 %v406, %v916
        %v920 = vmul.f32 %v411, %v916
        %v921 = vmul.f32 %v416, %v916
        %v922 = vmul.f32 %v421, %v916
        %v923 = vmul.f32 %v426, %v916
        %v924 = vmul.f32 %v431, %v916
        %v925 = vmul.f32 %v436, %v916
        %v926 = vmul.f32 %v441, %v916
        %v927 = vmul.f32 %v446, %v916
        %v928 = vmul.f32 %v451, %v916
        %v929 = vmul.f32 %v456, %v916
        %v930 = vmul.f32 %v461, %v916
        %v931 = vmul.f32 %v466, %v916
        %v932 = vmul.f32 %v471, %v916
        %v933 = vmul.f32 %v476, %v916
        %v934 = vmul.f32 %v481, %v916
        %v935 = vmul.f32 %v486, %v916
        %v936 = vmul.f32 %v491, %v916
        %v937 = vmul.f32 %v496, %v916
        %v938 = vmul.f32 %v501, %v916
        %v939 = vmul.f32 %v506, %v916
        %v940 = vmul.f32 %v511, %v916
        %v941 = vmul.f32 %v516, %v916
        %v942 = vmul.f32 %v521, %v916
        %v943 = vmul.f32 %v526, %v916
        %v944 = vmul.f32 %v531, %v916
        %v945 = vmul.f32 %v536, %v916
        %v946 = vmul.f32 %v541, %v916
        %v947 = vmul.f32 %v546, %v916
        %v948 = vmul.f32 %v551, %v916
        %v949 = vmul.f32 %v556, %v916
        %v950 = vmul.f32 %v561, %v916
        %v951 = vmul.f32 %v566, %v916
        %v952 = vmul.f32 %v571, %v916
        %v953 = vmul.f32 %v576, %v916
        %v954 = vmul.f32 %v581, %v916
        %v955 = vmul.f32 %v586, %v916
        %v956 = vmul.f32 %v591, %v916
        %v957 = vmul.f32 %v596, %v916
        %v958 = vmul.f32 %v601, %v916
        %v959 = vmul.f32 %v606, %v916
        %v960 = vmul.f32 %v611, %v916
        %v961 = vmul.f32 %v616, %v916
        %v962 = vmul.f32 %v621, %v916
        %v963 = vmul.f32 %v626, %v916
        %v964 = vmul.f32 %v631, %v916
        %v965 = vmul.f32 %v636, %v916
        %v966 = vmul.f32 %v641, %v916
        %v967 = vmul.f32 %v646, %v916
        %v968 = vmul.f32 %v651, %v916
        %v969 = vmul.f32 %v656, %v916
        %v970 = vmul.f32 %v661, %v916
        %v971 = vmul.f32 %v666, %v916
        %v972 = vmul.f32 %v671, %v916
        %v973 = vmul.f32 %v676, %v916
        %v974 = vmul.f32 %v681, %v916
        %v975 = vmul.f32 %v686, %v916
        %v976 = vmul.f32 %v691, %v916
        %v977 = vmul.f32 %v696, %v916
        %v978 = vmul.f32 %v701, %v916
        %v979 = vmul.f32 %v706, %v916
        %v980 = vmul.f32 %v711, %v916
        %v981 = vmul.f32 %v716, %v916
        %v982 = vmul.f32 %v721, %v916
        %v983 = vmul.f32 %v726, %v916
        %v984 = vmul.f32 %v731, %v916
        %v985 = vmul.f32 %v736, %v916
        %v986 = vmul.f32 %v741, %v916
        %v987 = vmul.f32 %v746, %v916
        %v988 = vmul.f32 %v751, %v916
        %v989 = vmul.f32 %v756, %v916
        %v990 = vmul.f32 %v761, %v916
        %v991 = vmul.f32 %v766, %v916
        %v992 = vmul.f32 %v771, %v916
        %v993 = vmul.f32 %v776, %v916
        %v994 = vmul.f32 %v781, %v916
        %v995 = vmul.f32 %v786, %v916
        %v996 = vmul.f32 %v791, %v916
        %v997 = vmul.f32 %v796, %v916
        %v998 = vmul.f32 %v801, %v916
        %v999 = vmul.f32 %v806, %v916
        %v1000 = vmul.f32 %v811, %v916
        %v1001 = vmul.f32 %v816, %v916
        %v1002 = vmul.f32 %v821, %v916
        %v1003 = vmul.f32 %v826, %v916
        %v1004 = vmul.f32 %v831, %v916
        %v1005 = vmul.f32 %v836, %v916
        %v1006 = vmul.f32 %v841, %v916
        %v1007 = vmul.f32 %v846, %v916
        %v1008 = vmul.f32 %v851, %v916
        %v1009 = vmul.f32 %v856, %v916
        %v1010 = vmul.f32 %v861, %v916
        %v1011 = vmul.f32 %v866, %v916
        %v1012 = vmul.f32 %v871, %v916
        %v1013 = vmul.f32 %v876, %v916
        %v1014 = vmul.f32 %v881, %v916
        %v1015 = vmul.f32 %v886, %v916
        %v1016 = vmul.f32 %v891, %v916
        %v1017 = vmul.f32 %v896, %v916
        %v1018 = vmul.f32 %v901, %v916
        %v1019 = vmul.f32 %v906, %v916
        %v1020 = vmul.f32 %v911, %v916
        %v1021 = vadd.f32 %v917, 0.0
        %v1022 = vadd.f32 %v918, 0.0
        %v1023 = vadd.f32 %v919, 0.0
        %v1024 = vadd.f32 %v920, 0.0
        %v1025 = vadd.f32 %v921, 0.0
        %v1026 = vadd.f32 %v922, 0.0
        %v1027 = vadd.f32 %v923, 0.0
        %v1028 = vadd.f32 %v924, 0.0
        %v1029 = vadd.f32 %v925, 0.0
        %v1030 = vadd.f32 %v926, 0.0
        %v1031 = vadd.f32 %v927, 0.0
        %v1032 = vadd.f32 %v928, 0.0
        %v1033 = vadd.f32 %v929, 0.0
        %v1034 = vadd.f32 %v930, 0.0
        %v1035 = vadd.f32 %v931, 0.0
        %v1036 = vadd.f32 %v932, 0.0
        %v1037 = vadd.f32 %v933, 0.0
        %v1038 = vadd.f32 %v934, 0.0
        %v1039 = vadd.f32 %v935, 0.0
        %v1040 = vadd.f32 %v936, 0.0
        %v1041 = vadd.f32 %v937, 0.0
        %v1042 = vadd.f32 %v938, 0.0
        %v1043 = vadd.f32 %v939, 0.0
        %v1044 = vadd.f32 %v940, 0.0
        %v1045 = vadd.f32 %v941, 0.0
        %v1046 = vadd.f32 %v942, 0.0
        %v1047 = vadd.f32 %v943, 0.0
        %v1048 = vadd.f32 %v944, 0.0
        %v1049 = vadd.f32 %v945, 0.0
        %v1050 = vadd.f32 %v946, 0.0
        %v1051 = vadd.f32 %v947, 0.0
        %v1052 = vadd.f32 %v948, 0.0
        %v1053 = vadd.f32 %v949, 0.0
        %v1054 = vadd.f32 %v950, 0.0
        %v1055 = vadd.f32 %v951, 0.0
        %v1056 = vadd.f32 %v952, 0.0
        %v1057 = vadd.f32 %v953, 0.0
        %v1058 = vadd.f32 %v954, 0.0
        %v1059 = vadd.f32 %v955, 0.0
        %v1060 = vadd.f32 %v956, 0.0
        %v1061 = vadd.f32 %v957, 0.0
        %v1062 = vadd.f32 %v958, 0.0
        %v1063 = vadd.f32 %v959, 0.0
        %v1064 = vadd.f32 %v960, 0.0
        %v1065 = vadd.f32 %v961, 0.0
        %v1066 = vadd.f32 %v962, 0.0
        %v1067 = vadd.f32 %v963, 0.0
        %v1068 = vadd.f32 %v964, 0.0
        %v1069 = vadd.f32 %v965, 0.0
        %v1070 = vadd.f32 %v966, 0.0
        %v1071 = vadd.f32 %v967, 0.0
        %v1072 = vadd.f32 %v968, 0.0
        %v1073 = vadd.f32 %v969, 0.0
        %v1074 = vadd.f32 %v970, 0.0
        %v1075 = vadd.f32 %v971, 0.0
        %v1076 = vadd.f32 %v972, 0.0
        %v1077 = vadd.f32 %v973, 0.0
        %v1078 = vadd.f32 %v974, 0.0
        %v1079 = vadd.f32 %v975, 0.0
        %v1080 = vadd.f32 %v976, 0.0
        %v1081 = vadd.f32 %v977, 0.0
        %v1082 = vadd.f32 %v978, 0.0
        %v1083 = vadd.f32 %v979, 0.0
        %v1084 = vadd.f32 %v980, 0.0
        %v1085 = vadd.f32 %v981, 0.0
        %v1086 = vadd.f32 %v982, 0.0
        %v1087 = vadd.f32 %v983, 0.0
        %v1088 = vadd.f32 %v984, 0.0
        %v1089 = vadd.f32 %v985, 0.0
        %v1090 = vadd.f32 %v986, 0.0
        %v1091 = vadd.f32 %v987, 0.0
        %v1092 = vadd.f32 %v988, 0.0
        %v1093 = vadd.f32 %v989, 0.0
        %v1094 = vadd.f32 %v990, 0.0
        %v1095 = vadd.f32 %v991, 0.0
        %v1096 = vadd.f32 %v992, 0.0
        %v1097 = vadd.f32 %v993, 0.0
        %v1098 = vadd.f32 %v994, 0.0
        %v1099 = vadd.f32 %v995, 0.0
        %v1100 = vadd.f32 %v996, 0.0
        %v1101 = vadd.f32 %v997, 0.0
        %v1102 = vadd.f32 %v998, 0.0
        %v1103 = vadd.f32 %v999, 0.0
        %v1104 = vadd.f32 %v1000, 0.0
        %v1105 = vadd.f32 %v1001, 0.0
        %v1106 = vadd.f32 %v1002, 0.0
        %v1107 = vadd.f32 %v1003, 0.0
        %v1108 = vadd.f32 %v1004, 0.0
        %v1109 = vadd.f32 %v1005, 0.0
        %v1110 = vadd.f32 %v1006, 0.0
        %v1111 = vadd.f32 %v1007, 0.0
        %v1112 = vadd.f32 %v1008, 0.0
        %v1113 = vadd.f32 %v1009, 0.0
        %v1114 = vadd.f32 %v1010, 0.0
        %v1115 = vadd.f32 %v1011, 0.0
        %v1116 = vadd.f32 %v1012, 0.0
        %v1117 = vadd.f32 %v1013, 0.0
        %v1118 = vadd.f32 %v1014, 0.0
        %v1119 = vadd.f32 %v1015, 0.0
        %v1120 = vadd.f32 %v1016, 0.0
        %v1121 = vadd.f32 %v1017, 0.0
        %v1122 = vadd.f32 %v1018, 0.0
        %v1123 = vadd.f32 %v1019, 0.0
        %v1124 = vadd.f32 %v1020, 0.0
        %v1125 = vld [vmem:[%s1 + $0x1] sm:$0x1]
        %v1126 = vlaneseq
        %v1127 = vshrl.u32 %v1126, 7
        %v1128 = vsub.s32 0, %v1127
        %v1129 = vrot.slane %v1125, %v1128
        %v1130 = vmul.f32 %v396, %v1129
        %v1131 = vmul.f32 %v401, %v1129
        %v1132 = vmul.f32 %v406, %v1129
        %v1133 = vmul.f32 %v411, %v1129
        %v1134 = vmul.f32 %v416, %v1129
        %v1135 = vmul.f32 %v421, %v1129
        %v1136 = vmul.f32 %v426, %v1129
        %v1137 = vmul.f32 %v431, %v1129
        %v1138 = vmul.f32 %v436, %v1129
        %v1139 = vmul.f32 %v441, %v1129
        %v1140 = vmul.f32 %v446, %v1129
        %v1141 = vmul.f32 %v451, %v1129
        %v1142 = vmul.f32 %v456, %v1129
        %v1143 = vmul.f32 %v461, %v1129
        %v1144 = vmul.f32 %v466, %v1129
        %v1145 = vmul.f32 %v471, %v1129
        %v1146 = vmul.f32 %v476, %v1129
        %v1147 = vmul.f32 %v481, %v1129
        %v1148 = vmul.f32 %v486, %v1129
        %v1149 = vmul.f32 %v491, %v1129
        %v1150 = vmul.f32 %v496, %v1129
        %v1151 = vmul.f32 %v501, %v1129
        %v1152 = vmul.f32 %v506, %v1129
        %v1153 = vmul.f32 %v511, %v1129
        %v1154 = vmul.f32 %v516, %v1129
        %v1155 = vmul.f32 %v521, %v1129
        %v1156 = vmul.f32 %v526, %v1129
        %v1157 = vmul.f32 %v531, %v1129
        %v1158 = vmul.f32 %v536, %v1129
        %v1159 = vmul.f32 %v541, %v1129
        %v1160 = vmul.f32 %v546, %v1129
        %v1161 = vmul.f32 %v551, %v1129
        %v1162 = vmul.f32 %v556, %v1129
        %v1163 = vmul.f32 %v561, %v1129
        %v1164 = vmul.f32 %v566, %v1129
        %v1165 = vmul.f32 %v571, %v1129
        %v1166 = vmul.f32 %v576, %v1129
        %v1167 = vmul.f32 %v581, %v1129
        %v1168 = vmul.f32 %v586, %v1129
        %v1169 = vmul.f32 %v591, %v1129
        %v1170 = vmul.f32 %v596, %v1129
        %v1171 = vmul.f32 %v601, %v1129
        %v1172 = vmul.f32 %v606, %v1129
        %v1173 = vmul.f32 %v611, %v1129
        %v1174 = vmul.f32 %v616, %v1129
        %v1175 = vmul.f32 %v621, %v1129
        %v1176 = vmul.f32 %v626, %v1129
        %v1177 = vmul.f32 %v631, %v1129
        %v1178 = vmul.f32 %v636, %v1129
        %v1179 = vmul.f32 %v641, %v1129
        %v1180 = vmul.f32 %v646, %v1129
        %v1181 = vmul.f32 %v651, %v1129
        %v1182 = vmul.f32 %v656, %v1129
        %v1183 = vmul.f32 %v661, %v1129
        %v1184 = vmul.f32 %v666, %v1129
        %v1185 = vmul.f32 %v671, %v1129
        %v1186 = vmul.f32 %v676, %v1129
        %v1187 = vmul.f32 %v681, %v1129
        %v1188 = vmul.f32 %v686, %v1129
        %v1189 = vmul.f32 %v691, %v1129
        %v1190 = vmul.f32 %v696, %v1129
        %v1191 = vmul.f32 %v701, %v1129
        %v1192 = vmul.f32 %v706, %v1129
        %v1193 = vmul.f32 %v711, %v1129
        %v1194 = vmul.f32 %v716, %v1129
        %v1195 = vmul.f32 %v721, %v1129
        %v1196 = vmul.f32 %v726, %v1129
        %v1197 = vmul.f32 %v731, %v1129
        %v1198 = vmul.f32 %v736, %v1129
        %v1199 = vmul.f32 %v741, %v1129
        %v1200 = vmul.f32 %v746, %v1129
        %v1201 = vmul.f32 %v751, %v1129
        %v1202 = vmul.f32 %v756, %v1129
        %v1203 = vmul.f32 %v761, %v1129
        %v1204 = vmul.f32 %v766, %v1129
        %v1205 = vmul.f32 %v771, %v1129
        %v1206 = vmul.f32 %v776, %v1129
        %v1207 = vmul.f32 %v781, %v1129
        %v1208 = vmul.f32 %v786, %v1129
        %v1209 = vmul.f32 %v791, %v1129
        %v1210 = vmul.f32 %v796, %v1129
        %v1211 = vmul.f32 %v801, %v1129
        %v1212 = vmul.f32 %v806, %v1129
        %v1213 = vmul.f32 %v811, %v1129
        %v1214 = vmul.f32 %v816, %v1129
        %v1215 = vmul.f32 %v821, %v1129
        %v1216 = vmul.f32 %v826, %v1129
        %v1217 = vmul.f32 %v831, %v1129
        %v1218 = vmul.f32 %v836, %v1129
        %v1219 = vmul.f32 %v841, %v1129
        %v1220 = vmul.f32 %v846, %v1129
        %v1221 = vmul.f32 %v851, %v1129
        %v1222 = vmul.f32 %v856, %v1129
        %v1223 = vmul.f32 %v861, %v1129
        %v1224 = vmul.f32 %v866, %v1129
        %v1225 = vmul.f32 %v871, %v1129
        %v1226 = vmul.f32 %v876, %v1129
        %v1227 = vmul.f32 %v881, %v1129
        %v1228 = vmul.f32 %v886, %v1129
        %v1229 = vmul.f32 %v891, %v1129
        %v1230 = vmul.f32 %v896, %v1129
        %v1231 = vmul.f32 %v901, %v1129
        %v1232 = vmul.f32 %v906, %v1129
        %v1233 = vmul.f32 %v911, %v1129
        %vm1338 = vcmask 1046528
        %v1339 = vrot.slane %v1130, 1
        %v1340 = vrot.slane %v1131, 1
        %v1341 = vsel %vm1338, %v1339, %v1340
        %v1342 = vrot.slane %v1132, 1
        %v1343 = vsel %vm1338, %v1340, %v1342
        %v1344 = vrot.slane %v1133, 1
        %v1345 = vsel %vm1338, %v1342, %v1344
        %v1346 = vrot.slane %v1134, 1
        %v1347 = vrot.slane %v1135, 1
        %v1348 = vsel %vm1338, %v1346, %v1347
        %v1349 = vrot.slane %v1136, 1
        %v1350 = vsel %vm1338, %v1347, %v1349
        %v1351 = vrot.slane %v1137, 1
        %v1352 = vsel %vm1338, %v1349, %v1351
        %v1353 = vrot.slane %v1138, 1
        %v1354 = vrot.slane %v1139, 1
        %v1355 = vsel %vm1338, %v1353, %v1354
        %v1356 = vrot.slane %v1140, 1
        %v1357 = vsel %vm1338, %v1354, %v1356
        %v1358 = vrot.slane %v1141, 1
        %v1359 = vsel %vm1338, %v1356, %v1358
        %v1360 = vrot.slane %v1142, 1
        %v1361 = vrot.slane %v1143, 1
        %v1362 = vsel %vm1338, %v1360, %v1361
        %v1363 = vrot.slane %v1144, 1
        %v1364 = vsel %vm1338, %v1361, %v1363
        %v1365 = vrot.slane %v1145, 1
        %v1366 = vsel %vm1338, %v1363, %v1365
        %v1367 = vrot.slane %v1146, 1
        %v1368 = vrot.slane %v1147, 1
        %v1369 = vsel %vm1338, %v1367, %v1368
        %v1370 = vrot.slane %v1148, 1
        %v1371 = vsel %vm1338, %v1368, %v1370
        %v1372 = vrot.slane %v1149, 1
        %v1373 = vsel %vm1338, %v1370, %v1372
        %v1374 = vrot.slane %v1150, 1
        %v1375 = vrot.slane %v1151, 1
        %v1376 = vsel %vm1338, %v1374, %v1375
        %v1377 = vrot.slane %v1152, 1
        %v1378 = vsel %vm1338, %v1375, %v1377
        %v1379 = vrot.slane %v1153, 1
        %v1380 = vsel %vm1338, %v1377, %v1379
        %v1381 = vrot.slane %v1154, 1
        %v1382 = vrot.slane %v1155, 1
        %v1383 = vsel %vm1338, %v1381, %v1382
        %v1384 = vrot.slane %v1156, 1
        %v1385 = vsel %vm1338, %v1382, %v1384
        %v1386 = vrot.slane %v1157, 1
        %v1387 = vsel %vm1338, %v1384, %v1386
        %v1388 = vrot.slane %v1158, 1
        %v1389 = vrot.slane %v1159, 1
        %v1390 = vsel %vm1338, %v1388, %v1389
        %v1391 = vrot.slane %v1160, 1
        %v1392 = vsel %vm1338, %v1389, %v1391
        %v1393 = vrot.slane %v1161, 1
        %v1394 = vsel %vm1338, %v1391, %v1393
        %v1395 = vrot.slane %v1162, 1
        %v1396 = vrot.slane %v1163, 1
        %v1397 = vsel %vm1338, %v1395, %v1396
        %v1398 = vrot.slane %v1164, 1
        %v1399 = vsel %vm1338, %v1396, %v1398
        %v1400 = vrot.slane %v1165, 1
        %v1401 = vsel %vm1338, %v1398, %v1400
        %v1402 = vrot.slane %v1166, 1
        %v1403 = vrot.slane %v1167, 1
        %v1404 = vsel %vm1338, %v1402, %v1403
        %v1405 = vrot.slane %v1168, 1
        %v1406 = vsel %vm1338, %v1403, %v1405
        %v1407 = vrot.slane %v1169, 1
        %v1408 = vsel %vm1338, %v1405, %v1407
        %v1409 = vrot.slane %v1170, 1
        %v1410 = vrot.slane %v1171, 1
        %v1411 = vsel %vm1338, %v1409, %v1410
        %v1412 = vrot.slane %v1172, 1
        %v1413 = vsel %vm1338, %v1410, %v1412
        %v1414 = vrot.slane %v1173, 1
        %v1415 = vsel %vm1338, %v1412, %v1414
        %v1416 = vrot.slane %v1174, 1
        %v1417 = vrot.slane %v1175, 1
        %v1418 = vsel %vm1338, %v1416, %v1417
        %v1419 = vrot.slane %v1176, 1
        %v1420 = vsel %vm1338, %v1417, %v1419
        %v1421 = vrot.slane %v1177, 1
        %v1422 = vsel %vm1338, %v1419, %v1421
        %v1423 = vrot.slane %v1178, 1
        %v1424 = vrot.slane %v1179, 1
        %v1425 = vsel %vm1338, %v1423, %v1424
        %v1426 = vrot.slane %v1180, 1
        %v1427 = vsel %vm1338, %v1424, %v1426
        %v1428 = vrot.slane %v1181, 1
        %v1429 = vsel %vm1338, %v1426, %v1428
        %v1430 = vrot.slane %v1182, 1
        %v1431 = vrot.slane %v1183, 1
        %v1432 = vsel %vm1338, %v1430, %v1431
        %v1433 = vrot.slane %v1184, 1
        %v1434 = vsel %vm1338, %v1431, %v1433
        %v1435 = vrot.slane %v1185, 1
        %v1436 = vsel %vm1338, %v1433, %v1435
        %v1437 = vrot.slane %v1186, 1
        %v1438 = vrot.slane %v1187, 1
        %v1439 = vsel %vm1338, %v1437, %v1438
        %v1440 = vrot.slane %v1188, 1
        %v1441 = vsel %vm1338, %v1438, %v1440
        %v1442 = vrot.slane %v1189, 1
        %v1443 = vsel %vm1338, %v1440, %v1442
        %v1444 = vrot.slane %v1190, 1
        %v1445 = vrot.slane %v1191, 1
        %v1446 = vsel %vm1338, %v1444, %v1445
        %v1447 = vrot.slane %v1192, 1
        %v1448 = vsel %vm1338, %v1445, %v1447
        %v1449 = vrot.slane %v1193, 1
        %v1450 = vsel %vm1338, %v1447, %v1449
        %v1451 = vrot.slane %v1194, 1
        %v1452 = vrot.slane %v1195, 1
        %v1453 = vsel %vm1338, %v1451, %v1452
        %v1454 = vrot.slane %v1196, 1
        %v1455 = vsel %vm1338, %v1452, %v1454
        %v1456 = vrot.slane %v1197, 1
        %v1457 = vsel %vm1338, %v1454, %v1456
        %v1458 = vrot.slane %v1198, 1
        %v1459 = vrot.slane %v1199, 1
        %v1460 = vsel %vm1338, %v1458, %v1459
        %v1461 = vrot.slane %v1200, 1
        %v1462 = vsel %vm1338, %v1459, %v1461
        %v1463 = vrot.slane %v1201, 1
        %v1464 = vsel %vm1338, %v1461, %v1463
        %v1465 = vrot.slane %v1202, 1
        %v1466 = vrot.slane %v1203, 1
        %v1467 = vsel %vm1338, %v1465, %v1466
        %v1468 = vrot.slane %v1204, 1
        %v1469 = vsel %vm1338, %v1466, %v1468
        %v1470 = vrot.slane %v1205, 1
        %v1471 = vsel %vm1338, %v1468, %v1470
        %v1472 = vrot.slane %v1206, 1
        %v1473 = vrot.slane %v1207, 1
        %v1474 = vsel %vm1338, %v1472, %v1473
        %v1475 = vrot.slane %v1208, 1
        %v1476 = vsel %vm1338, %v1473, %v1475
        %v1477 = vrot.slane %v1209, 1
        %v1478 = vsel %vm1338, %v1475, %v1477
        %v1479 = vrot.slane %v1210, 1
        %v1480 = vrot.slane %v1211, 1
        %v1481 = vsel %vm1338, %v1479, %v1480
        %v1482 = vrot.slane %v1212, 1
        %v1483 = vsel %vm1338, %v1480, %v1482
        %v1484 = vrot.slane %v1213, 1
        %v1485 = vsel %vm1338, %v1482, %v1484
        %v1486 = vrot.slane %v1214, 1
        %v1487 = vrot.slane %v1215, 1
        %v1488 = vsel %vm1338, %v1486, %v1487
        %v1489 = vrot.slane %v1216, 1
        %v1490 = vsel %vm1338, %v1487, %v1489
        %v1491 = vrot.slane %v1217, 1
        %v1492 = vsel %vm1338, %v1489, %v1491
        %v1493 = vrot.slane %v1218, 1
        %v1494 = vrot.slane %v1219, 1
        %v1495 = vsel %vm1338, %v1493, %v1494
        %v1496 = vrot.slane %v1220, 1
        %v1497 = vsel %vm1338, %v1494, %v1496
        %v1498 = vrot.slane %v1221, 1
        %v1499 = vsel %vm1338, %v1496, %v1498
        %v1500 = vrot.slane %v1222, 1
        %v1501 = vrot.slane %v1223, 1
        %v1502 = vsel %vm1338, %v1500, %v1501
        %v1503 = vrot.slane %v1224, 1
        %v1504 = vsel %vm1338, %v1501, %v1503
        %v1505 = vrot.slane %v1225, 1
        %v1506 = vsel %vm1338, %v1503, %v1505
        %v1507 = vrot.slane %v1226, 1
        %v1508 = vrot.slane %v1227, 1
        %v1509 = vsel %vm1338, %v1507, %v1508
        %v1510 = vrot.slane %v1228, 1
        %v1511 = vsel %vm1338, %v1508, %v1510
        %v1512 = vrot.slane %v1229, 1
        %v1513 = vsel %vm1338, %v1510, %v1512
        %v1514 = vrot.slane %v1230, 1
        %v1515 = vrot.slane %v1231, 1
        %v1516 = vsel %vm1338, %v1514, %v1515
        %v1517 = vrot.slane %v1232, 1
        %v1518 = vsel %vm1338, %v1515, %v1517
        %v1519 = vrot.slane %v1233, 1
        %v1520 = vsel %vm1338, %v1517, %v1519
        %v1625 = vadd.f32 %v1021, %v1341
        %v1626 = vadd.f32 %v1022, %v1343
        %v1627 = vadd.f32 %v1023, %v1345
        %v1628 = vadd.f32 %v1024, %v1344
        %v1629 = vadd.f32 %v1025, %v1348
        %v1630 = vadd.f32 %v1026, %v1350
        %v1631 = vadd.f32 %v1027, %v1352
        %v1632 = vadd.f32 %v1028, %v1351
        %v1633 = vadd.f32 %v1029, %v1355
        %v1634 = vadd.f32 %v1030, %v1357
        %v1635 = vadd.f32 %v1031, %v1359
        %v1636 = vadd.f32 %v1032, %v1358
        %v1637 = vadd.f32 %v1033, %v1362
        %v1638 = vadd.f32 %v1034, %v1364
        %v1639 = vadd.f32 %v1035, %v1366
        %v1640 = vadd.f32 %v1036, %v1365
        %v1641 = vadd.f32 %v1037, %v1369
        %v1642 = vadd.f32 %v1038, %v1371
        %v1643 = vadd.f32 %v1039, %v1373
        %v1644 = vadd.f32 %v1040, %v1372
        %v1645 = vadd.f32 %v1041, %v1376
        %v1646 = vadd.f32 %v1042, %v1378
        %v1647 = vadd.f32 %v1043, %v1380
        %v1648 = vadd.f32 %v1044, %v1379
        %v1649 = vadd.f32 %v1045, %v1383
        %v1650 = vadd.f32 %v1046, %v1385
        %v1651 = vadd.f32 %v1047, %v1387
        %v1652 = vadd.f32 %v1048, %v1386
        %v1653 = vadd.f32 %v1049, %v1390
        %v1654 = vadd.f32 %v1050, %v1392
        %v1655 = vadd.f32 %v1051, %v1394
        %v1656 = vadd.f32 %v1052, %v1393
        %v1657 = vadd.f32 %v1053, %v1397
        %v1658 = vadd.f32 %v1054, %v1399
        %v1659 = vadd.f32 %v1055, %v1401
        %v1660 = vadd.f32 %v1056, %v1400
        %v1661 = vadd.f32 %v1057, %v1404
        %v1662 = vadd.f32 %v1058, %v1406
        %v1663 = vadd.f32 %v1059, %v1408
        %v1664 = vadd.f32 %v1060, %v1407
        %v1665 = vadd.f32 %v1061, %v1411
        %v1666 = vadd.f32 %v1062, %v1413
        %v1667 = vadd.f32 %v1063, %v1415
        %v1668 = vadd.f32 %v1064, %v1414
        %v1669 = vadd.f32 %v1065, %v1418
        %v1670 = vadd.f32 %v1066, %v1420
        %v1671 = vadd.f32 %v1067, %v1422
        %v1672 = vadd.f32 %v1068, %v1421
        %v1673 = vadd.f32 %v1069, %v1425
        %v1674 = vadd.f32 %v1070, %v1427
        %v1675 = vadd.f32 %v1071, %v1429
        %v1676 = vadd.f32 %v1072, %v1428
        %v1677 = vadd.f32 %v1073, %v1432
        %v1678 = vadd.f32 %v1074, %v1434
        %v1679 = vadd.f32 %v1075, %v1436
        %v1680 = vadd.f32 %v1076, %v1435
        %v1681 = vadd.f32 %v1077, %v1439
        %v1682 = vadd.f32 %v1078, %v1441
        %v1683 = vadd.f32 %v1079, %v1443
        %v1684 = vadd.f32 %v1080, %v1442
        %v1685 = vadd.f32 %v1081, %v1446
        %v1686 = vadd.f32 %v1082, %v1448
        %v1687 = vadd.f32 %v1083, %v1450
        %v1688 = vadd.f32 %v1084, %v1449
        %v1689 = vadd.f32 %v1085, %v1453
        %v1690 = vadd.f32 %v1086, %v1455
        %v1691 = vadd.f32 %v1087, %v1457
        %v1692 = vadd.f32 %v1088, %v1456
        %v1693 = vadd.f32 %v1089, %v1460
        %v1694 = vadd.f32 %v1090, %v1462
        %v1695 = vadd.f32 %v1091, %v1464
        %v1696 = vadd.f32 %v1092, %v1463
        %v1697 = vadd.f32 %v1093, %v1467
        %v1698 = vadd.f32 %v1094, %v1469
        %v1699 = vadd.f32 %v1095, %v1471
        %v1700 = vadd.f32 %v1096, %v1470
        %v1701 = vadd.f32 %v1097, %v1474
        %v1702 = vadd.f32 %v1098, %v1476
        %v1703 = vadd.f32 %v1099, %v1478
        %v1704 = vadd.f32 %v1100, %v1477
        %v1705 = vadd.f32 %v1101, %v1481
        %v1706 = vadd.f32 %v1102, %v1483
        %v1707 = vadd.f32 %v1103, %v1485
        %v1708 = vadd.f32 %v1104, %v1484
        %v1709 = vadd.f32 %v1105, %v1488
        %v1710 = vadd.f32 %v1106, %v1490
        %v1711 = vadd.f32 %v1107, %v1492
        %v1712 = vadd.f32 %v1108, %v1491
        %v1713 = vadd.f32 %v1109, %v1495
        %v1714 = vadd.f32 %v1110, %v1497
        %v1715 = vadd.f32 %v1111, %v1499
        %v1716 = vadd.f32 %v1112, %v1498
        %v1717 = vadd.f32 %v1113, %v1502
        %v1718 = vadd.f32 %v1114, %v1504
        %v1719 = vadd.f32 %v1115, %v1506
        %v1720 = vadd.f32 %v1116, %v1505
        %v1721 = vadd.f32 %v1117, %v1509
        %v1722 = vadd.f32 %v1118, %v1511
        %v1723 = vadd.f32 %v1119, %v1513
        %v1724 = vadd.f32 %v1120, %v1512
        %v1725 = vadd.f32 %v1121, %v1516
        %v1726 = vadd.f32 %v1122, %v1518
        %v1727 = vadd.f32 %v1123, %v1520
        %v1728 = vadd.f32 %v1124, %v1519
        %v1729 = vld [vmem:[%s1 + $0x2] sm:$0x1]
        %v1730 = vlaneseq
        %v1731 = vshrl.u32 %v1730, 7
        %v1732 = vsub.s32 0, %v1731
        %v1733 = vrot.slane %v1729, %v1732
        %v1734 = vmul.f32 %v396, %v1733
        %v1735 = vmul.f32 %v401, %v1733
        %v1736 = vmul.f32 %v406, %v1733
        %v1737 = vmul.f32 %v411, %v1733
        %v1738 = vmul.f32 %v416, %v1733
        %v1739 = vmul.f32 %v421, %v1733
        %v1740 = vmul.f32 %v426, %v1733
        %v1741 = vmul.f32 %v431, %v1733
        %v1742 = vmul.f32 %v436, %v1733
        %v1743 = vmul.f32 %v441, %v1733
        %v1744 = vmul.f32 %v446, %v1733
        %v1745 = vmul.f32 %v451, %v1733
        %v1746 = vmul.f32 %v456, %v1733
        %v1747 = vmul.f32 %v461, %v1733
        %v1748 = vmul.f32 %v466, %v1733
        %v1749 = vmul.f32 %v471, %v1733
        %v1750 = vmul.f32 %v476, %v1733
        %v1751 = vmul.f32 %v481, %v1733
        %v1752 = vmul.f32 %v486, %v1733
        %v1753 = vmul.f32 %v491, %v1733
        %v1754 = vmul.f32 %v496, %v1733
        %v1755 = vmul.f32 %v501, %v1733
        %v1756 = vmul.f32 %v506, %v1733
        %v1757 = vmul.f32 %v511, %v1733
        %v1758 = vmul.f32 %v516, %v1733
        %v1759 = vmul.f32 %v521, %v1733
        %v1760 = vmul.f32 %v526, %v1733
        %v1761 = vmul.f32 %v531, %v1733
        %v1762 = vmul.f32 %v536, %v1733
        %v1763 = vmul.f32 %v541, %v1733
        %v1764 = vmul.f32 %v546, %v1733
        %v1765 = vmul.f32 %v551, %v1733
        %v1766 = vmul.f32 %v556, %v1733
        %v1767 = vmul.f32 %v561, %v1733
        %v1768 = vmul.f32 %v566, %v1733
        %v1769 = vmul.f32 %v571, %v1733
        %v1770 = vmul.f32 %v576, %v1733
        %v1771 = vmul.f32 %v581, %v1733
        %v1772 = vmul.f32 %v586, %v1733
        %v1773 = vmul.f32 %v591, %v1733
        %v1774 = vmul.f32 %v596, %v1733
        %v1775 = vmul.f32 %v601, %v1733
        %v1776 = vmul.f32 %v606, %v1733
        %v1777 = vmul.f32 %v611, %v1733
        %v1778 = vmul.f32 %v616, %v1733
        %v1779 = vmul.f32 %v621, %v1733
        %v1780 = vmul.f32 %v626, %v1733
        %v1781 = vmul.f32 %v631, %v1733
        %v1782 = vmul.f32 %v636, %v1733
        %v1783 = vmul.f32 %v641, %v1733
        %v1784 = vmul.f32 %v646, %v1733
        %v1785 = vmul.f32 %v651, %v1733
        %v1786 = vmul.f32 %v656, %v1733
        %v1787 = vmul.f32 %v661, %v1733
        %v1788 = vmul.f32 %v666, %v1733
        %v1789 = vmul.f32 %v671, %v1733
        %v1790 = vmul.f32 %v676, %v1733
        %v1791 = vmul.f32 %v681, %v1733
        %v1792 = vmul.f32 %v686, %v1733
        %v1793 = vmul.f32 %v691, %v1733
        %v1794 = vmul.f32 %v696, %v1733
        %v1795 = vmul.f32 %v701, %v1733
        %v1796 = vmul.f32 %v706, %v1733
        %v1797 = vmul.f32 %v711, %v1733
        %v1798 = vmul.f32 %v716, %v1733
        %v1799 = vmul.f32 %v721, %v1733
        %v1800 = vmul.f32 %v726, %v1733
        %v1801 = vmul.f32 %v731, %v1733
        %v1802 = vmul.f32 %v736, %v1733
        %v1803 = vmul.f32 %v741, %v1733
        %v1804 = vmul.f32 %v746, %v1733
        %v1805 = vmul.f32 %v751, %v1733
        %v1806 = vmul.f32 %v756, %v1733
        %v1807 = vmul.f32 %v761, %v1733
        %v1808 = vmul.f32 %v766, %v1733
        %v1809 = vmul.f32 %v771, %v1733
        %v1810 = vmul.f32 %v776, %v1733
        %v1811 = vmul.f32 %v781, %v1733
        %v1812 = vmul.f32 %v786, %v1733
        %v1813 = vmul.f32 %v791, %v1733
        %v1814 = vmul.f32 %v796, %v1733
        %v1815 = vmul.f32 %v801, %v1733
        %v1816 = vmul.f32 %v806, %v1733
        %v1817 = vmul.f32 %v811, %v1733
        %v1818 = vmul.f32 %v816, %v1733
        %v1819 = vmul.f32 %v821, %v1733
        %v1820 = vmul.f32 %v826, %v1733
        %v1821 = vmul.f32 %v831, %v1733
        %v1822 = vmul.f32 %v836, %v1733
        %v1823 = vmul.f32 %v841, %v1733
        %v1824 = vmul.f32 %v846, %v1733
        %v1825 = vmul.f32 %v851, %v1733
        %v1826 = vmul.f32 %v856, %v1733
        %v1827 = vmul.f32 %v861, %v1733
        %v1828 = vmul.f32 %v866, %v1733
        %v1829 = vmul.f32 %v871, %v1733
        %v1830 = vmul.f32 %v876, %v1733
        %v1831 = vmul.f32 %v881, %v1733
        %v1832 = vmul.f32 %v886, %v1733
        %v1833 = vmul.f32 %v891, %v1733
        %v1834 = vmul.f32 %v896, %v1733
        %v1835 = vmul.f32 %v901, %v1733
        %v1836 = vmul.f32 %v906, %v1733
        %v1837 = vmul.f32 %v911, %v1733
        %vm1942 = vcmask 1045504
        %v1943 = vrot.slane %v1734, 2
        %v1944 = vrot.slane %v1735, 2
        %v1945 = vsel %vm1942, %v1943, %v1944
        %v1946 = vrot.slane %v1736, 2
        %v1947 = vsel %vm1942, %v1944, %v1946
        %v1948 = vrot.slane %v1737, 2
        %v1949 = vsel %vm1942, %v1946, %v1948
        %v1950 = vrot.slane %v1738, 2
        %v1951 = vrot.slane %v1739, 2
        %v1952 = vsel %vm1942, %v1950, %v1951
        %v1953 = vrot.slane %v1740, 2
        %v1954 = vsel %vm1942, %v1951, %v1953
        %v1955 = vrot.slane %v1741, 2
        %v1956 = vsel %vm1942, %v1953, %v1955
        %v1957 = vrot.slane %v1742, 2
        %v1958 = vrot.slane %v1743, 2
        %v1959 = vsel %vm1942, %v1957, %v1958
        %v1960 = vrot.slane %v1744, 2
        %v1961 = vsel %vm1942, %v1958, %v1960
        %v1962 = vrot.slane %v1745, 2
        %v1963 = vsel %vm1942, %v1960, %v1962
        %v1964 = vrot.slane %v1746, 2
        %v1965 = vrot.slane %v1747, 2
        %v1966 = vsel %vm1942, %v1964, %v1965
        %v1967 = vrot.slane %v1748, 2
        %v1968 = vsel %vm1942, %v1965, %v1967
        %v1969 = vrot.slane %v1749, 2
        %v1970 = vsel %vm1942, %v1967, %v1969
        %v1971 = vrot.slane %v1750, 2
        %v1972 = vrot.slane %v1751, 2
        %v1973 = vsel %vm1942, %v1971, %v1972
        %v1974 = vrot.slane %v1752, 2
        %v1975 = vsel %vm1942, %v1972, %v1974
        %v1976 = vrot.slane %v1753, 2
        %v1977 = vsel %vm1942, %v1974, %v1976
        %v1978 = vrot.slane %v1754, 2
        %v1979 = vrot.slane %v1755, 2
        %v1980 = vsel %vm1942, %v1978, %v1979
        %v1981 = vrot.slane %v1756, 2
        %v1982 = vsel %vm1942, %v1979, %v1981
        %v1983 = vrot.slane %v1757, 2
        %v1984 = vsel %vm1942, %v1981, %v1983
        %v1985 = vrot.slane %v1758, 2
        %v1986 = vrot.slane %v1759, 2
        %v1987 = vsel %vm1942, %v1985, %v1986
        %v1988 = vrot.slane %v1760, 2
        %v1989 = vsel %vm1942, %v1986, %v1988
        %v1990 = vrot.slane %v1761, 2
        %v1991 = vsel %vm1942, %v1988, %v1990
        %v1992 = vrot.slane %v1762, 2
        %v1993 = vrot.slane %v1763, 2
        %v1994 = vsel %vm1942, %v1992, %v1993
        %v1995 = vrot.slane %v1764, 2
        %v1996 = vsel %vm1942, %v1993, %v1995
        %v1997 = vrot.slane %v1765, 2
        %v1998 = vsel %vm1942, %v1995, %v1997
        %v1999 = vrot.slane %v1766, 2
        %v2000 = vrot.slane %v1767, 2
        %v2001 = vsel %vm1942, %v1999, %v2000
        %v2002 = vrot.slane %v1768, 2
        %v2003 = vsel %vm1942, %v2000, %v2002
        %v2004 = vrot.slane %v1769, 2
        %v2005 = vsel %vm1942, %v2002, %v2004
        %v2006 = vrot.slane %v1770, 2
        %v2007 = vrot.slane %v1771, 2
        %v2008 = vsel %vm1942, %v2006, %v2007
        %v2009 = vrot.slane %v1772, 2
        %v2010 = vsel %vm1942, %v2007, %v2009
        %v2011 = vrot.slane %v1773, 2
        %v2012 = vsel %vm1942, %v2009, %v2011
        %v2013 = vrot.slane %v1774, 2
        %v2014 = vrot.slane %v1775, 2
        %v2015 = vsel %vm1942, %v2013, %v2014
        %v2016 = vrot.slane %v1776, 2
        %v2017 = vsel %vm1942, %v2014, %v2016
        %v2018 = vrot.slane %v1777, 2
        %v2019 = vsel %vm1942, %v2016, %v2018
        %v2020 = vrot.slane %v1778, 2
        %v2021 = vrot.slane %v1779, 2
        %v2022 = vsel %vm1942, %v2020, %v2021
        %v2023 = vrot.slane %v1780, 2
        %v2024 = vsel %vm1942, %v2021, %v2023
        %v2025 = vrot.slane %v1781, 2
        %v2026 = vsel %vm1942, %v2023, %v2025
        %v2027 = vrot.slane %v1782, 2
        %v2028 = vrot.slane %v1783, 2
        %v2029 = vsel %vm1942, %v2027, %v2028
        %v2030 = vrot.slane %v1784, 2
        %v2031 = vsel %vm1942, %v2028, %v2030
        %v2032 = vrot.slane %v1785, 2
        %v2033 = vsel %vm1942, %v2030, %v2032
        %v2034 = vrot.slane %v1786, 2
        %v2035 = vrot.slane %v1787, 2
        %v2036 = vsel %vm1942, %v2034, %v2035
        %v2037 = vrot.slane %v1788, 2
        %v2038 = vsel %vm1942, %v2035, %v2037
        %v2039 = vrot.slane %v1789, 2
        %v2040 = vsel %vm1942, %v2037, %v2039
        %v2041 = vrot.slane %v1790, 2
        %v2042 = vrot.slane %v1791, 2
        %v2043 = vsel %vm1942, %v2041, %v2042
        %v2044 = vrot.slane %v1792, 2
        %v2045 = vsel %vm1942, %v2042, %v2044
        %v2046 = vrot.slane %v1793, 2
        %v2047 = vsel %vm1942, %v2044, %v2046
        %v2048 = vrot.slane %v1794, 2
        %v2049 = vrot.slane %v1795, 2
        %v2050 = vsel %vm1942, %v2048, %v2049
        %v2051 = vrot.slane %v1796, 2
        %v2052 = vsel %vm1942, %v2049, %v2051
        %v2053 = vrot.slane %v1797, 2
        %v2054 = vsel %vm1942, %v2051, %v2053
        %v2055 = vrot.slane %v1798, 2
        %v2056 = vrot.slane %v1799, 2
        %v2057 = vsel %vm1942, %v2055, %v2056
        %v2058 = vrot.slane %v1800, 2
        %v2059 = vsel %vm1942, %v2056, %v2058
        %v2060 = vrot.slane %v1801, 2
        %v2061 = vsel %vm1942, %v2058, %v2060
        %v2062 = vrot.slane %v1802, 2
        %v2063 = vrot.slane %v1803, 2
        %v2064 = vsel %vm1942, %v2062, %v2063
        %v2065 = vrot.slane %v1804, 2
        %v2066 = vsel %vm1942, %v2063, %v2065
        %v2067 = vrot.slane %v1805, 2
        %v2068 = vsel %vm1942, %v2065, %v2067
        %v2069 = vrot.slane %v1806, 2
        %v2070 = vrot.slane %v1807, 2
        %v2071 = vsel %vm1942, %v2069, %v2070
        %v2072 = vrot.slane %v1808, 2
        %v2073 = vsel %vm1942, %v2070, %v2072
        %v2074 = vrot.slane %v1809, 2
        %v2075 = vsel %vm1942, %v2072, %v2074
        %v2076 = vrot.slane %v1810, 2
        %v2077 = vrot.slane %v1811, 2
        %v2078 = vsel %vm1942, %v2076, %v2077
        %v2079 = vrot.slane %v1812, 2
        %v2080 = vsel %vm1942, %v2077, %v2079
        %v2081 = vrot.slane %v1813, 2
        %v2082 = vsel %vm1942, %v2079, %v2081
        %v2083 = vrot.slane %v1814, 2
        %v2084 = vrot.slane %v1815, 2
        %v2085 = vsel %vm1942, %v2083, %v2084
        %v2086 = vrot.slane %v1816, 2
        %v2087 = vsel %vm1942, %v2084, %v2086
        %v2088 = vrot.slane %v1817, 2
        %v2089 = vsel %vm1942, %v2086, %v2088
        %v2090 = vrot.slane %v1818, 2
        %v2091 = vrot.slane %v1819, 2
        %v2092 = vsel %vm1942, %v2090, %v2091
        %v2093 = vrot.slane %v1820, 2
        %v2094 = vsel %vm1942, %v2091, %v2093
        %v2095 = vrot.slane %v1821, 2
        %v2096 = vsel %vm1942, %v2093, %v2095
        %v2097 = vrot.slane %v1822, 2
        %v2098 = vrot.slane %v1823, 2
        %v2099 = vsel %vm1942, %v2097, %v2098
        %v2100 = vrot.slane %v1824, 2
        %v2101 = vsel %vm1942, %v2098, %v2100
        %v2102 = vrot.slane %v1825, 2
        %v2103 = vsel %vm1942, %v2100, %v2102
        %v2104 = vrot.slane %v1826, 2
        %v2105 = vrot.slane %v1827, 2
        %v2106 = vsel %vm1942, %v2104, %v2105
        %v2107 = vrot.slane %v1828, 2
        %v2108 = vsel %vm1942, %v2105, %v2107
        %v2109 = vrot.slane %v1829, 2
        %v2110 = vsel %vm1942, %v2107, %v2109
        %v2111 = vrot.slane %v1830, 2
        %v2112 = vrot.slane %v1831, 2
        %v2113 = vsel %vm1942, %v2111, %v2112
        %v2114 = vrot.slane %v1832, 2
        %v2115 = vsel %vm1942, %v2112, %v2114
        %v2116 = vrot.slane %v1833, 2
        %v2117 = vsel %vm1942, %v2114, %v2116
        %v2118 = vrot.slane %v1834, 2
        %v2119 = vrot.slane %v1835, 2
        %v2120 = vsel %vm1942, %v2118, %v2119
        %v2121 = vrot.slane %v1836, 2
        %v2122 = vsel %vm1942, %v2119, %v2121
        %v2123 = vrot.slane %v1837, 2
        %v2124 = vsel %vm1942, %v2121, %v2123
        %v2229 = vadd.f32 %v1625, %v1945
        %v2230 = vadd.f32 %v1626, %v1947
        %v2231 = vadd.f32 %v1627, %v1949
        %v2232 = vadd.f32 %v1628, %v1948
        %v2233 = vadd.f32 %v1629, %v1952
        %v2234 = vadd.f32 %v1630, %v1954
        %v2235 = vadd.f32 %v1631, %v1956
        %v2236 = vadd.f32 %v1632, %v1955
        %v2237 = vadd.f32 %v1633, %v1959
        %v2238 = vadd.f32 %v1634, %v1961
        %v2239 = vadd.f32 %v1635, %v1963
        %v2240 = vadd.f32 %v1636, %v1962
        %v2241 = vadd.f32 %v1637, %v1966
        %v2242 = vadd.f32 %v1638, %v1968
        %v2243 = vadd.f32 %v1639, %v1970
        %v2244 = vadd.f32 %v1640, %v1969
        %v2245 = vadd.f32 %v1641, %v1973
        %v2246 = vadd.f32 %v1642, %v1975
        %v2247 = vadd.f32 %v1643, %v1977
        %v2248 = vadd.f32 %v1644, %v1976
        %v2249 = vadd.f32 %v1645, %v1980
        %v2250 = vadd.f32 %v1646, %v1982
        %v2251 = vadd.f32 %v1647, %v1984
        %v2252 = vadd.f32 %v1648, %v1983
        %v2253 = vadd.f32 %v1649, %v1987
        %v2254 = vadd.f32 %v1650, %v1989
        %v2255 = vadd.f32 %v1651, %v1991
        %v2256 = vadd.f32 %v1652, %v1990
        %v2257 = vadd.f32 %v1653, %v1994
        %v2258 = vadd.f32 %v1654, %v1996
        %v2259 = vadd.f32 %v1655, %v1998
        %v2260 = vadd.f32 %v1656, %v1997
        %v2261 = vadd.f32 %v1657, %v2001
        %v2262 = vadd.f32 %v1658, %v2003
        %v2263 = vadd.f32 %v1659, %v2005
        %v2264 = vadd.f32 %v1660, %v2004
        %v2265 = vadd.f32 %v1661, %v2008
        %v2266 = vadd.f32 %v1662, %v2010
        %v2267 = vadd.f32 %v1663, %v2012
        %v2268 = vadd.f32 %v1664, %v2011
        %v2269 = vadd.f32 %v1665, %v2015
        %v2270 = vadd.f32 %v1666, %v2017
        %v2271 = vadd.f32 %v1667, %v2019
        %v2272 = vadd.f32 %v1668, %v2018
        %v2273 = vadd.f32 %v1669, %v2022
        %v2274 = vadd.f32 %v1670, %v2024
        %v2275 = vadd.f32 %v1671, %v2026
        %v2276 = vadd.f32 %v1672, %v2025
        %v2277 = vadd.f32 %v1673, %v2029
        %v2278 = vadd.f32 %v1674, %v2031
        %v2279 = vadd.f32 %v1675, %v2033
        %v2280 = vadd.f32 %v1676, %v2032
        %v2281 = vadd.f32 %v1677, %v2036
        %v2282 = vadd.f32 %v1678, %v2038
        %v2283 = vadd.f32 %v1679, %v2040
        %v2284 = vadd.f32 %v1680, %v2039
        %v2285 = vadd.f32 %v1681, %v2043
        %v2286 = vadd.f32 %v1682, %v2045
        %v2287 = vadd.f32 %v1683, %v2047
        %v2288 = vadd.f32 %v1684, %v2046
        %v2289 = vadd.f32 %v1685, %v2050
        %v2290 = vadd.f32 %v1686, %v2052
        %v2291 = vadd.f32 %v1687, %v2054
        %v2292 = vadd.f32 %v1688, %v2053
        %v2293 = vadd.f32 %v1689, %v2057
        %v2294 = vadd.f32 %v1690, %v2059
        %v2295 = vadd.f32 %v1691, %v2061
        %v2296 = vadd.f32 %v1692, %v2060
        %v2297 = vadd.f32 %v1693, %v2064
        %v2298 = vadd.f32 %v1694, %v2066
        %v2299 = vadd.f32 %v1695, %v2068
        %v2300 = vadd.f32 %v1696, %v2067
        %v2301 = vadd.f32 %v1697, %v2071
        %v2302 = vadd.f32 %v1698, %v2073
        %v2303 = vadd.f32 %v1699, %v2075
        %v2304 = vadd.f32 %v1700, %v2074
        %v2305 = vadd.f32 %v1701, %v2078
        %v2306 = vadd.f32 %v1702, %v2080
        %v2307 = vadd.f32 %v1703, %v2082
        %v2308 = vadd.f32 %v1704, %v2081
        %v2309 = vadd.f32 %v1705, %v2085
        %v2310 = vadd.f32 %v1706, %v2087
        %v2311 = vadd.f32 %v1707, %v2089
        %v2312 = vadd.f32 %v1708, %v2088
        %v2313 = vadd.f32 %v1709, %v2092
        %v2314 = vadd.f32 %v1710, %v2094
        %v2315 = vadd.f32 %v1711, %v2096
        %v2316 = vadd.f32 %v1712, %v2095
        %v2317 = vadd.f32 %v1713, %v2099
        %v2318 = vadd.f32 %v1714, %v2101
        %v2319 = vadd.f32 %v1715, %v2103
        %v2320 = vadd.f32 %v1716, %v2102
        %v2321 = vadd.f32 %v1717, %v2106
        %v2322 = vadd.f32 %v1718, %v2108
        %v2323 = vadd.f32 %v1719, %v2110
        %v2324 = vadd.f32 %v1720, %v2109
        %v2325 = vadd.f32 %v1721, %v2113
        %v2326 = vadd.f32 %v1722, %v2115
        %v2327 = vadd.f32 %v1723, %v2117
        %v2328 = vadd.f32 %v1724, %v2116
        %v2329 = vadd.f32 %v1725, %v2120
        %v2330 = vadd.f32 %v1726, %v2122
        %v2331 = vadd.f32 %v1727, %v2124
        %v2332 = vadd.f32 %v1728, %v2123
        %v2333 = vld [vmem:[%s1 + $0x3] sm:$0x1]
        %2335 = vset.pattern.permute.xlu0 0
        %2336 = vperm.xlu0 %2335, %v384
        %v2337 = vpop.permute.xlu0 %2336
        %2340 = vset.pattern.permute.xlu0 0
        %2341 = vperm.xlu0 %2340, %v385
        %v2342 = vpop.permute.xlu0 %2341
        %2345 = vset.pattern.permute.xlu0 0
        %2346 = vperm.xlu0 %2345, %v386
        %v2347 = vpop.permute.xlu0 %2346
        %2350 = vset.pattern.permute.xlu0 0
        %2351 = vperm.xlu0 %2350, %v387
        %v2352 = vpop.permute.xlu0 %2351
        %v2354 = vlaneseq
        %v2355 = vshrl.u32 %v2354, 7
        %v2356 = vsub.s32 0, %v2355
        %v2357 = vrot.slane %v2333, %v2356
        %v2358 = vmul.f32 %v416, %v2357
        %v2359 = vmul.f32 %v421, %v2357
        %v2360 = vmul.f32 %v426, %v2357
        %v2361 = vmul.f32 %v431, %v2357
        %v2362 = vmul.f32 %v436, %v2357
        %v2363 = vmul.f32 %v441, %v2357
        %v2364 = vmul.f32 %v446, %v2357
        %v2365 = vmul.f32 %v451, %v2357
        %v2366 = vmul.f32 %v456, %v2357
        %v2367 = vmul.f32 %v461, %v2357
        %v2368 = vmul.f32 %v466, %v2357
        %v2369 = vmul.f32 %v471, %v2357
        %v2370 = vmul.f32 %v476, %v2357
        %v2371 = vmul.f32 %v481, %v2357
        %v2372 = vmul.f32 %v486, %v2357
        %v2373 = vmul.f32 %v491, %v2357
        %v2374 = vmul.f32 %v496, %v2357
        %v2375 = vmul.f32 %v501, %v2357
        %v2376 = vmul.f32 %v506, %v2357
        %v2377 = vmul.f32 %v511, %v2357
        %v2378 = vmul.f32 %v516, %v2357
        %v2379 = vmul.f32 %v521, %v2357
        %v2380 = vmul.f32 %v526, %v2357
        %v2381 = vmul.f32 %v531, %v2357
        %v2382 = vmul.f32 %v536, %v2357
        %v2383 = vmul.f32 %v541, %v2357
        %v2384 = vmul.f32 %v546, %v2357
        %v2385 = vmul.f32 %v551, %v2357
        %v2386 = vmul.f32 %v556, %v2357
        %v2387 = vmul.f32 %v561, %v2357
        %v2388 = vmul.f32 %v566, %v2357
        %v2389 = vmul.f32 %v571, %v2357
        %v2390 = vmul.f32 %v576, %v2357
        %v2391 = vmul.f32 %v581, %v2357
        %v2392 = vmul.f32 %v586, %v2357
        %v2393 = vmul.f32 %v591, %v2357
        %v2394 = vmul.f32 %v596, %v2357
        %v2395 = vmul.f32 %v601, %v2357
        %v2396 = vmul.f32 %v606, %v2357
        %v2397 = vmul.f32 %v611, %v2357
        %v2398 = vmul.f32 %v616, %v2357
        %v2399 = vmul.f32 %v621, %v2357
        %v2400 = vmul.f32 %v626, %v2357
        %v2401 = vmul.f32 %v631, %v2357
        %v2402 = vmul.f32 %v636, %v2357
        %v2403 = vmul.f32 %v641, %v2357
        %v2404 = vmul.f32 %v646, %v2357
        %v2405 = vmul.f32 %v651, %v2357
        %v2406 = vmul.f32 %v656, %v2357
        %v2407 = vmul.f32 %v661, %v2357
        %v2408 = vmul.f32 %v666, %v2357
        %v2409 = vmul.f32 %v671, %v2357
        %v2410 = vmul.f32 %v676, %v2357
        %v2411 = vmul.f32 %v681, %v2357
        %v2412 = vmul.f32 %v686, %v2357
        %v2413 = vmul.f32 %v691, %v2357
        %v2414 = vmul.f32 %v696, %v2357
        %v2415 = vmul.f32 %v701, %v2357
        %v2416 = vmul.f32 %v706, %v2357
        %v2417 = vmul.f32 %v711, %v2357
        %v2418 = vmul.f32 %v716, %v2357
        %v2419 = vmul.f32 %v721, %v2357
        %v2420 = vmul.f32 %v726, %v2357
        %v2421 = vmul.f32 %v731, %v2357
        %v2422 = vmul.f32 %v736, %v2357
        %v2423 = vmul.f32 %v741, %v2357
        %v2424 = vmul.f32 %v746, %v2357
        %v2425 = vmul.f32 %v751, %v2357
        %v2426 = vmul.f32 %v756, %v2357
        %v2427 = vmul.f32 %v761, %v2357
        %v2428 = vmul.f32 %v766, %v2357
        %v2429 = vmul.f32 %v771, %v2357
        %v2430 = vmul.f32 %v776, %v2357
        %v2431 = vmul.f32 %v781, %v2357
        %v2432 = vmul.f32 %v786, %v2357
        %v2433 = vmul.f32 %v791, %v2357
        %v2434 = vmul.f32 %v796, %v2357
        %v2435 = vmul.f32 %v801, %v2357
        %v2436 = vmul.f32 %v806, %v2357
        %v2437 = vmul.f32 %v811, %v2357
        %v2438 = vmul.f32 %v816, %v2357
        %v2439 = vmul.f32 %v821, %v2357
        %v2440 = vmul.f32 %v826, %v2357
        %v2441 = vmul.f32 %v831, %v2357
        %v2442 = vmul.f32 %v836, %v2357
        %v2443 = vmul.f32 %v841, %v2357
        %v2444 = vmul.f32 %v846, %v2357
        %v2445 = vmul.f32 %v851, %v2357
        %v2446 = vmul.f32 %v856, %v2357
        %v2447 = vmul.f32 %v861, %v2357
        %v2448 = vmul.f32 %v866, %v2357
        %v2449 = vmul.f32 %v871, %v2357
        %v2450 = vmul.f32 %v876, %v2357
        %v2451 = vmul.f32 %v881, %v2357
        %v2452 = vmul.f32 %v886, %v2357
        %v2453 = vmul.f32 %v891, %v2357
        %v2454 = vmul.f32 %v896, %v2357
        %v2455 = vmul.f32 %v901, %v2357
        %v2456 = vmul.f32 %v906, %v2357
        %v2457 = vmul.f32 %v911, %v2357
        %v2458 = vmul.f32 %v2337, %v2357
        %v2459 = vmul.f32 %v2342, %v2357
        %v2460 = vmul.f32 %v2347, %v2357
        %v2461 = vmul.f32 %v2352, %v2357
        %v2462 = vadd.f32 %v2229, %v2358
        %v2463 = vadd.f32 %v2230, %v2359
        %v2464 = vadd.f32 %v2231, %v2360
        %v2465 = vadd.f32 %v2232, %v2361
        %v2466 = vadd.f32 %v2233, %v2362
        %v2467 = vadd.f32 %v2234, %v2363
        %v2468 = vadd.f32 %v2235, %v2364
        %v2469 = vadd.f32 %v2236, %v2365
        %v2470 = vadd.f32 %v2237, %v2366
        %v2471 = vadd.f32 %v2238, %v2367
        %v2472 = vadd.f32 %v2239, %v2368
        %v2473 = vadd.f32 %v2240, %v2369
        %v2474 = vadd.f32 %v2241, %v2370
        %v2475 = vadd.f32 %v2242, %v2371
        %v2476 = vadd.f32 %v2243, %v2372
        %v2477 = vadd.f32 %v2244, %v2373
        %v2478 = vadd.f32 %v2245, %v2374
        %v2479 = vadd.f32 %v2246, %v2375
        %v2480 = vadd.f32 %v2247, %v2376
        %v2481 = vadd.f32 %v2248, %v2377
        %v2482 = vadd.f32 %v2249, %v2378
        %v2483 = vadd.f32 %v2250, %v2379
        %v2484 = vadd.f32 %v2251, %v2380
        %v2485 = vadd.f32 %v2252, %v2381
        %v2486 = vadd.f32 %v2253, %v2382
        %v2487 = vadd.f32 %v2254, %v2383
        %v2488 = vadd.f32 %v2255, %v2384
        %v2489 = vadd.f32 %v2256, %v2385
        %v2490 = vadd.f32 %v2257, %v2386
        %v2491 = vadd.f32 %v2258, %v2387
        %v2492 = vadd.f32 %v2259, %v2388
        %v2493 = vadd.f32 %v2260, %v2389
        %v2494 = vadd.f32 %v2261, %v2390
        %v2495 = vadd.f32 %v2262, %v2391
        %v2496 = vadd.f32 %v2263, %v2392
        %v2497 = vadd.f32 %v2264, %v2393
        %v2498 = vadd.f32 %v2265, %v2394
        %v2499 = vadd.f32 %v2266, %v2395
        %v2500 = vadd.f32 %v2267, %v2396
        %v2501 = vadd.f32 %v2268, %v2397
        %v2502 = vadd.f32 %v2269, %v2398
        %v2503 = vadd.f32 %v2270, %v2399
        %v2504 = vadd.f32 %v2271, %v2400
        %v2505 = vadd.f32 %v2272, %v2401
        %v2506 = vadd.f32 %v2273, %v2402
        %v2507 = vadd.f32 %v2274, %v2403
        %v2508 = vadd.f32 %v2275, %v2404
        %v2509 = vadd.f32 %v2276, %v2405
        %v2510 = vadd.f32 %v2277, %v2406
        %v2511 = vadd.f32 %v2278, %v2407
        %v2512 = vadd.f32 %v2279, %v2408
        %v2513 = vadd.f32 %v2280, %v2409
        %v2514 = vadd.f32 %v2281, %v2410
        %v2515 = vadd.f32 %v2282, %v2411
        %v2516 = vadd.f32 %v2283, %v2412
        %v2517 = vadd.f32 %v2284, %v2413
        %v2518 = vadd.f32 %v2285, %v2414
        %v2519 = vadd.f32 %v2286, %v2415
        %v2520 = vadd.f32 %v2287, %v2416
        %v2521 = vadd.f32 %v2288, %v2417
        %v2522 = vadd.f32 %v2289, %v2418
        %v2523 = vadd.f32 %v2290, %v2419
        %v2524 = vadd.f32 %v2291, %v2420
        %v2525 = vadd.f32 %v2292, %v2421
        %v2526 = vadd.f32 %v2293, %v2422
        %v2527 = vadd.f32 %v2294, %v2423
        %v2528 = vadd.f32 %v2295, %v2424
        %v2529 = vadd.f32 %v2296, %v2425
        %v2530 = vadd.f32 %v2297, %v2426
        %v2531 = vadd.f32 %v2298, %v2427
        %v2532 = vadd.f32 %v2299, %v2428
        %v2533 = vadd.f32 %v2300, %v2429
        %v2534 = vadd.f32 %v2301, %v2430
        %v2535 = vadd.f32 %v2302, %v2431
        %v2536 = vadd.f32 %v2303, %v2432
        %v2537 = vadd.f32 %v2304, %v2433
        %v2538 = vadd.f32 %v2305, %v2434
        %v2539 = vadd.f32 %v2306, %v2435
        %v2540 = vadd.f32 %v2307, %v2436
        %v2541 = vadd.f32 %v2308, %v2437
        %v2542 = vadd.f32 %v2309, %v2438
        %v2543 = vadd.f32 %v2310, %v2439
        %v2544 = vadd.f32 %v2311, %v2440
        %v2545 = vadd.f32 %v2312, %v2441
        %v2546 = vadd.f32 %v2313, %v2442
        %v2547 = vadd.f32 %v2314, %v2443
        %v2548 = vadd.f32 %v2315, %v2444
        %v2549 = vadd.f32 %v2316, %v2445
        %v2550 = vadd.f32 %v2317, %v2446
        %v2551 = vadd.f32 %v2318, %v2447
        %v2552 = vadd.f32 %v2319, %v2448
        %v2553 = vadd.f32 %v2320, %v2449
        %v2554 = vadd.f32 %v2321, %v2450
        %v2555 = vadd.f32 %v2322, %v2451
        %v2556 = vadd.f32 %v2323, %v2452
        %v2557 = vadd.f32 %v2324, %v2453
        %v2558 = vadd.f32 %v2325, %v2454
        %v2559 = vadd.f32 %v2326, %v2455
        %v2560 = vadd.f32 %v2327, %v2456
        %v2561 = vadd.f32 %v2328, %v2457
        %v2562 = vadd.f32 %v2329, %v2458
        %v2563 = vadd.f32 %v2330, %v2459
        %v2564 = vadd.f32 %v2331, %v2460
        %v2565 = vadd.f32 %v2332, %v2461
        %v2566 = vld [vmem:[%s1 + $0x4] sm:$0x1]
        %v2567 = vlaneseq
        %v2568 = vshrl.u32 %v2567, 7
        %v2569 = vsub.s32 0, %v2568
        %v2570 = vrot.slane %v2566, %v2569
        %v2571 = vmul.f32 %v416, %v2570
        %v2572 = vmul.f32 %v421, %v2570
        %v2573 = vmul.f32 %v426, %v2570
        %v2574 = vmul.f32 %v431, %v2570
        %v2575 = vmul.f32 %v436, %v2570
        %v2576 = vmul.f32 %v441, %v2570
        %v2577 = vmul.f32 %v446, %v2570
        %v2578 = vmul.f32 %v451, %v2570
        %v2579 = vmul.f32 %v456, %v2570
        %v2580 = vmul.f32 %v461, %v2570
        %v2581 = vmul.f32 %v466, %v2570
        %v2582 = vmul.f32 %v471, %v2570
        %v2583 = vmul.f32 %v476, %v2570
        %v2584 = vmul.f32 %v481, %v2570
        %v2585 = vmul.f32 %v486, %v2570
        %v2586 = vmul.f32 %v491, %v2570
        %v2587 = vmul.f32 %v496, %v2570
        %v2588 = vmul.f32 %v501, %v2570
        %v2589 = vmul.f32 %v506, %v2570
        %v2590 = vmul.f32 %v511, %v2570
        %v2591 = vmul.f32 %v516, %v2570
        %v2592 = vmul.f32 %v521, %v2570
        %v2593 = vmul.f32 %v526, %v2570
        %v2594 = vmul.f32 %v531, %v2570
        %v2595 = vmul.f32 %v536, %v2570
        %v2596 = vmul.f32 %v541, %v2570
        %v2597 = vmul.f32 %v546, %v2570
        %v2598 = vmul.f32 %v551, %v2570
        %v2599 = vmul.f32 %v556, %v2570
        %v2600 = vmul.f32 %v561, %v2570
        %v2601 = vmul.f32 %v566, %v2570
        %v2602 = vmul.f32 %v571, %v2570
        %v2603 = vmul.f32 %v576, %v2570
        %v2604 = vmul.f32 %v581, %v2570
        %v2605 = vmul.f32 %v586, %v2570
        %v2606 = vmul.f32 %v591, %v2570
        %v2607 = vmul.f32 %v596, %v2570
        %v2608 = vmul.f32 %v601, %v2570
        %v2609 = vmul.f32 %v606, %v2570
        %v2610 = vmul.f32 %v611, %v2570
        %v2611 = vmul.f32 %v616, %v2570
        %v2612 = vmul.f32 %v621, %v2570
        %v2613 = vmul.f32 %v626, %v2570
        %v2614 = vmul.f32 %v631, %v2570
        %v2615 = vmul.f32 %v636, %v2570
        %v2616 = vmul.f32 %v641, %v2570
        %v2617 = vmul.f32 %v646, %v2570
        %v2618 = vmul.f32 %v651, %v2570
        %v2619 = vmul.f32 %v656, %v2570
        %v2620 = vmul.f32 %v661, %v2570
        %v2621 = vmul.f32 %v666, %v2570
        %v2622 = vmul.f32 %v671, %v2570
        %v2623 = vmul.f32 %v676, %v2570
        %v2624 = vmul.f32 %v681, %v2570
        %v2625 = vmul.f32 %v686, %v2570
        %v2626 = vmul.f32 %v691, %v2570
        %v2627 = vmul.f32 %v696, %v2570
        %v2628 = vmul.f32 %v701, %v2570
        %v2629 = vmul.f32 %v706, %v2570
        %v2630 = vmul.f32 %v711, %v2570
        %v2631 = vmul.f32 %v716, %v2570
        %v2632 = vmul.f32 %v721, %v2570
        %v2633 = vmul.f32 %v726, %v2570
        %v2634 = vmul.f32 %v731, %v2570
        %v2635 = vmul.f32 %v736, %v2570
        %v2636 = vmul.f32 %v741, %v2570
        %v2637 = vmul.f32 %v746, %v2570
        %v2638 = vmul.f32 %v751, %v2570
        %v2639 = vmul.f32 %v756, %v2570
        %v2640 = vmul.f32 %v761, %v2570
        %v2641 = vmul.f32 %v766, %v2570
        %v2642 = vmul.f32 %v771, %v2570
        %v2643 = vmul.f32 %v776, %v2570
        %v2644 = vmul.f32 %v781, %v2570
        %v2645 = vmul.f32 %v786, %v2570
        %v2646 = vmul.f32 %v791, %v2570
        %v2647 = vmul.f32 %v796, %v2570
        %v2648 = vmul.f32 %v801, %v2570
        %v2649 = vmul.f32 %v806, %v2570
        %v2650 = vmul.f32 %v811, %v2570
        %v2651 = vmul.f32 %v816, %v2570
        %v2652 = vmul.f32 %v821, %v2570
        %v2653 = vmul.f32 %v826, %v2570
        %v2654 = vmul.f32 %v831, %v2570
        %v2655 = vmul.f32 %v836, %v2570
        %v2656 = vmul.f32 %v841, %v2570
        %v2657 = vmul.f32 %v846, %v2570
        %v2658 = vmul.f32 %v851, %v2570
        %v2659 = vmul.f32 %v856, %v2570
        %v2660 = vmul.f32 %v861, %v2570
        %v2661 = vmul.f32 %v866, %v2570
        %v2662 = vmul.f32 %v871, %v2570
        %v2663 = vmul.f32 %v876, %v2570
        %v2664 = vmul.f32 %v881, %v2570
        %v2665 = vmul.f32 %v886, %v2570
        %v2666 = vmul.f32 %v891, %v2570
        %v2667 = vmul.f32 %v896, %v2570
        %v2668 = vmul.f32 %v901, %v2570
        %v2669 = vmul.f32 %v906, %v2570
        %v2670 = vmul.f32 %v911, %v2570
        %v2671 = vmul.f32 %v2337, %v2570
        %v2672 = vmul.f32 %v2342, %v2570
        %v2673 = vmul.f32 %v2347, %v2570
        %v2674 = vmul.f32 %v2352, %v2570
        %v2779 = vrot.slane %v2571, 1
        %v2780 = vrot.slane %v2572, 1
        %v2781 = vsel %vm1338, %v2779, %v2780
        %v2782 = vrot.slane %v2573, 1
        %v2783 = vsel %vm1338, %v2780, %v2782
        %v2784 = vrot.slane %v2574, 1
        %v2785 = vsel %vm1338, %v2782, %v2784
        %v2786 = vrot.slane %v2575, 1
        %v2787 = vrot.slane %v2576, 1
        %v2788 = vsel %vm1338, %v2786, %v2787
        %v2789 = vrot.slane %v2577, 1
        %v2790 = vsel %vm1338, %v2787, %v2789
        %v2791 = vrot.slane %v2578, 1
        %v2792 = vsel %vm1338, %v2789, %v2791
        %v2793 = vrot.slane %v2579, 1
        %v2794 = vrot.slane %v2580, 1
        %v2795 = vsel %vm1338, %v2793, %v2794
        %v2796 = vrot.slane %v2581, 1
        %v2797 = vsel %vm1338, %v2794, %v2796
        %v2798 = vrot.slane %v2582, 1
        %v2799 = vsel %vm1338, %v2796, %v2798
        %v2800 = vrot.slane %v2583, 1
        %v2801 = vrot.slane %v2584, 1
        %v2802 = vsel %vm1338, %v2800, %v2801
        %v2803 = vrot.slane %v2585, 1
        %v2804 = vsel %vm1338, %v2801, %v2803
        %v2805 = vrot.slane %v2586, 1
        %v2806 = vsel %vm1338, %v2803, %v2805
        %v2807 = vrot.slane %v2587, 1
        %v2808 = vrot.slane %v2588, 1
        %v2809 = vsel %vm1338, %v2807, %v2808
        %v2810 = vrot.slane %v2589, 1
        %v2811 = vsel %vm1338, %v2808, %v2810
        %v2812 = vrot.slane %v2590, 1
        %v2813 = vsel %vm1338, %v2810, %v2812
        %v2814 = vrot.slane %v2591, 1
        %v2815 = vrot.slane %v2592, 1
        %v2816 = vsel %vm1338, %v2814, %v2815
        %v2817 = vrot.slane %v2593, 1
        %v2818 = vsel %vm1338, %v2815, %v2817
        %v2819 = vrot.slane %v2594, 1
        %v2820 = vsel %vm1338, %v2817, %v2819
        %v2821 = vrot.slane %v2595, 1
        %v2822 = vrot.slane %v2596, 1
        %v2823 = vsel %vm1338, %v2821, %v2822
        %v2824 = vrot.slane %v2597, 1
        %v2825 = vsel %vm1338, %v2822, %v2824
        %v2826 = vrot.slane %v2598, 1
        %v2827 = vsel %vm1338, %v2824, %v2826
        %v2828 = vrot.slane %v2599, 1
        %v2829 = vrot.slane %v2600, 1
        %v2830 = vsel %vm1338, %v2828, %v2829
        %v2831 = vrot.slane %v2601, 1
        %v2832 = vsel %vm1338, %v2829, %v2831
        %v2833 = vrot.slane %v2602, 1
        %v2834 = vsel %vm1338, %v2831, %v2833
        %v2835 = vrot.slane %v2603, 1
        %v2836 = vrot.slane %v2604, 1
        %v2837 = vsel %vm1338, %v2835, %v2836
        %v2838 = vrot.slane %v2605, 1
        %v2839 = vsel %vm1338, %v2836, %v2838
        %v2840 = vrot.slane %v2606, 1
        %v2841 = vsel %vm1338, %v2838, %v2840
        %v2842 = vrot.slane %v2607, 1
        %v2843 = vrot.slane %v2608, 1
        %v2844 = vsel %vm1338, %v2842, %v2843
        %v2845 = vrot.slane %v2609, 1
        %v2846 = vsel %vm1338, %v2843, %v2845
        %v2847 = vrot.slane %v2610, 1
        %v2848 = vsel %vm1338, %v2845, %v2847
        %v2849 = vrot.slane %v2611, 1
        %v2850 = vrot.slane %v2612, 1
        %v2851 = vsel %vm1338, %v2849, %v2850
        %v2852 = vrot.slane %v2613, 1
        %v2853 = vsel %vm1338, %v2850, %v2852
        %v2854 = vrot.slane %v2614, 1
        %v2855 = vsel %vm1338, %v2852, %v2854
        %v2856 = vrot.slane %v2615, 1
        %v2857 = vrot.slane %v2616, 1
        %v2858 = vsel %vm1338, %v2856, %v2857
        %v2859 = vrot.slane %v2617, 1
        %v2860 = vsel %vm1338, %v2857, %v2859
        %v2861 = vrot.slane %v2618, 1
        %v2862 = vsel %vm1338, %v2859, %v2861
        %v2863 = vrot.slane %v2619, 1
        %v2864 = vrot.slane %v2620, 1
        %v2865 = vsel %vm1338, %v2863, %v2864
        %v2866 = vrot.slane %v2621, 1
        %v2867 = vsel %vm1338, %v2864, %v2866
        %v2868 = vrot.slane %v2622, 1
        %v2869 = vsel %vm1338, %v2866, %v2868
        %v2870 = vrot.slane %v2623, 1
        %v2871 = vrot.slane %v2624, 1
        %v2872 = vsel %vm1338, %v2870, %v2871
        %v2873 = vrot.slane %v2625, 1
        %v2874 = vsel %vm1338, %v2871, %v2873
        %v2875 = vrot.slane %v2626, 1
        %v2876 = vsel %vm1338, %v2873, %v2875
        %v2877 = vrot.slane %v2627, 1
        %v2878 = vrot.slane %v2628, 1
        %v2879 = vsel %vm1338, %v2877, %v2878
        %v2880 = vrot.slane %v2629, 1
        %v2881 = vsel %vm1338, %v2878, %v2880
        %v2882 = vrot.slane %v2630, 1
        %v2883 = vsel %vm1338, %v2880, %v2882
        %v2884 = vrot.slane %v2631, 1
        %v2885 = vrot.slane %v2632, 1
        %v2886 = vsel %vm1338, %v2884, %v2885
        %v2887 = vrot.slane %v2633, 1
        %v2888 = vsel %vm1338, %v2885, %v2887
        %v2889 = vrot.slane %v2634, 1
        %v2890 = vsel %vm1338, %v2887, %v2889
        %v2891 = vrot.slane %v2635, 1
        %v2892 = vrot.slane %v2636, 1
        %v2893 = vsel %vm1338, %v2891, %v2892
        %v2894 = vrot.slane %v2637, 1
        %v2895 = vsel %vm1338, %v2892, %v2894
        %v2896 = vrot.slane %v2638, 1
        %v2897 = vsel %vm1338, %v2894, %v2896
        %v2898 = vrot.slane %v2639, 1
        %v2899 = vrot.slane %v2640, 1
        %v2900 = vsel %vm1338, %v2898, %v2899
        %v2901 = vrot.slane %v2641, 1
        %v2902 = vsel %vm1338, %v2899, %v2901
        %v2903 = vrot.slane %v2642, 1
        %v2904 = vsel %vm1338, %v2901, %v2903
        %v2905 = vrot.slane %v2643, 1
        %v2906 = vrot.slane %v2644, 1
        %v2907 = vsel %vm1338, %v2905, %v2906
        %v2908 = vrot.slane %v2645, 1
        %v2909 = vsel %vm1338, %v2906, %v2908
        %v2910 = vrot.slane %v2646, 1
        %v2911 = vsel %vm1338, %v2908, %v2910
        %v2912 = vrot.slane %v2647, 1
        %v2913 = vrot.slane %v2648, 1
        %v2914 = vsel %vm1338, %v2912, %v2913
        %v2915 = vrot.slane %v2649, 1
        %v2916 = vsel %vm1338, %v2913, %v2915
        %v2917 = vrot.slane %v2650, 1
        %v2918 = vsel %vm1338, %v2915, %v2917
        %v2919 = vrot.slane %v2651, 1
        %v2920 = vrot.slane %v2652, 1
        %v2921 = vsel %vm1338, %v2919, %v2920
        %v2922 = vrot.slane %v2653, 1
        %v2923 = vsel %vm1338, %v2920, %v2922
        %v2924 = vrot.slane %v2654, 1
        %v2925 = vsel %vm1338, %v2922, %v2924
        %v2926 = vrot.slane %v2655, 1
        %v2927 = vrot.slane %v2656, 1
        %v2928 = vsel %vm1338, %v2926, %v2927
        %v2929 = vrot.slane %v2657, 1
        %v2930 = vsel %vm1338, %v2927, %v2929
        %v2931 = vrot.slane %v2658, 1
        %v2932 = vsel %vm1338, %v2929, %v2931
        %v2933 = vrot.slane %v2659, 1
        %v2934 = vrot.slane %v2660, 1
        %v2935 = vsel %vm1338, %v2933, %v2934
        %v2936 = vrot.slane %v2661, 1
        %v2937 = vsel %vm1338, %v2934, %v2936
        %v2938 = vrot.slane %v2662, 1
        %v2939 = vsel %vm1338, %v2936, %v2938
        %v2940 = vrot.slane %v2663, 1
        %v2941 = vrot.slane %v2664, 1
        %v2942 = vsel %vm1338, %v2940, %v2941
        %v2943 = vrot.slane %v2665, 1
        %v2944 = vsel %vm1338, %v2941, %v2943
        %v2945 = vrot.slane %v2666, 1
        %v2946 = vsel %vm1338, %v2943, %v2945
        %v2947 = vrot.slane %v2667, 1
        %v2948 = vrot.slane %v2668, 1
        %v2949 = vsel %vm1338, %v2947, %v2948
        %v2950 = vrot.slane %v2669, 1
        %v2951 = vsel %vm1338, %v2948, %v2950
        %v2952 = vrot.slane %v2670, 1
        %v2953 = vsel %vm1338, %v2950, %v2952
        %v2954 = vrot.slane %v2671, 1
        %v2955 = vrot.slane %v2672, 1
        %v2956 = vsel %vm1338, %v2954, %v2955
        %v2957 = vrot.slane %v2673, 1
        %v2958 = vsel %vm1338, %v2955, %v2957
        %v2959 = vrot.slane %v2674, 1
        %v2960 = vsel %vm1338, %v2957, %v2959
        %v3065 = vadd.f32 %v2462, %v2781
        %v3066 = vadd.f32 %v2463, %v2783
        %v3067 = vadd.f32 %v2464, %v2785
        %v3068 = vadd.f32 %v2465, %v2784
        %v3069 = vadd.f32 %v2466, %v2788
        %v3070 = vadd.f32 %v2467, %v2790
        %v3071 = vadd.f32 %v2468, %v2792
        %v3072 = vadd.f32 %v2469, %v2791
        %v3073 = vadd.f32 %v2470, %v2795
        %v3074 = vadd.f32 %v2471, %v2797
        %v3075 = vadd.f32 %v2472, %v2799
        %v3076 = vadd.f32 %v2473, %v2798
        %v3077 = vadd.f32 %v2474, %v2802
        %v3078 = vadd.f32 %v2475, %v2804
        %v3079 = vadd.f32 %v2476, %v2806
        %v3080 = vadd.f32 %v2477, %v2805
        %v3081 = vadd.f32 %v2478, %v2809
        %v3082 = vadd.f32 %v2479, %v2811
        %v3083 = vadd.f32 %v2480, %v2813
        %v3084 = vadd.f32 %v2481, %v2812
        %v3085 = vadd.f32 %v2482, %v2816
        %v3086 = vadd.f32 %v2483, %v2818
        %v3087 = vadd.f32 %v2484, %v2820
        %v3088 = vadd.f32 %v2485, %v2819
        %v3089 = vadd.f32 %v2486, %v2823
        %v3090 = vadd.f32 %v2487, %v2825
        %v3091 = vadd.f32 %v2488, %v2827
        %v3092 = vadd.f32 %v2489, %v2826
        %v3093 = vadd.f32 %v2490, %v2830
        %v3094 = vadd.f32 %v2491, %v2832
        %v3095 = vadd.f32 %v2492, %v2834
        %v3096 = vadd.f32 %v2493, %v2833
        %v3097 = vadd.f32 %v2494, %v2837
        %v3098 = vadd.f32 %v2495, %v2839
        %v3099 = vadd.f32 %v2496, %v2841
        %v3100 = vadd.f32 %v2497, %v2840
        %v3101 = vadd.f32 %v2498, %v2844
        %v3102 = vadd.f32 %v2499, %v2846
        %v3103 = vadd.f32 %v2500, %v2848
        %v3104 = vadd.f32 %v2501, %v2847
        %v3105 = vadd.f32 %v2502, %v2851
        %v3106 = vadd.f32 %v2503, %v2853
        %v3107 = vadd.f32 %v2504, %v2855
        %v3108 = vadd.f32 %v2505, %v2854
        %v3109 = vadd.f32 %v2506, %v2858
        %v3110 = vadd.f32 %v2507, %v2860
        %v3111 = vadd.f32 %v2508, %v2862
        %v3112 = vadd.f32 %v2509, %v2861
        %v3113 = vadd.f32 %v2510, %v2865
        %v3114 = vadd.f32 %v2511, %v2867
        %v3115 = vadd.f32 %v2512, %v2869
        %v3116 = vadd.f32 %v2513, %v2868
        %v3117 = vadd.f32 %v2514, %v2872
        %v3118 = vadd.f32 %v2515, %v2874
        %v3119 = vadd.f32 %v2516, %v2876
        %v3120 = vadd.f32 %v2517, %v2875
        %v3121 = vadd.f32 %v2518, %v2879
        %v3122 = vadd.f32 %v2519, %v2881
        %v3123 = vadd.f32 %v2520, %v2883
        %v3124 = vadd.f32 %v2521, %v2882
        %v3125 = vadd.f32 %v2522, %v2886
        %v3126 = vadd.f32 %v2523, %v2888
        %v3127 = vadd.f32 %v2524, %v2890
        %v3128 = vadd.f32 %v2525, %v2889
        %v3129 = vadd.f32 %v2526, %v2893
        %v3130 = vadd.f32 %v2527, %v2895
        %v3131 = vadd.f32 %v2528, %v2897
        %v3132 = vadd.f32 %v2529, %v2896
        %v3133 = vadd.f32 %v2530, %v2900
        %v3134 = vadd.f32 %v2531, %v2902
        %v3135 = vadd.f32 %v2532, %v2904
        %v3136 = vadd.f32 %v2533, %v2903
        %v3137 = vadd.f32 %v2534, %v2907
        %v3138 = vadd.f32 %v2535, %v2909
        %v3139 = vadd.f32 %v2536, %v2911
        %v3140 = vadd.f32 %v2537, %v2910
        %v3141 = vadd.f32 %v2538, %v2914
        %v3142 = vadd.f32 %v2539, %v2916
        %v3143 = vadd.f32 %v2540, %v2918
        %v3144 = vadd.f32 %v2541, %v2917
        %v3145 = vadd.f32 %v2542, %v2921
        %v3146 = vadd.f32 %v2543, %v2923
        %v3147 = vadd.f32 %v2544, %v2925
        %v3148 = vadd.f32 %v2545, %v2924
        %v3149 = vadd.f32 %v2546, %v2928
        %v3150 = vadd.f32 %v2547, %v2930
        %v3151 = vadd.f32 %v2548, %v2932
        %v3152 = vadd.f32 %v2549, %v2931
        %v3153 = vadd.f32 %v2550, %v2935
        %v3154 = vadd.f32 %v2551, %v2937
        %v3155 = vadd.f32 %v2552, %v2939
        %v3156 = vadd.f32 %v2553, %v2938
        %v3157 = vadd.f32 %v2554, %v2942
        %v3158 = vadd.f32 %v2555, %v2944
        %v3159 = vadd.f32 %v2556, %v2946
        %v3160 = vadd.f32 %v2557, %v2945
        %v3161 = vadd.f32 %v2558, %v2949
        %v3162 = vadd.f32 %v2559, %v2951
        %v3163 = vadd.f32 %v2560, %v2953
        %v3164 = vadd.f32 %v2561, %v2952
        %v3165 = vadd.f32 %v2562, %v2956
        %v3166 = vadd.f32 %v2563, %v2958
        %v3167 = vadd.f32 %v2564, %v2960
        %v3168 = vadd.f32 %v2565, %v2959
        %v3169 = vld [vmem:[%s1 + $0x5] sm:$0x1]
        %v3170 = vlaneseq
        %v3171 = vshrl.u32 %v3170, 7
        %v3172 = vsub.s32 0, %v3171
        %v3173 = vrot.slane %v3169, %v3172
        %v3174 = vmul.f32 %v416, %v3173
        %v3175 = vmul.f32 %v421, %v3173
        %v3176 = vmul.f32 %v426, %v3173
        %v3177 = vmul.f32 %v431, %v3173
        %v3178 = vmul.f32 %v436, %v3173
        %v3179 = vmul.f32 %v441, %v3173
        %v3180 = vmul.f32 %v446, %v3173
        %v3181 = vmul.f32 %v451, %v3173
        %v3182 = vmul.f32 %v456, %v3173
        %v3183 = vmul.f32 %v461, %v3173
        %v3184 = vmul.f32 %v466, %v3173
        %v3185 = vmul.f32 %v471, %v3173
        %v3186 = vmul.f32 %v476, %v3173
        %v3187 = vmul.f32 %v481, %v3173
        %v3188 = vmul.f32 %v486, %v3173
        %v3189 = vmul.f32 %v491, %v3173
        %v3190 = vmul.f32 %v496, %v3173
        %v3191 = vmul.f32 %v501, %v3173
        %v3192 = vmul.f32 %v506, %v3173
        %v3193 = vmul.f32 %v511, %v3173
        %v3194 = vmul.f32 %v516, %v3173
        %v3195 = vmul.f32 %v521, %v3173
        %v3196 = vmul.f32 %v526, %v3173
        %v3197 = vmul.f32 %v531, %v3173
        %v3198 = vmul.f32 %v536, %v3173
        %v3199 = vmul.f32 %v541, %v3173
        %v3200 = vmul.f32 %v546, %v3173
        %v3201 = vmul.f32 %v551, %v3173
        %v3202 = vmul.f32 %v556, %v3173
        %v3203 = vmul.f32 %v561, %v3173
        %v3204 = vmul.f32 %v566, %v3173
        %v3205 = vmul.f32 %v571, %v3173
        %v3206 = vmul.f32 %v576, %v3173
        %v3207 = vmul.f32 %v581, %v3173
        %v3208 = vmul.f32 %v586, %v3173
        %v3209 = vmul.f32 %v591, %v3173
        %v3210 = vmul.f32 %v596, %v3173
        %v3211 = vmul.f32 %v601, %v3173
        %v3212 = vmul.f32 %v606, %v3173
        %v3213 = vmul.f32 %v611, %v3173
        %v3214 = vmul.f32 %v616, %v3173
        %v3215 = vmul.f32 %v621, %v3173
        %v3216 = vmul.f32 %v626, %v3173
        %v3217 = vmul.f32 %v631, %v3173
        %v3218 = vmul.f32 %v636, %v3173
        %v3219 = vmul.f32 %v641, %v3173
        %v3220 = vmul.f32 %v646, %v3173
        %v3221 = vmul.f32 %v651, %v3173
        %v3222 = vmul.f32 %v656, %v3173
        %v3223 = vmul.f32 %v661, %v3173
        %v3224 = vmul.f32 %v666, %v3173
        %v3225 = vmul.f32 %v671, %v3173
        %v3226 = vmul.f32 %v676, %v3173
        %v3227 = vmul.f32 %v681, %v3173
        %v3228 = vmul.f32 %v686, %v3173
        %v3229 = vmul.f32 %v691, %v3173
        %v3230 = vmul.f32 %v696, %v3173
        %v3231 = vmul.f32 %v701, %v3173
        %v3232 = vmul.f32 %v706, %v3173
        %v3233 = vmul.f32 %v711, %v3173
        %v3234 = vmul.f32 %v716, %v3173
        %v3235 = vmul.f32 %v721, %v3173
        %v3236 = vmul.f32 %v726, %v3173
        %v3237 = vmul.f32 %v731, %v3173
        %v3238 = vmul.f32 %v736, %v3173
        %v3239 = vmul.f32 %v741, %v3173
        %v3240 = vmul.f32 %v746, %v3173
        %v3241 = vmul.f32 %v751, %v3173
        %v3242 = vmul.f32 %v756, %v3173
        %v3243 = vmul.f32 %v761, %v3173
        %v3244 = vmul.f32 %v766, %v3173
        %v3245 = vmul.f32 %v771, %v3173
        %v3246 = vmul.f32 %v776, %v3173
        %v3247 = vmul.f32 %v781, %v3173
        %v3248 = vmul.f32 %v786, %v3173
        %v3249 = vmul.f32 %v791, %v3173
        %v3250 = vmul.f32 %v796, %v3173
        %v3251 = vmul.f32 %v801, %v3173
        %v3252 = vmul.f32 %v806, %v3173
        %v3253 = vmul.f32 %v811, %v3173
        %v3254 = vmul.f32 %v816, %v3173
        %v3255 = vmul.f32 %v821, %v3173
        %v3256 = vmul.f32 %v826, %v3173
        %v3257 = vmul.f32 %v831, %v3173
        %v3258 = vmul.f32 %v836, %v3173
        %v3259 = vmul.f32 %v841, %v3173
        %v3260 = vmul.f32 %v846, %v3173
        %v3261 = vmul.f32 %v851, %v3173
        %v3262 = vmul.f32 %v856, %v3173
        %v3263 = vmul.f32 %v861, %v3173
        %v3264 = vmul.f32 %v866, %v3173
        %v3265 = vmul.f32 %v871, %v3173
        %v3266 = vmul.f32 %v876, %v3173
        %v3267 = vmul.f32 %v881, %v3173
        %v3268 = vmul.f32 %v886, %v3173
        %v3269 = vmul.f32 %v891, %v3173
        %v3270 = vmul.f32 %v896, %v3173
        %v3271 = vmul.f32 %v901, %v3173
        %v3272 = vmul.f32 %v906, %v3173
        %v3273 = vmul.f32 %v911, %v3173
        %v3274 = vmul.f32 %v2337, %v3173
        %v3275 = vmul.f32 %v2342, %v3173
        %v3276 = vmul.f32 %v2347, %v3173
        %v3277 = vmul.f32 %v2352, %v3173
        %v3382 = vrot.slane %v3174, 2
        %v3383 = vrot.slane %v3175, 2
        %v3384 = vsel %vm1942, %v3382, %v3383
        %v3385 = vrot.slane %v3176, 2
        %v3386 = vsel %vm1942, %v3383, %v3385
        %v3387 = vrot.slane %v3177, 2
        %v3388 = vsel %vm1942, %v3385, %v3387
        %v3389 = vrot.slane %v3178, 2
        %v3390 = vrot.slane %v3179, 2
        %v3391 = vsel %vm1942, %v3389, %v3390
        %v3392 = vrot.slane %v3180, 2
        %v3393 = vsel %vm1942, %v3390, %v3392
        %v3394 = vrot.slane %v3181, 2
        %v3395 = vsel %vm1942, %v3392, %v3394
        %v3396 = vrot.slane %v3182, 2
        %v3397 = vrot.slane %v3183, 2
        %v3398 = vsel %vm1942, %v3396, %v3397
        %v3399 = vrot.slane %v3184, 2
        %v3400 = vsel %vm1942, %v3397, %v3399
        %v3401 = vrot.slane %v3185, 2
        %v3402 = vsel %vm1942, %v3399, %v3401
        %v3403 = vrot.slane %v3186, 2
        %v3404 = vrot.slane %v3187, 2
        %v3405 = vsel %vm1942, %v3403, %v3404
        %v3406 = vrot.slane %v3188, 2
        %v3407 = vsel %vm1942, %v3404, %v3406
        %v3408 = vrot.slane %v3189, 2
        %v3409 = vsel %vm1942, %v3406, %v3408
        %v3410 = vrot.slane %v3190, 2
        %v3411 = vrot.slane %v3191, 2
        %v3412 = vsel %vm1942, %v3410, %v3411
        %v3413 = vrot.slane %v3192, 2
        %v3414 = vsel %vm1942, %v3411, %v3413
        %v3415 = vrot.slane %v3193, 2
        %v3416 = vsel %vm1942, %v3413, %v3415
        %v3417 = vrot.slane %v3194, 2
        %v3418 = vrot.slane %v3195, 2
        %v3419 = vsel %vm1942, %v3417, %v3418
        %v3420 = vrot.slane %v3196, 2
        %v3421 = vsel %vm1942, %v3418, %v3420
        %v3422 = vrot.slane %v3197, 2
        %v3423 = vsel %vm1942, %v3420, %v3422
        %v3424 = vrot.slane %v3198, 2
        %v3425 = vrot.slane %v3199, 2
        %v3426 = vsel %vm1942, %v3424, %v3425
        %v3427 = vrot.slane %v3200, 2
        %v3428 = vsel %vm1942, %v3425, %v3427
        %v3429 = vrot.slane %v3201, 2
        %v3430 = vsel %vm1942, %v3427, %v3429
        %v3431 = vrot.slane %v3202, 2
        %v3432 = vrot.slane %v3203, 2
        %v3433 = vsel %vm1942, %v3431, %v3432
        %v3434 = vrot.slane %v3204, 2
        %v3435 = vsel %vm1942, %v3432, %v3434
        %v3436 = vrot.slane %v3205, 2
        %v3437 = vsel %vm1942, %v3434, %v3436
        %v3438 = vrot.slane %v3206, 2
        %v3439 = vrot.slane %v3207, 2
        %v3440 = vsel %vm1942, %v3438, %v3439
        %v3441 = vrot.slane %v3208, 2
        %v3442 = vsel %vm1942, %v3439, %v3441
        %v3443 = vrot.slane %v3209, 2
        %v3444 = vsel %vm1942, %v3441, %v3443
        %v3445 = vrot.slane %v3210, 2
        %v3446 = vrot.slane %v3211, 2
        %v3447 = vsel %vm1942, %v3445, %v3446
        %v3448 = vrot.slane %v3212, 2
        %v3449 = vsel %vm1942, %v3446, %v3448
        %v3450 = vrot.slane %v3213, 2
        %v3451 = vsel %vm1942, %v3448, %v3450
        %v3452 = vrot.slane %v3214, 2
        %v3453 = vrot.slane %v3215, 2
        %v3454 = vsel %vm1942, %v3452, %v3453
        %v3455 = vrot.slane %v3216, 2
        %v3456 = vsel %vm1942, %v3453, %v3455
        %v3457 = vrot.slane %v3217, 2
        %v3458 = vsel %vm1942, %v3455, %v3457
        %v3459 = vrot.slane %v3218, 2
        %v3460 = vrot.slane %v3219, 2
        %v3461 = vsel %vm1942, %v3459, %v3460
        %v3462 = vrot.slane %v3220, 2
        %v3463 = vsel %vm1942, %v3460, %v3462
        %v3464 = vrot.slane %v3221, 2
        %v3465 = vsel %vm1942, %v3462, %v3464
        %v3466 = vrot.slane %v3222, 2
        %v3467 = vrot.slane %v3223, 2
        %v3468 = vsel %vm1942, %v3466, %v3467
        %v3469 = vrot.slane %v3224, 2
        %v3470 = vsel %vm1942, %v3467, %v3469
        %v3471 = vrot.slane %v3225, 2
        %v3472 = vsel %vm1942, %v3469, %v3471
        %v3473 = vrot.slane %v3226, 2
        %v3474 = vrot.slane %v3227, 2
        %v3475 = vsel %vm1942, %v3473, %v3474
        %v3476 = vrot.slane %v3228, 2
        %v3477 = vsel %vm1942, %v3474, %v3476
        %v3478 = vrot.slane %v3229, 2
        %v3479 = vsel %vm1942, %v3476, %v3478
        %v3480 = vrot.slane %v3230, 2
        %v3481 = vrot.slane %v3231, 2
        %v3482 = vsel %vm1942, %v3480, %v3481
        %v3483 = vrot.slane %v3232, 2
        %v3484 = vsel %vm1942, %v3481, %v3483
        %v3485 = vrot.slane %v3233, 2
        %v3486 = vsel %vm1942, %v3483, %v3485
        %v3487 = vrot.slane %v3234, 2
        %v3488 = vrot.slane %v3235, 2
        %v3489 = vsel %vm1942, %v3487, %v3488
        %v3490 = vrot.slane %v3236, 2
        %v3491 = vsel %vm1942, %v3488, %v3490
        %v3492 = vrot.slane %v3237, 2
        %v3493 = vsel %vm1942, %v3490, %v3492
        %v3494 = vrot.slane %v3238, 2
        %v3495 = vrot.slane %v3239, 2
        %v3496 = vsel %vm1942, %v3494, %v3495
        %v3497 = vrot.slane %v3240, 2
        %v3498 = vsel %vm1942, %v3495, %v3497
        %v3499 = vrot.slane %v3241, 2
        %v3500 = vsel %vm1942, %v3497, %v3499
        %v3501 = vrot.slane %v3242, 2
        %v3502 = vrot.slane %v3243, 2
        %v3503 = vsel %vm1942, %v3501, %v3502
        %v3504 = vrot.slane %v3244, 2
        %v3505 = vsel %vm1942, %v3502, %v3504
        %v3506 = vrot.slane %v3245, 2
        %v3507 = vsel %vm1942, %v3504, %v3506
        %v3508 = vrot.slane %v3246, 2
        %v3509 = vrot.slane %v3247, 2
        %v3510 = vsel %vm1942, %v3508, %v3509
        %v3511 = vrot.slane %v3248, 2
        %v3512 = vsel %vm1942, %v3509, %v3511
        %v3513 = vrot.slane %v3249, 2
        %v3514 = vsel %vm1942, %v3511, %v3513
        %v3515 = vrot.slane %v3250, 2
        %v3516 = vrot.slane %v3251, 2
        %v3517 = vsel %vm1942, %v3515, %v3516
        %v3518 = vrot.slane %v3252, 2
        %v3519 = vsel %vm1942, %v3516, %v3518
        %v3520 = vrot.slane %v3253, 2
        %v3521 = vsel %vm1942, %v3518, %v3520
        %v3522 = vrot.slane %v3254, 2
        %v3523 = vrot.slane %v3255, 2
        %v3524 = vsel %vm1942, %v3522, %v3523
        %v3525 = vrot.slane %v3256, 2
        %v3526 = vsel %vm1942, %v3523, %v3525
        %v3527 = vrot.slane %v3257, 2
        %v3528 = vsel %vm1942, %v3525, %v3527
        %v3529 = vrot.slane %v3258, 2
        %v3530 = vrot.slane %v3259, 2
        %v3531 = vsel %vm1942, %v3529, %v3530
        %v3532 = vrot.slane %v3260, 2
        %v3533 = vsel %vm1942, %v3530, %v3532
        %v3534 = vrot.slane %v3261, 2
        %v3535 = vsel %vm1942, %v3532, %v3534
        %v3536 = vrot.slane %v3262, 2
        %v3537 = vrot.slane %v3263, 2
        %v3538 = vsel %vm1942, %v3536, %v3537
        %v3539 = vrot.slane %v3264, 2
        %v3540 = vsel %vm1942, %v3537, %v3539
        %v3541 = vrot.slane %v3265, 2
        %v3542 = vsel %vm1942, %v3539, %v3541
        %v3543 = vrot.slane %v3266, 2
        %v3544 = vrot.slane %v3267, 2
        %v3545 = vsel %vm1942, %v3543, %v3544
        %v3546 = vrot.slane %v3268, 2
        %v3547 = vsel %vm1942, %v3544, %v3546
        %v3548 = vrot.slane %v3269, 2
        %v3549 = vsel %vm1942, %v3546, %v3548
        %v3550 = vrot.slane %v3270, 2
        %v3551 = vrot.slane %v3271, 2
        %v3552 = vsel %vm1942, %v3550, %v3551
        %v3553 = vrot.slane %v3272, 2
        %v3554 = vsel %vm1942, %v3551, %v3553
        %v3555 = vrot.slane %v3273, 2
        %v3556 = vsel %vm1942, %v3553, %v3555
        %v3557 = vrot.slane %v3274, 2
        %v3558 = vrot.slane %v3275, 2
        %v3559 = vsel %vm1942, %v3557, %v3558
        %v3560 = vrot.slane %v3276, 2
        %v3561 = vsel %vm1942, %v3558, %v3560
        %v3562 = vrot.slane %v3277, 2
        %v3563 = vsel %vm1942, %v3560, %v3562
        %v3668 = vadd.f32 %v3065, %v3384
        %v3669 = vadd.f32 %v3066, %v3386
        %v3670 = vadd.f32 %v3067, %v3388
        %v3671 = vadd.f32 %v3068, %v3387
        %v3672 = vadd.f32 %v3069, %v3391
        %v3673 = vadd.f32 %v3070, %v3393
        %v3674 = vadd.f32 %v3071, %v3395
        %v3675 = vadd.f32 %v3072, %v3394
        %v3676 = vadd.f32 %v3073, %v3398
        %v3677 = vadd.f32 %v3074, %v3400
        %v3678 = vadd.f32 %v3075, %v3402
        %v3679 = vadd.f32 %v3076, %v3401
        %v3680 = vadd.f32 %v3077, %v3405
        %v3681 = vadd.f32 %v3078, %v3407
        %v3682 = vadd.f32 %v3079, %v3409
        %v3683 = vadd.f32 %v3080, %v3408
        %v3684 = vadd.f32 %v3081, %v3412
        %v3685 = vadd.f32 %v3082, %v3414
        %v3686 = vadd.f32 %v3083, %v3416
        %v3687 = vadd.f32 %v3084, %v3415
        %v3688 = vadd.f32 %v3085, %v3419
        %v3689 = vadd.f32 %v3086, %v3421
        %v3690 = vadd.f32 %v3087, %v3423
        %v3691 = vadd.f32 %v3088, %v3422
        %v3692 = vadd.f32 %v3089, %v3426
        %v3693 = vadd.f32 %v3090, %v3428
        %v3694 = vadd.f32 %v3091, %v3430
        %v3695 = vadd.f32 %v3092, %v3429
        %v3696 = vadd.f32 %v3093, %v3433
        %v3697 = vadd.f32 %v3094, %v3435
        %v3698 = vadd.f32 %v3095, %v3437
        %v3699 = vadd.f32 %v3096, %v3436
        %v3700 = vadd.f32 %v3097, %v3440
        %v3701 = vadd.f32 %v3098, %v3442
        %v3702 = vadd.f32 %v3099, %v3444
        %v3703 = vadd.f32 %v3100, %v3443
        %v3704 = vadd.f32 %v3101, %v3447
        %v3705 = vadd.f32 %v3102, %v3449
        %v3706 = vadd.f32 %v3103, %v3451
        %v3707 = vadd.f32 %v3104, %v3450
        %v3708 = vadd.f32 %v3105, %v3454
        %v3709 = vadd.f32 %v3106, %v3456
        %v3710 = vadd.f32 %v3107, %v3458
        %v3711 = vadd.f32 %v3108, %v3457
        %v3712 = vadd.f32 %v3109, %v3461
        %v3713 = vadd.f32 %v3110, %v3463
        %v3714 = vadd.f32 %v3111, %v3465
        %v3715 = vadd.f32 %v3112, %v3464
        %v3716 = vadd.f32 %v3113, %v3468
        %v3717 = vadd.f32 %v3114, %v3470
        %v3718 = vadd.f32 %v3115, %v3472
        %v3719 = vadd.f32 %v3116, %v3471
        %v3720 = vadd.f32 %v3117, %v3475
        %v3721 = vadd.f32 %v3118, %v3477
        %v3722 = vadd.f32 %v3119, %v3479
        %v3723 = vadd.f32 %v3120, %v3478
        %v3724 = vadd.f32 %v3121, %v3482
        %v3725 = vadd.f32 %v3122, %v3484
        %v3726 = vadd.f32 %v3123, %v3486
        %v3727 = vadd.f32 %v3124, %v3485
        %v3728 = vadd.f32 %v3125, %v3489
        %v3729 = vadd.f32 %v3126, %v3491
        %v3730 = vadd.f32 %v3127, %v3493
        %v3731 = vadd.f32 %v3128, %v3492
        %v3732 = vadd.f32 %v3129, %v3496
        %v3733 = vadd.f32 %v3130, %v3498
        %v3734 = vadd.f32 %v3131, %v3500
        %v3735 = vadd.f32 %v3132, %v3499
        %v3736 = vadd.f32 %v3133, %v3503
        %v3737 = vadd.f32 %v3134, %v3505
        %v3738 = vadd.f32 %v3135, %v3507
        %v3739 = vadd.f32 %v3136, %v3506
        %v3740 = vadd.f32 %v3137, %v3510
        %v3741 = vadd.f32 %v3138, %v3512
        %v3742 = vadd.f32 %v3139, %v3514
        %v3743 = vadd.f32 %v3140, %v3513
        %v3744 = vadd.f32 %v3141, %v3517
        %v3745 = vadd.f32 %v3142, %v3519
        %v3746 = vadd.f32 %v3143, %v3521
        %v3747 = vadd.f32 %v3144, %v3520
        %v3748 = vadd.f32 %v3145, %v3524
        %v3749 = vadd.f32 %v3146, %v3526
        %v3750 = vadd.f32 %v3147, %v3528
        %v3751 = vadd.f32 %v3148, %v3527
        %v3752 = vadd.f32 %v3149, %v3531
        %v3753 = vadd.f32 %v3150, %v3533
        %v3754 = vadd.f32 %v3151, %v3535
        %v3755 = vadd.f32 %v3152, %v3534
        %v3756 = vadd.f32 %v3153, %v3538
        %v3757 = vadd.f32 %v3154, %v3540
        %v3758 = vadd.f32 %v3155, %v3542
        %v3759 = vadd.f32 %v3156, %v3541
        %v3760 = vadd.f32 %v3157, %v3545
        %v3761 = vadd.f32 %v3158, %v3547
        %v3762 = vadd.f32 %v3159, %v3549
        %v3763 = vadd.f32 %v3160, %v3548
        %v3764 = vadd.f32 %v3161, %v3552
        %v3765 = vadd.f32 %v3162, %v3554
        %v3766 = vadd.f32 %v3163, %v3556
        %v3767 = vadd.f32 %v3164, %v3555
        %v3768 = vadd.f32 %v3165, %v3559
        %v3769 = vadd.f32 %v3166, %v3561
        %v3770 = vadd.f32 %v3167, %v3563
        %v3771 = vadd.f32 %v3168, %v3562
        %v3772 = vld [vmem:[%s1 + $0x6] sm:$0x1]
        %3774 = vset.pattern.permute.xlu0 0
        %3775 = vperm.xlu0 %3774, %v388
        %v3776 = vpop.permute.xlu0 %3775
        %3779 = vset.pattern.permute.xlu0 0
        %3780 = vperm.xlu0 %3779, %v389
        %v3781 = vpop.permute.xlu0 %3780
        %3784 = vset.pattern.permute.xlu0 0
        %3785 = vperm.xlu0 %3784, %v390
        %v3786 = vpop.permute.xlu0 %3785
        %3789 = vset.pattern.permute.xlu0 0
        %3790 = vperm.xlu0 %3789, %v391
        %v3791 = vpop.permute.xlu0 %3790
        %v3793 = vlaneseq
        %v3794 = vshrl.u32 %v3793, 7
        %v3795 = vsub.s32 0, %v3794
        %v3796 = vrot.slane %v3772, %v3795
        %v3797 = vmul.f32 %v436, %v3796
        %v3798 = vmul.f32 %v441, %v3796
        %v3799 = vmul.f32 %v446, %v3796
        %v3800 = vmul.f32 %v451, %v3796
        %v3801 = vmul.f32 %v456, %v3796
        %v3802 = vmul.f32 %v461, %v3796
        %v3803 = vmul.f32 %v466, %v3796
        %v3804 = vmul.f32 %v471, %v3796
        %v3805 = vmul.f32 %v476, %v3796
        %v3806 = vmul.f32 %v481, %v3796
        %v3807 = vmul.f32 %v486, %v3796
        %v3808 = vmul.f32 %v491, %v3796
        %v3809 = vmul.f32 %v496, %v3796
        %v3810 = vmul.f32 %v501, %v3796
        %v3811 = vmul.f32 %v506, %v3796
        %v3812 = vmul.f32 %v511, %v3796
        %v3813 = vmul.f32 %v516, %v3796
        %v3814 = vmul.f32 %v521, %v3796
        %v3815 = vmul.f32 %v526, %v3796
        %v3816 = vmul.f32 %v531, %v3796
        %v3817 = vmul.f32 %v536, %v3796
        %v3818 = vmul.f32 %v541, %v3796
        %v3819 = vmul.f32 %v546, %v3796
        %v3820 = vmul.f32 %v551, %v3796
        %v3821 = vmul.f32 %v556, %v3796
        %v3822 = vmul.f32 %v561, %v3796
        %v3823 = vmul.f32 %v566, %v3796
        %v3824 = vmul.f32 %v571, %v3796
        %v3825 = vmul.f32 %v576, %v3796
        %v3826 = vmul.f32 %v581, %v3796
        %v3827 = vmul.f32 %v586, %v3796
        %v3828 = vmul.f32 %v591, %v3796
        %v3829 = vmul.f32 %v596, %v3796
        %v3830 = vmul.f32 %v601, %v3796
        %v3831 = vmul.f32 %v606, %v3796
        %v3832 = vmul.f32 %v611, %v3796
        %v3833 = vmul.f32 %v616, %v3796
        %v3834 = vmul.f32 %v621, %v3796
        %v3835 = vmul.f32 %v626, %v3796
        %v3836 = vmul.f32 %v631, %v3796
        %v3837 = vmul.f32 %v636, %v3796
        %v3838 = vmul.f32 %v641, %v3796
        %v3839 = vmul.f32 %v646, %v3796
        %v3840 = vmul.f32 %v651, %v3796
        %v3841 = vmul.f32 %v656, %v3796
        %v3842 = vmul.f32 %v661, %v3796
        %v3843 = vmul.f32 %v666, %v3796
        %v3844 = vmul.f32 %v671, %v3796
        %v3845 = vmul.f32 %v676, %v3796
        %v3846 = vmul.f32 %v681, %v3796
        %v3847 = vmul.f32 %v686, %v3796
        %v3848 = vmul.f32 %v691, %v3796
        %v3849 = vmul.f32 %v696, %v3796
        %v3850 = vmul.f32 %v701, %v3796
        %v3851 = vmul.f32 %v706, %v3796
        %v3852 = vmul.f32 %v711, %v3796
        %v3853 = vmul.f32 %v716, %v3796
        %v3854 = vmul.f32 %v721, %v3796
        %v3855 = vmul.f32 %v726, %v3796
        %v3856 = vmul.f32 %v731, %v3796
        %v3857 = vmul.f32 %v736, %v3796
        %v3858 = vmul.f32 %v741, %v3796
        %v3859 = vmul.f32 %v746, %v3796
        %v3860 = vmul.f32 %v751, %v3796
        %v3861 = vmul.f32 %v756, %v3796
        %v3862 = vmul.f32 %v761, %v3796
        %v3863 = vmul.f32 %v766, %v3796
        %v3864 = vmul.f32 %v771, %v3796
        %v3865 = vmul.f32 %v776, %v3796
        %v3866 = vmul.f32 %v781, %v3796
        %v3867 = vmul.f32 %v786, %v3796
        %v3868 = vmul.f32 %v791, %v3796
        %v3869 = vmul.f32 %v796, %v3796
        %v3870 = vmul.f32 %v801, %v3796
        %v3871 = vmul.f32 %v806, %v3796
        %v3872 = vmul.f32 %v811, %v3796
        %v3873 = vmul.f32 %v816, %v3796
        %v3874 = vmul.f32 %v821, %v3796
        %v3875 = vmul.f32 %v826, %v3796
        %v3876 = vmul.f32 %v831, %v3796
        %v3877 = vmul.f32 %v836, %v3796
        %v3878 = vmul.f32 %v841, %v3796
        %v3879 = vmul.f32 %v846, %v3796
        %v3880 = vmul.f32 %v851, %v3796
        %v3881 = vmul.f32 %v856, %v3796
        %v3882 = vmul.f32 %v861, %v3796
        %v3883 = vmul.f32 %v866, %v3796
        %v3884 = vmul.f32 %v871, %v3796
        %v3885 = vmul.f32 %v876, %v3796
        %v3886 = vmul.f32 %v881, %v3796
        %v3887 = vmul.f32 %v886, %v3796
        %v3888 = vmul.f32 %v891, %v3796
        %v3889 = vmul.f32 %v896, %v3796
        %v3890 = vmul.f32 %v901, %v3796
        %v3891 = vmul.f32 %v906, %v3796
        %v3892 = vmul.f32 %v911, %v3796
        %v3893 = vmul.f32 %v2337, %v3796
        %v3894 = vmul.f32 %v2342, %v3796
        %v3895 = vmul.f32 %v2347, %v3796
        %v3896 = vmul.f32 %v2352, %v3796
        %v3897 = vmul.f32 %v3776, %v3796
        %v3898 = vmul.f32 %v3781, %v3796
        %v3899 = vmul.f32 %v3786, %v3796
        %v3900 = vmul.f32 %v3791, %v3796
        %v3901 = vadd.f32 %v3668, %v3797
        %v3902 = vadd.f32 %v3669, %v3798
        %v3903 = vadd.f32 %v3670, %v3799
        %v3904 = vadd.f32 %v3671, %v3800
        %v3905 = vadd.f32 %v3672, %v3801
        %v3906 = vadd.f32 %v3673, %v3802
        %v3907 = vadd.f32 %v3674, %v3803
        %v3908 = vadd.f32 %v3675, %v3804
        %v3909 = vadd.f32 %v3676, %v3805
        %v3910 = vadd.f32 %v3677, %v3806
        %v3911 = vadd.f32 %v3678, %v3807
        %v3912 = vadd.f32 %v3679, %v3808
        %v3913 = vadd.f32 %v3680, %v3809
        %v3914 = vadd.f32 %v3681, %v3810
        %v3915 = vadd.f32 %v3682, %v3811
        %v3916 = vadd.f32 %v3683, %v3812
        %v3917 = vadd.f32 %v3684, %v3813
        %v3918 = vadd.f32 %v3685, %v3814
        %v3919 = vadd.f32 %v3686, %v3815
        %v3920 = vadd.f32 %v3687, %v3816
        %v3921 = vadd.f32 %v3688, %v3817
        %v3922 = vadd.f32 %v3689, %v3818
        %v3923 = vadd.f32 %v3690, %v3819
        %v3924 = vadd.f32 %v3691, %v3820
        %v3925 = vadd.f32 %v3692, %v3821
        %v3926 = vadd.f32 %v3693, %v3822
        %v3927 = vadd.f32 %v3694, %v3823
        %v3928 = vadd.f32 %v3695, %v3824
        %v3929 = vadd.f32 %v3696, %v3825
        %v3930 = vadd.f32 %v3697, %v3826
        %v3931 = vadd.f32 %v3698, %v3827
        %v3932 = vadd.f32 %v3699, %v3828
        %v3933 = vadd.f32 %v3700, %v3829
        %v3934 = vadd.f32 %v3701, %v3830
        %v3935 = vadd.f32 %v3702, %v3831
        %v3936 = vadd.f32 %v3703, %v3832
        %v3937 = vadd.f32 %v3704, %v3833
        %v3938 = vadd.f32 %v3705, %v3834
        %v3939 = vadd.f32 %v3706, %v3835
        %v3940 = vadd.f32 %v3707, %v3836
        %v3941 = vadd.f32 %v3708, %v3837
        %v3942 = vadd.f32 %v3709, %v3838
        %v3943 = vadd.f32 %v3710, %v3839
        %v3944 = vadd.f32 %v3711, %v3840
        %v3945 = vadd.f32 %v3712, %v3841
        %v3946 = vadd.f32 %v3713, %v3842
        %v3947 = vadd.f32 %v3714, %v3843
        %v3948 = vadd.f32 %v3715, %v3844
        %v3949 = vadd.f32 %v3716, %v3845
        %v3950 = vadd.f32 %v3717, %v3846
        %v3951 = vadd.f32 %v3718, %v3847
        %v3952 = vadd.f32 %v3719, %v3848
        %v3953 = vadd.f32 %v3720, %v3849
        %v3954 = vadd.f32 %v3721, %v3850
        %v3955 = vadd.f32 %v3722, %v3851
        %v3956 = vadd.f32 %v3723, %v3852
        %v3957 = vadd.f32 %v3724, %v3853
        %v3958 = vadd.f32 %v3725, %v3854
        %v3959 = vadd.f32 %v3726, %v3855
        %v3960 = vadd.f32 %v3727, %v3856
        %v3961 = vadd.f32 %v3728, %v3857
        %v3962 = vadd.f32 %v3729, %v3858
        %v3963 = vadd.f32 %v3730, %v3859
        %v3964 = vadd.f32 %v3731, %v3860
        %v3965 = vadd.f32 %v3732, %v3861
        %v3966 = vadd.f32 %v3733, %v3862
        %v3967 = vadd.f32 %v3734, %v3863
        %v3968 = vadd.f32 %v3735, %v3864
        %v3969 = vadd.f32 %v3736, %v3865
        %v3970 = vadd.f32 %v3737, %v3866
        %v3971 = vadd.f32 %v3738, %v3867
        %v3972 = vadd.f32 %v3739, %v3868
        %v3973 = vadd.f32 %v3740, %v3869
        %v3974 = vadd.f32 %v3741, %v3870
        %v3975 = vadd.f32 %v3742, %v3871
        %v3976 = vadd.f32 %v3743, %v3872
        %v3977 = vadd.f32 %v3744, %v3873
        %v3978 = vadd.f32 %v3745, %v3874
        %v3979 = vadd.f32 %v3746, %v3875
        %v3980 = vadd.f32 %v3747, %v3876
        %v3981 = vadd.f32 %v3748, %v3877
        %v3982 = vadd.f32 %v3749, %v3878
        %v3983 = vadd.f32 %v3750, %v3879
        %v3984 = vadd.f32 %v3751, %v3880
        %v3985 = vadd.f32 %v3752, %v3881
        %v3986 = vadd.f32 %v3753, %v3882
        %v3987 = vadd.f32 %v3754, %v3883
        %v3988 = vadd.f32 %v3755, %v3884
        %v3989 = vadd.f32 %v3756, %v3885
        %v3990 = vadd.f32 %v3757, %v3886
        %v3991 = vadd.f32 %v3758, %v3887
        %v3992 = vadd.f32 %v3759, %v3888
        %v3993 = vadd.f32 %v3760, %v3889
        %v3994 = vadd.f32 %v3761, %v3890
        %v3995 = vadd.f32 %v3762, %v3891
        %v3996 = vadd.f32 %v3763, %v3892
        %v3997 = vadd.f32 %v3764, %v3893
        %v3998 = vadd.f32 %v3765, %v3894
        %v3999 = vadd.f32 %v3766, %v3895
        %v4000 = vadd.f32 %v3767, %v3896
        %v4001 = vadd.f32 %v3768, %v3897
        %v4002 = vadd.f32 %v3769, %v3898
        %v4003 = vadd.f32 %v3770, %v3899
        %v4004 = vadd.f32 %v3771, %v3900
        %v4005 = vld [vmem:[%s1 + $0x7] sm:$0x1]
        %v4006 = vlaneseq
        %v4007 = vshrl.u32 %v4006, 7
        %v4008 = vsub.s32 0, %v4007
        %v4009 = vrot.slane %v4005, %v4008
        %v4010 = vmul.f32 %v436, %v4009
        %v4011 = vmul.f32 %v441, %v4009
        %v4012 = vmul.f32 %v446, %v4009
        %v4013 = vmul.f32 %v451, %v4009
        %v4014 = vmul.f32 %v456, %v4009
        %v4015 = vmul.f32 %v461, %v4009
        %v4016 = vmul.f32 %v466, %v4009
        %v4017 = vmul.f32 %v471, %v4009
        %v4018 = vmul.f32 %v476, %v4009
        %v4019 = vmul.f32 %v481, %v4009
        %v4020 = vmul.f32 %v486, %v4009
        %v4021 = vmul.f32 %v491, %v4009
        %v4022 = vmul.f32 %v496, %v4009
        %v4023 = vmul.f32 %v501, %v4009
        %v4024 = vmul.f32 %v506, %v4009
        %v4025 = vmul.f32 %v511, %v4009
        %v4026 = vmul.f32 %v516, %v4009
        %v4027 = vmul.f32 %v521, %v4009
        %v4028 = vmul.f32 %v526, %v4009
        %v4029 = vmul.f32 %v531, %v4009
        %v4030 = vmul.f32 %v536, %v4009
        %v4031 = vmul.f32 %v541, %v4009
        %v4032 = vmul.f32 %v546, %v4009
        %v4033 = vmul.f32 %v551, %v4009
        %v4034 = vmul.f32 %v556, %v4009
        %v4035 = vmul.f32 %v561, %v4009
        %v4036 = vmul.f32 %v566, %v4009
        %v4037 = vmul.f32 %v571, %v4009
        %v4038 = vmul.f32 %v576, %v4009
        %v4039 = vmul.f32 %v581, %v4009
        %v4040 = vmul.f32 %v586, %v4009
        %v4041 = vmul.f32 %v591, %v4009
        %v4042 = vmul.f32 %v596, %v4009
        %v4043 = vmul.f32 %v601, %v4009
        %v4044 = vmul.f32 %v606, %v4009
        %v4045 = vmul.f32 %v611, %v4009
        %v4046 = vmul.f32 %v616, %v4009
        %v4047 = vmul.f32 %v621, %v4009
        %v4048 = vmul.f32 %v626, %v4009
        %v4049 = vmul.f32 %v631, %v4009
        %v4050 = vmul.f32 %v636, %v4009
        %v4051 = vmul.f32 %v641, %v4009
        %v4052 = vmul.f32 %v646, %v4009
        %v4053 = vmul.f32 %v651, %v4009
        %v4054 = vmul.f32 %v656, %v4009
        %v4055 = vmul.f32 %v661, %v4009
        %v4056 = vmul.f32 %v666, %v4009
        %v4057 = vmul.f32 %v671, %v4009
        %v4058 = vmul.f32 %v676, %v4009
        %v4059 = vmul.f32 %v681, %v4009
        %v4060 = vmul.f32 %v686, %v4009
        %v4061 = vmul.f32 %v691, %v4009
        %v4062 = vmul.f32 %v696, %v4009
        %v4063 = vmul.f32 %v701, %v4009
        %v4064 = vmul.f32 %v706, %v4009
        %v4065 = vmul.f32 %v711, %v4009
        %v4066 = vmul.f32 %v716, %v4009
        %v4067 = vmul.f32 %v721, %v4009
        %v4068 = vmul.f32 %v726, %v4009
        %v4069 = vmul.f32 %v731, %v4009
        %v4070 = vmul.f32 %v736, %v4009
        %v4071 = vmul.f32 %v741, %v4009
        %v4072 = vmul.f32 %v746, %v4009
        %v4073 = vmul.f32 %v751, %v4009
        %v4074 = vmul.f32 %v756, %v4009
        %v4075 = vmul.f32 %v761, %v4009
        %v4076 = vmul.f32 %v766, %v4009
        %v4077 = vmul.f32 %v771, %v4009
        %v4078 = vmul.f32 %v776, %v4009
        %v4079 = vmul.f32 %v781, %v4009
        %v4080 = vmul.f32 %v786, %v4009
        %v4081 = vmul.f32 %v791, %v4009
        %v4082 = vmul.f32 %v796, %v4009
        %v4083 = vmul.f32 %v801, %v4009
        %v4084 = vmul.f32 %v806, %v4009
        %v4085 = vmul.f32 %v811, %v4009
        %v4086 = vmul.f32 %v816, %v4009
        %v4087 = vmul.f32 %v821, %v4009
        %v4088 = vmul.f32 %v826, %v4009
        %v4089 = vmul.f32 %v831, %v4009
        %v4090 = vmul.f32 %v836, %v4009
        %v4091 = vmul.f32 %v841, %v4009
        %v4092 = vmul.f32 %v846, %v4009
        %v4093 = vmul.f32 %v851, %v4009
        %v4094 = vmul.f32 %v856, %v4009
        %v4095 = vmul.f32 %v861, %v4009
        %v4096 = vmul.f32 %v866, %v4009
        %v4097 = vmul.f32 %v871, %v4009
        %v4098 = vmul.f32 %v876, %v4009
        %v4099 = vmul.f32 %v881, %v4009
        %v4100 = vmul.f32 %v886, %v4009
        %v4101 = vmul.f32 %v891, %v4009
        %v4102 = vmul.f32 %v896, %v4009
        %v4103 = vmul.f32 %v901, %v4009
        %v4104 = vmul.f32 %v906, %v4009
        %v4105 = vmul.f32 %v911, %v4009
        %v4106 = vmul.f32 %v2337, %v4009
        %v4107 = vmul.f32 %v2342, %v4009
        %v4108 = vmul.f32 %v2347, %v4009
        %v4109 = vmul.f32 %v2352, %v4009
        %v4110 = vmul.f32 %v3776, %v4009
        %v4111 = vmul.f32 %v3781, %v4009
        %v4112 = vmul.f32 %v3786, %v4009
        %v4113 = vmul.f32 %v3791, %v4009
        %v4218 = vrot.slane %v4010, 1
        %v4219 = vrot.slane %v4011, 1
        %v4220 = vsel %vm1338, %v4218, %v4219
        %v4221 = vrot.slane %v4012, 1
        %v4222 = vsel %vm1338, %v4219, %v4221
        %v4223 = vrot.slane %v4013, 1
        %v4224 = vsel %vm1338, %v4221, %v4223
        %v4225 = vrot.slane %v4014, 1
        %v4226 = vrot.slane %v4015, 1
        %v4227 = vsel %vm1338, %v4225, %v4226
        %v4228 = vrot.slane %v4016, 1
        %v4229 = vsel %vm1338, %v4226, %v4228
        %v4230 = vrot.slane %v4017, 1
        %v4231 = vsel %vm1338, %v4228, %v4230
        %v4232 = vrot.slane %v4018, 1
        %v4233 = vrot.slane %v4019, 1
        %v4234 = vsel %vm1338, %v4232, %v4233
        %v4235 = vrot.slane %v4020, 1
        %v4236 = vsel %vm1338, %v4233, %v4235
        %v4237 = vrot.slane %v4021, 1
        %v4238 = vsel %vm1338, %v4235, %v4237
        %v4239 = vrot.slane %v4022, 1
        %v4240 = vrot.slane %v4023, 1
        %v4241 = vsel %vm1338, %v4239, %v4240
        %v4242 = vrot.slane %v4024, 1
        %v4243 = vsel %vm1338, %v4240, %v4242
        %v4244 = vrot.slane %v4025, 1
        %v4245 = vsel %vm1338, %v4242, %v4244
        %v4246 = vrot.slane %v4026, 1
        %v4247 = vrot.slane %v4027, 1
        %v4248 = vsel %vm1338, %v4246, %v4247
        %v4249 = vrot.slane %v4028, 1
        %v4250 = vsel %vm1338, %v4247, %v4249
        %v4251 = vrot.slane %v4029, 1
        %v4252 = vsel %vm1338, %v4249, %v4251
        %v4253 = vrot.slane %v4030, 1
        %v4254 = vrot.slane %v4031, 1
        %v4255 = vsel %vm1338, %v4253, %v4254
        %v4256 = vrot.slane %v4032, 1
        %v4257 = vsel %vm1338, %v4254, %v4256
        %v4258 = vrot.slane %v4033, 1
        %v4259 = vsel %vm1338, %v4256, %v4258
        %v4260 = vrot.slane %v4034, 1
        %v4261 = vrot.slane %v4035, 1
        %v4262 = vsel %vm1338, %v4260, %v4261
        %v4263 = vrot.slane %v4036, 1
        %v4264 = vsel %vm1338, %v4261, %v4263
        %v4265 = vrot.slane %v4037, 1
        %v4266 = vsel %vm1338, %v4263, %v4265
        %v4267 = vrot.slane %v4038, 1
        %v4268 = vrot.slane %v4039, 1
        %v4269 = vsel %vm1338, %v4267, %v4268
        %v4270 = vrot.slane %v4040, 1
        %v4271 = vsel %vm1338, %v4268, %v4270
        %v4272 = vrot.slane %v4041, 1
        %v4273 = vsel %vm1338, %v4270, %v4272
        %v4274 = vrot.slane %v4042, 1
        %v4275 = vrot.slane %v4043, 1
        %v4276 = vsel %vm1338, %v4274, %v4275
        %v4277 = vrot.slane %v4044, 1
        %v4278 = vsel %vm1338, %v4275, %v4277
        %v4279 = vrot.slane %v4045, 1
        %v4280 = vsel %vm1338, %v4277, %v4279
        %v4281 = vrot.slane %v4046, 1
        %v4282 = vrot.slane %v4047, 1
        %v4283 = vsel %vm1338, %v4281, %v4282
        %v4284 = vrot.slane %v4048, 1
        %v4285 = vsel %vm1338, %v4282, %v4284
        %v4286 = vrot.slane %v4049, 1
        %v4287 = vsel %vm1338, %v4284, %v4286
        %v4288 = vrot.slane %v4050, 1
        %v4289 = vrot.slane %v4051, 1
        %v4290 = vsel %vm1338, %v4288, %v4289
        %v4291 = vrot.slane %v4052, 1
        %v4292 = vsel %vm1338, %v4289, %v4291
        %v4293 = vrot.slane %v4053, 1
        %v4294 = vsel %vm1338, %v4291, %v4293
        %v4295 = vrot.slane %v4054, 1
        %v4296 = vrot.slane %v4055, 1
        %v4297 = vsel %vm1338, %v4295, %v4296
        %v4298 = vrot.slane %v4056, 1
        %v4299 = vsel %vm1338, %v4296, %v4298
        %v4300 = vrot.slane %v4057, 1
        %v4301 = vsel %vm1338, %v4298, %v4300
        %v4302 = vrot.slane %v4058, 1
        %v4303 = vrot.slane %v4059, 1
        %v4304 = vsel %vm1338, %v4302, %v4303
        %v4305 = vrot.slane %v4060, 1
        %v4306 = vsel %vm1338, %v4303, %v4305
        %v4307 = vrot.slane %v4061, 1
        %v4308 = vsel %vm1338, %v4305, %v4307
        %v4309 = vrot.slane %v4062, 1
        %v4310 = vrot.slane %v4063, 1
        %v4311 = vsel %vm1338, %v4309, %v4310
        %v4312 = vrot.slane %v4064, 1
        %v4313 = vsel %vm1338, %v4310, %v4312
        %v4314 = vrot.slane %v4065, 1
        %v4315 = vsel %vm1338, %v4312, %v4314
        %v4316 = vrot.slane %v4066, 1
        %v4317 = vrot.slane %v4067, 1
        %v4318 = vsel %vm1338, %v4316, %v4317
        %v4319 = vrot.slane %v4068, 1
        %v4320 = vsel %vm1338, %v4317, %v4319
        %v4321 = vrot.slane %v4069, 1
        %v4322 = vsel %vm1338, %v4319, %v4321
        %v4323 = vrot.slane %v4070, 1
        %v4324 = vrot.slane %v4071, 1
        %v4325 = vsel %vm1338, %v4323, %v4324
        %v4326 = vrot.slane %v4072, 1
        %v4327 = vsel %vm1338, %v4324, %v4326
        %v4328 = vrot.slane %v4073, 1
        %v4329 = vsel %vm1338, %v4326, %v4328
        %v4330 = vrot.slane %v4074, 1
        %v4331 = vrot.slane %v4075, 1
        %v4332 = vsel %vm1338, %v4330, %v4331
        %v4333 = vrot.slane %v4076, 1
        %v4334 = vsel %vm1338, %v4331, %v4333
        %v4335 = vrot.slane %v4077, 1
        %v4336 = vsel %vm1338, %v4333, %v4335
        %v4337 = vrot.slane %v4078, 1
        %v4338 = vrot.slane %v4079, 1
        %v4339 = vsel %vm1338, %v4337, %v4338
        %v4340 = vrot.slane %v4080, 1
        %v4341 = vsel %vm1338, %v4338, %v4340
        %v4342 = vrot.slane %v4081, 1
        %v4343 = vsel %vm1338, %v4340, %v4342
        %v4344 = vrot.slane %v4082, 1
        %v4345 = vrot.slane %v4083, 1
        %v4346 = vsel %vm1338, %v4344, %v4345
        %v4347 = vrot.slane %v4084, 1
        %v4348 = vsel %vm1338, %v4345, %v4347
        %v4349 = vrot.slane %v4085, 1
        %v4350 = vsel %vm1338, %v4347, %v4349
        %v4351 = vrot.slane %v4086, 1
        %v4352 = vrot.slane %v4087, 1
        %v4353 = vsel %vm1338, %v4351, %v4352
        %v4354 = vrot.slane %v4088, 1
        %v4355 = vsel %vm1338, %v4352, %v4354
        %v4356 = vrot.slane %v4089, 1
        %v4357 = vsel %vm1338, %v4354, %v4356
        %v4358 = vrot.slane %v4090, 1
        %v4359 = vrot.slane %v4091, 1
        %v4360 = vsel %vm1338, %v4358, %v4359
        %v4361 = vrot.slane %v4092, 1
        %v4362 = vsel %vm1338, %v4359, %v4361
        %v4363 = vrot.slane %v4093, 1
        %v4364 = vsel %vm1338, %v4361, %v4363
        %v4365 = vrot.slane %v4094, 1
        %v4366 = vrot.slane %v4095, 1
        %v4367 = vsel %vm1338, %v4365, %v4366
        %v4368 = vrot.slane %v4096, 1
        %v4369 = vsel %vm1338, %v4366, %v4368
        %v4370 = vrot.slane %v4097, 1
        %v4371 = vsel %vm1338, %v4368, %v4370
        %v4372 = vrot.slane %v4098, 1
        %v4373 = vrot.slane %v4099, 1
        %v4374 = vsel %vm1338, %v4372, %v4373
        %v4375 = vrot.slane %v4100, 1
        %v4376 = vsel %vm1338, %v4373, %v4375
        %v4377 = vrot.slane %v4101, 1
        %v4378 = vsel %vm1338, %v4375, %v4377
        %v4379 = vrot.slane %v4102, 1
        %v4380 = vrot.slane %v4103, 1
        %v4381 = vsel %vm1338, %v4379, %v4380
        %v4382 = vrot.slane %v4104, 1
        %v4383 = vsel %vm1338, %v4380, %v4382
        %v4384 = vrot.slane %v4105, 1
        %v4385 = vsel %vm1338, %v4382, %v4384
        %v4386 = vrot.slane %v4106, 1
        %v4387 = vrot.slane %v4107, 1
        %v4388 = vsel %vm1338, %v4386, %v4387
        %v4389 = vrot.slane %v4108, 1
        %v4390 = vsel %vm1338, %v4387, %v4389
        %v4391 = vrot.slane %v4109, 1
        %v4392 = vsel %vm1338, %v4389, %v4391
        %v4393 = vrot.slane %v4110, 1
        %v4394 = vrot.slane %v4111, 1
        %v4395 = vsel %vm1338, %v4393, %v4394
        %v4396 = vrot.slane %v4112, 1
        %v4397 = vsel %vm1338, %v4394, %v4396
        %v4398 = vrot.slane %v4113, 1
        %v4399 = vsel %vm1338, %v4396, %v4398
        %v4504 = vadd.f32 %v3901, %v4220
        %v4505 = vadd.f32 %v3902, %v4222
        %v4506 = vadd.f32 %v3903, %v4224
        %v4507 = vadd.f32 %v3904, %v4223
        %v4508 = vadd.f32 %v3905, %v4227
        %v4509 = vadd.f32 %v3906, %v4229
        %v4510 = vadd.f32 %v3907, %v4231
        %v4511 = vadd.f32 %v3908, %v4230
        %v4512 = vadd.f32 %v3909, %v4234
        %v4513 = vadd.f32 %v3910, %v4236
        %v4514 = vadd.f32 %v3911, %v4238
        %v4515 = vadd.f32 %v3912, %v4237
        %v4516 = vadd.f32 %v3913, %v4241
        %v4517 = vadd.f32 %v3914, %v4243
        %v4518 = vadd.f32 %v3915, %v4245
        %v4519 = vadd.f32 %v3916, %v4244
        %v4520 = vadd.f32 %v3917, %v4248
        %v4521 = vadd.f32 %v3918, %v4250
        %v4522 = vadd.f32 %v3919, %v4252
        %v4523 = vadd.f32 %v3920, %v4251
        %v4524 = vadd.f32 %v3921, %v4255
        %v4525 = vadd.f32 %v3922, %v4257
        %v4526 = vadd.f32 %v3923, %v4259
        %v4527 = vadd.f32 %v3924, %v4258
        %v4528 = vadd.f32 %v3925, %v4262
        %v4529 = vadd.f32 %v3926, %v4264
        %v4530 = vadd.f32 %v3927, %v4266
        %v4531 = vadd.f32 %v3928, %v4265
        %v4532 = vadd.f32 %v3929, %v4269
        %v4533 = vadd.f32 %v3930, %v4271
        %v4534 = vadd.f32 %v3931, %v4273
        %v4535 = vadd.f32 %v3932, %v4272
        %v4536 = vadd.f32 %v3933, %v4276
        %v4537 = vadd.f32 %v3934, %v4278
        %v4538 = vadd.f32 %v3935, %v4280
        %v4539 = vadd.f32 %v3936, %v4279
        %v4540 = vadd.f32 %v3937, %v4283
        %v4541 = vadd.f32 %v3938, %v4285
        %v4542 = vadd.f32 %v3939, %v4287
        %v4543 = vadd.f32 %v3940, %v4286
        %v4544 = vadd.f32 %v3941, %v4290
        %v4545 = vadd.f32 %v3942, %v4292
        %v4546 = vadd.f32 %v3943, %v4294
        %v4547 = vadd.f32 %v3944, %v4293
        %v4548 = vadd.f32 %v3945, %v4297
        %v4549 = vadd.f32 %v3946, %v4299
        %v4550 = vadd.f32 %v3947, %v4301
        %v4551 = vadd.f32 %v3948, %v4300
        %v4552 = vadd.f32 %v3949, %v4304
        %v4553 = vadd.f32 %v3950, %v4306
        %v4554 = vadd.f32 %v3951, %v4308
        %v4555 = vadd.f32 %v3952, %v4307
        %v4556 = vadd.f32 %v3953, %v4311
        %v4557 = vadd.f32 %v3954, %v4313
        %v4558 = vadd.f32 %v3955, %v4315
        %v4559 = vadd.f32 %v3956, %v4314
        %v4560 = vadd.f32 %v3957, %v4318
        %v4561 = vadd.f32 %v3958, %v4320
        %v4562 = vadd.f32 %v3959, %v4322
        %v4563 = vadd.f32 %v3960, %v4321
        %v4564 = vadd.f32 %v3961, %v4325
        %v4565 = vadd.f32 %v3962, %v4327
        %v4566 = vadd.f32 %v3963, %v4329
        %v4567 = vadd.f32 %v3964, %v4328
        %v4568 = vadd.f32 %v3965, %v4332
        %v4569 = vadd.f32 %v3966, %v4334
        %v4570 = vadd.f32 %v3967, %v4336
        %v4571 = vadd.f32 %v3968, %v4335
        %v4572 = vadd.f32 %v3969, %v4339
        %v4573 = vadd.f32 %v3970, %v4341
        %v4574 = vadd.f32 %v3971, %v4343
        %v4575 = vadd.f32 %v3972, %v4342
        %v4576 = vadd.f32 %v3973, %v4346
        %v4577 = vadd.f32 %v3974, %v4348
        %v4578 = vadd.f32 %v3975, %v4350
        %v4579 = vadd.f32 %v3976, %v4349
        %v4580 = vadd.f32 %v3977, %v4353
        %v4581 = vadd.f32 %v3978, %v4355
        %v4582 = vadd.f32 %v3979, %v4357
        %v4583 = vadd.f32 %v3980, %v4356
        %v4584 = vadd.f32 %v3981, %v4360
        %v4585 = vadd.f32 %v3982, %v4362
        %v4586 = vadd.f32 %v3983, %v4364
        %v4587 = vadd.f32 %v3984, %v4363
        %v4588 = vadd.f32 %v3985, %v4367
        %v4589 = vadd.f32 %v3986, %v4369
        %v4590 = vadd.f32 %v3987, %v4371
        %v4591 = vadd.f32 %v3988, %v4370
        %v4592 = vadd.f32 %v3989, %v4374
        %v4593 = vadd.f32 %v3990, %v4376
        %v4594 = vadd.f32 %v3991, %v4378
        %v4595 = vadd.f32 %v3992, %v4377
        %v4596 = vadd.f32 %v3993, %v4381
        %v4597 = vadd.f32 %v3994, %v4383
        %v4598 = vadd.f32 %v3995, %v4385
        %v4599 = vadd.f32 %v3996, %v4384
        %v4600 = vadd.f32 %v3997, %v4388
        %v4601 = vadd.f32 %v3998, %v4390
        %v4602 = vadd.f32 %v3999, %v4392
        %v4603 = vadd.f32 %v4000, %v4391
        %v4604 = vadd.f32 %v4001, %v4395
        %v4605 = vadd.f32 %v4002, %v4397
        %v4606 = vadd.f32 %v4003, %v4399
        %v4607 = vadd.f32 %v4004, %v4398
        %v4608 = vld [vmem:[%s1 + $0x8] sm:$0x1]
        %v4609 = vlaneseq
        %v4610 = vshrl.u32 %v4609, 7
        %v4611 = vsub.s32 0, %v4610
        %v4612 = vrot.slane %v4608, %v4611
        %v4613 = vmul.f32 %v436, %v4612
        %v4614 = vmul.f32 %v441, %v4612
        %v4615 = vmul.f32 %v446, %v4612
        %v4616 = vmul.f32 %v451, %v4612
        %v4617 = vmul.f32 %v456, %v4612
        %v4618 = vmul.f32 %v461, %v4612
        %v4619 = vmul.f32 %v466, %v4612
        %v4620 = vmul.f32 %v471, %v4612
        %v4621 = vmul.f32 %v476, %v4612
        %v4622 = vmul.f32 %v481, %v4612
        %v4623 = vmul.f32 %v486, %v4612
        %v4624 = vmul.f32 %v491, %v4612
        %v4625 = vmul.f32 %v496, %v4612
        %v4626 = vmul.f32 %v501, %v4612
        %v4627 = vmul.f32 %v506, %v4612
        %v4628 = vmul.f32 %v511, %v4612
        %v4629 = vmul.f32 %v516, %v4612
        %v4630 = vmul.f32 %v521, %v4612
        %v4631 = vmul.f32 %v526, %v4612
        %v4632 = vmul.f32 %v531, %v4612
        %v4633 = vmul.f32 %v536, %v4612
        %v4634 = vmul.f32 %v541, %v4612
        %v4635 = vmul.f32 %v546, %v4612
        %v4636 = vmul.f32 %v551, %v4612
        %v4637 = vmul.f32 %v556, %v4612
        %v4638 = vmul.f32 %v561, %v4612
        %v4639 = vmul.f32 %v566, %v4612
        %v4640 = vmul.f32 %v571, %v4612
        %v4641 = vmul.f32 %v576, %v4612
        %v4642 = vmul.f32 %v581, %v4612
        %v4643 = vmul.f32 %v586, %v4612
        %v4644 = vmul.f32 %v591, %v4612
        %v4645 = vmul.f32 %v596, %v4612
        %v4646 = vmul.f32 %v601, %v4612
        %v4647 = vmul.f32 %v606, %v4612
        %v4648 = vmul.f32 %v611, %v4612
        %v4649 = vmul.f32 %v616, %v4612
        %v4650 = vmul.f32 %v621, %v4612
        %v4651 = vmul.f32 %v626, %v4612
        %v4652 = vmul.f32 %v631, %v4612
        %v4653 = vmul.f32 %v636, %v4612
        %v4654 = vmul.f32 %v641, %v4612
        %v4655 = vmul.f32 %v646, %v4612
        %v4656 = vmul.f32 %v651, %v4612
        %v4657 = vmul.f32 %v656, %v4612
        %v4658 = vmul.f32 %v661, %v4612
        %v4659 = vmul.f32 %v666, %v4612
        %v4660 = vmul.f32 %v671, %v4612
        %v4661 = vmul.f32 %v676, %v4612
        %v4662 = vmul.f32 %v681, %v4612
        %v4663 = vmul.f32 %v686, %v4612
        %v4664 = vmul.f32 %v691, %v4612
        %v4665 = vmul.f32 %v696, %v4612
        %v4666 = vmul.f32 %v701, %v4612
        %v4667 = vmul.f32 %v706, %v4612
        %v4668 = vmul.f32 %v711, %v4612
        %v4669 = vmul.f32 %v716, %v4612
        %v4670 = vmul.f32 %v721, %v4612
        %v4671 = vmul.f32 %v726, %v4612
        %v4672 = vmul.f32 %v731, %v4612
        %v4673 = vmul.f32 %v736, %v4612
        %v4674 = vmul.f32 %v741, %v4612
        %v4675 = vmul.f32 %v746, %v4612
        %v4676 = vmul.f32 %v751, %v4612
        %v4677 = vmul.f32 %v756, %v4612
        %v4678 = vmul.f32 %v761, %v4612
        %v4679 = vmul.f32 %v766, %v4612
        %v4680 = vmul.f32 %v771, %v4612
        %v4681 = vmul.f32 %v776, %v4612
        %v4682 = vmul.f32 %v781, %v4612
        %v4683 = vmul.f32 %v786, %v4612
        %v4684 = vmul.f32 %v791, %v4612
        %v4685 = vmul.f32 %v796, %v4612
        %v4686 = vmul.f32 %v801, %v4612
        %v4687 = vmul.f32 %v806, %v4612
        %v4688 = vmul.f32 %v811, %v4612
        %v4689 = vmul.f32 %v816, %v4612
        %v4690 = vmul.f32 %v821, %v4612
        %v4691 = vmul.f32 %v826, %v4612
        %v4692 = vmul.f32 %v831, %v4612
        %v4693 = vmul.f32 %v836, %v4612
        %v4694 = vmul.f32 %v841, %v4612
        %v4695 = vmul.f32 %v846, %v4612
        %v4696 = vmul.f32 %v851, %v4612
        %v4697 = vmul.f32 %v856, %v4612
        %v4698 = vmul.f32 %v861, %v4612
        %v4699 = vmul.f32 %v866, %v4612
        %v4700 = vmul.f32 %v871, %v4612
        %v4701 = vmul.f32 %v876, %v4612
        %v4702 = vmul.f32 %v881, %v4612
        %v4703 = vmul.f32 %v886, %v4612
        %v4704 = vmul.f32 %v891, %v4612
        %v4705 = vmul.f32 %v896, %v4612
        %v4706 = vmul.f32 %v901, %v4612
        %v4707 = vmul.f32 %v906, %v4612
        %v4708 = vmul.f32 %v911, %v4612
        %v4709 = vmul.f32 %v2337, %v4612
        %v4710 = vmul.f32 %v2342, %v4612
        %v4711 = vmul.f32 %v2347, %v4612
        %v4712 = vmul.f32 %v2352, %v4612
        %v4713 = vmul.f32 %v3776, %v4612
        %v4714 = vmul.f32 %v3781, %v4612
        %v4715 = vmul.f32 %v3786, %v4612
        %v4716 = vmul.f32 %v3791, %v4612
        %v4821 = vrot.slane %v4613, 2
        %v4822 = vrot.slane %v4614, 2
        %v4823 = vsel %vm1942, %v4821, %v4822
        %v4824 = vrot.slane %v4615, 2
        %v4825 = vsel %vm1942, %v4822, %v4824
        %v4826 = vrot.slane %v4616, 2
        %v4827 = vsel %vm1942, %v4824, %v4826
        %v4828 = vrot.slane %v4617, 2
        %v4829 = vrot.slane %v4618, 2
        %v4830 = vsel %vm1942, %v4828, %v4829
        %v4831 = vrot.slane %v4619, 2
        %v4832 = vsel %vm1942, %v4829, %v4831
        %v4833 = vrot.slane %v4620, 2
        %v4834 = vsel %vm1942, %v4831, %v4833
        %v4835 = vrot.slane %v4621, 2
        %v4836 = vrot.slane %v4622, 2
        %v4837 = vsel %vm1942, %v4835, %v4836
        %v4838 = vrot.slane %v4623, 2
        %v4839 = vsel %vm1942, %v4836, %v4838
        %v4840 = vrot.slane %v4624, 2
        %v4841 = vsel %vm1942, %v4838, %v4840
        %v4842 = vrot.slane %v4625, 2
        %v4843 = vrot.slane %v4626, 2
        %v4844 = vsel %vm1942, %v4842, %v4843
        %v4845 = vrot.slane %v4627, 2
        %v4846 = vsel %vm1942, %v4843, %v4845
        %v4847 = vrot.slane %v4628, 2
        %v4848 = vsel %vm1942, %v4845, %v4847
        %v4849 = vrot.slane %v4629, 2
        %v4850 = vrot.slane %v4630, 2
        %v4851 = vsel %vm1942, %v4849, %v4850
        %v4852 = vrot.slane %v4631, 2
        %v4853 = vsel %vm1942, %v4850, %v4852
        %v4854 = vrot.slane %v4632, 2
        %v4855 = vsel %vm1942, %v4852, %v4854
        %v4856 = vrot.slane %v4633, 2
        %v4857 = vrot.slane %v4634, 2
        %v4858 = vsel %vm1942, %v4856, %v4857
        %v4859 = vrot.slane %v4635, 2
        %v4860 = vsel %vm1942, %v4857, %v4859
        %v4861 = vrot.slane %v4636, 2
        %v4862 = vsel %vm1942, %v4859, %v4861
        %v4863 = vrot.slane %v4637, 2
        %v4864 = vrot.slane %v4638, 2
        %v4865 = vsel %vm1942, %v4863, %v4864
        %v4866 = vrot.slane %v4639, 2
        %v4867 = vsel %vm1942, %v4864, %v4866
        %v4868 = vrot.slane %v4640, 2
        %v4869 = vsel %vm1942, %v4866, %v4868
        %v4870 = vrot.slane %v4641, 2
        %v4871 = vrot.slane %v4642, 2
        %v4872 = vsel %vm1942, %v4870, %v4871
        %v4873 = vrot.slane %v4643, 2
        %v4874 = vsel %vm1942, %v4871, %v4873
        %v4875 = vrot.slane %v4644, 2
        %v4876 = vsel %vm1942, %v4873, %v4875
        %v4877 = vrot.slane %v4645, 2
        %v4878 = vrot.slane %v4646, 2
        %v4879 = vsel %vm1942, %v4877, %v4878
        %v4880 = vrot.slane %v4647, 2
        %v4881 = vsel %vm1942, %v4878, %v4880
        %v4882 = vrot.slane %v4648, 2
        %v4883 = vsel %vm1942, %v4880, %v4882
        %v4884 = vrot.slane %v4649, 2
        %v4885 = vrot.slane %v4650, 2
        %v4886 = vsel %vm1942, %v4884, %v4885
        %v4887 = vrot.slane %v4651, 2
        %v4888 = vsel %vm1942, %v4885, %v4887
        %v4889 = vrot.slane %v4652, 2
        %v4890 = vsel %vm1942, %v4887, %v4889
        %v4891 = vrot.slane %v4653, 2
        %v4892 = vrot.slane %v4654, 2
        %v4893 = vsel %vm1942, %v4891, %v4892
        %v4894 = vrot.slane %v4655, 2
        %v4895 = vsel %vm1942, %v4892, %v4894
        %v4896 = vrot.slane %v4656, 2
        %v4897 = vsel %vm1942, %v4894, %v4896
        %v4898 = vrot.slane %v4657, 2
        %v4899 = vrot.slane %v4658, 2
        %v4900 = vsel %vm1942, %v4898, %v4899
        %v4901 = vrot.slane %v4659, 2
        %v4902 = vsel %vm1942, %v4899, %v4901
        %v4903 = vrot.slane %v4660, 2
        %v4904 = vsel %vm1942, %v4901, %v4903
        %v4905 = vrot.slane %v4661, 2
        %v4906 = vrot.slane %v4662, 2
        %v4907 = vsel %vm1942, %v4905, %v4906
        %v4908 = vrot.slane %v4663, 2
        %v4909 = vsel %vm1942, %v4906, %v4908
        %v4910 = vrot.slane %v4664, 2
        %v4911 = vsel %vm1942, %v4908, %v4910
        %v4912 = vrot.slane %v4665, 2
        %v4913 = vrot.slane %v4666, 2
        %v4914 = vsel %vm1942, %v4912, %v4913
        %v4915 = vrot.slane %v4667, 2
        %v4916 = vsel %vm1942, %v4913, %v4915
        %v4917 = vrot.slane %v4668, 2
        %v4918 = vsel %vm1942, %v4915, %v4917
        %v4919 = vrot.slane %v4669, 2
        %v4920 = vrot.slane %v4670, 2
        %v4921 = vsel %vm1942, %v4919, %v4920
        %v4922 = vrot.slane %v4671, 2
        %v4923 = vsel %vm1942, %v4920, %v4922
        %v4924 = vrot.slane %v4672, 2
        %v4925 = vsel %vm1942, %v4922, %v4924
        %v4926 = vrot.slane %v4673, 2
        %v4927 = vrot.slane %v4674, 2
        %v4928 = vsel %vm1942, %v4926, %v4927
        %v4929 = vrot.slane %v4675, 2
        %v4930 = vsel %vm1942, %v4927, %v4929
        %v4931 = vrot.slane %v4676, 2
        %v4932 = vsel %vm1942, %v4929, %v4931
        %v4933 = vrot.slane %v4677, 2
        %v4934 = vrot.slane %v4678, 2
        %v4935 = vsel %vm1942, %v4933, %v4934
        %v4936 = vrot.slane %v4679, 2
        %v4937 = vsel %vm1942, %v4934, %v4936
        %v4938 = vrot.slane %v4680, 2
        %v4939 = vsel %vm1942, %v4936, %v4938
        %v4940 = vrot.slane %v4681, 2
        %v4941 = vrot.slane %v4682, 2
        %v4942 = vsel %vm1942, %v4940, %v4941
        %v4943 = vrot.slane %v4683, 2
        %v4944 = vsel %vm1942, %v4941, %v4943
        %v4945 = vrot.slane %v4684, 2
        %v4946 = vsel %vm1942, %v4943, %v4945
        %v4947 = vrot.slane %v4685, 2
        %v4948 = vrot.slane %v4686, 2
        %v4949 = vsel %vm1942, %v4947, %v4948
        %v4950 = vrot.slane %v4687, 2
        %v4951 = vsel %vm1942, %v4948, %v4950
        %v4952 = vrot.slane %v4688, 2
        %v4953 = vsel %vm1942, %v4950, %v4952
        %v4954 = vrot.slane %v4689, 2
        %v4955 = vrot.slane %v4690, 2
        %v4956 = vsel %vm1942, %v4954, %v4955
        %v4957 = vrot.slane %v4691, 2
        %v4958 = vsel %vm1942, %v4955, %v4957
        %v4959 = vrot.slane %v4692, 2
        %v4960 = vsel %vm1942, %v4957, %v4959
        %v4961 = vrot.slane %v4693, 2
        %v4962 = vrot.slane %v4694, 2
        %v4963 = vsel %vm1942, %v4961, %v4962
        %v4964 = vrot.slane %v4695, 2
        %v4965 = vsel %vm1942, %v4962, %v4964
        %v4966 = vrot.slane %v4696, 2
        %v4967 = vsel %vm1942, %v4964, %v4966
        %v4968 = vrot.slane %v4697, 2
        %v4969 = vrot.slane %v4698, 2
        %v4970 = vsel %vm1942, %v4968, %v4969
        %v4971 = vrot.slane %v4699, 2
        %v4972 = vsel %vm1942, %v4969, %v4971
        %v4973 = vrot.slane %v4700, 2
        %v4974 = vsel %vm1942, %v4971, %v4973
        %v4975 = vrot.slane %v4701, 2
        %v4976 = vrot.slane %v4702, 2
        %v4977 = vsel %vm1942, %v4975, %v4976
        %v4978 = vrot.slane %v4703, 2
        %v4979 = vsel %vm1942, %v4976, %v4978
        %v4980 = vrot.slane %v4704, 2
        %v4981 = vsel %vm1942, %v4978, %v4980
        %v4982 = vrot.slane %v4705, 2
        %v4983 = vrot.slane %v4706, 2
        %v4984 = vsel %vm1942, %v4982, %v4983
        %v4985 = vrot.slane %v4707, 2
        %v4986 = vsel %vm1942, %v4983, %v4985
        %v4987 = vrot.slane %v4708, 2
        %v4988 = vsel %vm1942, %v4985, %v4987
        %v4989 = vrot.slane %v4709, 2
        %v4990 = vrot.slane %v4710, 2
        %v4991 = vsel %vm1942, %v4989, %v4990
        %v4992 = vrot.slane %v4711, 2
        %v4993 = vsel %vm1942, %v4990, %v4992
        %v4994 = vrot.slane %v4712, 2
        %v4995 = vsel %vm1942, %v4992, %v4994
        %v4996 = vrot.slane %v4713, 2
        %v4997 = vrot.slane %v4714, 2
        %v4998 = vsel %vm1942, %v4996, %v4997
        %v4999 = vrot.slane %v4715, 2
        %v5000 = vsel %vm1942, %v4997, %v4999
        %v5001 = vrot.slane %v4716, 2
        %v5002 = vsel %vm1942, %v4999, %v5001
        %v5107 = vadd.f32 %v4504, %v4823
        %v5108 = vadd.f32 %v4505, %v4825
        %v5109 = vadd.f32 %v4506, %v4827
        %v5110 = vadd.f32 %v4507, %v4826
        %v5111 = vadd.f32 %v4508, %v4830
        %v5112 = vadd.f32 %v4509, %v4832
        %v5113 = vadd.f32 %v4510, %v4834
        %v5114 = vadd.f32 %v4511, %v4833
        %v5115 = vadd.f32 %v4512, %v4837
        %v5116 = vadd.f32 %v4513, %v4839
        %v5117 = vadd.f32 %v4514, %v4841
        %v5118 = vadd.f32 %v4515, %v4840
        %v5119 = vadd.f32 %v4516, %v4844
        %v5120 = vadd.f32 %v4517, %v4846
        %v5121 = vadd.f32 %v4518, %v4848
        %v5122 = vadd.f32 %v4519, %v4847
        %v5123 = vadd.f32 %v4520, %v4851
        %v5124 = vadd.f32 %v4521, %v4853
        %v5125 = vadd.f32 %v4522, %v4855
        %v5126 = vadd.f32 %v4523, %v4854
        %v5127 = vadd.f32 %v4524, %v4858
        %v5128 = vadd.f32 %v4525, %v4860
        %v5129 = vadd.f32 %v4526, %v4862
        %v5130 = vadd.f32 %v4527, %v4861
        %v5131 = vadd.f32 %v4528, %v4865
        %v5132 = vadd.f32 %v4529, %v4867
        %v5133 = vadd.f32 %v4530, %v4869
        %v5134 = vadd.f32 %v4531, %v4868
        %v5135 = vadd.f32 %v4532, %v4872
        %v5136 = vadd.f32 %v4533, %v4874
        %v5137 = vadd.f32 %v4534, %v4876
        %v5138 = vadd.f32 %v4535, %v4875
        %v5139 = vadd.f32 %v4536, %v4879
        %v5140 = vadd.f32 %v4537, %v4881
        %v5141 = vadd.f32 %v4538, %v4883
        %v5142 = vadd.f32 %v4539, %v4882
        %v5143 = vadd.f32 %v4540, %v4886
        %v5144 = vadd.f32 %v4541, %v4888
        %v5145 = vadd.f32 %v4542, %v4890
        %v5146 = vadd.f32 %v4543, %v4889
        %v5147 = vadd.f32 %v4544, %v4893
        %v5148 = vadd.f32 %v4545, %v4895
        %v5149 = vadd.f32 %v4546, %v4897
        %v5150 = vadd.f32 %v4547, %v4896
        %v5151 = vadd.f32 %v4548, %v4900
        %v5152 = vadd.f32 %v4549, %v4902
        %v5153 = vadd.f32 %v4550, %v4904
        %v5154 = vadd.f32 %v4551, %v4903
        %v5155 = vadd.f32 %v4552, %v4907
        %v5156 = vadd.f32 %v4553, %v4909
        %v5157 = vadd.f32 %v4554, %v4911
        %v5158 = vadd.f32 %v4555, %v4910
        %v5159 = vadd.f32 %v4556, %v4914
        %v5160 = vadd.f32 %v4557, %v4916
        %v5161 = vadd.f32 %v4558, %v4918
        %v5162 = vadd.f32 %v4559, %v4917
        %v5163 = vadd.f32 %v4560, %v4921
        %v5164 = vadd.f32 %v4561, %v4923
        %v5165 = vadd.f32 %v4562, %v4925
        %v5166 = vadd.f32 %v4563, %v4924
        %v5167 = vadd.f32 %v4564, %v4928
        %v5168 = vadd.f32 %v4565, %v4930
        %v5169 = vadd.f32 %v4566, %v4932
        %v5170 = vadd.f32 %v4567, %v4931
        %v5171 = vadd.f32 %v4568, %v4935
        %v5172 = vadd.f32 %v4569, %v4937
        %v5173 = vadd.f32 %v4570, %v4939
        %v5174 = vadd.f32 %v4571, %v4938
        %v5175 = vadd.f32 %v4572, %v4942
        %v5176 = vadd.f32 %v4573, %v4944
        %v5177 = vadd.f32 %v4574, %v4946
        %v5178 = vadd.f32 %v4575, %v4945
        %v5179 = vadd.f32 %v4576, %v4949
        %v5180 = vadd.f32 %v4577, %v4951
        %v5181 = vadd.f32 %v4578, %v4953
        %v5182 = vadd.f32 %v4579, %v4952
        %v5183 = vadd.f32 %v4580, %v4956
        %v5184 = vadd.f32 %v4581, %v4958
        %v5185 = vadd.f32 %v4582, %v4960
        %v5186 = vadd.f32 %v4583, %v4959
        %v5187 = vadd.f32 %v4584, %v4963
        %v5188 = vadd.f32 %v4585, %v4965
        %v5189 = vadd.f32 %v4586, %v4967
        %v5190 = vadd.f32 %v4587, %v4966
        %v5191 = vadd.f32 %v4588, %v4970
        %v5192 = vadd.f32 %v4589, %v4972
        %v5193 = vadd.f32 %v4590, %v4974
        %v5194 = vadd.f32 %v4591, %v4973
        %v5195 = vadd.f32 %v4592, %v4977
        %v5196 = vadd.f32 %v4593, %v4979
        %v5197 = vadd.f32 %v4594, %v4981
        %v5198 = vadd.f32 %v4595, %v4980
        %v5199 = vadd.f32 %v4596, %v4984
        %v5200 = vadd.f32 %v4597, %v4986
        %v5201 = vadd.f32 %v4598, %v4988
        %v5202 = vadd.f32 %v4599, %v4987
        %v5203 = vadd.f32 %v4600, %v4991
        %v5204 = vadd.f32 %v4601, %v4993
        %v5205 = vadd.f32 %v4602, %v4995
        %v5206 = vadd.f32 %v4603, %v4994
        %v5207 = vadd.f32 %v4604, %v4998
        %v5208 = vadd.f32 %v4605, %v5000
        %v5209 = vadd.f32 %v4606, %v5002
        %v5210 = vadd.f32 %v4607, %v5001
        %v5212 = vlaneseq
        %v5213 = vshrl.u32 %v5212, 7
        %v5214 = vsub.s32 0, %v5213
        %v5215 = vrot.slane %v278, %v5214
        %v5217 = vadd.f32 %v5107, %v5215
        %v5218 = vadd.f32 %v5108, %v5215
        %v5219 = vadd.f32 %v5109, %v5215
        %v5220 = vadd.f32 %v5110, %v5215
        %v5221 = vadd.f32 %v5111, %v5215
        %v5222 = vadd.f32 %v5112, %v5215
        %v5223 = vadd.f32 %v5113, %v5215
        %v5224 = vadd.f32 %v5114, %v5215
        %v5225 = vadd.f32 %v5115, %v5215
        %v5226 = vadd.f32 %v5116, %v5215
        %v5227 = vadd.f32 %v5117, %v5215
        %v5228 = vadd.f32 %v5118, %v5215
        %v5229 = vadd.f32 %v5119, %v5215
        %v5230 = vadd.f32 %v5120, %v5215
        %v5231 = vadd.f32 %v5121, %v5215
        %v5232 = vadd.f32 %v5122, %v5215
        %v5233 = vadd.f32 %v5123, %v5215
        %v5234 = vadd.f32 %v5124, %v5215
        %v5235 = vadd.f32 %v5125, %v5215
        %v5236 = vadd.f32 %v5126, %v5215
        %v5237 = vadd.f32 %v5127, %v5215
        %v5238 = vadd.f32 %v5128, %v5215
        %v5239 = vadd.f32 %v5129, %v5215
        %v5240 = vadd.f32 %v5130, %v5215
        %v5241 = vadd.f32 %v5131, %v5215
        %v5242 = vadd.f32 %v5132, %v5215
        %v5243 = vadd.f32 %v5133, %v5215
        %v5244 = vadd.f32 %v5134, %v5215
        %v5245 = vadd.f32 %v5135, %v5215
        %v5246 = vadd.f32 %v5136, %v5215
        %v5247 = vadd.f32 %v5137, %v5215
        %v5248 = vadd.f32 %v5138, %v5215
        %v5249 = vadd.f32 %v5139, %v5215
        %v5250 = vadd.f32 %v5140, %v5215
        %v5251 = vadd.f32 %v5141, %v5215
        %v5252 = vadd.f32 %v5142, %v5215
        %v5253 = vadd.f32 %v5143, %v5215
        %v5254 = vadd.f32 %v5144, %v5215
        %v5255 = vadd.f32 %v5145, %v5215
        %v5256 = vadd.f32 %v5146, %v5215
        %v5257 = vadd.f32 %v5147, %v5215
        %v5258 = vadd.f32 %v5148, %v5215
        %v5259 = vadd.f32 %v5149, %v5215
        %v5260 = vadd.f32 %v5150, %v5215
        %v5261 = vadd.f32 %v5151, %v5215
        %v5262 = vadd.f32 %v5152, %v5215
        %v5263 = vadd.f32 %v5153, %v5215
        %v5264 = vadd.f32 %v5154, %v5215
        %v5265 = vadd.f32 %v5155, %v5215
        %v5266 = vadd.f32 %v5156, %v5215
        %v5267 = vadd.f32 %v5157, %v5215
        %v5268 = vadd.f32 %v5158, %v5215
        %v5269 = vadd.f32 %v5159, %v5215
        %v5270 = vadd.f32 %v5160, %v5215
        %v5271 = vadd.f32 %v5161, %v5215
        %v5272 = vadd.f32 %v5162, %v5215
        %v5273 = vadd.f32 %v5163, %v5215
        %v5274 = vadd.f32 %v5164, %v5215
        %v5275 = vadd.f32 %v5165, %v5215
        %v5276 = vadd.f32 %v5166, %v5215
        %v5277 = vadd.f32 %v5167, %v5215
        %v5278 = vadd.f32 %v5168, %v5215
        %v5279 = vadd.f32 %v5169, %v5215
        %v5280 = vadd.f32 %v5170, %v5215
        %v5281 = vadd.f32 %v5171, %v5215
        %v5282 = vadd.f32 %v5172, %v5215
        %v5283 = vadd.f32 %v5173, %v5215
        %v5284 = vadd.f32 %v5174, %v5215
        %v5285 = vadd.f32 %v5175, %v5215
        %v5286 = vadd.f32 %v5176, %v5215
        %v5287 = vadd.f32 %v5177, %v5215
        %v5288 = vadd.f32 %v5178, %v5215
        %v5289 = vadd.f32 %v5179, %v5215
        %v5290 = vadd.f32 %v5180, %v5215
        %v5291 = vadd.f32 %v5181, %v5215
        %v5292 = vadd.f32 %v5182, %v5215
        %v5293 = vadd.f32 %v5183, %v5215
        %v5294 = vadd.f32 %v5184, %v5215
        %v5295 = vadd.f32 %v5185, %v5215
        %v5296 = vadd.f32 %v5186, %v5215
        %v5297 = vadd.f32 %v5187, %v5215
        %v5298 = vadd.f32 %v5188, %v5215
        %v5299 = vadd.f32 %v5189, %v5215
        %v5300 = vadd.f32 %v5190, %v5215
        %v5301 = vadd.f32 %v5191, %v5215
        %v5302 = vadd.f32 %v5192, %v5215
        %v5303 = vadd.f32 %v5193, %v5215
        %v5304 = vadd.f32 %v5194, %v5215
        %v5305 = vadd.f32 %v5195, %v5215
        %v5306 = vadd.f32 %v5196, %v5215
        %v5307 = vadd.f32 %v5197, %v5215
        %v5308 = vadd.f32 %v5198, %v5215
        %v5309 = vadd.f32 %v5199, %v5215
        %v5310 = vadd.f32 %v5200, %v5215
        %v5311 = vadd.f32 %v5201, %v5215
        %v5312 = vadd.f32 %v5202, %v5215
        %v5313 = vadd.f32 %v5203, %v5215
        %v5314 = vadd.f32 %v5204, %v5215
        %v5315 = vadd.f32 %v5205, %v5215
        %v5316 = vadd.f32 %v5206, %v5215
        %v5317 = vadd.f32 %v5207, %v5215
        %v5318 = vadd.f32 %v5208, %v5215
        %v5319 = vadd.f32 %v5209, %v5215
        %v5320 = vadd.f32 %v5210, %v5215
        %v5321 = vmax.f32 %v5217, 0.0
        %v5322 = vmax.f32 %v5218, 0.0
        %v5323 = vmax.f32 %v5219, 0.0
        %v5324 = vmax.f32 %v5220, 0.0
        %v5325 = vmax.f32 %v5221, 0.0
        %v5326 = vmax.f32 %v5222, 0.0
        %v5327 = vmax.f32 %v5223, 0.0
        %v5328 = vmax.f32 %v5224, 0.0
        %v5329 = vmax.f32 %v5225, 0.0
        %v5330 = vmax.f32 %v5226, 0.0
        %v5331 = vmax.f32 %v5227, 0.0
        %v5332 = vmax.f32 %v5228, 0.0
        %v5333 = vmax.f32 %v5229, 0.0
        %v5334 = vmax.f32 %v5230, 0.0
        %v5335 = vmax.f32 %v5231, 0.0
        %v5336 = vmax.f32 %v5232, 0.0
        %v5337 = vmax.f32 %v5233, 0.0
        %v5338 = vmax.f32 %v5234, 0.0
        %v5339 = vmax.f32 %v5235, 0.0
        %v5340 = vmax.f32 %v5236, 0.0
        %v5341 = vmax.f32 %v5237, 0.0
        %v5342 = vmax.f32 %v5238, 0.0
        %v5343 = vmax.f32 %v5239, 0.0
        %v5344 = vmax.f32 %v5240, 0.0
        %v5345 = vmax.f32 %v5241, 0.0
        %v5346 = vmax.f32 %v5242, 0.0
        %v5347 = vmax.f32 %v5243, 0.0
        %v5348 = vmax.f32 %v5244, 0.0
        %v5349 = vmax.f32 %v5245, 0.0
        %v5350 = vmax.f32 %v5246, 0.0
        %v5351 = vmax.f32 %v5247, 0.0
        %v5352 = vmax.f32 %v5248, 0.0
        %v5353 = vmax.f32 %v5249, 0.0
        %v5354 = vmax.f32 %v5250, 0.0
        %v5355 = vmax.f32 %v5251, 0.0
        %v5356 = vmax.f32 %v5252, 0.0
        %v5357 = vmax.f32 %v5253, 0.0
        %v5358 = vmax.f32 %v5254, 0.0
        %v5359 = vmax.f32 %v5255, 0.0
        %v5360 = vmax.f32 %v5256, 0.0
        %v5361 = vmax.f32 %v5257, 0.0
        %v5362 = vmax.f32 %v5258, 0.0
        %v5363 = vmax.f32 %v5259, 0.0
        %v5364 = vmax.f32 %v5260, 0.0
        %v5365 = vmax.f32 %v5261, 0.0
        %v5366 = vmax.f32 %v5262, 0.0
        %v5367 = vmax.f32 %v5263, 0.0
        %v5368 = vmax.f32 %v5264, 0.0
        %v5369 = vmax.f32 %v5265, 0.0
        %v5370 = vmax.f32 %v5266, 0.0
        %v5371 = vmax.f32 %v5267, 0.0
        %v5372 = vmax.f32 %v5268, 0.0
        %v5373 = vmax.f32 %v5269, 0.0
        %v5374 = vmax.f32 %v5270, 0.0
        %v5375 = vmax.f32 %v5271, 0.0
        %v5376 = vmax.f32 %v5272, 0.0
        %v5377 = vmax.f32 %v5273, 0.0
        %v5378 = vmax.f32 %v5274, 0.0
        %v5379 = vmax.f32 %v5275, 0.0
        %v5380 = vmax.f32 %v5276, 0.0
        %v5381 = vmax.f32 %v5277, 0.0
        %v5382 = vmax.f32 %v5278, 0.0
        %v5383 = vmax.f32 %v5279, 0.0
        %v5384 = vmax.f32 %v5280, 0.0
        %v5385 = vmax.f32 %v5281, 0.0
        %v5386 = vmax.f32 %v5282, 0.0
        %v5387 = vmax.f32 %v5283, 0.0
        %v5388 = vmax.f32 %v5284, 0.0
        %v5389 = vmax.f32 %v5285, 0.0
        %v5390 = vmax.f32 %v5286, 0.0
        %v5391 = vmax.f32 %v5287, 0.0
        %v5392 = vmax.f32 %v5288, 0.0
        %v5393 = vmax.f32 %v5289, 0.0
        %v5394 = vmax.f32 %v5290, 0.0
        %v5395 = vmax.f32 %v5291, 0.0
        %v5396 = vmax.f32 %v5292, 0.0
        %v5397 = vmax.f32 %v5293, 0.0
        %v5398 = vmax.f32 %v5294, 0.0
        %v5399 = vmax.f32 %v5295, 0.0
        %v5400 = vmax.f32 %v5296, 0.0
        %v5401 = vmax.f32 %v5297, 0.0
        %v5402 = vmax.f32 %v5298, 0.0
        %v5403 = vmax.f32 %v5299, 0.0
        %v5404 = vmax.f32 %v5300, 0.0
        %v5405 = vmax.f32 %v5301, 0.0
        %v5406 = vmax.f32 %v5302, 0.0
        %v5407 = vmax.f32 %v5303, 0.0
        %v5408 = vmax.f32 %v5304, 0.0
        %v5409 = vmax.f32 %v5305, 0.0
        %v5410 = vmax.f32 %v5306, 0.0
        %v5411 = vmax.f32 %v5307, 0.0
        %v5412 = vmax.f32 %v5308, 0.0
        %v5413 = vmax.f32 %v5309, 0.0
        %v5414 = vmax.f32 %v5310, 0.0
        %v5415 = vmax.f32 %v5311, 0.0
        %v5416 = vmax.f32 %v5312, 0.0
        %v5417 = vmax.f32 %v5313, 0.0
        %v5418 = vmax.f32 %v5314, 0.0
        %v5419 = vmax.f32 %v5315, 0.0
        %v5420 = vmax.f32 %v5316, 0.0
        %v5421 = vmax.f32 %v5317, 0.0
        %v5422 = vmax.f32 %v5318, 0.0
        %v5423 = vmax.f32 %v5319, 0.0
        %v5424 = vmax.f32 %v5320, 0.0
        %v5425 = vmax.f32 %v5321, %v5325
        %v5426 = vmax.f32 %v5322, %v5326
        %v5427 = vmax.f32 %v5323, %v5327
        %v5428 = vmax.f32 %v5324, %v5328
        %v5429 = vmax.f32 %v5329, %v5333
        %v5430 = vmax.f32 %v5330, %v5334
        %v5431 = vmax.f32 %v5331, %v5335
        %v5432 = vmax.f32 %v5332, %v5336
        %v5433 = vmax.f32 %v5337, %v5341
        %v5434 = vmax.f32 %v5338, %v5342
        %v5435 = vmax.f32 %v5339, %v5343
        %v5436 = vmax.f32 %v5340, %v5344
        %v5437 = vmax.f32 %v5345, %v5349
        %v5438 = vmax.f32 %v5346, %v5350
        %v5439 = vmax.f32 %v5347, %v5351
        %v5440 = vmax.f32 %v5348, %v5352
        %v5441 = vmax.f32 %v5353, %v5357
        %v5442 = vmax.f32 %v5354, %v5358
        %v5443 = vmax.f32 %v5355, %v5359
        %v5444 = vmax.f32 %v5356, %v5360
        %v5445 = vmax.f32 %v5361, %v5365
        %v5446 = vmax.f32 %v5362, %v5366
        %v5447 = vmax.f32 %v5363, %v5367
        %v5448 = vmax.f32 %v5364, %v5368
        %v5449 = vmax.f32 %v5369, %v5373
        %v5450 = vmax.f32 %v5370, %v5374
        %v5451 = vmax.f32 %v5371, %v5375
        %v5452 = vmax.f32 %v5372, %v5376
        %v5453 = vmax.f32 %v5377, %v5381
        %v5454 = vmax.f32 %v5378, %v5382
        %v5455 = vmax.f32 %v5379, %v5383
        %v5456 = vmax.f32 %v5380, %v5384
        %v5457 = vmax.f32 %v5385, %v5389
        %v5458 = vmax.f32 %v5386, %v5390
        %v5459 = vmax.f32 %v5387, %v5391
        %v5460 = vmax.f32 %v5388, %v5392
        %v5461 = vmax.f32 %v5393, %v5397
        %v5462 = vmax.f32 %v5394, %v5398
        %v5463 = vmax.f32 %v5395, %v5399
        %v5464 = vmax.f32 %v5396, %v5400
        %v5465 = vmax.f32 %v5401, %v5405
        %v5466 = vmax.f32 %v5402, %v5406
        %v5467 = vmax.f32 %v5403, %v5407
        %v5468 = vmax.f32 %v5404, %v5408
        %v5469 = vmax.f32 %v5409, %v5413
        %v5470 = vmax.f32 %v5410, %v5414
        %v5471 = vmax.f32 %v5411, %v5415
        %v5472 = vmax.f32 %v5412, %v5416
        %v5473 = vmax.f32 %v5417, %v5421
        %v5474 = vmax.f32 %v5418, %v5422
        %v5475 = vmax.f32 %v5419, %v5423
        %v5476 = vmax.f32 %v5420, %v5424
        %v5490 = vrot.slane %v5425, 1
        %v5491 = vrot.slane %v5429, 1
        %v5492 = vrot.slane %v5433, 1
        %v5493 = vrot.slane %v5437, 1
        %v5494 = vrot.slane %v5441, 1
        %v5495 = vrot.slane %v5445, 1
        %v5496 = vrot.slane %v5449, 1
        %v5497 = vrot.slane %v5453, 1
        %v5498 = vrot.slane %v5457, 1
        %v5499 = vrot.slane %v5461, 1
        %v5500 = vrot.slane %v5465, 1
        %v5501 = vrot.slane %v5469, 1
        %v5502 = vrot.slane %v5473, 1
        %v5516 = vmax.f32 %v5425, %v5490
        %v5517 = vmax.f32 %v5429, %v5491
        %v5518 = vmax.f32 %v5433, %v5492
        %v5519 = vmax.f32 %v5437, %v5493
        %v5520 = vmax.f32 %v5441, %v5494
        %v5521 = vmax.f32 %v5445, %v5495
        %v5522 = vmax.f32 %v5449, %v5496
        %v5523 = vmax.f32 %v5453, %v5497
        %v5524 = vmax.f32 %v5457, %v5498
        %v5525 = vmax.f32 %v5461, %v5499
        %v5526 = vmax.f32 %v5465, %v5500
        %v5527 = vmax.f32 %v5469, %v5501
        %v5528 = vmax.f32 %v5473, %v5502
        %vm5529 = vcmask 253952
        %5530 = vst.msk [vmem:[#allocation3] sm:$0x1] %vm5529, %v5516
        %5531 = vst.msk [vmem:[#allocation3 + $0x10] sm:$0x1] %vm5529, %v5517
        %5532 = vst.msk [vmem:[#allocation3 + $0x20] sm:$0x1] %vm5529, %v5518
        %5533 = vst.msk [vmem:[#allocation3 + $0x30] sm:$0x1] %vm5529, %v5519
        %5534 = vst.msk [vmem:[#allocation3 + $0x40] sm:$0x1] %vm5529, %v5520
        %5535 = vst.msk [vmem:[#allocation3 + $0x50] sm:$0x1] %vm5529, %v5521
        %5536 = vst.msk [vmem:[#allocation3 + $0x60] sm:$0x1] %vm5529, %v5522
        %5537 = vst.msk [vmem:[#allocation3 + $0x70] sm:$0x1] %vm5529, %v5523
        %5538 = vst.msk [vmem:[#allocation3 + $0x80] sm:$0x1] %vm5529, %v5524
        %5539 = vst.msk [vmem:[#allocation3 + $0x90] sm:$0x1] %vm5529, %v5525
        %5540 = vst.msk [vmem:[#allocation3 + $0xa0] sm:$0x1] %vm5529, %v5526
        %5541 = vst.msk [vmem:[#allocation3 + $0xb0] sm:$0x1] %vm5529, %v5527
        %5542 = vst.msk [vmem:[#allocation3 + $0xc0] sm:$0x1] %vm5529, %v5528
        %vm5543 = vcmask 256002
        %5544 = vst.msk [vmem:[#allocation3 - $0x1] sm:$0x4] %vm5543, %v5516
        %5545 = vst.msk [vmem:[#allocation3 + $0xf] sm:$0x4] %vm5543, %v5517
        %5546 = vst.msk [vmem:[#allocation3 + $0x1f] sm:$0x4] %vm5543, %v5518
        %5547 = vst.msk [vmem:[#allocation3 + $0x2f] sm:$0x4] %vm5543, %v5519
        %5548 = vst.msk [vmem:[#allocation3 + $0x3f] sm:$0x4] %vm5543, %v5520
        %5549 = vst.msk [vmem:[#allocation3 + $0x4f] sm:$0x4] %vm5543, %v5521
        %5550 = vst.msk [vmem:[#allocation3 + $0x5f] sm:$0x4] %vm5543, %v5522
        %5551 = vst.msk [vmem:[#allocation3 + $0x6f] sm:$0x4] %vm5543, %v5523
        %5552 = vst.msk [vmem:[#allocation3 + $0x7f] sm:$0x4] %vm5543, %v5524
        %5553 = vst.msk [vmem:[#allocation3 + $0x8f] sm:$0x4] %vm5543, %v5525
        %5554 = vst.msk [vmem:[#allocation3 + $0x9f] sm:$0x4] %vm5543, %v5526
        %5555 = vst.msk [vmem:[#allocation3 + $0xaf] sm:$0x4] %vm5543, %v5527
        %5556 = vst.msk [vmem:[#allocation3 + $0xbf] sm:$0x4] %vm5543, %v5528
        %vm5557 = vcmask 258052
        %5558 = vst.msk [vmem:[#allocation3 - $0x2] sm:$0x10] %vm5557, %v5516
        %5559 = vst.msk [vmem:[#allocation3 + $0xe] sm:$0x10] %vm5557, %v5517
        %5560 = vst.msk [vmem:[#allocation3 + $0x1e] sm:$0x10] %vm5557, %v5518
        %5561 = vst.msk [vmem:[#allocation3 + $0x2e] sm:$0x10] %vm5557, %v5519
        %5562 = vst.msk [vmem:[#allocation3 + $0x3e] sm:$0x10] %vm5557, %v5520
        %5563 = vst.msk [vmem:[#allocation3 + $0x4e] sm:$0x10] %vm5557, %v5521
        %5564 = vst.msk [vmem:[#allocation3 + $0x5e] sm:$0x10] %vm5557, %v5522
        %5565 = vst.msk [vmem:[#allocation3 + $0x6e] sm:$0x10] %vm5557, %v5523
        %5566 = vst.msk [vmem:[#allocation3 + $0x7e] sm:$0x10] %vm5557, %v5524
        %5567 = vst.msk [vmem:[#allocation3 + $0x8e] sm:$0x10] %vm5557, %v5525
        %5568 = vst.msk [vmem:[#allocation3 + $0x9e] sm:$0x10] %vm5557, %v5526
        %5569 = vst.msk [vmem:[#allocation3 + $0xae] sm:$0x10] %vm5557, %v5527
        %5570 = vst.msk [vmem:[#allocation3 + $0xbe] sm:$0x10] %vm5557, %v5528
        %vm5571 = vcmask 260102
        %5572 = vst.msk [vmem:[#allocation3 - $0x3] sm:$0x40] %vm5571, %v5516
        %5573 = vst.msk [vmem:[#allocation3 + $0xd] sm:$0x40] %vm5571, %v5517
        %5574 = vst.msk [vmem:[#allocation3 + $0x1d] sm:$0x40] %vm5571, %v5518
        %5575 = vst.msk [vmem:[#allocation3 + $0x2d] sm:$0x40] %vm5571, %v5519
        %5576 = vst.msk [vmem:[#allocation3 + $0x3d] sm:$0x40] %vm5571, %v5520
        %5577 = vst.msk [vmem:[#allocation3 + $0x4d] sm:$0x40] %vm5571, %v5521
        %5578 = vst.msk [vmem:[#allocation3 + $0x5d] sm:$0x40] %vm5571, %v5522
        %5579 = vst.msk [vmem:[#allocation3 + $0x6d] sm:$0x40] %vm5571, %v5523
        %5580 = vst.msk [vmem:[#allocation3 + $0x7d] sm:$0x40] %vm5571, %v5524
        %5581 = vst.msk [vmem:[#allocation3 + $0x8d] sm:$0x40] %vm5571, %v5525
        %5582 = vst.msk [vmem:[#allocation3 + $0x9d] sm:$0x40] %vm5571, %v5526
        %5583 = vst.msk [vmem:[#allocation3 + $0xad] sm:$0x40] %vm5571, %v5527
        %5584 = vst.msk [vmem:[#allocation3 + $0xbd] sm:$0x40] %vm5571, %v5528
        %v5598 = vrot.slane %v5426, 1
        %v5599 = vrot.slane %v5430, 1
        %v5600 = vrot.slane %v5434, 1
        %v5601 = vrot.slane %v5438, 1
        %v5602 = vrot.slane %v5442, 1
        %v5603 = vrot.slane %v5446, 1
        %v5604 = vrot.slane %v5450, 1
        %v5605 = vrot.slane %v5454, 1
        %v5606 = vrot.slane %v5458, 1
        %v5607 = vrot.slane %v5462, 1
        %v5608 = vrot.slane %v5466, 1
        %v5609 = vrot.slane %v5470, 1
        %v5610 = vrot.slane %v5474, 1
        %v5624 = vmax.f32 %v5426, %v5598
        %v5625 = vmax.f32 %v5430, %v5599
        %v5626 = vmax.f32 %v5434, %v5600
        %v5627 = vmax.f32 %v5438, %v5601
        %v5628 = vmax.f32 %v5442, %v5602
        %v5629 = vmax.f32 %v5446, %v5603
        %v5630 = vmax.f32 %v5450, %v5604
        %v5631 = vmax.f32 %v5454, %v5605
        %v5632 = vmax.f32 %v5458, %v5606
        %v5633 = vmax.f32 %v5462, %v5607
        %v5634 = vmax.f32 %v5466, %v5608
        %v5635 = vmax.f32 %v5470, %v5609
        %v5636 = vmax.f32 %v5474, %v5610
        %5637 = vst.msk [vmem:[#allocation3 + $0x4] sm:$0x1] %vm5529, %v5624
        %5638 = vst.msk [vmem:[#allocation3 + $0x14] sm:$0x1] %vm5529, %v5625
        %5639 = vst.msk [vmem:[#allocation3 + $0x24] sm:$0x1] %vm5529, %v5626
        %5640 = vst.msk [vmem:[#allocation3 + $0x34] sm:$0x1] %vm5529, %v5627
        %5641 = vst.msk [vmem:[#allocation3 + $0x44] sm:$0x1] %vm5529, %v5628
        %5642 = vst.msk [vmem:[#allocation3 + $0x54] sm:$0x1] %vm5529, %v5629
        %5643 = vst.msk [vmem:[#allocation3 + $0x64] sm:$0x1] %vm5529, %v5630
        %5644 = vst.msk [vmem:[#allocation3 + $0x74] sm:$0x1] %vm5529, %v5631
        %5645 = vst.msk [vmem:[#allocation3 + $0x84] sm:$0x1] %vm5529, %v5632
        %5646 = vst.msk [vmem:[#allocation3 + $0x94] sm:$0x1] %vm5529, %v5633
        %5647 = vst.msk [vmem:[#allocation3 + $0xa4] sm:$0x1] %vm5529, %v5634
        %5648 = vst.msk [vmem:[#allocation3 + $0xb4] sm:$0x1] %vm5529, %v5635
        %5649 = vst.msk [vmem:[#allocation3 + $0xc4] sm:$0x1] %vm5529, %v5636
        %5650 = vst.msk [vmem:[#allocation3 + $0x3] sm:$0x4] %vm5543, %v5624
        %5651 = vst.msk [vmem:[#allocation3 + $0x13] sm:$0x4] %vm5543, %v5625
        %5652 = vst.msk [vmem:[#allocation3 + $0x23] sm:$0x4] %vm5543, %v5626
        %5653 = vst.msk [vmem:[#allocation3 + $0x33] sm:$0x4] %vm5543, %v5627
        %5654 = vst.msk [vmem:[#allocation3 + $0x43] sm:$0x4] %vm5543, %v5628
        %5655 = vst.msk [vmem:[#allocation3 + $0x53] sm:$0x4] %vm5543, %v5629
        %5656 = vst.msk [vmem:[#allocation3 + $0x63] sm:$0x4] %vm5543, %v5630
        %5657 = vst.msk [vmem:[#allocation3 + $0x73] sm:$0x4] %vm5543, %v5631
        %5658 = vst.msk [vmem:[#allocation3 + $0x83] sm:$0x4] %vm5543, %v5632
        %5659 = vst.msk [vmem:[#allocation3 + $0x93] sm:$0x4] %vm5543, %v5633
        %5660 = vst.msk [vmem:[#allocation3 + $0xa3] sm:$0x4] %vm5543, %v5634
        %5661 = vst.msk [vmem:[#allocation3 + $0xb3] sm:$0x4] %vm5543, %v5635
        %5662 = vst.msk [vmem:[#allocation3 + $0xc3] sm:$0x4] %vm5543, %v5636
        %5663 = vst.msk [vmem:[#allocation3 + $0x2] sm:$0x10] %vm5557, %v5624
        %5664 = vst.msk [vmem:[#allocation3 + $0x12] sm:$0x10] %vm5557, %v5625
        %5665 = vst.msk [vmem:[#allocation3 + $0x22] sm:$0x10] %vm5557, %v5626
        %5666 = vst.msk [vmem:[#allocation3 + $0x32] sm:$0x10] %vm5557, %v5627
        %5667 = vst.msk [vmem:[#allocation3 + $0x42] sm:$0x10] %vm5557, %v5628
        %5668 = vst.msk [vmem:[#allocation3 + $0x52] sm:$0x10] %vm5557, %v5629
        %5669 = vst.msk [vmem:[#allocation3 + $0x62] sm:$0x10] %vm5557, %v5630
        %5670 = vst.msk [vmem:[#allocation3 + $0x72] sm:$0x10] %vm5557, %v5631
        %5671 = vst.msk [vmem:[#allocation3 + $0x82] sm:$0x10] %vm5557, %v5632
        %5672 = vst.msk [vmem:[#allocation3 + $0x92] sm:$0x10] %vm5557, %v5633
        %5673 = vst.msk [vmem:[#allocation3 + $0xa2] sm:$0x10] %vm5557, %v5634
        %5674 = vst.msk [vmem:[#allocation3 + $0xb2] sm:$0x10] %vm5557, %v5635
        %5675 = vst.msk [vmem:[#allocation3 + $0xc2] sm:$0x10] %vm5557, %v5636
        %5676 = vst.msk [vmem:[#allocation3 + $0x1] sm:$0x40] %vm5571, %v5624
        %5677 = vst.msk [vmem:[#allocation3 + $0x11] sm:$0x40] %vm5571, %v5625
        %5678 = vst.msk [vmem:[#allocation3 + $0x21] sm:$0x40] %vm5571, %v5626
        %5679 = vst.msk [vmem:[#allocation3 + $0x31] sm:$0x40] %vm5571, %v5627
        %5680 = vst.msk [vmem:[#allocation3 + $0x41] sm:$0x40] %vm5571, %v5628
        %5681 = vst.msk [vmem:[#allocation3 + $0x51] sm:$0x40] %vm5571, %v5629
        %5682 = vst.msk [vmem:[#allocation3 + $0x61] sm:$0x40] %vm5571, %v5630
        %5683 = vst.msk [vmem:[#allocation3 + $0x71] sm:$0x40] %vm5571, %v5631
        %5684 = vst.msk [vmem:[#allocation3 + $0x81] sm:$0x40] %vm5571, %v5632
        %5685 = vst.msk [vmem:[#allocation3 + $0x91] sm:$0x40] %vm5571, %v5633
        %5686 = vst.msk [vmem:[#allocation3 + $0xa1] sm:$0x40] %vm5571, %v5634
        %5687 = vst.msk [vmem:[#allocation3 + $0xb1] sm:$0x40] %vm5571, %v5635
        %5688 = vst.msk [vmem:[#allocation3 + $0xc1] sm:$0x40] %vm5571, %v5636
        %v5702 = vrot.slane %v5427, 1
        %v5703 = vrot.slane %v5431, 1
        %v5704 = vrot.slane %v5435, 1
        %v5705 = vrot.slane %v5439, 1
        %v5706 = vrot.slane %v5443, 1
        %v5707 = vrot.slane %v5447, 1
        %v5708 = vrot.slane %v5451, 1
        %v5709 = vrot.slane %v5455, 1
        %v5710 = vrot.slane %v5459, 1
        %v5711 = vrot.slane %v5463, 1
        %v5712 = vrot.slane %v5467, 1
        %v5713 = vrot.slane %v5471, 1
        %v5714 = vrot.slane %v5475, 1
        %v5728 = vmax.f32 %v5427, %v5702
        %v5729 = vmax.f32 %v5431, %v5703
        %v5730 = vmax.f32 %v5435, %v5704
        %v5731 = vmax.f32 %v5439, %v5705
        %v5732 = vmax.f32 %v5443, %v5706
        %v5733 = vmax.f32 %v5447, %v5707
        %v5734 = vmax.f32 %v5451, %v5708
        %v5735 = vmax.f32 %v5455, %v5709
        %v5736 = vmax.f32 %v5459, %v5710
        %v5737 = vmax.f32 %v5463, %v5711
        %v5738 = vmax.f32 %v5467, %v5712
        %v5739 = vmax.f32 %v5471, %v5713
        %v5740 = vmax.f32 %v5475, %v5714
        %5741 = vst.msk [vmem:[#allocation3 + $0x8] sm:$0x1] %vm5529, %v5728
        %5742 = vst.msk [vmem:[#allocation3 + $0x18] sm:$0x1] %vm5529, %v5729
        %5743 = vst.msk [vmem:[#allocation3 + $0x28] sm:$0x1] %vm5529, %v5730
        %5744 = vst.msk [vmem:[#allocation3 + $0x38] sm:$0x1] %vm5529, %v5731
        %5745 = vst.msk [vmem:[#allocation3 + $0x48] sm:$0x1] %vm5529, %v5732
        %5746 = vst.msk [vmem:[#allocation3 + $0x58] sm:$0x1] %vm5529, %v5733
        %5747 = vst.msk [vmem:[#allocation3 + $0x68] sm:$0x1] %vm5529, %v5734
        %5748 = vst.msk [vmem:[#allocation3 + $0x78] sm:$0x1] %vm5529, %v5735
        %5749 = vst.msk [vmem:[#allocation3 + $0x88] sm:$0x1] %vm5529, %v5736
        %5750 = vst.msk [vmem:[#allocation3 + $0x98] sm:$0x1] %vm5529, %v5737
        %5751 = vst.msk [vmem:[#allocation3 + $0xa8] sm:$0x1] %vm5529, %v5738
        %5752 = vst.msk [vmem:[#allocation3 + $0xb8] sm:$0x1] %vm5529, %v5739
        %5753 = vst.msk [vmem:[#allocation3 + $0xc8] sm:$0x1] %vm5529, %v5740
        %5754 = vst.msk [vmem:[#allocation3 + $0x7] sm:$0x4] %vm5543, %v5728
        %5755 = vst.msk [vmem:[#allocation3 + $0x17] sm:$0x4] %vm5543, %v5729
        %5756 = vst.msk [vmem:[#allocation3 + $0x27] sm:$0x4] %vm5543, %v5730
        %5757 = vst.msk [vmem:[#allocation3 + $0x37] sm:$0x4] %vm5543, %v5731
        %5758 = vst.msk [vmem:[#allocation3 + $0x47] sm:$0x4] %vm5543, %v5732
        %5759 = vst.msk [vmem:[#allocation3 + $0x57] sm:$0x4] %vm5543, %v5733
        %5760 = vst.msk [vmem:[#allocation3 + $0x67] sm:$0x4] %vm5543, %v5734
        %5761 = vst.msk [vmem:[#allocation3 + $0x77] sm:$0x4] %vm5543, %v5735
        %5762 = vst.msk [vmem:[#allocation3 + $0x87] sm:$0x4] %vm5543, %v5736
        %5763 = vst.msk [vmem:[#allocation3 + $0x97] sm:$0x4] %vm5543, %v5737
        %5764 = vst.msk [vmem:[#allocation3 + $0xa7] sm:$0x4] %vm5543, %v5738
        %5765 = vst.msk [vmem:[#allocation3 + $0xb7] sm:$0x4] %vm5543, %v5739
        %5766 = vst.msk [vmem:[#allocation3 + $0xc7] sm:$0x4] %vm5543, %v5740
        %5767 = vst.msk [vmem:[#allocation3 + $0x6] sm:$0x10] %vm5557, %v5728
        %5768 = vst.msk [vmem:[#allocation3 + $0x16] sm:$0x10] %vm5557, %v5729
        %5769 = vst.msk [vmem:[#allocation3 + $0x26] sm:$0x10] %vm5557, %v5730
        %5770 = vst.msk [vmem:[#allocation3 + $0x36] sm:$0x10] %vm5557, %v5731
        %5771 = vst.msk [vmem:[#allocation3 + $0x46] sm:$0x10] %vm5557, %v5732
        %5772 = vst.msk [vmem:[#allocation3 + $0x56] sm:$0x10] %vm5557, %v5733
        %5773 = vst.msk [vmem:[#allocation3 + $0x66] sm:$0x10] %vm5557, %v5734
        %5774 = vst.msk [vmem:[#allocation3 + $0x76] sm:$0x10] %vm5557, %v5735
        %5775 = vst.msk [vmem:[#allocation3 + $0x86] sm:$0x10] %vm5557, %v5736
        %5776 = vst.msk [vmem:[#allocation3 + $0x96] sm:$0x10] %vm5557, %v5737
        %5777 = vst.msk [vmem:[#allocation3 + $0xa6] sm:$0x10] %vm5557, %v5738
        %5778 = vst.msk [vmem:[#allocation3 + $0xb6] sm:$0x10] %vm5557, %v5739
        %5779 = vst.msk [vmem:[#allocation3 + $0xc6] sm:$0x10] %vm5557, %v5740
        %5780 = vst.msk [vmem:[#allocation3 + $0x5] sm:$0x40] %vm5571, %v5728
        %5781 = vst.msk [vmem:[#allocation3 + $0x15] sm:$0x40] %vm5571, %v5729
        %5782 = vst.msk [vmem:[#allocation3 + $0x25] sm:$0x40] %vm5571, %v5730
        %5783 = vst.msk [vmem:[#allocation3 + $0x35] sm:$0x40] %vm5571, %v5731
        %5784 = vst.msk [vmem:[#allocation3 + $0x45] sm:$0x40] %vm5571, %v5732
        %5785 = vst.msk [vmem:[#allocation3 + $0x55] sm:$0x40] %vm5571, %v5733
        %5786 = vst.msk [vmem:[#allocation3 + $0x65] sm:$0x40] %vm5571, %v5734
        %5787 = vst.msk [vmem:[#allocation3 + $0x75] sm:$0x40] %vm5571, %v5735
        %5788 = vst.msk [vmem:[#allocation3 + $0x85] sm:$0x40] %vm5571, %v5736
        %5789 = vst.msk [vmem:[#allocation3 + $0x95] sm:$0x40] %vm5571, %v5737
        %5790 = vst.msk [vmem:[#allocation3 + $0xa5] sm:$0x40] %vm5571, %v5738
        %5791 = vst.msk [vmem:[#allocation3 + $0xb5] sm:$0x40] %vm5571, %v5739
        %5792 = vst.msk [vmem:[#allocation3 + $0xc5] sm:$0x40] %vm5571, %v5740
        %v5806 = vrot.slane %v5428, 1
        %v5807 = vrot.slane %v5432, 1
        %v5808 = vrot.slane %v5436, 1
        %v5809 = vrot.slane %v5440, 1
        %v5810 = vrot.slane %v5444, 1
        %v5811 = vrot.slane %v5448, 1
        %v5812 = vrot.slane %v5452, 1
        %v5813 = vrot.slane %v5456, 1
        %v5814 = vrot.slane %v5460, 1
        %v5815 = vrot.slane %v5464, 1
        %v5816 = vrot.slane %v5468, 1
        %v5817 = vrot.slane %v5472, 1
        %v5818 = vrot.slane %v5476, 1
        %v5832 = vmax.f32 %v5428, %v5806
        %v5833 = vmax.f32 %v5432, %v5807
        %v5834 = vmax.f32 %v5436, %v5808
        %v5835 = vmax.f32 %v5440, %v5809
        %v5836 = vmax.f32 %v5444, %v5810
        %v5837 = vmax.f32 %v5448, %v5811
        %v5838 = vmax.f32 %v5452, %v5812
        %v5839 = vmax.f32 %v5456, %v5813
        %v5840 = vmax.f32 %v5460, %v5814
        %v5841 = vmax.f32 %v5464, %v5815
        %v5842 = vmax.f32 %v5468, %v5816
        %v5843 = vmax.f32 %v5472, %v5817
        %v5844 = vmax.f32 %v5476, %v5818
        %5845 = vst.msk [vmem:[#allocation3 + $0xc] sm:$0x1] %vm5529, %v5832
        %5846 = vst.msk [vmem:[#allocation3 + $0x1c] sm:$0x1] %vm5529, %v5833
        %5847 = vst.msk [vmem:[#allocation3 + $0x2c] sm:$0x1] %vm5529, %v5834
        %5848 = vst.msk [vmem:[#allocation3 + $0x3c] sm:$0x1] %vm5529, %v5835
        %5849 = vst.msk [vmem:[#allocation3 + $0x4c] sm:$0x1] %vm5529, %v5836
        %5850 = vst.msk [vmem:[#allocation3 + $0x5c] sm:$0x1] %vm5529, %v5837
        %5851 = vst.msk [vmem:[#allocation3 + $0x6c] sm:$0x1] %vm5529, %v5838
        %5852 = vst.msk [vmem:[#allocation3 + $0x7c] sm:$0x1] %vm5529, %v5839
        %5853 = vst.msk [vmem:[#allocation3 + $0x8c] sm:$0x1] %vm5529, %v5840
        %5854 = vst.msk [vmem:[#allocation3 + $0x9c] sm:$0x1] %vm5529, %v5841
        %5855 = vst.msk [vmem:[#allocation3 + $0xac] sm:$0x1] %vm5529, %v5842
        %5856 = vst.msk [vmem:[#allocation3 + $0xbc] sm:$0x1] %vm5529, %v5843
        %5857 = vst.msk [vmem:[#allocation3 + $0xcc] sm:$0x1] %vm5529, %v5844
        %v5858 = vld [vmem:[#allocation3] sm:$0xff]
        %v5859 = vld [vmem:[#allocation3 + $0x8] sm:$0x1f]
        %vm5860 = vcmask 261120
        %5861 = vst.msk [vmem:[#allocation2] sm:$0xff] %vm5860, %v5858
        %vm5862 = vcmask 258048
        %5863 = vst.msk [vmem:[#allocation2 + $0x8] sm:$0x1f] %vm5862, %v5859
        %s5864 = scalar_lea.vmem [#allocation3], 16
        %v5865 = vld [vmem:[%s5864] sm:$0xff]
        %v5866 = vld [vmem:[%s5864 + $0x8] sm:$0x1f]
        %5867 = vst.msk [vmem:[#allocation2 + $0xd] sm:$0xff] %vm5860, %v5865
        %5868 = vst.msk [vmem:[#allocation2 + $0x15] sm:$0x1f] %vm5862, %v5866
        %s5869 = scalar_lea.vmem [#allocation3], 32
        %v5870 = vld [vmem:[%s5869] sm:$0xff]
        %v5871 = vld [vmem:[%s5869 + $0x8] sm:$0x1f]
        %5872 = vst.msk [vmem:[#allocation2 + $0x1a] sm:$0xff] %vm5860, %v5870
        %5873 = vst.msk [vmem:[#allocation2 + $0x22] sm:$0x1f] %vm5862, %v5871
        %s5874 = scalar_lea.vmem [#allocation3], 48
        %v5875 = vld [vmem:[%s5874] sm:$0xff]
        %v5876 = vld [vmem:[%s5874 + $0x8] sm:$0x1f]
        %5877 = vst.msk [vmem:[#allocation2 + $0x27] sm:$0xff] %vm5860, %v5875
        %5878 = vst.msk [vmem:[#allocation2 + $0x2f] sm:$0x1f] %vm5862, %v5876
        %s5879 = scalar_lea.vmem [#allocation3], 64
        %v5880 = vld [vmem:[%s5879] sm:$0xff]
        %v5881 = vld [vmem:[%s5879 + $0x8] sm:$0x1f]
        %5882 = vst.msk [vmem:[#allocation2 + $0x34] sm:$0xff] %vm5860, %v5880
        %5883 = vst.msk [vmem:[#allocation2 + $0x3c] sm:$0x1f] %vm5862, %v5881
        %s5884 = scalar_lea.vmem [#allocation3], 80
        %v5885 = vld [vmem:[%s5884] sm:$0xff]
        %v5886 = vld [vmem:[%s5884 + $0x8] sm:$0x1f]
        %5887 = vst.msk [vmem:[#allocation2 + $0x41] sm:$0xff] %vm5860, %v5885
        %5888 = vst.msk [vmem:[#allocation2 + $0x49] sm:$0x1f] %vm5862, %v5886
        %s5889 = scalar_lea.vmem [#allocation3], 96
        %v5890 = vld [vmem:[%s5889] sm:$0xff]
        %v5891 = vld [vmem:[%s5889 + $0x8] sm:$0x1f]
        %5892 = vst.msk [vmem:[#allocation2 + $0x4e] sm:$0xff] %vm5860, %v5890
        %5893 = vst.msk [vmem:[#allocation2 + $0x56] sm:$0x1f] %vm5862, %v5891
        %s5894 = scalar_lea.vmem [#allocation3], 112
        %v5895 = vld [vmem:[%s5894] sm:$0xff]
        %v5896 = vld [vmem:[%s5894 + $0x8] sm:$0x1f]
        %5897 = vst.msk [vmem:[#allocation2 + $0x5b] sm:$0xff] %vm5860, %v5895
        %5898 = vst.msk [vmem:[#allocation2 + $0x63] sm:$0x1f] %vm5862, %v5896
        %s5899 = scalar_lea.vmem [#allocation3], 128
        %v5900 = vld [vmem:[%s5899] sm:$0xff]
        %v5901 = vld [vmem:[%s5899 + $0x8] sm:$0x1f]
        %5902 = vst.msk [vmem:[#allocation2 + $0x68] sm:$0xff] %vm5860, %v5900
        %5903 = vst.msk [vmem:[#allocation2 + $0x70] sm:$0x1f] %vm5862, %v5901
        %s5904 = scalar_lea.vmem [#allocation3], 144
        %v5905 = vld [vmem:[%s5904] sm:$0xff]
        %v5906 = vld [vmem:[%s5904 + $0x8] sm:$0x1f]
        %5907 = vst.msk [vmem:[#allocation2 + $0x75] sm:$0xff] %vm5860, %v5905
        %5908 = vst.msk [vmem:[#allocation2 + $0x7d] sm:$0x1f] %vm5862, %v5906
        %s5909 = scalar_lea.vmem [#allocation3], 160
        %v5910 = vld [vmem:[%s5909] sm:$0xff]
        %v5911 = vld [vmem:[%s5909 + $0x8] sm:$0x1f]
        %5912 = vst.msk [vmem:[#allocation2 + $0x82] sm:$0xff] %vm5860, %v5910
        %5913 = vst.msk [vmem:[#allocation2 + $0x8a] sm:$0x1f] %vm5862, %v5911
        %s5914 = scalar_lea.vmem [#allocation3], 176
        %v5915 = vld [vmem:[%s5914] sm:$0xff]
        %v5916 = vld [vmem:[%s5914 + $0x8] sm:$0x1f]
        %5917 = vst.msk [vmem:[#allocation2 + $0x8f] sm:$0xff] %vm5860, %v5915
        %5918 = vst.msk [vmem:[#allocation2 + $0x97] sm:$0x1f] %vm5862, %v5916
        %s5919 = scalar_lea.vmem [#allocation3], 192
        %v5920 = vld [vmem:[%s5919] sm:$0xff]
        %v5921 = vld [vmem:[%s5919 + $0x8] sm:$0x1f]
        %5922 = vst.msk [vmem:[#allocation2 + $0x9c] sm:$0xff] %vm5860, %v5920
        %5923 = vst.msk [vmem:[#allocation2 + $0xa4] sm:$0x1f] %vm5862, %v5921
        %v5924 = vld [vmem:[#allocation2] sm:$0xff]
        %v5925 = vld [vmem:[#allocation2 + $0x8] sm:$0xff]
        %v5926 = vld [vmem:[#allocation2 + $0x10] sm:$0xff]
        %v5927 = vld [vmem:[#allocation2 + $0x18] sm:$0xff]
        %v5928 = vld [vmem:[#allocation2 + $0x20] sm:$0xff]
        %v5929 = vld [vmem:[#allocation2 + $0x28] sm:$0xff]
        %v5930 = vld [vmem:[#allocation2 + $0x30] sm:$0xff]
        %v5931 = vld [vmem:[#allocation2 + $0x38] sm:$0xff]
        %v5932 = vld [vmem:[#allocation2 + $0x40] sm:$0xff]
        %v5933 = vld [vmem:[#allocation2 + $0x48] sm:$0xff]
        %v5934 = vld [vmem:[#allocation2 + $0x50] sm:$0xff]
        %v5935 = vld [vmem:[#allocation2 + $0x58] sm:$0xff]
        %v5936 = vld [vmem:[#allocation2 + $0x60] sm:$0xff]
        %v5937 = vld [vmem:[#allocation2 + $0x68] sm:$0xff]
        %v5938 = vld [vmem:[#allocation2 + $0x70] sm:$0xff]
        %v5939 = vld [vmem:[#allocation2 + $0x78] sm:$0xff]
        %v5940 = vld [vmem:[#allocation2 + $0x80] sm:$0xff]
        %v5941 = vld [vmem:[#allocation2 + $0x88] sm:$0x7f]
        %v5942 = vld [vmem:[%s3] sm:$0xff]
        %v5943 = vld [vmem:[%s3 + $0x8] sm:$0xff]
        %v5944 = vld [vmem:[%s3 + $0x10] sm:$0xff]
        %v5945 = vld [vmem:[%s3 + $0x18] sm:$0xff]
        %v5946 = vld [vmem:[#allocation2 + $0x1] sm:$0xff]
        %v5947 = vld [vmem:[#allocation2 + $0x9] sm:$0xff]
        %v5948 = vld [vmem:[#allocation2 + $0x11] sm:$0xff]
        %v5949 = vld [vmem:[#allocation2 + $0x19] sm:$0xff]
        %v5950 = vld [vmem:[#allocation2 + $0x21] sm:$0xff]
        %v5951 = vld [vmem:[#allocation2 + $0x29] sm:$0xff]
        %v5952 = vld [vmem:[#allocation2 + $0x31] sm:$0xff]
        %v5953 = vld [vmem:[#allocation2 + $0x39] sm:$0xff]
        %v5954 = vld [vmem:[#allocation2 + $0x41] sm:$0xff]
        %v5955 = vld [vmem:[#allocation2 + $0x49] sm:$0xff]
        %v5956 = vld [vmem:[#allocation2 + $0x51] sm:$0xff]
        %v5957 = vld [vmem:[#allocation2 + $0x59] sm:$0xff]
        %v5958 = vld [vmem:[#allocation2 + $0x61] sm:$0xff]
        %v5959 = vld [vmem:[#allocation2 + $0x69] sm:$0xff]
        %v5960 = vld [vmem:[#allocation2 + $0x71] sm:$0xff]
        %v5961 = vld [vmem:[#allocation2 + $0x79] sm:$0xff]
        %v5962 = vld [vmem:[#allocation2 + $0x81] sm:$0xff]
        %v5963 = vld [vmem:[#allocation2 + $0x89] sm:$0x7f]
        %s5964 = scalar_lea.vmem %s3, 32
        %v5965 = vld [vmem:[%s5964] sm:$0xff]
        %v5966 = vld [vmem:[%s5964 + $0x8] sm:$0xff]
        %v5967 = vld [vmem:[%s5964 + $0x10] sm:$0xff]
        %v5968 = vld [vmem:[%s5964 + $0x18] sm:$0xff]
        %v5970 = vsel %vm5860, %v5946, 0
        %v5973 = vsel %vm5860, %v5947, 0
        %v5976 = vsel %vm5860, %v5948, 0
        %v5979 = vsel %vm5860, %v5949, 0
        %v5982 = vsel %vm5860, %v5950, 0
        %v5985 = vsel %vm5860, %v5951, 0
        %v5988 = vsel %vm5860, %v5952, 0
        %v5991 = vsel %vm5860, %v5953, 0
        %v5994 = vsel %vm5860, %v5954, 0
        %v5997 = vsel %vm5860, %v5955, 0
        %v6000 = vsel %vm5860, %v5956, 0
        %v6003 = vsel %vm5860, %v5957, 0
        %v6006 = vsel %vm5860, %v5958, 0
        %v6009 = vsel %vm5860, %v5959, 0
        %v6012 = vsel %vm5860, %v5960, 0
        %v6015 = vsel %vm5860, %v5961, 0
        %v6018 = vsel %vm5860, %v5962, 0
        %v6021 = vsel %vm5860, %v5963, 0
        %6023 = vmatprep.subr.mxu0 0.0
        %6024 = vmatpush1.msra.mxu0 %v5965
        %6025 = vmatprep.subr.mxu0 0.0
        %6026 = vmatpush1.msra.mxu0 %v5966
        %6027 = vmatprep.subr.mxu0 0.0
        %6028 = vmatpush1.msra.mxu0 %v5967
        %6029 = vmatprep.subr.mxu0 0.0
        %6030 = vmatpush1.msra.mxu0 %v5968
        %6031 = vmatprep.subr.mxu0 0.0
        %6032 = vmatpush1.msra.mxu0 0.0
        %6033 = vmatprep.subr.mxu0 0.0
        %6034 = vmatpush1.msra.mxu0 0.0
        %6035 = vmatprep.subr.mxu0 0.0
        %6036 = vmatpush1.msra.mxu0 0.0
        %6037 = vmatprep.subr.mxu0 0.0
        %6038 = vmatpush1.msra.mxu0 0.0
        %6039 = vmatprep.subr.mxu0 0.0
        %6040 = vmatpush1.msra.mxu0 0.0
        %6041 = vmatprep.subr.mxu0 0.0
        %6042 = vmatpush1.msra.mxu0 0.0
        %6043 = vmatprep.subr.mxu0 0.0
        %6044 = vmatpush1.msra.mxu0 0.0
        %6045 = vmatprep.subr.mxu0 0.0
        %6046 = vmatpush1.msra.mxu0 0.0
        %6047 = vmatprep.subr.mxu0 0.0
        %6048 = vmatpush1.msra.mxu0 0.0
        %6049 = vmatprep.subr.mxu0 0.0
        %6050 = vmatpush1.msra.mxu0 0.0
        %6051 = vmatprep.subr.mxu0 0.0
        %6052 = vmatpush1.msra.mxu0 0.0
        %6053 = vmatprep.subr.mxu0 0.0
        %6054 = vmatpush1.msra.mxu0 0.0
        %6055 = vmatprep.subr.mxu0 0.0
        %6056 = vmatpush1.msra.mxu0 0.0
        %6057 = vmatprep.subr.mxu0 0.0
        %6058 = vmatpush1.msra.mxu0 0.0
        %6059 = vmatprep.subr.mxu0 0.0
        %6060 = vmatpush1.msra.mxu0 0.0
        %6061 = vmatprep.subr.mxu0 0.0
        %6062 = vmatpush1.msra.mxu0 0.0
        %6063 = vmatprep.subr.mxu0 0.0
        %6064 = vmatpush1.msra.mxu0 0.0
        %6065 = vmatprep.subr.mxu0 0.0
        %6066 = vmatpush1.msra.mxu0 0.0
        %6067 = vmatprep.subr.mxu0 0.0
        %6068 = vmatpush1.msra.mxu0 0.0
        %6069 = vmatprep.subr.mxu0 0.0
        %6070 = vmatpush1.msra.mxu0 0.0
        %6071 = vmatprep.subr.mxu0 0.0
        %6072 = vmatpush1.msra.mxu0 0.0
        %6073 = vmatprep.subr.mxu0 0.0
        %6074 = vmatpush1.msra.mxu0 0.0
        %6075 = vmatprep.subr.mxu0 0.0
        %6076 = vmatpush1.msra.mxu0 0.0
        %6077 = vmatprep.subr.mxu0 0.0
        %6078 = vmatpush1.msra.mxu0 0.0
        %6079 = vmatprep.subr.mxu0 0.0
        %6080 = vmatpush1.msra.mxu0 0.0
        %6081 = vmatprep.subr.mxu0 0.0
        %6082 = vmatpush1.msra.mxu0 0.0
        %6083 = vmatprep.subr.mxu0 0.0
        %6084 = vmatpush1.msra.mxu0 0.0
        %6085 = vmatprep.subr.mxu0 0.0
        %6086 = vmatpush1.msra.mxu0 0.0
        %6087 = vmatprep.mubr.f32.mxu0 0.0
        %6088 = vmatmul.mubr.f32.gmra.mrb[0].mxu0 %v5970
        %v6089 = vpop.f32.mrb[0].mxu0
        %v6090 = vadd.f32 0.0, %v6089
        %v6091 = vpop.f32.mrb[0].mxu0
        %6092 = vmatprep.mubr.f32.mxu0 0.0
        %6093 = vmatmul.mubr.f32.gmra.mrb[0].mxu0 %v5973
        %v6094 = vpop.f32.mrb[0].mxu0
        %v6095 = vadd.f32 0.0, %v6094
        %v6096 = vpop.f32.mrb[0].mxu0
        %6097 = vmatprep.mubr.f32.mxu0 0.0
        %6098 = vmatmul.mubr.f32.gmra.mrb[0].mxu0 %v5976
        %v6099 = vpop.f32.mrb[0].mxu0
        %v6100 = vadd.f32 0.0, %v6099
        %v6101 = vpop.f32.mrb[0].mxu0
        %6102 = vmatprep.mubr.f32.mxu0 0.0
        %6103 = vmatmul.mubr.f32.gmra.mrb[0].mxu0 %v5979
        %v6104 = vpop.f32.mrb[0].mxu0
        %v6105 = vadd.f32 0.0, %v6104
        %v6106 = vpop.f32.mrb[0].mxu0
        %6107 = vmatprep.mubr.f32.mxu0 0.0
        %6108 = vmatmul.mubr.f32.gmra.mrb[0].mxu0 %v5982
        %v6109 = vpop.f32.mrb[0].mxu0
        %v6110 = vadd.f32 0.0, %v6109
        %v6111 = vpop.f32.mrb[0].mxu0
        %6112 = vmatprep.mubr.f32.mxu0 0.0
        %6113 = vmatmul.mubr.f32.gmra.mrb[0].mxu0 %v5985
        %v6114 = vpop.f32.mrb[0].mxu0
        %v6115 = vadd.f32 0.0, %v6114
        %v6116 = vpop.f32.mrb[0].mxu0
        %6117 = vmatprep.mubr.f32.mxu0 0.0
        %6118 = vmatmul.mubr.f32.gmra.mrb[0].mxu0 %v5988
        %v6119 = vpop.f32.mrb[0].mxu0
        %v6120 = vadd.f32 0.0, %v6119
        %v6121 = vpop.f32.mrb[0].mxu0
        %6122 = vmatprep.mubr.f32.mxu0 0.0
        %6123 = vmatmul.mubr.f32.gmra.mrb[0].mxu0 %v5991
        %v6124 = vpop.f32.mrb[0].mxu0
        %v6125 = vadd.f32 0.0, %v6124
        %v6126 = vpop.f32.mrb[0].mxu0
        %6127 = vmatprep.mubr.f32.mxu0 0.0
        %6128 = vmatmul.mubr.f32.gmra.mrb[0].mxu0 %v5994
        %v6129 = vpop.f32.mrb[0].mxu0
        %v6130 = vadd.f32 0.0, %v6129
        %v6131 = vpop.f32.mrb[0].mxu0
        %6132 = vmatprep.mubr.f32.mxu0 0.0
        %6133 = vmatmul.mubr.f32.gmra.mrb[0].mxu0 %v5997
        %v6134 = vpop.f32.mrb[0].mxu0
        %v6135 = vadd.f32 0.0, %v6134
        %v6136 = vpop.f32.mrb[0].mxu0
        %6137 = vmatprep.mubr.f32.mxu0 0.0
        %6138 = vmatmul.mubr.f32.gmra.mrb[0].mxu0 %v6000
        %v6139 = vpop.f32.mrb[0].mxu0
        %v6140 = vadd.f32 0.0, %v6139
        %v6141 = vpop.f32.mrb[0].mxu0
        %6142 = vmatprep.mubr.f32.mxu0 0.0
        %6143 = vmatmul.mubr.f32.gmra.mrb[0].mxu0 %v6003
        %v6144 = vpop.f32.mrb[0].mxu0
        %v6145 = vadd.f32 0.0, %v6144
        %v6146 = vpop.f32.mrb[0].mxu0
        %6147 = vmatprep.mubr.f32.mxu0 0.0
        %6148 = vmatmul.mubr.f32.gmra.mrb[0].mxu0 %v6006
        %v6149 = vpop.f32.mrb[0].mxu0
        %v6150 = vadd.f32 0.0, %v6149
        %v6151 = vpop.f32.mrb[0].mxu0
        %6152 = vmatprep.mubr.f32.mxu0 0.0
        %6153 = vmatmul.mubr.f32.gmra.mrb[0].mxu0 %v6009
        %v6154 = vpop.f32.mrb[0].mxu0
        %v6155 = vadd.f32 0.0, %v6154
        %v6156 = vpop.f32.mrb[0].mxu0
        %6157 = vmatprep.mubr.f32.mxu0 0.0
        %6158 = vmatmul.mubr.f32.gmra.mrb[0].mxu0 %v6012
        %v6159 = vpop.f32.mrb[0].mxu0
        %v6160 = vadd.f32 0.0, %v6159
        %v6161 = vpop.f32.mrb[0].mxu0
        %6162 = vmatprep.mubr.f32.mxu0 0.0
        %6163 = vmatmul.mubr.f32.gmra.mrb[0].mxu0 %v6015
        %v6164 = vpop.f32.mrb[0].mxu0
        %v6165 = vadd.f32 0.0, %v6164
        %v6166 = vpop.f32.mrb[0].mxu0
        %6167 = vmatprep.mubr.f32.mxu0 0.0
        %6168 = vmatmul.mubr.f32.gmra.mrb[0].mxu0 %v6018
        %v6169 = vpop.f32.mrb[0].mxu0
        %v6170 = vadd.f32 0.0, %v6169
        %v6171 = vpop.f32.mrb[0].mxu0
        %6172 = vmatprep.mubr.f32.mxu0 0.0
        %6173 = vmatmul.mubr.f32.gmra.mrb[0].mxu0 %v6021
        %v6174 = vpop.f32.mrb[0].mxu0
        %v6175 = vpop.f32.mrb[0].mxu0
        %6176 = vdwg.mxu0
        %v6178 = vsel %vm5860, %v5924, 0
        %v6181 = vsel %vm5860, %v5925, 0
        %v6184 = vsel %vm5860, %v5926, 0
        %v6187 = vsel %vm5860, %v5927, 0
        %v6190 = vsel %vm5860, %v5928, 0
        %v6193 = vsel %vm5860, %v5929, 0
        %v6196 = vsel %vm5860, %v5930, 0
        %v6199 = vsel %vm5860, %v5931, 0
        %v6202 = vsel %vm5860, %v5932, 0
        %v6205 = vsel %vm5860, %v5933, 0
        %v6208 = vsel %vm5860, %v5934, 0
        %v6211 = vsel %vm5860, %v5935, 0
        %v6214 = vsel %vm5860, %v5936, 0
        %v6217 = vsel %vm5860, %v5937, 0
        %v6220 = vsel %vm5860, %v5938, 0
        %v6223 = vsel %vm5860, %v5939, 0
        %v6226 = vsel %vm5860, %v5940, 0
        %v6229 = vsel %vm5860, %v5941, 0
        %6231 = vmatprep.subr.mxu0 0.0
        %6232 = vmatpush1.msra.mxu0 %v5942
        %6233 = vmatprep.subr.mxu0 0.0
        %6234 = vmatpush1.msra.mxu0 %v5943
        %6235 = vmatprep.subr.mxu0 0.0
        %6236 = vmatpush1.msra.mxu0 %v5944
        %6237 = vmatprep.subr.mxu0 0.0
        %6238 = vmatpush1.msra.mxu0 %v5945
        %6239 = vmatprep.subr.mxu0 0.0
        %6240 = vmatpush1.msra.mxu0 0.0
        %6241 = vmatprep.subr.mxu0 0.0
        %6242 = vmatpush1.msra.mxu0 0.0
        %6243 = vmatprep.subr.mxu0 0.0
        %6244 = vmatpush1.msra.mxu0 0.0
        %6245 = vmatprep.subr.mxu0 0.0
        %6246 = vmatpush1.msra.mxu0 0.0
        %6247 = vmatprep.subr.mxu0 0.0
        %6248 = vmatpush1.msra.mxu0 0.0
        %6249 = vmatprep.subr.mxu0 0.0
        %6250 = vmatpush1.msra.mxu0 0.0
        %6251 = vmatprep.subr.mxu0 0.0
        %6252 = vmatpush1.msra.mxu0 0.0
        %6253 = vmatprep.subr.mxu0 0.0
        %6254 = vmatpush1.msra.mxu0 0.0
        %6255 = vmatprep.subr.mxu0 0.0
        %6256 = vmatpush1.msra.mxu0 0.0
        %6257 = vmatprep.subr.mxu0 0.0
        %6258 = vmatpush1.msra.mxu0 0.0
        %6259 = vmatprep.subr.mxu0 0.0
        %6260 = vmatpush1.msra.mxu0 0.0
        %6261 = vmatprep.subr.mxu0 0.0
        %6262 = vmatpush1.msra.mxu0 0.0
        %6263 = vmatprep.subr.mxu0 0.0
        %6264 = vmatpush1.msra.mxu0 0.0
        %6265 = vmatprep.subr.mxu0 0.0
        %6266 = vmatpush1.msra.mxu0 0.0
        %6267 = vmatprep.subr.mxu0 0.0
        %6268 = vmatpush1.msra.mxu0 0.0
        %6269 = vmatprep.subr.mxu0 0.0
        %6270 = vmatpush1.msra.mxu0 0.0
        %6271 = vmatprep.subr.mxu0 0.0
        %6272 = vmatpush1.msra.mxu0 0.0
        %6273 = vmatprep.subr.mxu0 0.0
        %6274 = vmatpush1.msra.mxu0 0.0
        %6275 = vmatprep.subr.mxu0 0.0
        %6276 = vmatpush1.msra.mxu0 0.0
        %6277 = vmatprep.subr.mxu0 0.0
        %6278 = vmatpush1.msra.mxu0 0.0
        %6279 = vmatprep.subr.mxu0 0.0
        %6280 = vmatpush1.msra.mxu0 0.0
        %6281 = vmatprep.subr.mxu0 0.0
        %6282 = vmatpush1.msra.mxu0 0.0
        %6283 = vmatprep.subr.mxu0 0.0
        %6284 = vmatpush1.msra.mxu0 0.0
        %6285 = vmatprep.subr.mxu0 0.0
        %6286 = vmatpush1.msra.mxu0 0.0
        %6287 = vmatprep.subr.mxu0 0.0
        %6288 = vmatpush1.msra.mxu0 0.0
        %6289 = vmatprep.subr.mxu0 0.0
        %6290 = vmatpush1.msra.mxu0 0.0
        %6291 = vmatprep.subr.mxu0 0.0
        %6292 = vmatpush1.msra.mxu0 0.0
        %6293 = vmatprep.subr.mxu0 0.0
        %6294 = vmatpush1.msra.mxu0 0.0
        %6295 = vmatprep.mubr.f32.mxu0 0.0
        %6296 = vmatmul.mubr.f32.gmra.mrb[0].mxu0 %v6178
        %v6297 = vpop.f32.mrb[0].mxu0
        %v6298 = vadd.f32 %v6090, %v6297
        %v6299 = vpop.f32.mrb[0].mxu0
        %6300 = vmatprep.mubr.f32.mxu0 0.0
        %6301 = vmatmul.mubr.f32.gmra.mrb[0].mxu0 %v6181
        %v6302 = vpop.f32.mrb[0].mxu0
        %v6303 = vadd.f32 %v6095, %v6302
        %v6304 = vpop.f32.mrb[0].mxu0
        %6305 = vmatprep.mubr.f32.mxu0 0.0
        %6306 = vmatmul.mubr.f32.gmra.mrb[0].mxu0 %v6184
        %v6307 = vpop.f32.mrb[0].mxu0
        %v6308 = vadd.f32 %v6100, %v6307
        %v6309 = vpop.f32.mrb[0].mxu0
        %6310 = vmatprep.mubr.f32.mxu0 0.0
        %6311 = vmatmul.mubr.f32.gmra.mrb[0].mxu0 %v6187
        %v6312 = vpop.f32.mrb[0].mxu0
        %v6313 = vadd.f32 %v6105, %v6312
        %v6314 = vpop.f32.mrb[0].mxu0
        %6315 = vmatprep.mubr.f32.mxu0 0.0
        %6316 = vmatmul.mubr.f32.gmra.mrb[0].mxu0 %v6190
        %v6317 = vpop.f32.mrb[0].mxu0
        %v6318 = vadd.f32 %v6110, %v6317
        %v6319 = vpop.f32.mrb[0].mxu0
        %6320 = vmatprep.mubr.f32.mxu0 0.0
        %6321 = vmatmul.mubr.f32.gmra.mrb[0].mxu0 %v6193
        %v6322 = vpop.f32.mrb[0].mxu0
        %v6323 = vadd.f32 %v6115, %v6322
        %v6324 = vpop.f32.mrb[0].mxu0
        %6325 = vmatprep.mubr.f32.mxu0 0.0
        %6326 = vmatmul.mubr.f32.gmra.mrb[0].mxu0 %v6196
        %v6327 = vpop.f32.mrb[0].mxu0
        %v6328 = vadd.f32 %v6120, %v6327
        %v6329 = vpop.f32.mrb[0].mxu0
        %6330 = vmatprep.mubr.f32.mxu0 0.0
        %6331 = vmatmul.mubr.f32.gmra.mrb[0].mxu0 %v6199
        %v6332 = vpop.f32.mrb[0].mxu0
        %v6333 = vadd.f32 %v6125, %v6332
        %v6334 = vpop.f32.mrb[0].mxu0
        %6335 = vmatprep.mubr.f32.mxu0 0.0
        %6336 = vmatmul.mubr.f32.gmra.mrb[0].mxu0 %v6202
        %v6337 = vpop.f32.mrb[0].mxu0
        %v6338 = vadd.f32 %v6130, %v6337
        %v6339 = vpop.f32.mrb[0].mxu0
        %6340 = vmatprep.mubr.f32.mxu0 0.0
        %6341 = vmatmul.mubr.f32.gmra.mrb[0].mxu0 %v6205
        %v6342 = vpop.f32.mrb[0].mxu0
        %v6343 = vadd.f32 %v6135, %v6342
        %v6344 = vpop.f32.mrb[0].mxu0
        %6345 = vmatprep.mubr.f32.mxu0 0.0
        %6346 = vmatmul.mubr.f32.gmra.mrb[0].mxu0 %v6208
        %v6347 = vpop.f32.mrb[0].mxu0
        %v6348 = vadd.f32 %v6140, %v6347
        %v6349 = vpop.f32.mrb[0].mxu0
        %6350 = vmatprep.mubr.f32.mxu0 0.0
        %6351 = vmatmul.mubr.f32.gmra.mrb[0].mxu0 %v6211
        %v6352 = vpop.f32.mrb[0].mxu0
        %v6353 = vadd.f32 %v6145, %v6352
        %v6354 = vpop.f32.mrb[0].mxu0
        %6355 = vmatprep.mubr.f32.mxu0 0.0
        %6356 = vmatmul.mubr.f32.gmra.mrb[0].mxu0 %v6214
        %v6357 = vpop.f32.mrb[0].mxu0
        %v6358 = vadd.f32 %v6150, %v6357
        %v6359 = vpop.f32.mrb[0].mxu0
        %6360 = vmatprep.mubr.f32.mxu0 0.0
        %6361 = vmatmul.mubr.f32.gmra.mrb[0].mxu0 %v6217
        %v6362 = vpop.f32.mrb[0].mxu0
        %v6363 = vadd.f32 %v6155, %v6362
        %v6364 = vpop.f32.mrb[0].mxu0
        %6365 = vmatprep.mubr.f32.mxu0 0.0
        %6366 = vmatmul.mubr.f32.gmra.mrb[0].mxu0 %v6220
        %v6367 = vpop.f32.mrb[0].mxu0
        %v6368 = vadd.f32 %v6160, %v6367
        %v6369 = vpop.f32.mrb[0].mxu0
        %6370 = vmatprep.mubr.f32.mxu0 0.0
        %6371 = vmatmul.mubr.f32.gmra.mrb[0].mxu0 %v6223
        %v6372 = vpop.f32.mrb[0].mxu0
        %v6373 = vadd.f32 %v6165, %v6372
        %v6374 = vpop.f32.mrb[0].mxu0
        %6375 = vmatprep.mubr.f32.mxu0 0.0
        %6376 = vmatmul.mubr.f32.gmra.mrb[0].mxu0 %v6226
        %v6377 = vpop.f32.mrb[0].mxu0
        %v6378 = vadd.f32 %v6170, %v6377
        %v6379 = vpop.f32.mrb[0].mxu0
        %6380 = vmatprep.mubr.f32.mxu0 0.0
        %6381 = vmatmul.mubr.f32.gmra.mrb[0].mxu0 %v6229
        %v6382 = vpop.f32.mrb[0].mxu0
        %v6383 = vpop.f32.mrb[0].mxu0
        %6384 = vdwg.mxu0
        %v6385 = vld [vmem:[#allocation2 + $0x2] sm:$0xff]
        %v6386 = vld [vmem:[#allocation2 + $0xa] sm:$0xff]
        %v6387 = vld [vmem:[#allocation2 + $0x12] sm:$0xff]
        %v6388 = vld [vmem:[#allocation2 + $0x1a] sm:$0xff]
        %v6389 = vld [vmem:[#allocation2 + $0x22] sm:$0xff]
        %v6390 = vld [vmem:[#allocation2 + $0x2a] sm:$0xff]
        %v6391 = vld [vmem:[#allocation2 + $0x32] sm:$0xff]
        %v6392 = vld [vmem:[#allocation2 + $0x3a] sm:$0xff]
        %v6393 = vld [vmem:[#allocation2 + $0x42] sm:$0xff]
        %v6394 = vld [vmem:[#allocation2 + $0x4a] sm:$0xff]
        %v6395 = vld [vmem:[#allocation2 + $0x52] sm:$0xff]
        %v6396 = vld [vmem:[#allocation2 + $0x5a] sm:$0xff]
        %v6397 = vld [vmem:[#allocation2 + $0x62] sm:$0xff]
        %v6398 = vld [vmem:[#allocation2 + $0x6a] sm:$0xff]
        %v6399 = vld [vmem:[#allocation2 + $0x72] sm:$0xff]
        %v6400 = vld [vmem:[#allocation2 + $0x7a] sm:$0xff]
        %v6401 = vld [vmem:[#allocation2 + $0x82] sm:$0xff]
        %v6402 = vld [vmem:[#allocation2 + $0x8a] sm:$0x7f]
        %s6403 = scalar_lea.vmem %s3, 64
        %v6404 = vld [vmem:[%s6403] sm:$0xff]
        %v6405 = vld [vmem:[%s6403 + $0x8] sm:$0xff]
        %v6406 = vld [vmem:[%s6403 + $0x10] sm:$0xff]
        %v6407 = vld [vmem:[%s6403 + $0x18] sm:$0xff]
        %v6409 = vsel %vm5860, %v6385, 0
        %v6412 = vsel %vm5860, %v6386, 0
        %v6415 = vsel %vm5860, %v6387, 0
        %v6418 = vsel %vm5860, %v6388, 0
        %v6421 = vsel %vm5860, %v6389, 0
        %v6424 = vsel %vm5860, %v6390, 0
        %v6427 = vsel %vm5860, %v6391, 0
        %v6430 = vsel %vm5860, %v6392, 0
        %v6433 = vsel %vm5860, %v6393, 0
        %v6436 = vsel %vm5860, %v6394, 0
        %v6439 = vsel %vm5860, %v6395, 0
        %v6442 = vsel %vm5860, %v6396, 0
        %v6445 = vsel %vm5860, %v6397, 0
        %v6448 = vsel %vm5860, %v6398, 0
        %v6451 = vsel %vm5860, %v6399, 0
        %v6454 = vsel %vm5860, %v6400, 0
        %v6457 = vsel %vm5860, %v6401, 0
        %v6460 = vsel %vm5860, %v6402, 0
        %6462 = vmatprep.subr.mxu0 0.0
        %6463 = vmatpush1.msra.mxu0 %v6404
        %6464 = vmatprep.subr.mxu0 0.0
        %6465 = vmatpush1.msra.mxu0 %v6405
        %6466 = vmatprep.subr.mxu0 0.0
        %6467 = vmatpush1.msra.mxu0 %v6406
        %6468 = vmatprep.subr.mxu0 0.0
        %6469 = vmatpush1.msra.mxu0 %v6407
        %6470 = vmatprep.subr.mxu0 0.0
        %6471 = vmatpush1.msra.mxu0 0.0
        %6472 = vmatprep.subr.mxu0 0.0
        %6473 = vmatpush1.msra.mxu0 0.0
        %6474 = vmatprep.subr.mxu0 0.0
        %6475 = vmatpush1.msra.mxu0 0.0
        %6476 = vmatprep.subr.mxu0 0.0
        %6477 = vmatpush1.msra.mxu0 0.0
        %6478 = vmatprep.subr.mxu0 0.0
        %6479 = vmatpush1.msra.mxu0 0.0
        %6480 = vmatprep.subr.mxu0 0.0
        %6481 = vmatpush1.msra.mxu0 0.0
        %6482 = vmatprep.subr.mxu0 0.0
        %6483 = vmatpush1.msra.mxu0 0.0
        %6484 = vmatprep.subr.mxu0 0.0
        %6485 = vmatpush1.msra.mxu0 0.0
        %6486 = vmatprep.subr.mxu0 0.0
        %6487 = vmatpush1.msra.mxu0 0.0
        %6488 = vmatprep.subr.mxu0 0.0
        %6489 = vmatpush1.msra.mxu0 0.0
        %6490 = vmatprep.subr.mxu0 0.0
        %6491 = vmatpush1.msra.mxu0 0.0
        %6492 = vmatprep.subr.mxu0 0.0
        %6493 = vmatpush1.msra.mxu0 0.0
        %6494 = vmatprep.subr.mxu0 0.0
        %6495 = vmatpush1.msra.mxu0 0.0
        %6496 = vmatprep.subr.mxu0 0.0
        %6497 = vmatpush1.msra.mxu0 0.0
        %6498 = vmatprep.subr.mxu0 0.0
        %6499 = vmatpush1.msra.mxu0 0.0
        %6500 = vmatprep.subr.mxu0 0.0
        %6501 = vmatpush1.msra.mxu0 0.0
        %6502 = vmatprep.subr.mxu0 0.0
        %6503 = vmatpush1.msra.mxu0 0.0
        %6504 = vmatprep.subr.mxu0 0.0
        %6505 = vmatpush1.msra.mxu0 0.0
        %6506 = vmatprep.subr.mxu0 0.0
        %6507 = vmatpush1.msra.mxu0 0.0
        %6508 = vmatprep.subr.mxu0 0.0
        %6509 = vmatpush1.msra.mxu0 0.0
        %6510 = vmatprep.subr.mxu0 0.0
        %6511 = vmatpush1.msra.mxu0 0.0
        %6512 = vmatprep.subr.mxu0 0.0
        %6513 = vmatpush1.msra.mxu0 0.0
        %6514 = vmatprep.subr.mxu0 0.0
        %6515 = vmatpush1.msra.mxu0 0.0
        %6516 = vmatprep.subr.mxu0 0.0
        %6517 = vmatpush1.msra.mxu0 0.0
        %6518 = vmatprep.subr.mxu0 0.0
        %6519 = vmatpush1.msra.mxu0 0.0
        %6520 = vmatprep.subr.mxu0 0.0
        %6521 = vmatpush1.msra.mxu0 0.0
        %6522 = vmatprep.subr.mxu0 0.0
        %6523 = vmatpush1.msra.mxu0 0.0
        %6524 = vmatprep.subr.mxu0 0.0
        %6525 = vmatpush1.msra.mxu0 0.0
        %6526 = vmatprep.mubr.f32.mxu0 0.0
        %6527 = vmatmul.mubr.f32.gmra.mrb[0].mxu0 %v6409
        %v6528 = vpop.f32.mrb[0].mxu0
        %v6529 = vadd.f32 0.0, %v6528
        %v6530 = vpop.f32.mrb[0].mxu0
        %6531 = vmatprep.mubr.f32.mxu0 0.0
        %6532 = vmatmul.mubr.f32.gmra.mrb[0].mxu0 %v6412
        %v6533 = vpop.f32.mrb[0].mxu0
        %v6534 = vadd.f32 0.0, %v6533
        %v6535 = vpop.f32.mrb[0].mxu0
        %6536 = vmatprep.mubr.f32.mxu0 0.0
        %6537 = vmatmul.mubr.f32.gmra.mrb[0].mxu0 %v6415
        %v6538 = vpop.f32.mrb[0].mxu0
        %v6539 = vadd.f32 0.0, %v6538
        %v6540 = vpop.f32.mrb[0].mxu0
        %6541 = vmatprep.mubr.f32.mxu0 0.0
        %6542 = vmatmul.mubr.f32.gmra.mrb[0].mxu0 %v6418
        %v6543 = vpop.f32.mrb[0].mxu0
        %v6544 = vadd.f32 0.0, %v6543
        %v6545 = vpop.f32.mrb[0].mxu0
        %6546 = vmatprep.mubr.f32.mxu0 0.0
        %6547 = vmatmul.mubr.f32.gmra.mrb[0].mxu0 %v6421
        %v6548 = vpop.f32.mrb[0].mxu0
        %v6549 = vadd.f32 0.0, %v6548
        %v6550 = vpop.f32.mrb[0].mxu0
        %6551 = vmatprep.mubr.f32.mxu0 0.0
        %6552 = vmatmul.mubr.f32.gmra.mrb[0].mxu0 %v6424
        %v6553 = vpop.f32.mrb[0].mxu0
        %v6554 = vadd.f32 0.0, %v6553
        %v6555 = vpop.f32.mrb[0].mxu0
        %6556 = vmatprep.mubr.f32.mxu0 0.0
        %6557 = vmatmul.mubr.f32.gmra.mrb[0].mxu0 %v6427
        %v6558 = vpop.f32.mrb[0].mxu0
        %v6559 = vadd.f32 0.0, %v6558
        %v6560 = vpop.f32.mrb[0].mxu0
        %6561 = vmatprep.mubr.f32.mxu0 0.0
        %6562 = vmatmul.mubr.f32.gmra.mrb[0].mxu0 %v6430
        %v6563 = vpop.f32.mrb[0].mxu0
        %v6564 = vadd.f32 0.0, %v6563
        %v6565 = vpop.f32.mrb[0].mxu0
        %6566 = vmatprep.mubr.f32.mxu0 0.0
        %6567 = vmatmul.mubr.f32.gmra.mrb[0].mxu0 %v6433
        %v6568 = vpop.f32.mrb[0].mxu0
        %v6569 = vadd.f32 0.0, %v6568
        %v6570 = vpop.f32.mrb[0].mxu0
        %6571 = vmatprep.mubr.f32.mxu0 0.0
        %6572 = vmatmul.mubr.f32.gmra.mrb[0].mxu0 %v6436
        %v6573 = vpop.f32.mrb[0].mxu0
        %v6574 = vadd.f32 0.0, %v6573
        %v6575 = vpop.f32.mrb[0].mxu0
        %6576 = vmatprep.mubr.f32.mxu0 0.0
        %6577 = vmatmul.mubr.f32.gmra.mrb[0].mxu0 %v6439
        %v6578 = vpop.f32.mrb[0].mxu0
        %v6579 = vadd.f32 0.0, %v6578
        %v6580 = vpop.f32.mrb[0].mxu0
        %6581 = vmatprep.mubr.f32.mxu0 0.0
        %6582 = vmatmul.mubr.f32.gmra.mrb[0].mxu0 %v6442
        %v6583 = vpop.f32.mrb[0].mxu0
        %v6584 = vadd.f32 0.0, %v6583
        %v6585 = vpop.f32.mrb[0].mxu0
        %6586 = vmatprep.mubr.f32.mxu0 0.0
        %6587 = vmatmul.mubr.f32.gmra.mrb[0].mxu0 %v6445
        %v6588 = vpop.f32.mrb[0].mxu0
        %v6589 = vadd.f32 0.0, %v6588
        %v6590 = vpop.f32.mrb[0].mxu0
        %6591 = vmatprep.mubr.f32.mxu0 0.0
        %6592 = vmatmul.mubr.f32.gmra.mrb[0].mxu0 %v6448
        %v6593 = vpop.f32.mrb[0].mxu0
        %v6594 = vadd.f32 0.0, %v6593
        %v6595 = vpop.f32.mrb[0].mxu0
        %6596 = vmatprep.mubr.f32.mxu0 0.0
        %6597 = vmatmul.mubr.f32.gmra.mrb[0].mxu0 %v6451
        %v6598 = vpop.f32.mrb[0].mxu0
        %v6599 = vadd.f32 0.0, %v6598
        %v6600 = vpop.f32.mrb[0].mxu0
        %6601 = vmatprep.mubr.f32.mxu0 0.0
        %6602 = vmatmul.mubr.f32.gmra.mrb[0].mxu0 %v6454
        %v6603 = vpop.f32.mrb[0].mxu0
        %v6604 = vadd.f32 0.0, %v6603
        %v6605 = vpop.f32.mrb[0].mxu0
        %6606 = vmatprep.mubr.f32.mxu0 0.0
        %6607 = vmatmul.mubr.f32.gmra.mrb[0].mxu0 %v6457
        %v6608 = vpop.f32.mrb[0].mxu0
        %v6609 = vadd.f32 0.0, %v6608
        %v6610 = vpop.f32.mrb[0].mxu0
        %6611 = vmatprep.mubr.f32.mxu0 0.0
        %6612 = vmatmul.mubr.f32.gmra.mrb[0].mxu0 %v6460
        %v6613 = vpop.f32.mrb[0].mxu0
        %v6614 = vpop.f32.mrb[0].mxu0
        %6615 = vdwg.mxu0
        %v6616 = vadd.f32 %v6298, %v6529
        %v6617 = vadd.f32 %v6303, %v6534
        %v6618 = vadd.f32 %v6308, %v6539
        %v6619 = vadd.f32 %v6313, %v6544
        %v6620 = vadd.f32 %v6318, %v6549
        %v6621 = vadd.f32 %v6323, %v6554
        %v6622 = vadd.f32 %v6328, %v6559
        %v6623 = vadd.f32 %v6333, %v6564
        %v6624 = vadd.f32 %v6338, %v6569
        %v6625 = vadd.f32 %v6343, %v6574
        %v6626 = vadd.f32 %v6348, %v6579
        %v6627 = vadd.f32 %v6353, %v6584
        %v6628 = vadd.f32 %v6358, %v6589
        %v6629 = vadd.f32 %v6363, %v6594
        %v6630 = vadd.f32 %v6368, %v6599
        %v6631 = vadd.f32 %v6373, %v6604
        %v6632 = vadd.f32 %v6378, %v6609
        %v6633 = vld [vmem:[#allocation2 + $0xd] sm:$0xff]
        %v6634 = vld [vmem:[#allocation2 + $0x15] sm:$0xff]
        %v6635 = vld [vmem:[#allocation2 + $0x1d] sm:$0xff]
        %v6636 = vld [vmem:[#allocation2 + $0x25] sm:$0xff]
        %v6637 = vld [vmem:[#allocation2 + $0x2d] sm:$0xff]
        %v6638 = vld [vmem:[#allocation2 + $0x35] sm:$0xff]
        %v6639 = vld [vmem:[#allocation2 + $0x3d] sm:$0xff]
        %v6640 = vld [vmem:[#allocation2 + $0x45] sm:$0xff]
        %v6641 = vld [vmem:[#allocation2 + $0x4d] sm:$0xff]
        %v6642 = vld [vmem:[#allocation2 + $0x55] sm:$0xff]
        %v6643 = vld [vmem:[#allocation2 + $0x5d] sm:$0xff]
        %v6644 = vld [vmem:[#allocation2 + $0x65] sm:$0xff]
        %v6645 = vld [vmem:[#allocation2 + $0x6d] sm:$0xff]
        %v6646 = vld [vmem:[#allocation2 + $0x75] sm:$0xff]
        %v6647 = vld [vmem:[#allocation2 + $0x7d] sm:$0xff]
        %v6648 = vld [vmem:[#allocation2 + $0x85] sm:$0xff]
        %v6649 = vld [vmem:[#allocation2 + $0x8d] sm:$0xff]
        %v6650 = vld [vmem:[#allocation2 + $0x95] sm:$0x7f]
        %s6651 = scalar_lea.vmem %s3, 96
        %v6652 = vld [vmem:[%s6651] sm:$0xff]
        %v6653 = vld [vmem:[%s6651 + $0x8] sm:$0xff]
        %v6654 = vld [vmem:[%s6651 + $0x10] sm:$0xff]
        %v6655 = vld [vmem:[%s6651 + $0x18] sm:$0xff]
        %v6657 = vsel %vm5860, %v6633, 0
        %v6660 = vsel %vm5860, %v6634, 0
        %v6663 = vsel %vm5860, %v6635, 0
        %v6666 = vsel %vm5860, %v6636, 0
        %v6669 = vsel %vm5860, %v6637, 0
        %v6672 = vsel %vm5860, %v6638, 0
        %v6675 = vsel %vm5860, %v6639, 0
        %v6678 = vsel %vm5860, %v6640, 0
        %v6681 = vsel %vm5860, %v6641, 0
        %v6684 = vsel %vm5860, %v6642, 0
        %v6687 = vsel %vm5860, %v6643, 0
        %v6690 = vsel %vm5860, %v6644, 0
        %v6693 = vsel %vm5860, %v6645, 0
        %v6696 = vsel %vm5860, %v6646, 0
        %v6699 = vsel %vm5860, %v6647, 0
        %v6702 = vsel %vm5860, %v6648, 0
        %v6705 = vsel %vm5860, %v6649, 0
        %v6708 = vsel %vm5860, %v6650, 0
        %6710 = vmatprep.subr.mxu0 0.0
        %6711 = vmatpush1.msra.mxu0 %v6652
        %6712 = vmatprep.subr.mxu0 0.0
        %6713 = vmatpush1.msra.mxu0 %v6653
        %6714 = vmatprep.subr.mxu0 0.0
        %6715 = vmatpush1.msra.mxu0 %v6654
        %6716 = vmatprep.subr.mxu0 0.0
        %6717 = vmatpush1.msra.mxu0 %v6655
        %6718 = vmatprep.subr.mxu0 0.0
        %6719 = vmatpush1.msra.mxu0 0.0
        %6720 = vmatprep.subr.mxu0 0.0
        %6721 = vmatpush1.msra.mxu0 0.0
        %6722 = vmatprep.subr.mxu0 0.0
        %6723 = vmatpush1.msra.mxu0 0.0
        %6724 = vmatprep.subr.mxu0 0.0
        %6725 = vmatpush1.msra.mxu0 0.0
        %6726 = vmatprep.subr.mxu0 0.0
        %6727 = vmatpush1.msra.mxu0 0.0
        %6728 = vmatprep.subr.mxu0 0.0
        %6729 = vmatpush1.msra.mxu0 0.0
        %6730 = vmatprep.subr.mxu0 0.0
        %6731 = vmatpush1.msra.mxu0 0.0
        %6732 = vmatprep.subr.mxu0 0.0
        %6733 = vmatpush1.msra.mxu0 0.0
        %6734 = vmatprep.subr.mxu0 0.0
        %6735 = vmatpush1.msra.mxu0 0.0
        %6736 = vmatprep.subr.mxu0 0.0
        %6737 = vmatpush1.msra.mxu0 0.0
        %6738 = vmatprep.subr.mxu0 0.0
        %6739 = vmatpush1.msra.mxu0 0.0
        %6740 = vmatprep.subr.mxu0 0.0
        %6741 = vmatpush1.msra.mxu0 0.0
        %6742 = vmatprep.subr.mxu0 0.0
        %6743 = vmatpush1.msra.mxu0 0.0
        %6744 = vmatprep.subr.mxu0 0.0
        %6745 = vmatpush1.msra.mxu0 0.0
        %6746 = vmatprep.subr.mxu0 0.0
        %6747 = vmatpush1.msra.mxu0 0.0
        %6748 = vmatprep.subr.mxu0 0.0
        %6749 = vmatpush1.msra.mxu0 0.0
        %6750 = vmatprep.subr.mxu0 0.0
        %6751 = vmatpush1.msra.mxu0 0.0
        %6752 = vmatprep.subr.mxu0 0.0
        %6753 = vmatpush1.msra.mxu0 0.0
        %6754 = vmatprep.subr.mxu0 0.0
        %6755 = vmatpush1.msra.mxu0 0.0
        %6756 = vmatprep.subr.mxu0 0.0
        %6757 = vmatpush1.msra.mxu0 0.0
        %6758 = vmatprep.subr.mxu0 0.0
        %6759 = vmatpush1.msra.mxu0 0.0
        %6760 = vmatprep.subr.mxu0 0.0
        %6761 = vmatpush1.msra.mxu0 0.0
        %6762 = vmatprep.subr.mxu0 0.0
        %6763 = vmatpush1.msra.mxu0 0.0
        %6764 = vmatprep.subr.mxu0 0.0
        %6765 = vmatpush1.msra.mxu0 0.0
        %6766 = vmatprep.subr.mxu0 0.0
        %6767 = vmatpush1.msra.mxu0 0.0
        %6768 = vmatprep.subr.mxu0 0.0
        %6769 = vmatpush1.msra.mxu0 0.0
        %6770 = vmatprep.subr.mxu0 0.0
        %6771 = vmatpush1.msra.mxu0 0.0
        %6772 = vmatprep.subr.mxu0 0.0
        %6773 = vmatpush1.msra.mxu0 0.0
        %6774 = vmatprep.mubr.f32.mxu0 0.0
        %6775 = vmatmul.mubr.f32.gmra.mrb[0].mxu0 %v6657
        %v6776 = vpop.f32.mrb[0].mxu0
        %v6777 = vadd.f32 0.0, %v6776
        %v6778 = vpop.f32.mrb[0].mxu0
        %6779 = vmatprep.mubr.f32.mxu0 0.0
        %6780 = vmatmul.mubr.f32.gmra.mrb[0].mxu0 %v6660
        %v6781 = vpop.f32.mrb[0].mxu0
        %v6782 = vadd.f32 0.0, %v6781
        %v6783 = vpop.f32.mrb[0].mxu0
        %6784 = vmatprep.mubr.f32.mxu0 0.0
        %6785 = vmatmul.mubr.f32.gmra.mrb[0].mxu0 %v6663
        %v6786 = vpop.f32.mrb[0].mxu0
        %v6787 = vadd.f32 0.0, %v6786
        %v6788 = vpop.f32.mrb[0].mxu0
        %6789 = vmatprep.mubr.f32.mxu0 0.0
        %6790 = vmatmul.mubr.f32.gmra.mrb[0].mxu0 %v6666
        %v6791 = vpop.f32.mrb[0].mxu0
        %v6792 = vadd.f32 0.0, %v6791
        %v6793 = vpop.f32.mrb[0].mxu0
        %6794 = vmatprep.mubr.f32.mxu0 0.0
        %6795 = vmatmul.mubr.f32.gmra.mrb[0].mxu0 %v6669
        %v6796 = vpop.f32.mrb[0].mxu0
        %v6797 = vadd.f32 0.0, %v6796
        %v6798 = vpop.f32.mrb[0].mxu0
        %6799 = vmatprep.mubr.f32.mxu0 0.0
        %6800 = vmatmul.mubr.f32.gmra.mrb[0].mxu0 %v6672
        %v6801 = vpop.f32.mrb[0].mxu0
        %v6802 = vadd.f32 0.0, %v6801
        %v6803 = vpop.f32.mrb[0].mxu0
        %6804 = vmatprep.mubr.f32.mxu0 0.0
        %6805 = vmatmul.mubr.f32.gmra.mrb[0].mxu0 %v6675
        %v6806 = vpop.f32.mrb[0].mxu0
        %v6807 = vadd.f32 0.0, %v6806
        %v6808 = vpop.f32.mrb[0].mxu0
        %6809 = vmatprep.mubr.f32.mxu0 0.0
        %6810 = vmatmul.mubr.f32.gmra.mrb[0].mxu0 %v6678
        %v6811 = vpop.f32.mrb[0].mxu0
        %v6812 = vadd.f32 0.0, %v6811
        %v6813 = vpop.f32.mrb[0].mxu0
        %6814 = vmatprep.mubr.f32.mxu0 0.0
        %6815 = vmatmul.mubr.f32.gmra.mrb[0].mxu0 %v6681
        %v6816 = vpop.f32.mrb[0].mxu0
        %v6817 = vadd.f32 0.0, %v6816
        %v6818 = vpop.f32.mrb[0].mxu0
        %6819 = vmatprep.mubr.f32.mxu0 0.0
        %6820 = vmatmul.mubr.f32.gmra.mrb[0].mxu0 %v6684
        %v6821 = vpop.f32.mrb[0].mxu0
        %v6822 = vadd.f32 0.0, %v6821
        %v6823 = vpop.f32.mrb[0].mxu0
        %6824 = vmatprep.mubr.f32.mxu0 0.0
        %6825 = vmatmul.mubr.f32.gmra.mrb[0].mxu0 %v6687
        %v6826 = vpop.f32.mrb[0].mxu0
        %v6827 = vadd.f32 0.0, %v6826
        %v6828 = vpop.f32.mrb[0].mxu0
        %6829 = vmatprep.mubr.f32.mxu0 0.0
        %6830 = vmatmul.mubr.f32.gmra.mrb[0].mxu0 %v6690
        %v6831 = vpop.f32.mrb[0].mxu0
        %v6832 = vadd.f32 0.0, %v6831
        %v6833 = vpop.f32.mrb[0].mxu0
        %6834 = vmatprep.mubr.f32.mxu0 0.0
        %6835 = vmatmul.mubr.f32.gmra.mrb[0].mxu0 %v6693
        %v6836 = vpop.f32.mrb[0].mxu0
        %v6837 = vadd.f32 0.0, %v6836
        %v6838 = vpop.f32.mrb[0].mxu0
        %6839 = vmatprep.mubr.f32.mxu0 0.0
        %6840 = vmatmul.mubr.f32.gmra.mrb[0].mxu0 %v6696
        %v6841 = vpop.f32.mrb[0].mxu0
        %v6842 = vadd.f32 0.0, %v6841
        %v6843 = vpop.f32.mrb[0].mxu0
        %6844 = vmatprep.mubr.f32.mxu0 0.0
        %6845 = vmatmul.mubr.f32.gmra.mrb[0].mxu0 %v6699
        %v6846 = vpop.f32.mrb[0].mxu0
        %v6847 = vadd.f32 0.0, %v6846
        %v6848 = vpop.f32.mrb[0].mxu0
        %6849 = vmatprep.mubr.f32.mxu0 0.0
        %6850 = vmatmul.mubr.f32.gmra.mrb[0].mxu0 %v6702
        %v6851 = vpop.f32.mrb[0].mxu0
        %v6852 = vadd.f32 0.0, %v6851
        %v6853 = vpop.f32.mrb[0].mxu0
        %6854 = vmatprep.mubr.f32.mxu0 0.0
        %6855 = vmatmul.mubr.f32.gmra.mrb[0].mxu0 %v6705
        %v6856 = vpop.f32.mrb[0].mxu0
        %v6857 = vadd.f32 0.0, %v6856
        %v6858 = vpop.f32.mrb[0].mxu0
        %6859 = vmatprep.mubr.f32.mxu0 0.0
        %6860 = vmatmul.mubr.f32.gmra.mrb[0].mxu0 %v6708
        %v6861 = vpop.f32.mrb[0].mxu0
        %v6862 = vpop.f32.mrb[0].mxu0
        %6863 = vdwg.mxu0
        %v6864 = vadd.f32 %v6616, %v6777
        %v6865 = vadd.f32 %v6617, %v6782
        %v6866 = vadd.f32 %v6618, %v6787
        %v6867 = vadd.f32 %v6619, %v6792
        %v6868 = vadd.f32 %v6620, %v6797
        %v6869 = vadd.f32 %v6621, %v6802
        %v6870 = vadd.f32 %v6622, %v6807
        %v6871 = vadd.f32 %v6623, %v6812
        %v6872 = vadd.f32 %v6624, %v6817
        %v6873 = vadd.f32 %v6625, %v6822
        %v6874 = vadd.f32 %v6626, %v6827
        %v6875 = vadd.f32 %v6627, %v6832
        %v6876 = vadd.f32 %v6628, %v6837
        %v6877 = vadd.f32 %v6629, %v6842
        %v6878 = vadd.f32 %v6630, %v6847
        %v6879 = vadd.f32 %v6631, %v6852
        %v6880 = vadd.f32 %v6632, %v6857
        %v6881 = vld [vmem:[#allocation2 + $0xe] sm:$0xff]
        %v6882 = vld [vmem:[#allocation2 + $0x16] sm:$0xff]
        %v6883 = vld [vmem:[#allocation2 + $0x1e] sm:$0xff]
        %v6884 = vld [vmem:[#allocation2 + $0x26] sm:$0xff]
        %v6885 = vld [vmem:[#allocation2 + $0x2e] sm:$0xff]
        %v6886 = vld [vmem:[#allocation2 + $0x36] sm:$0xff]
        %v6887 = vld [vmem:[#allocation2 + $0x3e] sm:$0xff]
        %v6888 = vld [vmem:[#allocation2 + $0x46] sm:$0xff]
        %v6889 = vld [vmem:[#allocation2 + $0x4e] sm:$0xff]
        %v6890 = vld [vmem:[#allocation2 + $0x56] sm:$0xff]
        %v6891 = vld [vmem:[#allocation2 + $0x5e] sm:$0xff]
        %v6892 = vld [vmem:[#allocation2 + $0x66] sm:$0xff]
        %v6893 = vld [vmem:[#allocation2 + $0x6e] sm:$0xff]
        %v6894 = vld [vmem:[#allocation2 + $0x76] sm:$0xff]
        %v6895 = vld [vmem:[#allocation2 + $0x7e] sm:$0xff]
        %v6896 = vld [vmem:[#allocation2 + $0x86] sm:$0xff]
        %v6897 = vld [vmem:[#allocation2 + $0x8e] sm:$0xff]
        %v6898 = vld [vmem:[#allocation2 + $0x96] sm:$0x7f]
        %s6899 = scalar_lea.vmem %s3, 128
        %v6900 = vld [vmem:[%s6899] sm:$0xff]
        %v6901 = vld [vmem:[%s6899 + $0x8] sm:$0xff]
        %v6902 = vld [vmem:[%s6899 + $0x10] sm:$0xff]
        %v6903 = vld [vmem:[%s6899 + $0x18] sm:$0xff]
        %v6905 = vsel %vm5860, %v6881, 0
        %v6908 = vsel %vm5860, %v6882, 0
        %v6911 = vsel %vm5860, %v6883, 0
        %v6914 = vsel %vm5860, %v6884, 0
        %v6917 = vsel %vm5860, %v6885, 0
        %v6920 = vsel %vm5860, %v6886, 0
        %v6923 = vsel %vm5860, %v6887, 0
        %v6926 = vsel %vm5860, %v6888, 0
        %v6929 = vsel %vm5860, %v6889, 0
        %v6932 = vsel %vm5860, %v6890, 0
        %v6935 = vsel %vm5860, %v6891, 0
        %v6938 = vsel %vm5860, %v6892, 0
        %v6941 = vsel %vm5860, %v6893, 0
        %v6944 = vsel %vm5860, %v6894, 0
        %v6947 = vsel %vm5860, %v6895, 0
        %v6950 = vsel %vm5860, %v6896, 0
        %v6953 = vsel %vm5860, %v6897, 0
        %v6956 = vsel %vm5860, %v6898, 0
        %6958 = vmatprep.subr.mxu0 0.0
        %6959 = vmatpush1.msra.mxu0 %v6900
        %6960 = vmatprep.subr.mxu0 0.0
        %6961 = vmatpush1.msra.mxu0 %v6901
        %6962 = vmatprep.subr.mxu0 0.0
        %6963 = vmatpush1.msra.mxu0 %v6902
        %6964 = vmatprep.subr.mxu0 0.0
        %6965 = vmatpush1.msra.mxu0 %v6903
        %6966 = vmatprep.subr.mxu0 0.0
        %6967 = vmatpush1.msra.mxu0 0.0
        %6968 = vmatprep.subr.mxu0 0.0
        %6969 = vmatpush1.msra.mxu0 0.0
        %6970 = vmatprep.subr.mxu0 0.0
        %6971 = vmatpush1.msra.mxu0 0.0
        %6972 = vmatprep.subr.mxu0 0.0
        %6973 = vmatpush1.msra.mxu0 0.0
        %6974 = vmatprep.subr.mxu0 0.0
        %6975 = vmatpush1.msra.mxu0 0.0
        %6976 = vmatprep.subr.mxu0 0.0
        %6977 = vmatpush1.msra.mxu0 0.0
        %6978 = vmatprep.subr.mxu0 0.0
        %6979 = vmatpush1.msra.mxu0 0.0
        %6980 = vmatprep.subr.mxu0 0.0
        %6981 = vmatpush1.msra.mxu0 0.0
        %6982 = vmatprep.subr.mxu0 0.0
        %6983 = vmatpush1.msra.mxu0 0.0
        %6984 = vmatprep.subr.mxu0 0.0
        %6985 = vmatpush1.msra.mxu0 0.0
        %6986 = vmatprep.subr.mxu0 0.0
        %6987 = vmatpush1.msra.mxu0 0.0
        %6988 = vmatprep.subr.mxu0 0.0
        %6989 = vmatpush1.msra.mxu0 0.0
        %6990 = vmatprep.subr.mxu0 0.0
        %6991 = vmatpush1.msra.mxu0 0.0
        %6992 = vmatprep.subr.mxu0 0.0
        %6993 = vmatpush1.msra.mxu0 0.0
        %6994 = vmatprep.subr.mxu0 0.0
        %6995 = vmatpush1.msra.mxu0 0.0
        %6996 = vmatprep.subr.mxu0 0.0
        %6997 = vmatpush1.msra.mxu0 0.0
        %6998 = vmatprep.subr.mxu0 0.0
        %6999 = vmatpush1.msra.mxu0 0.0
        %7000 = vmatprep.subr.mxu0 0.0
        %7001 = vmatpush1.msra.mxu0 0.0
        %7002 = vmatprep.subr.mxu0 0.0
        %7003 = vmatpush1.msra.mxu0 0.0
        %7004 = vmatprep.subr.mxu0 0.0
        %7005 = vmatpush1.msra.mxu0 0.0
        %7006 = vmatprep.subr.mxu0 0.0
        %7007 = vmatpush1.msra.mxu0 0.0
        %7008 = vmatprep.subr.mxu0 0.0
        %7009 = vmatpush1.msra.mxu0 0.0
        %7010 = vmatprep.subr.mxu0 0.0
        %7011 = vmatpush1.msra.mxu0 0.0
        %7012 = vmatprep.subr.mxu0 0.0
        %7013 = vmatpush1.msra.mxu0 0.0
        %7014 = vmatprep.subr.mxu0 0.0
        %7015 = vmatpush1.msra.mxu0 0.0
        %7016 = vmatprep.subr.mxu0 0.0
        %7017 = vmatpush1.msra.mxu0 0.0
        %7018 = vmatprep.subr.mxu0 0.0
        %7019 = vmatpush1.msra.mxu0 0.0
        %7020 = vmatprep.subr.mxu0 0.0
        %7021 = vmatpush1.msra.mxu0 0.0
        %7022 = vmatprep.mubr.f32.mxu0 0.0
        %7023 = vmatmul.mubr.f32.gmra.mrb[0].mxu0 %v6905
        %v7024 = vpop.f32.mrb[0].mxu0
        %v7025 = vadd.f32 0.0, %v7024
        %v7026 = vpop.f32.mrb[0].mxu0
        %7027 = vmatprep.mubr.f32.mxu0 0.0
        %7028 = vmatmul.mubr.f32.gmra.mrb[0].mxu0 %v6908
        %v7029 = vpop.f32.mrb[0].mxu0
        %v7030 = vadd.f32 0.0, %v7029
        %v7031 = vpop.f32.mrb[0].mxu0
        %7032 = vmatprep.mubr.f32.mxu0 0.0
        %7033 = vmatmul.mubr.f32.gmra.mrb[0].mxu0 %v6911
        %v7034 = vpop.f32.mrb[0].mxu0
        %v7035 = vadd.f32 0.0, %v7034
        %v7036 = vpop.f32.mrb[0].mxu0
        %7037 = vmatprep.mubr.f32.mxu0 0.0
        %7038 = vmatmul.mubr.f32.gmra.mrb[0].mxu0 %v6914
        %v7039 = vpop.f32.mrb[0].mxu0
        %v7040 = vadd.f32 0.0, %v7039
        %v7041 = vpop.f32.mrb[0].mxu0
        %7042 = vmatprep.mubr.f32.mxu0 0.0
        %7043 = vmatmul.mubr.f32.gmra.mrb[0].mxu0 %v6917
        %v7044 = vpop.f32.mrb[0].mxu0
        %v7045 = vadd.f32 0.0, %v7044
        %v7046 = vpop.f32.mrb[0].mxu0
        %7047 = vmatprep.mubr.f32.mxu0 0.0
        %7048 = vmatmul.mubr.f32.gmra.mrb[0].mxu0 %v6920
        %v7049 = vpop.f32.mrb[0].mxu0
        %v7050 = vadd.f32 0.0, %v7049
        %v7051 = vpop.f32.mrb[0].mxu0
        %7052 = vmatprep.mubr.f32.mxu0 0.0
        %7053 = vmatmul.mubr.f32.gmra.mrb[0].mxu0 %v6923
        %v7054 = vpop.f32.mrb[0].mxu0
        %v7055 = vadd.f32 0.0, %v7054
        %v7056 = vpop.f32.mrb[0].mxu0
        %7057 = vmatprep.mubr.f32.mxu0 0.0
        %7058 = vmatmul.mubr.f32.gmra.mrb[0].mxu0 %v6926
        %v7059 = vpop.f32.mrb[0].mxu0
        %v7060 = vadd.f32 0.0, %v7059
        %v7061 = vpop.f32.mrb[0].mxu0
        %7062 = vmatprep.mubr.f32.mxu0 0.0
        %7063 = vmatmul.mubr.f32.gmra.mrb[0].mxu0 %v6929
        %v7064 = vpop.f32.mrb[0].mxu0
        %v7065 = vadd.f32 0.0, %v7064
        %v7066 = vpop.f32.mrb[0].mxu0
        %7067 = vmatprep.mubr.f32.mxu0 0.0
        %7068 = vmatmul.mubr.f32.gmra.mrb[0].mxu0 %v6932
        %v7069 = vpop.f32.mrb[0].mxu0
        %v7070 = vadd.f32 0.0, %v7069
        %v7071 = vpop.f32.mrb[0].mxu0
        %7072 = vmatprep.mubr.f32.mxu0 0.0
        %7073 = vmatmul.mubr.f32.gmra.mrb[0].mxu0 %v6935
        %v7074 = vpop.f32.mrb[0].mxu0
        %v7075 = vadd.f32 0.0, %v7074
        %v7076 = vpop.f32.mrb[0].mxu0
        %7077 = vmatprep.mubr.f32.mxu0 0.0
        %7078 = vmatmul.mubr.f32.gmra.mrb[0].mxu0 %v6938
        %v7079 = vpop.f32.mrb[0].mxu0
        %v7080 = vadd.f32 0.0, %v7079
        %v7081 = vpop.f32.mrb[0].mxu0
        %7082 = vmatprep.mubr.f32.mxu0 0.0
        %7083 = vmatmul.mubr.f32.gmra.mrb[0].mxu0 %v6941
        %v7084 = vpop.f32.mrb[0].mxu0
        %v7085 = vadd.f32 0.0, %v7084
        %v7086 = vpop.f32.mrb[0].mxu0
        %7087 = vmatprep.mubr.f32.mxu0 0.0
        %7088 = vmatmul.mubr.f32.gmra.mrb[0].mxu0 %v6944
        %v7089 = vpop.f32.mrb[0].mxu0
        %v7090 = vadd.f32 0.0, %v7089
        %v7091 = vpop.f32.mrb[0].mxu0
        %7092 = vmatprep.mubr.f32.mxu0 0.0
        %7093 = vmatmul.mubr.f32.gmra.mrb[0].mxu0 %v6947
        %v7094 = vpop.f32.mrb[0].mxu0
        %v7095 = vadd.f32 0.0, %v7094
        %v7096 = vpop.f32.mrb[0].mxu0
        %7097 = vmatprep.mubr.f32.mxu0 0.0
        %7098 = vmatmul.mubr.f32.gmra.mrb[0].mxu0 %v6950
        %v7099 = vpop.f32.mrb[0].mxu0
        %v7100 = vadd.f32 0.0, %v7099
        %v7101 = vpop.f32.mrb[0].mxu0
        %7102 = vmatprep.mubr.f32.mxu0 0.0
        %7103 = vmatmul.mubr.f32.gmra.mrb[0].mxu0 %v6953
        %v7104 = vpop.f32.mrb[0].mxu0
        %v7105 = vadd.f32 0.0, %v7104
        %v7106 = vpop.f32.mrb[0].mxu0
        %7107 = vmatprep.mubr.f32.mxu0 0.0
        %7108 = vmatmul.mubr.f32.gmra.mrb[0].mxu0 %v6956
        %v7109 = vpop.f32.mrb[0].mxu0
        %v7110 = vpop.f32.mrb[0].mxu0
        %7111 = vdwg.mxu0
        %v7112 = vadd.f32 %v6864, %v7025
        %v7113 = vadd.f32 %v6865, %v7030
        %v7114 = vadd.f32 %v6866, %v7035
        %v7115 = vadd.f32 %v6867, %v7040
        %v7116 = vadd.f32 %v6868, %v7045
        %v7117 = vadd.f32 %v6869, %v7050
        %v7118 = vadd.f32 %v6870, %v7055
        %v7119 = vadd.f32 %v6871, %v7060
        %v7120 = vadd.f32 %v6872, %v7065
        %v7121 = vadd.f32 %v6873, %v7070
        %v7122 = vadd.f32 %v6874, %v7075
        %v7123 = vadd.f32 %v6875, %v7080
        %v7124 = vadd.f32 %v6876, %v7085
        %v7125 = vadd.f32 %v6877, %v7090
        %v7126 = vadd.f32 %v6878, %v7095
        %v7127 = vadd.f32 %v6879, %v7100
        %v7128 = vadd.f32 %v6880, %v7105
        %v7129 = vld [vmem:[#allocation2 + $0xf] sm:$0xff]
        %v7130 = vld [vmem:[#allocation2 + $0x17] sm:$0xff]
        %v7131 = vld [vmem:[#allocation2 + $0x1f] sm:$0xff]
        %v7132 = vld [vmem:[#allocation2 + $0x27] sm:$0xff]
        %v7133 = vld [vmem:[#allocation2 + $0x2f] sm:$0xff]
        %v7134 = vld [vmem:[#allocation2 + $0x37] sm:$0xff]
        %v7135 = vld [vmem:[#allocation2 + $0x3f] sm:$0xff]
        %v7136 = vld [vmem:[#allocation2 + $0x47] sm:$0xff]
        %v7137 = vld [vmem:[#allocation2 + $0x4f] sm:$0xff]
        %v7138 = vld [vmem:[#allocation2 + $0x57] sm:$0xff]
        %v7139 = vld [vmem:[#allocation2 + $0x5f] sm:$0xff]
        %v7140 = vld [vmem:[#allocation2 + $0x67] sm:$0xff]
        %v7141 = vld [vmem:[#allocation2 + $0x6f] sm:$0xff]
        %v7142 = vld [vmem:[#allocation2 + $0x77] sm:$0xff]
        %v7143 = vld [vmem:[#allocation2 + $0x7f] sm:$0xff]
        %v7144 = vld [vmem:[#allocation2 + $0x87] sm:$0xff]
        %v7145 = vld [vmem:[#allocation2 + $0x8f] sm:$0xff]
        %v7146 = vld [vmem:[#allocation2 + $0x97] sm:$0x7f]
        %s7147 = scalar_lea.vmem %s3, 160
        %v7148 = vld [vmem:[%s7147] sm:$0xff]
        %v7149 = vld [vmem:[%s7147 + $0x8] sm:$0xff]
        %v7150 = vld [vmem:[%s7147 + $0x10] sm:$0xff]
        %v7151 = vld [vmem:[%s7147 + $0x18] sm:$0xff]
        %v7153 = vsel %vm5860, %v7129, 0
        %v7156 = vsel %vm5860, %v7130, 0
        %v7159 = vsel %vm5860, %v7131, 0
        %v7162 = vsel %vm5860, %v7132, 0
        %v7165 = vsel %vm5860, %v7133, 0
        %v7168 = vsel %vm5860, %v7134, 0
        %v7171 = vsel %vm5860, %v7135, 0
        %v7174 = vsel %vm5860, %v7136, 0
        %v7177 = vsel %vm5860, %v7137, 0
        %v7180 = vsel %vm5860, %v7138, 0
        %v7183 = vsel %vm5860, %v7139, 0
        %v7186 = vsel %vm5860, %v7140, 0
        %v7189 = vsel %vm5860, %v7141, 0
        %v7192 = vsel %vm5860, %v7142, 0
        %v7195 = vsel %vm5860, %v7143, 0
        %v7198 = vsel %vm5860, %v7144, 0
        %v7201 = vsel %vm5860, %v7145, 0
        %v7204 = vsel %vm5860, %v7146, 0
        %7206 = vmatprep.subr.mxu0 0.0
        %7207 = vmatpush1.msra.mxu0 %v7148
        %7208 = vmatprep.subr.mxu0 0.0
        %7209 = vmatpush1.msra.mxu0 %v7149
        %7210 = vmatprep.subr.mxu0 0.0
        %7211 = vmatpush1.msra.mxu0 %v7150
        %7212 = vmatprep.subr.mxu0 0.0
        %7213 = vmatpush1.msra.mxu0 %v7151
        %7214 = vmatprep.subr.mxu0 0.0
        %7215 = vmatpush1.msra.mxu0 0.0
        %7216 = vmatprep.subr.mxu0 0.0
        %7217 = vmatpush1.msra.mxu0 0.0
        %7218 = vmatprep.subr.mxu0 0.0
        %7219 = vmatpush1.msra.mxu0 0.0
        %7220 = vmatprep.subr.mxu0 0.0
        %7221 = vmatpush1.msra.mxu0 0.0
        %7222 = vmatprep.subr.mxu0 0.0
        %7223 = vmatpush1.msra.mxu0 0.0
        %7224 = vmatprep.subr.mxu0 0.0
        %7225 = vmatpush1.msra.mxu0 0.0
        %7226 = vmatprep.subr.mxu0 0.0
        %7227 = vmatpush1.msra.mxu0 0.0
        %7228 = vmatprep.subr.mxu0 0.0
        %7229 = vmatpush1.msra.mxu0 0.0
        %7230 = vmatprep.subr.mxu0 0.0
        %7231 = vmatpush1.msra.mxu0 0.0
        %7232 = vmatprep.subr.mxu0 0.0
        %7233 = vmatpush1.msra.mxu0 0.0
        %7234 = vmatprep.subr.mxu0 0.0
        %7235 = vmatpush1.msra.mxu0 0.0
        %7236 = vmatprep.subr.mxu0 0.0
        %7237 = vmatpush1.msra.mxu0 0.0
        %7238 = vmatprep.subr.mxu0 0.0
        %7239 = vmatpush1.msra.mxu0 0.0
        %7240 = vmatprep.subr.mxu0 0.0
        %7241 = vmatpush1.msra.mxu0 0.0
        %7242 = vmatprep.subr.mxu0 0.0
        %7243 = vmatpush1.msra.mxu0 0.0
        %7244 = vmatprep.subr.mxu0 0.0
        %7245 = vmatpush1.msra.mxu0 0.0
        %7246 = vmatprep.subr.mxu0 0.0
        %7247 = vmatpush1.msra.mxu0 0.0
        %7248 = vmatprep.subr.mxu0 0.0
        %7249 = vmatpush1.msra.mxu0 0.0
        %7250 = vmatprep.subr.mxu0 0.0
        %7251 = vmatpush1.msra.mxu0 0.0
        %7252 = vmatprep.subr.mxu0 0.0
        %7253 = vmatpush1.msra.mxu0 0.0
        %7254 = vmatprep.subr.mxu0 0.0
        %7255 = vmatpush1.msra.mxu0 0.0
        %7256 = vmatprep.subr.mxu0 0.0
        %7257 = vmatpush1.msra.mxu0 0.0
        %7258 = vmatprep.subr.mxu0 0.0
        %7259 = vmatpush1.msra.mxu0 0.0
        %7260 = vmatprep.subr.mxu0 0.0
        %7261 = vmatpush1.msra.mxu0 0.0
        %7262 = vmatprep.subr.mxu0 0.0
        %7263 = vmatpush1.msra.mxu0 0.0
        %7264 = vmatprep.subr.mxu0 0.0
        %7265 = vmatpush1.msra.mxu0 0.0
        %7266 = vmatprep.subr.mxu0 0.0
        %7267 = vmatpush1.msra.mxu0 0.0
        %7268 = vmatprep.subr.mxu0 0.0
        %7269 = vmatpush1.msra.mxu0 0.0
        %7270 = vmatprep.mubr.f32.mxu0 0.0
        %7271 = vmatmul.mubr.f32.gmra.mrb[0].mxu0 %v7153
        %v7272 = vpop.f32.mrb[0].mxu0
        %v7273 = vadd.f32 0.0, %v7272
        %v7274 = vpop.f32.mrb[0].mxu0
        %7275 = vmatprep.mubr.f32.mxu0 0.0
        %7276 = vmatmul.mubr.f32.gmra.mrb[0].mxu0 %v7156
        %v7277 = vpop.f32.mrb[0].mxu0
        %v7278 = vadd.f32 0.0, %v7277
        %v7279 = vpop.f32.mrb[0].mxu0
        %7280 = vmatprep.mubr.f32.mxu0 0.0
        %7281 = vmatmul.mubr.f32.gmra.mrb[0].mxu0 %v7159
        %v7282 = vpop.f32.mrb[0].mxu0
        %v7283 = vadd.f32 0.0, %v7282
        %v7284 = vpop.f32.mrb[0].mxu0
        %7285 = vmatprep.mubr.f32.mxu0 0.0
        %7286 = vmatmul.mubr.f32.gmra.mrb[0].mxu0 %v7162
        %v7287 = vpop.f32.mrb[0].mxu0
        %v7288 = vadd.f32 0.0, %v7287
        %v7289 = vpop.f32.mrb[0].mxu0
        %7290 = vmatprep.mubr.f32.mxu0 0.0
        %7291 = vmatmul.mubr.f32.gmra.mrb[0].mxu0 %v7165
        %v7292 = vpop.f32.mrb[0].mxu0
        %v7293 = vadd.f32 0.0, %v7292
        %v7294 = vpop.f32.mrb[0].mxu0
        %7295 = vmatprep.mubr.f32.mxu0 0.0
        %7296 = vmatmul.mubr.f32.gmra.mrb[0].mxu0 %v7168
        %v7297 = vpop.f32.mrb[0].mxu0
        %v7298 = vadd.f32 0.0, %v7297
        %v7299 = vpop.f32.mrb[0].mxu0
        %7300 = vmatprep.mubr.f32.mxu0 0.0
        %7301 = vmatmul.mubr.f32.gmra.mrb[0].mxu0 %v7171
        %v7302 = vpop.f32.mrb[0].mxu0
        %v7303 = vadd.f32 0.0, %v7302
        %v7304 = vpop.f32.mrb[0].mxu0
        %7305 = vmatprep.mubr.f32.mxu0 0.0
        %7306 = vmatmul.mubr.f32.gmra.mrb[0].mxu0 %v7174
        %v7307 = vpop.f32.mrb[0].mxu0
        %v7308 = vadd.f32 0.0, %v7307
        %v7309 = vpop.f32.mrb[0].mxu0
        %7310 = vmatprep.mubr.f32.mxu0 0.0
        %7311 = vmatmul.mubr.f32.gmra.mrb[0].mxu0 %v7177
        %v7312 = vpop.f32.mrb[0].mxu0
        %v7313 = vadd.f32 0.0, %v7312
        %v7314 = vpop.f32.mrb[0].mxu0
        %7315 = vmatprep.mubr.f32.mxu0 0.0
        %7316 = vmatmul.mubr.f32.gmra.mrb[0].mxu0 %v7180
        %v7317 = vpop.f32.mrb[0].mxu0
        %v7318 = vadd.f32 0.0, %v7317
        %v7319 = vpop.f32.mrb[0].mxu0
        %7320 = vmatprep.mubr.f32.mxu0 0.0
        %7321 = vmatmul.mubr.f32.gmra.mrb[0].mxu0 %v7183
        %v7322 = vpop.f32.mrb[0].mxu0
        %v7323 = vadd.f32 0.0, %v7322
        %v7324 = vpop.f32.mrb[0].mxu0
        %7325 = vmatprep.mubr.f32.mxu0 0.0
        %7326 = vmatmul.mubr.f32.gmra.mrb[0].mxu0 %v7186
        %v7327 = vpop.f32.mrb[0].mxu0
        %v7328 = vadd.f32 0.0, %v7327
        %v7329 = vpop.f32.mrb[0].mxu0
        %7330 = vmatprep.mubr.f32.mxu0 0.0
        %7331 = vmatmul.mubr.f32.gmra.mrb[0].mxu0 %v7189
        %v7332 = vpop.f32.mrb[0].mxu0
        %v7333 = vadd.f32 0.0, %v7332
        %v7334 = vpop.f32.mrb[0].mxu0
        %7335 = vmatprep.mubr.f32.mxu0 0.0
        %7336 = vmatmul.mubr.f32.gmra.mrb[0].mxu0 %v7192
        %v7337 = vpop.f32.mrb[0].mxu0
        %v7338 = vadd.f32 0.0, %v7337
        %v7339 = vpop.f32.mrb[0].mxu0
        %7340 = vmatprep.mubr.f32.mxu0 0.0
        %7341 = vmatmul.mubr.f32.gmra.mrb[0].mxu0 %v7195
        %v7342 = vpop.f32.mrb[0].mxu0
        %v7343 = vadd.f32 0.0, %v7342
        %v7344 = vpop.f32.mrb[0].mxu0
        %7345 = vmatprep.mubr.f32.mxu0 0.0
        %7346 = vmatmul.mubr.f32.gmra.mrb[0].mxu0 %v7198
        %v7347 = vpop.f32.mrb[0].mxu0
        %v7348 = vadd.f32 0.0, %v7347
        %v7349 = vpop.f32.mrb[0].mxu0
        %7350 = vmatprep.mubr.f32.mxu0 0.0
        %7351 = vmatmul.mubr.f32.gmra.mrb[0].mxu0 %v7201
        %v7352 = vpop.f32.mrb[0].mxu0
        %v7353 = vadd.f32 0.0, %v7352
        %v7354 = vpop.f32.mrb[0].mxu0
        %7355 = vmatprep.mubr.f32.mxu0 0.0
        %7356 = vmatmul.mubr.f32.gmra.mrb[0].mxu0 %v7204
        %v7357 = vpop.f32.mrb[0].mxu0
        %v7358 = vpop.f32.mrb[0].mxu0
        %7359 = vdwg.mxu0
        %v7360 = vadd.f32 %v7112, %v7273
        %v7361 = vadd.f32 %v7113, %v7278
        %v7362 = vadd.f32 %v7114, %v7283
        %v7363 = vadd.f32 %v7115, %v7288
        %v7364 = vadd.f32 %v7116, %v7293
        %v7365 = vadd.f32 %v7117, %v7298
        %v7366 = vadd.f32 %v7118, %v7303
        %v7367 = vadd.f32 %v7119, %v7308
        %v7368 = vadd.f32 %v7120, %v7313
        %v7369 = vadd.f32 %v7121, %v7318
        %v7370 = vadd.f32 %v7122, %v7323
        %v7371 = vadd.f32 %v7123, %v7328
        %v7372 = vadd.f32 %v7124, %v7333
        %v7373 = vadd.f32 %v7125, %v7338
        %v7374 = vadd.f32 %v7126, %v7343
        %v7375 = vadd.f32 %v7127, %v7348
        %v7376 = vadd.f32 %v7128, %v7353
        %v7377 = vld [vmem:[#allocation2 + $0x1a] sm:$0xff]
        %v7378 = vld [vmem:[#allocation2 + $0x22] sm:$0xff]
        %v7379 = vld [vmem:[#allocation2 + $0x2a] sm:$0xff]
        %v7380 = vld [vmem:[#allocation2 + $0x32] sm:$0xff]
        %v7381 = vld [vmem:[#allocation2 + $0x3a] sm:$0xff]
        %v7382 = vld [vmem:[#allocation2 + $0x42] sm:$0xff]
        %v7383 = vld [vmem:[#allocation2 + $0x4a] sm:$0xff]
        %v7384 = vld [vmem:[#allocation2 + $0x52] sm:$0xff]
        %v7385 = vld [vmem:[#allocation2 + $0x5a] sm:$0xff]
        %v7386 = vld [vmem:[#allocation2 + $0x62] sm:$0xff]
        %v7387 = vld [vmem:[#allocation2 + $0x6a] sm:$0xff]
        %v7388 = vld [vmem:[#allocation2 + $0x72] sm:$0xff]
        %v7389 = vld [vmem:[#allocation2 + $0x7a] sm:$0xff]
        %v7390 = vld [vmem:[#allocation2 + $0x82] sm:$0xff]
        %v7391 = vld [vmem:[#allocation2 + $0x8a] sm:$0xff]
        %v7392 = vld [vmem:[#allocation2 + $0x92] sm:$0xff]
        %v7393 = vld [vmem:[#allocation2 + $0x9a] sm:$0xff]
        %v7394 = vld [vmem:[#allocation2 + $0xa2] sm:$0x7f]
        %s7395 = scalar_lea.vmem %s3, 192
        %v7396 = vld [vmem:[%s7395] sm:$0xff]
        %v7397 = vld [vmem:[%s7395 + $0x8] sm:$0xff]
        %v7398 = vld [vmem:[%s7395 + $0x10] sm:$0xff]
        %v7399 = vld [vmem:[%s7395 + $0x18] sm:$0xff]
        %v7401 = vsel %vm5860, %v7377, 0
        %v7404 = vsel %vm5860, %v7378, 0
        %v7407 = vsel %vm5860, %v7379, 0
        %v7410 = vsel %vm5860, %v7380, 0
        %v7413 = vsel %vm5860, %v7381, 0
        %v7416 = vsel %vm5860, %v7382, 0
        %v7419 = vsel %vm5860, %v7383, 0
        %v7422 = vsel %vm5860, %v7384, 0
        %v7425 = vsel %vm5860, %v7385, 0
        %v7428 = vsel %vm5860, %v7386, 0
        %v7431 = vsel %vm5860, %v7387, 0
        %v7434 = vsel %vm5860, %v7388, 0
        %v7437 = vsel %vm5860, %v7389, 0
        %v7440 = vsel %vm5860, %v7390, 0
        %v7443 = vsel %vm5860, %v7391, 0
        %v7446 = vsel %vm5860, %v7392, 0
        %v7449 = vsel %vm5860, %v7393, 0
        %v7452 = vsel %vm5860, %v7394, 0
        %7454 = vmatprep.subr.mxu0 0.0
        %7455 = vmatpush1.msra.mxu0 %v7396
        %7456 = vmatprep.subr.mxu0 0.0
        %7457 = vmatpush1.msra.mxu0 %v7397
        %7458 = vmatprep.subr.mxu0 0.0
        %7459 = vmatpush1.msra.mxu0 %v7398
        %7460 = vmatprep.subr.mxu0 0.0
        %7461 = vmatpush1.msra.mxu0 %v7399
        %7462 = vmatprep.subr.mxu0 0.0
        %7463 = vmatpush1.msra.mxu0 0.0
        %7464 = vmatprep.subr.mxu0 0.0
        %7465 = vmatpush1.msra.mxu0 0.0
        %7466 = vmatprep.subr.mxu0 0.0
        %7467 = vmatpush1.msra.mxu0 0.0
        %7468 = vmatprep.subr.mxu0 0.0
        %7469 = vmatpush1.msra.mxu0 0.0
        %7470 = vmatprep.subr.mxu0 0.0
        %7471 = vmatpush1.msra.mxu0 0.0
        %7472 = vmatprep.subr.mxu0 0.0
        %7473 = vmatpush1.msra.mxu0 0.0
        %7474 = vmatprep.subr.mxu0 0.0
        %7475 = vmatpush1.msra.mxu0 0.0
        %7476 = vmatprep.subr.mxu0 0.0
        %7477 = vmatpush1.msra.mxu0 0.0
        %7478 = vmatprep.subr.mxu0 0.0
        %7479 = vmatpush1.msra.mxu0 0.0
        %7480 = vmatprep.subr.mxu0 0.0
        %7481 = vmatpush1.msra.mxu0 0.0
        %7482 = vmatprep.subr.mxu0 0.0
        %7483 = vmatpush1.msra.mxu0 0.0
        %7484 = vmatprep.subr.mxu0 0.0
        %7485 = vmatpush1.msra.mxu0 0.0
        %7486 = vmatprep.subr.mxu0 0.0
        %7487 = vmatpush1.msra.mxu0 0.0
        %7488 = vmatprep.subr.mxu0 0.0
        %7489 = vmatpush1.msra.mxu0 0.0
        %7490 = vmatprep.subr.mxu0 0.0
        %7491 = vmatpush1.msra.mxu0 0.0
        %7492 = vmatprep.subr.mxu0 0.0
        %7493 = vmatpush1.msra.mxu0 0.0
        %7494 = vmatprep.subr.mxu0 0.0
        %7495 = vmatpush1.msra.mxu0 0.0
        %7496 = vmatprep.subr.mxu0 0.0
        %7497 = vmatpush1.msra.mxu0 0.0
        %7498 = vmatprep.subr.mxu0 0.0
        %7499 = vmatpush1.msra.mxu0 0.0
        %7500 = vmatprep.subr.mxu0 0.0
        %7501 = vmatpush1.msra.mxu0 0.0
        %7502 = vmatprep.subr.mxu0 0.0
        %7503 = vmatpush1.msra.mxu0 0.0
        %7504 = vmatprep.subr.mxu0 0.0
        %7505 = vmatpush1.msra.mxu0 0.0
        %7506 = vmatprep.subr.mxu0 0.0
        %7507 = vmatpush1.msra.mxu0 0.0
        %7508 = vmatprep.subr.mxu0 0.0
        %7509 = vmatpush1.msra.mxu0 0.0
        %7510 = vmatprep.subr.mxu0 0.0
        %7511 = vmatpush1.msra.mxu0 0.0
        %7512 = vmatprep.subr.mxu0 0.0
        %7513 = vmatpush1.msra.mxu0 0.0
        %7514 = vmatprep.subr.mxu0 0.0
        %7515 = vmatpush1.msra.mxu0 0.0
        %7516 = vmatprep.subr.mxu0 0.0
        %7517 = vmatpush1.msra.mxu0 0.0
        %7518 = vmatprep.mubr.f32.mxu0 0.0
        %7519 = vmatmul.mubr.f32.gmra.mrb[0].mxu0 %v7401
        %v7520 = vpop.f32.mrb[0].mxu0
        %v7521 = vadd.f32 0.0, %v7520
        %v7522 = vpop.f32.mrb[0].mxu0
        %7523 = vmatprep.mubr.f32.mxu0 0.0
        %7524 = vmatmul.mubr.f32.gmra.mrb[0].mxu0 %v7404
        %v7525 = vpop.f32.mrb[0].mxu0
        %v7526 = vadd.f32 0.0, %v7525
        %v7527 = vpop.f32.mrb[0].mxu0
        %7528 = vmatprep.mubr.f32.mxu0 0.0
        %7529 = vmatmul.mubr.f32.gmra.mrb[0].mxu0 %v7407
        %v7530 = vpop.f32.mrb[0].mxu0
        %v7531 = vadd.f32 0.0, %v7530
        %v7532 = vpop.f32.mrb[0].mxu0
        %7533 = vmatprep.mubr.f32.mxu0 0.0
        %7534 = vmatmul.mubr.f32.gmra.mrb[0].mxu0 %v7410
        %v7535 = vpop.f32.mrb[0].mxu0
        %v7536 = vadd.f32 0.0, %v7535
        %v7537 = vpop.f32.mrb[0].mxu0
        %7538 = vmatprep.mubr.f32.mxu0 0.0
        %7539 = vmatmul.mubr.f32.gmra.mrb[0].mxu0 %v7413
        %v7540 = vpop.f32.mrb[0].mxu0
        %v7541 = vadd.f32 0.0, %v7540
        %v7542 = vpop.f32.mrb[0].mxu0
        %7543 = vmatprep.mubr.f32.mxu0 0.0
        %7544 = vmatmul.mubr.f32.gmra.mrb[0].mxu0 %v7416
        %v7545 = vpop.f32.mrb[0].mxu0
        %v7546 = vadd.f32 0.0, %v7545
        %v7547 = vpop.f32.mrb[0].mxu0
        %7548 = vmatprep.mubr.f32.mxu0 0.0
        %7549 = vmatmul.mubr.f32.gmra.mrb[0].mxu0 %v7419
        %v7550 = vpop.f32.mrb[0].mxu0
        %v7551 = vadd.f32 0.0, %v7550
        %v7552 = vpop.f32.mrb[0].mxu0
        %7553 = vmatprep.mubr.f32.mxu0 0.0
        %7554 = vmatmul.mubr.f32.gmra.mrb[0].mxu0 %v7422
        %v7555 = vpop.f32.mrb[0].mxu0
        %v7556 = vadd.f32 0.0, %v7555
        %v7557 = vpop.f32.mrb[0].mxu0
        %7558 = vmatprep.mubr.f32.mxu0 0.0
        %7559 = vmatmul.mubr.f32.gmra.mrb[0].mxu0 %v7425
        %v7560 = vpop.f32.mrb[0].mxu0
        %v7561 = vadd.f32 0.0, %v7560
        %v7562 = vpop.f32.mrb[0].mxu0
        %7563 = vmatprep.mubr.f32.mxu0 0.0
        %7564 = vmatmul.mubr.f32.gmra.mrb[0].mxu0 %v7428
        %v7565 = vpop.f32.mrb[0].mxu0
        %v7566 = vadd.f32 0.0, %v7565
        %v7567 = vpop.f32.mrb[0].mxu0
        %7568 = vmatprep.mubr.f32.mxu0 0.0
        %7569 = vmatmul.mubr.f32.gmra.mrb[0].mxu0 %v7431
        %v7570 = vpop.f32.mrb[0].mxu0
        %v7571 = vadd.f32 0.0, %v7570
        %v7572 = vpop.f32.mrb[0].mxu0
        %7573 = vmatprep.mubr.f32.mxu0 0.0
        %7574 = vmatmul.mubr.f32.gmra.mrb[0].mxu0 %v7434
        %v7575 = vpop.f32.mrb[0].mxu0
        %v7576 = vadd.f32 0.0, %v7575
        %v7577 = vpop.f32.mrb[0].mxu0
        %7578 = vmatprep.mubr.f32.mxu0 0.0
        %7579 = vmatmul.mubr.f32.gmra.mrb[0].mxu0 %v7437
        %v7580 = vpop.f32.mrb[0].mxu0
        %v7581 = vadd.f32 0.0, %v7580
        %v7582 = vpop.f32.mrb[0].mxu0
        %7583 = vmatprep.mubr.f32.mxu0 0.0
        %7584 = vmatmul.mubr.f32.gmra.mrb[0].mxu0 %v7440
        %v7585 = vpop.f32.mrb[0].mxu0
        %v7586 = vadd.f32 0.0, %v7585
        %v7587 = vpop.f32.mrb[0].mxu0
        %7588 = vmatprep.mubr.f32.mxu0 0.0
        %7589 = vmatmul.mubr.f32.gmra.mrb[0].mxu0 %v7443
        %v7590 = vpop.f32.mrb[0].mxu0
        %v7591 = vadd.f32 0.0, %v7590
        %v7592 = vpop.f32.mrb[0].mxu0
        %7593 = vmatprep.mubr.f32.mxu0 0.0
        %7594 = vmatmul.mubr.f32.gmra.mrb[0].mxu0 %v7446
        %v7595 = vpop.f32.mrb[0].mxu0
        %v7596 = vadd.f32 0.0, %v7595
        %v7597 = vpop.f32.mrb[0].mxu0
        %7598 = vmatprep.mubr.f32.mxu0 0.0
        %7599 = vmatmul.mubr.f32.gmra.mrb[0].mxu0 %v7449
        %v7600 = vpop.f32.mrb[0].mxu0
        %v7601 = vadd.f32 0.0, %v7600
        %v7602 = vpop.f32.mrb[0].mxu0
        %7603 = vmatprep.mubr.f32.mxu0 0.0
        %7604 = vmatmul.mubr.f32.gmra.mrb[0].mxu0 %v7452
        %v7605 = vpop.f32.mrb[0].mxu0
        %v7606 = vpop.f32.mrb[0].mxu0
        %7607 = vdwg.mxu0
        %v7608 = vadd.f32 %v7360, %v7521
        %v7609 = vadd.f32 %v7361, %v7526
        %v7610 = vadd.f32 %v7362, %v7531
        %v7611 = vadd.f32 %v7363, %v7536
        %v7612 = vadd.f32 %v7364, %v7541
        %v7613 = vadd.f32 %v7365, %v7546
        %v7614 = vadd.f32 %v7366, %v7551
        %v7615 = vadd.f32 %v7367, %v7556
        %v7616 = vadd.f32 %v7368, %v7561
        %v7617 = vadd.f32 %v7369, %v7566
        %v7618 = vadd.f32 %v7370, %v7571
        %v7619 = vadd.f32 %v7371, %v7576
        %v7620 = vadd.f32 %v7372, %v7581
        %v7621 = vadd.f32 %v7373, %v7586
        %v7622 = vadd.f32 %v7374, %v7591
        %v7623 = vadd.f32 %v7375, %v7596
        %v7624 = vadd.f32 %v7376, %v7601
        %v7625 = vld [vmem:[#allocation2 + $0x1b] sm:$0xff]
        %v7626 = vld [vmem:[#allocation2 + $0x23] sm:$0xff]
        %v7627 = vld [vmem:[#allocation2 + $0x2b] sm:$0xff]
        %v7628 = vld [vmem:[#allocation2 + $0x33] sm:$0xff]
        %v7629 = vld [vmem:[#allocation2 + $0x3b] sm:$0xff]
        %v7630 = vld [vmem:[#allocation2 + $0x43] sm:$0xff]
        %v7631 = vld [vmem:[#allocation2 + $0x4b] sm:$0xff]
        %v7632 = vld [vmem:[#allocation2 + $0x53] sm:$0xff]
        %v7633 = vld [vmem:[#allocation2 + $0x5b] sm:$0xff]
        %v7634 = vld [vmem:[#allocation2 + $0x63] sm:$0xff]
        %v7635 = vld [vmem:[#allocation2 + $0x6b] sm:$0xff]
        %v7636 = vld [vmem:[#allocation2 + $0x73] sm:$0xff]
        %v7637 = vld [vmem:[#allocation2 + $0x7b] sm:$0xff]
        %v7638 = vld [vmem:[#allocation2 + $0x83] sm:$0xff]
        %v7639 = vld [vmem:[#allocation2 + $0x8b] sm:$0xff]
        %v7640 = vld [vmem:[#allocation2 + $0x93] sm:$0xff]
        %v7641 = vld [vmem:[#allocation2 + $0x9b] sm:$0xff]
        %v7642 = vld [vmem:[#allocation2 + $0xa3] sm:$0x7f]
        %s7643 = scalar_lea.vmem %s3, 224
        %v7644 = vld [vmem:[%s7643] sm:$0xff]
        %v7645 = vld [vmem:[%s7643 + $0x8] sm:$0xff]
        %v7646 = vld [vmem:[%s7643 + $0x10] sm:$0xff]
        %v7647 = vld [vmem:[%s7643 + $0x18] sm:$0xff]
        %v7649 = vsel %vm5860, %v7625, 0
        %v7652 = vsel %vm5860, %v7626, 0
        %v7655 = vsel %vm5860, %v7627, 0
        %v7658 = vsel %vm5860, %v7628, 0
        %v7661 = vsel %vm5860, %v7629, 0
        %v7664 = vsel %vm5860, %v7630, 0
        %v7667 = vsel %vm5860, %v7631, 0
        %v7670 = vsel %vm5860, %v7632, 0
        %v7673 = vsel %vm5860, %v7633, 0
        %v7676 = vsel %vm5860, %v7634, 0
        %v7679 = vsel %vm5860, %v7635, 0
        %v7682 = vsel %vm5860, %v7636, 0
        %v7685 = vsel %vm5860, %v7637, 0
        %v7688 = vsel %vm5860, %v7638, 0
        %v7691 = vsel %vm5860, %v7639, 0
        %v7694 = vsel %vm5860, %v7640, 0
        %v7697 = vsel %vm5860, %v7641, 0
        %v7700 = vsel %vm5860, %v7642, 0
        %7702 = vmatprep.subr.mxu0 0.0
        %7703 = vmatpush1.msra.mxu0 %v7644
        %7704 = vmatprep.subr.mxu0 0.0
        %7705 = vmatpush1.msra.mxu0 %v7645
        %7706 = vmatprep.subr.mxu0 0.0
        %7707 = vmatpush1.msra.mxu0 %v7646
        %7708 = vmatprep.subr.mxu0 0.0
        %7709 = vmatpush1.msra.mxu0 %v7647
        %7710 = vmatprep.subr.mxu0 0.0
        %7711 = vmatpush1.msra.mxu0 0.0
        %7712 = vmatprep.subr.mxu0 0.0
        %7713 = vmatpush1.msra.mxu0 0.0
        %7714 = vmatprep.subr.mxu0 0.0
        %7715 = vmatpush1.msra.mxu0 0.0
        %7716 = vmatprep.subr.mxu0 0.0
        %7717 = vmatpush1.msra.mxu0 0.0
        %7718 = vmatprep.subr.mxu0 0.0
        %7719 = vmatpush1.msra.mxu0 0.0
        %7720 = vmatprep.subr.mxu0 0.0
        %7721 = vmatpush1.msra.mxu0 0.0
        %7722 = vmatprep.subr.mxu0 0.0
        %7723 = vmatpush1.msra.mxu0 0.0
        %7724 = vmatprep.subr.mxu0 0.0
        %7725 = vmatpush1.msra.mxu0 0.0
        %7726 = vmatprep.subr.mxu0 0.0
        %7727 = vmatpush1.msra.mxu0 0.0
        %7728 = vmatprep.subr.mxu0 0.0
        %7729 = vmatpush1.msra.mxu0 0.0
        %7730 = vmatprep.subr.mxu0 0.0
        %7731 = vmatpush1.msra.mxu0 0.0
        %7732 = vmatprep.subr.mxu0 0.0
        %7733 = vmatpush1.msra.mxu0 0.0
        %7734 = vmatprep.subr.mxu0 0.0
        %7735 = vmatpush1.msra.mxu0 0.0
        %7736 = vmatprep.subr.mxu0 0.0
        %7737 = vmatpush1.msra.mxu0 0.0
        %7738 = vmatprep.subr.mxu0 0.0
        %7739 = vmatpush1.msra.mxu0 0.0
        %7740 = vmatprep.subr.mxu0 0.0
        %7741 = vmatpush1.msra.mxu0 0.0
        %7742 = vmatprep.subr.mxu0 0.0
        %7743 = vmatpush1.msra.mxu0 0.0
        %7744 = vmatprep.subr.mxu0 0.0
        %7745 = vmatpush1.msra.mxu0 0.0
        %7746 = vmatprep.subr.mxu0 0.0
        %7747 = vmatpush1.msra.mxu0 0.0
        %7748 = vmatprep.subr.mxu0 0.0
        %7749 = vmatpush1.msra.mxu0 0.0
        %7750 = vmatprep.subr.mxu0 0.0
        %7751 = vmatpush1.msra.mxu0 0.0
        %7752 = vmatprep.subr.mxu0 0.0
        %7753 = vmatpush1.msra.mxu0 0.0
        %7754 = vmatprep.subr.mxu0 0.0
        %7755 = vmatpush1.msra.mxu0 0.0
        %7756 = vmatprep.subr.mxu0 0.0
        %7757 = vmatpush1.msra.mxu0 0.0
        %7758 = vmatprep.subr.mxu0 0.0
        %7759 = vmatpush1.msra.mxu0 0.0
        %7760 = vmatprep.subr.mxu0 0.0
        %7761 = vmatpush1.msra.mxu0 0.0
        %7762 = vmatprep.subr.mxu0 0.0
        %7763 = vmatpush1.msra.mxu0 0.0
        %7764 = vmatprep.subr.mxu0 0.0
        %7765 = vmatpush1.msra.mxu0 0.0
        %7766 = vmatprep.mubr.f32.mxu0 0.0
        %7767 = vmatmul.mubr.f32.gmra.mrb[0].mxu0 %v7649
        %v7768 = vpop.f32.mrb[0].mxu0
        %v7769 = vadd.f32 0.0, %v7768
        %v7770 = vpop.f32.mrb[0].mxu0
        %7771 = vmatprep.mubr.f32.mxu0 0.0
        %7772 = vmatmul.mubr.f32.gmra.mrb[0].mxu0 %v7652
        %v7773 = vpop.f32.mrb[0].mxu0
        %v7774 = vadd.f32 0.0, %v7773
        %v7775 = vpop.f32.mrb[0].mxu0
        %7776 = vmatprep.mubr.f32.mxu0 0.0
        %7777 = vmatmul.mubr.f32.gmra.mrb[0].mxu0 %v7655
        %v7778 = vpop.f32.mrb[0].mxu0
        %v7779 = vadd.f32 0.0, %v7778
        %v7780 = vpop.f32.mrb[0].mxu0
        %7781 = vmatprep.mubr.f32.mxu0 0.0
        %7782 = vmatmul.mubr.f32.gmra.mrb[0].mxu0 %v7658
        %v7783 = vpop.f32.mrb[0].mxu0
        %v7784 = vadd.f32 0.0, %v7783
        %v7785 = vpop.f32.mrb[0].mxu0
        %7786 = vmatprep.mubr.f32.mxu0 0.0
        %7787 = vmatmul.mubr.f32.gmra.mrb[0].mxu0 %v7661
        %v7788 = vpop.f32.mrb[0].mxu0
        %v7789 = vadd.f32 0.0, %v7788
        %v7790 = vpop.f32.mrb[0].mxu0
        %7791 = vmatprep.mubr.f32.mxu0 0.0
        %7792 = vmatmul.mubr.f32.gmra.mrb[0].mxu0 %v7664
        %v7793 = vpop.f32.mrb[0].mxu0
        %v7794 = vadd.f32 0.0, %v7793
        %v7795 = vpop.f32.mrb[0].mxu0
        %7796 = vmatprep.mubr.f32.mxu0 0.0
        %7797 = vmatmul.mubr.f32.gmra.mrb[0].mxu0 %v7667
        %v7798 = vpop.f32.mrb[0].mxu0
        %v7799 = vadd.f32 0.0, %v7798
        %v7800 = vpop.f32.mrb[0].mxu0
        %7801 = vmatprep.mubr.f32.mxu0 0.0
        %7802 = vmatmul.mubr.f32.gmra.mrb[0].mxu0 %v7670
        %v7803 = vpop.f32.mrb[0].mxu0
        %v7804 = vadd.f32 0.0, %v7803
        %v7805 = vpop.f32.mrb[0].mxu0
        %7806 = vmatprep.mubr.f32.mxu0 0.0
        %7807 = vmatmul.mubr.f32.gmra.mrb[0].mxu0 %v7673
        %v7808 = vpop.f32.mrb[0].mxu0
        %v7809 = vadd.f32 0.0, %v7808
        %v7810 = vpop.f32.mrb[0].mxu0
        %7811 = vmatprep.mubr.f32.mxu0 0.0
        %7812 = vmatmul.mubr.f32.gmra.mrb[0].mxu0 %v7676
        %v7813 = vpop.f32.mrb[0].mxu0
        %v7814 = vadd.f32 0.0, %v7813
        %v7815 = vpop.f32.mrb[0].mxu0
        %7816 = vmatprep.mubr.f32.mxu0 0.0
        %7817 = vmatmul.mubr.f32.gmra.mrb[0].mxu0 %v7679
        %v7818 = vpop.f32.mrb[0].mxu0
        %v7819 = vadd.f32 0.0, %v7818
        %v7820 = vpop.f32.mrb[0].mxu0
        %7821 = vmatprep.mubr.f32.mxu0 0.0
        %7822 = vmatmul.mubr.f32.gmra.mrb[0].mxu0 %v7682
        %v7823 = vpop.f32.mrb[0].mxu0
        %v7824 = vadd.f32 0.0, %v7823
        %v7825 = vpop.f32.mrb[0].mxu0
        %7826 = vmatprep.mubr.f32.mxu0 0.0
        %7827 = vmatmul.mubr.f32.gmra.mrb[0].mxu0 %v7685
        %v7828 = vpop.f32.mrb[0].mxu0
        %v7829 = vadd.f32 0.0, %v7828
        %v7830 = vpop.f32.mrb[0].mxu0
        %7831 = vmatprep.mubr.f32.mxu0 0.0
        %7832 = vmatmul.mubr.f32.gmra.mrb[0].mxu0 %v7688
        %v7833 = vpop.f32.mrb[0].mxu0
        %v7834 = vadd.f32 0.0, %v7833
        %v7835 = vpop.f32.mrb[0].mxu0
        %7836 = vmatprep.mubr.f32.mxu0 0.0
        %7837 = vmatmul.mubr.f32.gmra.mrb[0].mxu0 %v7691
        %v7838 = vpop.f32.mrb[0].mxu0
        %v7839 = vadd.f32 0.0, %v7838
        %v7840 = vpop.f32.mrb[0].mxu0
        %7841 = vmatprep.mubr.f32.mxu0 0.0
        %7842 = vmatmul.mubr.f32.gmra.mrb[0].mxu0 %v7694
        %v7843 = vpop.f32.mrb[0].mxu0
        %v7844 = vadd.f32 0.0, %v7843
        %v7845 = vpop.f32.mrb[0].mxu0
        %7846 = vmatprep.mubr.f32.mxu0 0.0
        %7847 = vmatmul.mubr.f32.gmra.mrb[0].mxu0 %v7697
        %v7848 = vpop.f32.mrb[0].mxu0
        %v7849 = vadd.f32 0.0, %v7848
        %v7850 = vpop.f32.mrb[0].mxu0
        %7851 = vmatprep.mubr.f32.mxu0 0.0
        %7852 = vmatmul.mubr.f32.gmra.mrb[0].mxu0 %v7700
        %v7853 = vpop.f32.mrb[0].mxu0
        %v7854 = vpop.f32.mrb[0].mxu0
        %7855 = vdwg.mxu0
        %v7856 = vadd.f32 %v7608, %v7769
        %v7857 = vadd.f32 %v7609, %v7774
        %v7858 = vadd.f32 %v7610, %v7779
        %v7859 = vadd.f32 %v7611, %v7784
        %v7860 = vadd.f32 %v7612, %v7789
        %v7861 = vadd.f32 %v7613, %v7794
        %v7862 = vadd.f32 %v7614, %v7799
        %v7863 = vadd.f32 %v7615, %v7804
        %v7864 = vadd.f32 %v7616, %v7809
        %v7865 = vadd.f32 %v7617, %v7814
        %v7866 = vadd.f32 %v7618, %v7819
        %v7867 = vadd.f32 %v7619, %v7824
        %v7868 = vadd.f32 %v7620, %v7829
        %v7869 = vadd.f32 %v7621, %v7834
        %v7870 = vadd.f32 %v7622, %v7839
        %v7871 = vadd.f32 %v7623, %v7844
        %v7872 = vadd.f32 %v7624, %v7849
        %v7873 = vld [vmem:[#allocation2 + $0x1c] sm:$0xff]
        %v7874 = vld [vmem:[#allocation2 + $0x24] sm:$0xff]
        %v7875 = vld [vmem:[#allocation2 + $0x2c] sm:$0xff]
        %v7876 = vld [vmem:[#allocation2 + $0x34] sm:$0xff]
        %v7877 = vld [vmem:[#allocation2 + $0x3c] sm:$0xff]
        %v7878 = vld [vmem:[#allocation2 + $0x44] sm:$0xff]
        %v7879 = vld [vmem:[#allocation2 + $0x4c] sm:$0xff]
        %v7880 = vld [vmem:[#allocation2 + $0x54] sm:$0xff]
        %v7881 = vld [vmem:[#allocation2 + $0x5c] sm:$0xff]
        %v7882 = vld [vmem:[#allocation2 + $0x64] sm:$0xff]
        %v7883 = vld [vmem:[#allocation2 + $0x6c] sm:$0xff]
        %v7884 = vld [vmem:[#allocation2 + $0x74] sm:$0xff]
        %v7885 = vld [vmem:[#allocation2 + $0x7c] sm:$0xff]
        %v7886 = vld [vmem:[#allocation2 + $0x84] sm:$0xff]
        %v7887 = vld [vmem:[#allocation2 + $0x8c] sm:$0xff]
        %v7888 = vld [vmem:[#allocation2 + $0x94] sm:$0xff]
        %v7889 = vld [vmem:[#allocation2 + $0x9c] sm:$0xff]
        %v7890 = vld [vmem:[#allocation2 + $0xa4] sm:$0x7f]
        %s7891 = scalar_lea.vmem %s3, 256
        %v7892 = vld [vmem:[%s7891] sm:$0xff]
        %v7893 = vld [vmem:[%s7891 + $0x8] sm:$0xff]
        %v7894 = vld [vmem:[%s7891 + $0x10] sm:$0xff]
        %v7895 = vld [vmem:[%s7891 + $0x18] sm:$0xff]
        %v7897 = vsel %vm5860, %v7873, 0
        %v7900 = vsel %vm5860, %v7874, 0
        %v7903 = vsel %vm5860, %v7875, 0
        %v7906 = vsel %vm5860, %v7876, 0
        %v7909 = vsel %vm5860, %v7877, 0
        %v7912 = vsel %vm5860, %v7878, 0
        %v7915 = vsel %vm5860, %v7879, 0
        %v7918 = vsel %vm5860, %v7880, 0
        %v7921 = vsel %vm5860, %v7881, 0
        %v7924 = vsel %vm5860, %v7882, 0
        %v7927 = vsel %vm5860, %v7883, 0
        %v7930 = vsel %vm5860, %v7884, 0
        %v7933 = vsel %vm5860, %v7885, 0
        %v7936 = vsel %vm5860, %v7886, 0
        %v7939 = vsel %vm5860, %v7887, 0
        %v7942 = vsel %vm5860, %v7888, 0
        %v7945 = vsel %vm5860, %v7889, 0
        %v7948 = vsel %vm5860, %v7890, 0
        %7950 = vmatprep.subr.mxu0 0.0
        %7951 = vmatpush1.msra.mxu0 %v7892
        %7952 = vmatprep.subr.mxu0 0.0
        %7953 = vmatpush1.msra.mxu0 %v7893
        %7954 = vmatprep.subr.mxu0 0.0
        %7955 = vmatpush1.msra.mxu0 %v7894
        %7956 = vmatprep.subr.mxu0 0.0
        %7957 = vmatpush1.msra.mxu0 %v7895
        %7958 = vmatprep.subr.mxu0 0.0
        %7959 = vmatpush1.msra.mxu0 0.0
        %7960 = vmatprep.subr.mxu0 0.0
        %7961 = vmatpush1.msra.mxu0 0.0
        %7962 = vmatprep.subr.mxu0 0.0
        %7963 = vmatpush1.msra.mxu0 0.0
        %7964 = vmatprep.subr.mxu0 0.0
        %7965 = vmatpush1.msra.mxu0 0.0
        %7966 = vmatprep.subr.mxu0 0.0
        %7967 = vmatpush1.msra.mxu0 0.0
        %7968 = vmatprep.subr.mxu0 0.0
        %7969 = vmatpush1.msra.mxu0 0.0
        %7970 = vmatprep.subr.mxu0 0.0
        %7971 = vmatpush1.msra.mxu0 0.0
        %7972 = vmatprep.subr.mxu0 0.0
        %7973 = vmatpush1.msra.mxu0 0.0
        %7974 = vmatprep.subr.mxu0 0.0
        %7975 = vmatpush1.msra.mxu0 0.0
        %7976 = vmatprep.subr.mxu0 0.0
        %7977 = vmatpush1.msra.mxu0 0.0
        %7978 = vmatprep.subr.mxu0 0.0
        %7979 = vmatpush1.msra.mxu0 0.0
        %7980 = vmatprep.subr.mxu0 0.0
        %7981 = vmatpush1.msra.mxu0 0.0
        %7982 = vmatprep.subr.mxu0 0.0
        %7983 = vmatpush1.msra.mxu0 0.0
        %7984 = vmatprep.subr.mxu0 0.0
        %7985 = vmatpush1.msra.mxu0 0.0
        %7986 = vmatprep.subr.mxu0 0.0
        %7987 = vmatpush1.msra.mxu0 0.0
        %7988 = vmatprep.subr.mxu0 0.0
        %7989 = vmatpush1.msra.mxu0 0.0
        %7990 = vmatprep.subr.mxu0 0.0
        %7991 = vmatpush1.msra.mxu0 0.0
        %7992 = vmatprep.subr.mxu0 0.0
        %7993 = vmatpush1.msra.mxu0 0.0
        %7994 = vmatprep.subr.mxu0 0.0
        %7995 = vmatpush1.msra.mxu0 0.0
        %7996 = vmatprep.subr.mxu0 0.0
        %7997 = vmatpush1.msra.mxu0 0.0
        %7998 = vmatprep.subr.mxu0 0.0
        %7999 = vmatpush1.msra.mxu0 0.0
        %8000 = vmatprep.subr.mxu0 0.0
        %8001 = vmatpush1.msra.mxu0 0.0
        %8002 = vmatprep.subr.mxu0 0.0
        %8003 = vmatpush1.msra.mxu0 0.0
        %8004 = vmatprep.subr.mxu0 0.0
        %8005 = vmatpush1.msra.mxu0 0.0
        %8006 = vmatprep.subr.mxu0 0.0
        %8007 = vmatpush1.msra.mxu0 0.0
        %8008 = vmatprep.subr.mxu0 0.0
        %8009 = vmatpush1.msra.mxu0 0.0
        %8010 = vmatprep.subr.mxu0 0.0
        %8011 = vmatpush1.msra.mxu0 0.0
        %8012 = vmatprep.subr.mxu0 0.0
        %8013 = vmatpush1.msra.mxu0 0.0
        %8014 = vmatprep.mubr.f32.mxu0 0.0
        %8015 = vmatmul.mubr.f32.gmra.mrb[0].mxu0 %v7897
        %v8016 = vpop.f32.mrb[0].mxu0
        %v8017 = vadd.f32 0.0, %v8016
        %v8018 = vpop.f32.mrb[0].mxu0
        %8019 = vmatprep.mubr.f32.mxu0 0.0
        %8020 = vmatmul.mubr.f32.gmra.mrb[0].mxu0 %v7900
        %v8021 = vpop.f32.mrb[0].mxu0
        %v8022 = vadd.f32 0.0, %v8021
        %v8023 = vpop.f32.mrb[0].mxu0
        %8024 = vmatprep.mubr.f32.mxu0 0.0
        %8025 = vmatmul.mubr.f32.gmra.mrb[0].mxu0 %v7903
        %v8026 = vpop.f32.mrb[0].mxu0
        %v8027 = vadd.f32 0.0, %v8026
        %v8028 = vpop.f32.mrb[0].mxu0
        %8029 = vmatprep.mubr.f32.mxu0 0.0
        %8030 = vmatmul.mubr.f32.gmra.mrb[0].mxu0 %v7906
        %v8031 = vpop.f32.mrb[0].mxu0
        %v8032 = vadd.f32 0.0, %v8031
        %v8033 = vpop.f32.mrb[0].mxu0
        %8034 = vmatprep.mubr.f32.mxu0 0.0
        %8035 = vmatmul.mubr.f32.gmra.mrb[0].mxu0 %v7909
        %v8036 = vpop.f32.mrb[0].mxu0
        %v8037 = vadd.f32 0.0, %v8036
        %v8038 = vpop.f32.mrb[0].mxu0
        %8039 = vmatprep.mubr.f32.mxu0 0.0
        %8040 = vmatmul.mubr.f32.gmra.mrb[0].mxu0 %v7912
        %v8041 = vpop.f32.mrb[0].mxu0
        %v8042 = vadd.f32 0.0, %v8041
        %v8043 = vpop.f32.mrb[0].mxu0
        %8044 = vmatprep.mubr.f32.mxu0 0.0
        %8045 = vmatmul.mubr.f32.gmra.mrb[0].mxu0 %v7915
        %v8046 = vpop.f32.mrb[0].mxu0
        %v8047 = vadd.f32 0.0, %v8046
        %v8048 = vpop.f32.mrb[0].mxu0
        %8049 = vmatprep.mubr.f32.mxu0 0.0
        %8050 = vmatmul.mubr.f32.gmra.mrb[0].mxu0 %v7918
        %v8051 = vpop.f32.mrb[0].mxu0
        %v8052 = vadd.f32 0.0, %v8051
        %v8053 = vpop.f32.mrb[0].mxu0
        %8054 = vmatprep.mubr.f32.mxu0 0.0
        %8055 = vmatmul.mubr.f32.gmra.mrb[0].mxu0 %v7921
        %v8056 = vpop.f32.mrb[0].mxu0
        %v8057 = vadd.f32 0.0, %v8056
        %v8058 = vpop.f32.mrb[0].mxu0
        %8059 = vmatprep.mubr.f32.mxu0 0.0
        %8060 = vmatmul.mubr.f32.gmra.mrb[0].mxu0 %v7924
        %v8061 = vpop.f32.mrb[0].mxu0
        %v8062 = vadd.f32 0.0, %v8061
        %v8063 = vpop.f32.mrb[0].mxu0
        %8064 = vmatprep.mubr.f32.mxu0 0.0
        %8065 = vmatmul.mubr.f32.gmra.mrb[0].mxu0 %v7927
        %v8066 = vpop.f32.mrb[0].mxu0
        %v8067 = vadd.f32 0.0, %v8066
        %v8068 = vpop.f32.mrb[0].mxu0
        %8069 = vmatprep.mubr.f32.mxu0 0.0
        %8070 = vmatmul.mubr.f32.gmra.mrb[0].mxu0 %v7930
        %v8071 = vpop.f32.mrb[0].mxu0
        %v8072 = vadd.f32 0.0, %v8071
        %v8073 = vpop.f32.mrb[0].mxu0
        %8074 = vmatprep.mubr.f32.mxu0 0.0
        %8075 = vmatmul.mubr.f32.gmra.mrb[0].mxu0 %v7933
        %v8076 = vpop.f32.mrb[0].mxu0
        %v8077 = vadd.f32 0.0, %v8076
        %v8078 = vpop.f32.mrb[0].mxu0
        %8079 = vmatprep.mubr.f32.mxu0 0.0
        %8080 = vmatmul.mubr.f32.gmra.mrb[0].mxu0 %v7936
        %v8081 = vpop.f32.mrb[0].mxu0
        %v8082 = vadd.f32 0.0, %v8081
        %v8083 = vpop.f32.mrb[0].mxu0
        %8084 = vmatprep.mubr.f32.mxu0 0.0
        %8085 = vmatmul.mubr.f32.gmra.mrb[0].mxu0 %v7939
        %v8086 = vpop.f32.mrb[0].mxu0
        %v8087 = vadd.f32 0.0, %v8086
        %v8088 = vpop.f32.mrb[0].mxu0
        %8089 = vmatprep.mubr.f32.mxu0 0.0
        %8090 = vmatmul.mubr.f32.gmra.mrb[0].mxu0 %v7942
        %v8091 = vpop.f32.mrb[0].mxu0
        %v8092 = vadd.f32 0.0, %v8091
        %v8093 = vpop.f32.mrb[0].mxu0
        %8094 = vmatprep.mubr.f32.mxu0 0.0
        %8095 = vmatmul.mubr.f32.gmra.mrb[0].mxu0 %v7945
        %v8096 = vpop.f32.mrb[0].mxu0
        %v8097 = vadd.f32 0.0, %v8096
        %v8098 = vpop.f32.mrb[0].mxu0
        %8099 = vmatprep.mubr.f32.mxu0 0.0
        %8100 = vmatmul.mubr.f32.gmra.mrb[0].mxu0 %v7948
        %v8101 = vpop.f32.mrb[0].mxu0
        %v8102 = vpop.f32.mrb[0].mxu0
        %8103 = vdwg.mxu0
        %v8104 = vadd.f32 %v7856, %v8017
        %v8105 = vadd.f32 %v7857, %v8022
        %v8106 = vadd.f32 %v7858, %v8027
        %v8107 = vadd.f32 %v7859, %v8032
        %v8108 = vadd.f32 %v7860, %v8037
        %v8109 = vadd.f32 %v7861, %v8042
        %v8110 = vadd.f32 %v7862, %v8047
        %v8111 = vadd.f32 %v7863, %v8052
        %v8112 = vadd.f32 %v7864, %v8057
        %v8113 = vadd.f32 %v7865, %v8062
        %v8114 = vadd.f32 %v7866, %v8067
        %v8115 = vadd.f32 %v7867, %v8072
        %v8116 = vadd.f32 %v7868, %v8077
        %v8117 = vadd.f32 %v7869, %v8082
        %v8118 = vadd.f32 %v7870, %v8087
        %v8119 = vadd.f32 %v7871, %v8092
        %v8120 = vadd.f32 %v7872, %v8097
        %v8122 = vlaneseq
        %v8123 = vshrl.u32 %v8122, 7
        %v8124 = vsub.s32 0, %v8123
        %v8125 = vrot.slane %v279, %v8124
        %v8127 = vadd.f32 %v8104, %v8125
        %v8128 = vadd.f32 %v8105, %v8125
        %v8129 = vadd.f32 %v8106, %v8125
        %v8130 = vadd.f32 %v8107, %v8125
        %v8131 = vadd.f32 %v8108, %v8125
        %v8132 = vadd.f32 %v8109, %v8125
        %v8133 = vadd.f32 %v8110, %v8125
        %v8134 = vadd.f32 %v8111, %v8125
        %v8135 = vadd.f32 %v8112, %v8125
        %v8136 = vadd.f32 %v8113, %v8125
        %v8137 = vadd.f32 %v8114, %v8125
        %v8138 = vadd.f32 %v8115, %v8125
        %v8139 = vadd.f32 %v8116, %v8125
        %v8140 = vadd.f32 %v8117, %v8125
        %v8141 = vadd.f32 %v8118, %v8125
        %v8142 = vadd.f32 %v8119, %v8125
        %v8143 = vadd.f32 %v8120, %v8125
        %v8144 = vmax.f32 %v8127, 0.0
        %v8145 = vmax.f32 %v8128, 0.0
        %v8146 = vmax.f32 %v8129, 0.0
        %v8147 = vmax.f32 %v8130, 0.0
        %v8148 = vmax.f32 %v8131, 0.0
        %v8149 = vmax.f32 %v8132, 0.0
        %v8150 = vmax.f32 %v8133, 0.0
        %v8151 = vmax.f32 %v8134, 0.0
        %v8152 = vmax.f32 %v8135, 0.0
        %v8153 = vmax.f32 %v8136, 0.0
        %v8154 = vmax.f32 %v8137, 0.0
        %v8155 = vmax.f32 %v8138, 0.0
        %v8156 = vmax.f32 %v8139, 0.0
        %v8157 = vmax.f32 %v8140, 0.0
        %v8158 = vmax.f32 %v8141, 0.0
        %v8159 = vmax.f32 %v8142, 0.0
        %v8160 = vmax.f32 %v8143, 0.0
        %vm8164 = vcmask 1042432
        %v8165 = vrot.slane %v8145, 5
        %v8166 = vrot.slane %v8146, 5
        %v8167 = vsel %vm8164, %v8165, %v8166
        %v8168 = vrot.slane %v8147, 5
        %v8169 = vsel %vm8164, %v8166, %v8168
        %v8172 = vmax.f32 %v8144, %v8167
        %v8173 = vmax.f32 %v8145, %v8169
        %v8175 = vrot.slane %v8172, 1
        %v8177 = vmax.f32 %v8172, %v8175
        %v8178 = vlaneseq
        %vm8179 = vcmp.ge.s32.totalorder %v8178, 0
        %vm8180 = vcmp.lt.s32.totalorder %v8178, 64
        %vm8181 = vmand %vm8179, %vm8180
        %8182 = vst.msk [vmem:[#allocation4] sm:$0x1] %vm8181, %v8177
        %v8185 = vunpack.c.l.s4 1966171168
        %v8186 = vunpack.c.0.s8 %v8185
        %v8187 = vlaneseq
        %v8188 = vshrl.u32 %v8187, 7
        %v8189 = vsub.s32 %v8186, %v8188
        %v8190 = vrot.slane %v8177, %v8189
        %v8192 = vunpack.c.l.s4 1966171168
        %v8193 = vunpack.c.0.s8 %v8192
        %v8194 = vlaneseq
        %v8195 = vshrl.u32 %v8194, 7
        %v8196 = vsub.s32 %v8193, %v8195
        %v8197 = vrot.slane %v8190, %v8196
        %v8198 = vcombine.high %v8197, %v8197
        %8199 = vrot.lane.b32.xlu0 %v8198, 64
        %v8200 = vpop.permute.xlu0 %8199
        %vm8202 = vcmp.ge.s32.totalorder %v8178, 64
        %vm8203 = vcmp.lt.s32.totalorder %v8178, 128
        %vm8204 = vmand %vm8202, %vm8203
        %8205 = vst.msk [vmem:[#allocation4] sm:$0x1] %vm8204, %v8200
        %v8206 = vcombine.high %v8177, %v8177
        %v8208 = vunpack.c.l.s4 1966171168
        %v8209 = vunpack.c.0.s8 %v8208
        %v8210 = vlaneseq
        %v8211 = vshrl.u32 %v8210, 7
        %v8212 = vsub.s32 %v8209, %v8211
        %v8213 = vrot.slane %v8206, %v8212
        %v8215 = vunpack.c.l.s4 1966171168
        %v8216 = vunpack.c.0.s8 %v8215
        %v8217 = vlaneseq
        %v8218 = vshrl.u32 %v8217, 7
        %v8219 = vsub.s32 %v8216, %v8218
        %v8220 = vrot.slane %v8213, %v8219
        %8222 = vst.msk [vmem:[#allocation4 + $0x1] sm:$0x1] %vm8181, %v8220
        %v8223 = vcombine.high %v8220, %v8220
        %8224 = vrot.lane.b32.xlu0 %v8223, 64
        %v8225 = vpop.permute.xlu0 %8224
        %8227 = vst.msk [vmem:[#allocation4 + $0x1] sm:$0x1] %vm8204, %v8225
        %v8229 = vrot.slane %v8173, 1
        %v8231 = vmax.f32 %v8173, %v8229
        %8232 = vst.msk [vmem:[#allocation4 + $0x2] sm:$0x1] %vm8181, %v8231
        %v8236 = vrot.slane %v8148, 5
        %v8237 = vrot.slane %v8149, 5
        %v8238 = vsel %vm8164, %v8236, %v8237
        %v8239 = vrot.slane %v8150, 5
        %v8240 = vsel %vm8164, %v8237, %v8239
        %v8243 = vmax.f32 %v8147, %v8238
        %v8244 = vmax.f32 %v8148, %v8240
        %v8246 = vrot.slane %v8243, 1
        %v8248 = vmax.f32 %v8243, %v8246
        %v8251 = vunpack.c.l.s4 1966171168
        %v8252 = vunpack.c.0.s8 %v8251
        %v8253 = vlaneseq
        %v8254 = vshrl.u32 %v8253, 7
        %v8255 = vsub.s32 %v8252, %v8254
        %v8256 = vrot.slane %v8248, %v8255
        %v8258 = vunpack.c.l.s4 1966171168
        %v8259 = vunpack.c.0.s8 %v8258
        %v8260 = vlaneseq
        %v8261 = vshrl.u32 %v8260, 7
        %v8262 = vsub.s32 %v8259, %v8261
        %v8263 = vrot.slane %v8256, %v8262
        %v8264 = vcombine.high %v8263, %v8263
        %8265 = vrot.lane.b32.xlu0 %v8264, 64
        %v8266 = vpop.permute.xlu0 %8265
        %8268 = vst.msk [vmem:[#allocation4 + $0x2] sm:$0x1] %vm8204, %v8266
        %v8269 = vcombine.high %v8248, %v8248
        %v8271 = vunpack.c.l.s4 1966171168
        %v8272 = vunpack.c.0.s8 %v8271
        %v8273 = vlaneseq
        %v8274 = vshrl.u32 %v8273, 7
        %v8275 = vsub.s32 %v8272, %v8274
        %v8276 = vrot.slane %v8269, %v8275
        %v8278 = vunpack.c.l.s4 1966171168
        %v8279 = vunpack.c.0.s8 %v8278
        %v8280 = vlaneseq
        %v8281 = vshrl.u32 %v8280, 7
        %v8282 = vsub.s32 %v8279, %v8281
        %v8283 = vrot.slane %v8276, %v8282
        %8285 = vst.msk [vmem:[#allocation4 + $0x3] sm:$0x1] %vm8181, %v8283
        %v8286 = vcombine.high %v8283, %v8283
        %8287 = vrot.lane.b32.xlu0 %v8286, 64
        %v8288 = vpop.permute.xlu0 %8287
        %8290 = vst.msk [vmem:[#allocation4 + $0x3] sm:$0x1] %vm8204, %v8288
        %v8292 = vrot.slane %v8244, 1
        %v8294 = vmax.f32 %v8244, %v8292
        %8295 = vst.msk [vmem:[#allocation4 + $0x4] sm:$0x1] %vm8181, %v8294
        %v8298 = vunpack.c.l.s4 1966171168
        %v8299 = vunpack.c.0.s8 %v8298
        %v8300 = vlaneseq
        %v8301 = vshrl.u32 %v8300, 7
        %v8302 = vsub.s32 %v8299, %v8301
        %v8303 = vrot.slane %v8294, %v8302
        %v8305 = vunpack.c.l.s4 1966171168
        %v8306 = vunpack.c.0.s8 %v8305
        %v8307 = vlaneseq
        %v8308 = vshrl.u32 %v8307, 7
        %v8309 = vsub.s32 %v8306, %v8308
        %v8310 = vrot.slane %v8303, %v8309
        %v8311 = vcombine.high %v8310, %v8310
        %8312 = vrot.lane.b32.xlu0 %v8311, 64
        %v8313 = vpop.permute.xlu0 %8312
        %8315 = vst.msk [vmem:[#allocation4 + $0x4] sm:$0x1] %vm8204, %v8313
        %v8318 = vrot.slane %v8152, 5
        %v8319 = vrot.slane %v8153, 5
        %v8320 = vsel %vm8164, %v8318, %v8319
        %v8323 = vmax.f32 %v8150, %v8318
        %v8324 = vmax.f32 %v8151, %v8320
        %v8326 = vrot.slane %v8323, 1
        %v8328 = vmax.f32 %v8323, %v8326
        %v8330 = vcombine.high %v8328, %v8328
        %v8332 = vunpack.c.l.s4 1966171168
        %v8333 = vunpack.c.0.s8 %v8332
        %v8334 = vlaneseq
        %v8335 = vshrl.u32 %v8334, 7
        %v8336 = vsub.s32 %v8333, %v8335
        %v8337 = vrot.slane %v8330, %v8336
        %v8339 = vunpack.c.l.s4 1966171168
        %v8340 = vunpack.c.0.s8 %v8339
        %v8341 = vlaneseq
        %v8342 = vshrl.u32 %v8341, 7
        %v8343 = vsub.s32 %v8340, %v8342
        %v8344 = vrot.slane %v8337, %v8343
        %8346 = vst.msk [vmem:[#allocation4 + $0x5] sm:$0x1] %vm8181, %v8344
        %v8347 = vcombine.high %v8344, %v8344
        %8348 = vrot.lane.b32.xlu0 %v8347, 64
        %v8349 = vpop.permute.xlu0 %8348
        %8351 = vst.msk [vmem:[#allocation4 + $0x5] sm:$0x1] %vm8204, %v8349
        %v8353 = vrot.slane %v8324, 1
        %v8355 = vmax.f32 %v8324, %v8353
        %8356 = vst.msk [vmem:[#allocation4 + $0x6] sm:$0x1] %vm8181, %v8355
        %v8359 = vunpack.c.l.s4 1966171168
        %v8360 = vunpack.c.0.s8 %v8359
        %v8361 = vlaneseq
        %v8362 = vshrl.u32 %v8361, 7
        %v8363 = vsub.s32 %v8360, %v8362
        %v8364 = vrot.slane %v8355, %v8363
        %v8366 = vunpack.c.l.s4 1966171168
        %v8367 = vunpack.c.0.s8 %v8366
        %v8368 = vlaneseq
        %v8369 = vshrl.u32 %v8368, 7
        %v8370 = vsub.s32 %v8367, %v8369
        %v8371 = vrot.slane %v8364, %v8370
        %v8372 = vcombine.high %v8371, %v8371
        %8373 = vrot.lane.b32.xlu0 %v8372, 64
        %v8374 = vpop.permute.xlu0 %8373
        %8376 = vst.msk [vmem:[#allocation4 + $0x6] sm:$0x1] %vm8204, %v8374
        %v8377 = vcombine.high %v8355, %v8355
        %v8379 = vunpack.c.l.s4 1966171168
        %v8380 = vunpack.c.0.s8 %v8379
        %v8381 = vlaneseq
        %v8382 = vshrl.u32 %v8381, 7
        %v8383 = vsub.s32 %v8380, %v8382
        %v8384 = vrot.slane %v8377, %v8383
        %v8386 = vunpack.c.l.s4 1966171168
        %v8387 = vunpack.c.0.s8 %v8386
        %v8388 = vlaneseq
        %v8389 = vshrl.u32 %v8388, 7
        %v8390 = vsub.s32 %v8387, %v8389
        %v8391 = vrot.slane %v8384, %v8390
        %8393 = vst.msk [vmem:[#allocation4 + $0x7] sm:$0x1] %vm8181, %v8391
        %v8396 = vrot.slane %v8155, 5
        %v8397 = vrot.slane %v8156, 5
        %v8398 = vsel %vm8164, %v8396, %v8397
        %v8401 = vmax.f32 %v8153, %v8396
        %v8402 = vmax.f32 %v8154, %v8398
        %v8404 = vrot.slane %v8401, 1
        %v8406 = vmax.f32 %v8401, %v8404
        %v8408 = vcombine.high %v8406, %v8406
        %v8410 = vunpack.c.l.s4 1966171168
        %v8411 = vunpack.c.0.s8 %v8410
        %v8412 = vlaneseq
        %v8413 = vshrl.u32 %v8412, 7
        %v8414 = vsub.s32 %v8411, %v8413
        %v8415 = vrot.slane %v8408, %v8414
        %v8417 = vunpack.c.l.s4 1966171168
        %v8418 = vunpack.c.0.s8 %v8417
        %v8419 = vlaneseq
        %v8420 = vshrl.u32 %v8419, 7
        %v8421 = vsub.s32 %v8418, %v8420
        %v8422 = vrot.slane %v8415, %v8421
        %v8423 = vcombine.high %v8422, %v8422
        %8424 = vrot.lane.b32.xlu0 %v8423, 64
        %v8425 = vpop.permute.xlu0 %8424
        %8427 = vst.msk [vmem:[#allocation4 + $0x7] sm:$0x1] %vm8204, %v8425
        %v8429 = vrot.slane %v8402, 1
        %v8431 = vmax.f32 %v8402, %v8429
        %8432 = vst.msk [vmem:[#allocation4 + $0x8] sm:$0x1] %vm8181, %v8431
        %v8435 = vunpack.c.l.s4 1966171168
        %v8436 = vunpack.c.0.s8 %v8435
        %v8437 = vlaneseq
        %v8438 = vshrl.u32 %v8437, 7
        %v8439 = vsub.s32 %v8436, %v8438
        %v8440 = vrot.slane %v8431, %v8439
        %v8442 = vunpack.c.l.s4 1966171168
        %v8443 = vunpack.c.0.s8 %v8442
        %v8444 = vlaneseq
        %v8445 = vshrl.u32 %v8444, 7
        %v8446 = vsub.s32 %v8443, %v8445
        %v8447 = vrot.slane %v8440, %v8446
        %v8448 = vcombine.high %v8447, %v8447
        %8449 = vrot.lane.b32.xlu0 %v8448, 64
        %v8450 = vpop.permute.xlu0 %8449
        %8452 = vst.msk [vmem:[#allocation4 + $0x8] sm:$0x1] %vm8204, %v8450
        %v8453 = vcombine.high %v8431, %v8431
        %v8455 = vunpack.c.l.s4 1966171168
        %v8456 = vunpack.c.0.s8 %v8455
        %v8457 = vlaneseq
        %v8458 = vshrl.u32 %v8457, 7
        %v8459 = vsub.s32 %v8456, %v8458
        %v8460 = vrot.slane %v8453, %v8459
        %v8462 = vunpack.c.l.s4 1966171168
        %v8463 = vunpack.c.0.s8 %v8462
        %v8464 = vlaneseq
        %v8465 = vshrl.u32 %v8464, 7
        %v8466 = vsub.s32 %v8463, %v8465
        %v8467 = vrot.slane %v8460, %v8466
        %8469 = vst.msk [vmem:[#allocation4 + $0x9] sm:$0x1] %vm8181, %v8467
        %v8470 = vcombine.high %v8467, %v8467
        %8471 = vrot.lane.b32.xlu0 %v8470, 64
        %v8472 = vpop.permute.xlu0 %8471
        %8474 = vst.msk [vmem:[#allocation4 + $0x9] sm:$0x1] %vm8204, %v8472
        %v8478 = vrot.slane %v8158, 5
        %v8479 = vrot.slane %v8159, 5
        %v8480 = vsel %vm8164, %v8478, %v8479
        %v8481 = vrot.slane %v8160, 5
        %v8482 = vsel %vm8164, %v8479, %v8481
        %v8485 = vmax.f32 %v8157, %v8480
        %v8486 = vmax.f32 %v8158, %v8482
        %v8488 = vrot.slane %v8485, 1
        %v8490 = vmax.f32 %v8485, %v8488
        %8491 = vst.msk [vmem:[#allocation4 + $0xa] sm:$0x1] %vm8181, %v8490
        %v8494 = vunpack.c.l.s4 1966171168
        %v8495 = vunpack.c.0.s8 %v8494
        %v8496 = vlaneseq
        %v8497 = vshrl.u32 %v8496, 7
        %v8498 = vsub.s32 %v8495, %v8497
        %v8499 = vrot.slane %v8490, %v8498
        %v8501 = vunpack.c.l.s4 1966171168
        %v8502 = vunpack.c.0.s8 %v8501
        %v8503 = vlaneseq
        %v8504 = vshrl.u32 %v8503, 7
        %v8505 = vsub.s32 %v8502, %v8504
        %v8506 = vrot.slane %v8499, %v8505
        %v8507 = vcombine.high %v8506, %v8506
        %8508 = vrot.lane.b32.xlu0 %v8507, 64
        %v8509 = vpop.permute.xlu0 %8508
        %8511 = vst.msk [vmem:[#allocation4 + $0xa] sm:$0x1] %vm8204, %v8509
        %v8512 = vcombine.high %v8490, %v8490
        %v8514 = vunpack.c.l.s4 1966171168
        %v8515 = vunpack.c.0.s8 %v8514
        %v8516 = vlaneseq
        %v8517 = vshrl.u32 %v8516, 7
        %v8518 = vsub.s32 %v8515, %v8517
        %v8519 = vrot.slane %v8512, %v8518
        %v8521 = vunpack.c.l.s4 1966171168
        %v8522 = vunpack.c.0.s8 %v8521
        %v8523 = vlaneseq
        %v8524 = vshrl.u32 %v8523, 7
        %v8525 = vsub.s32 %v8522, %v8524
        %v8526 = vrot.slane %v8519, %v8525
        %8528 = vst.msk [vmem:[#allocation4 + $0xb] sm:$0x1] %vm8181, %v8526
        %v8529 = vcombine.high %v8526, %v8526
        %8530 = vrot.lane.b32.xlu0 %v8529, 64
        %v8531 = vpop.permute.xlu0 %8530
        %8533 = vst.msk [vmem:[#allocation4 + $0xb] sm:$0x1] %vm8204, %v8531
        %v8535 = vrot.slane %v8486, 1
        %v8537 = vmax.f32 %v8486, %v8535
        %8538 = vst.msk [vmem:[#allocation4 + $0xc] sm:$0x1] %vm8181, %v8537
        %v8539 = vld [vmem:[#allocation4] sm:$0xff]
        %v8540 = vld [vmem:[#allocation4 + $0x8] sm:$0x1f]
        %v8541 = vld [vmem:[%s5] sm:$0xff]
        %v8542 = vld [vmem:[%s5 + $0x8] sm:$0xff]
        %v8543 = vld [vmem:[%s5 + $0x10] sm:$0xff]
        %v8544 = vld [vmem:[%s5 + $0x18] sm:$0xff]
        %v8545 = vld [vmem:[%s5 + $0x20] sm:$0xff]
        %v8546 = vld [vmem:[%s5 + $0x28] sm:$0xff]
        %v8547 = vld [vmem:[%s5 + $0x30] sm:$0xff]
        %v8548 = vld [vmem:[%s5 + $0x38] sm:$0xff]
        %v8549 = vld [vmem:[%s5 + $0x40] sm:$0xff]
        %v8550 = vld [vmem:[%s5 + $0x48] sm:$0xff]
        %v8551 = vld [vmem:[%s5 + $0x50] sm:$0xff]
        %v8552 = vld [vmem:[%s5 + $0x58] sm:$0xff]
        %v8553 = vld [vmem:[%s5 + $0x60] sm:$0xff]
        %v8554 = vld [vmem:[%s5 + $0x68] sm:$0xff]
        %v8555 = vld [vmem:[%s5 + $0x70] sm:$0xff]
        %v8556 = vld [vmem:[%s5 + $0x78] sm:$0xff]
        %v8557 = vld [vmem:[%s5 + $0x80] sm:$0xff]
        %v8558 = vld [vmem:[%s5 + $0x88] sm:$0xff]
        %v8559 = vld [vmem:[%s5 + $0x90] sm:$0xff]
        %v8560 = vld [vmem:[%s5 + $0x98] sm:$0xff]
        %v8561 = vld [vmem:[%s5 + $0xa0] sm:$0xff]
        %v8562 = vld [vmem:[%s5 + $0xa8] sm:$0xff]
        %v8563 = vld [vmem:[%s5 + $0xb0] sm:$0xff]
        %v8564 = vld [vmem:[%s5 + $0xb8] sm:$0xff]
        %v8565 = vld [vmem:[%s5 + $0xc0] sm:$0xff]
        %v8566 = vld [vmem:[%s5 + $0xc8] sm:$0xff]
        %v8567 = vld [vmem:[%s5 + $0xd0] sm:$0xff]
        %v8568 = vld [vmem:[%s5 + $0xd8] sm:$0xff]
        %v8569 = vld [vmem:[%s5 + $0xe0] sm:$0xff]
        %v8570 = vld [vmem:[%s5 + $0xe8] sm:$0xff]
        %v8571 = vld [vmem:[%s5 + $0xf0] sm:$0xff]
        %v8572 = vld [vmem:[%s5 + $0xf8] sm:$0xff]
        %v8573 = vld [vmem:[%s5 + $0x100] sm:$0xff]
        %v8574 = vld [vmem:[%s5 + $0x108] sm:$0xff]
        %v8575 = vld [vmem:[%s5 + $0x110] sm:$0xff]
        %v8576 = vld [vmem:[%s5 + $0x118] sm:$0xff]
        %v8577 = vld [vmem:[%s5 + $0x120] sm:$0xff]
        %v8578 = vld [vmem:[%s5 + $0x128] sm:$0xff]
        %v8579 = vld [vmem:[%s5 + $0x130] sm:$0xff]
        %v8580 = vld [vmem:[%s5 + $0x138] sm:$0xff]
        %v8581 = vld [vmem:[%s5 + $0x140] sm:$0xff]
        %v8582 = vld [vmem:[%s5 + $0x148] sm:$0xff]
        %v8583 = vld [vmem:[%s5 + $0x150] sm:$0xff]
        %v8584 = vld [vmem:[%s5 + $0x158] sm:$0xff]
        %v8585 = vld [vmem:[%s5 + $0x160] sm:$0xff]
        %v8586 = vld [vmem:[%s5 + $0x168] sm:$0xff]
        %v8587 = vld [vmem:[%s5 + $0x170] sm:$0xff]
        %v8588 = vld [vmem:[%s5 + $0x178] sm:$0xff]
        %v8589 = vld [vmem:[%s5 + $0x180] sm:$0xff]
        %v8590 = vld [vmem:[%s5 + $0x188] sm:$0xff]
        %v8591 = vld [vmem:[%s5 + $0x190] sm:$0xff]
        %v8592 = vld [vmem:[%s5 + $0x198] sm:$0xff]
        %v8593 = vld [vmem:[%s5 + $0x1a0] sm:$0xff]
        %v8594 = vld [vmem:[%s5 + $0x1a8] sm:$0xff]
        %v8595 = vld [vmem:[%s5 + $0x1b0] sm:$0xff]
        %v8596 = vld [vmem:[%s5 + $0x1b8] sm:$0xff]
        %v8597 = vld [vmem:[%s5 + $0x1c0] sm:$0xff]
        %v8598 = vld [vmem:[%s5 + $0x1c8] sm:$0xff]
        %v8599 = vld [vmem:[%s5 + $0x1d0] sm:$0xff]
        %v8600 = vld [vmem:[%s5 + $0x1d8] sm:$0xff]
        %v8601 = vld [vmem:[%s5 + $0x1e0] sm:$0xff]
        %v8602 = vld [vmem:[%s5 + $0x1e8] sm:$0xff]
        %v8603 = vld [vmem:[%s5 + $0x1f0] sm:$0xff]
        %v8604 = vld [vmem:[%s5 + $0x1f8] sm:$0xff]
        %v8605 = vld [vmem:[%s5 + $0x200] sm:$0xff]
        %v8606 = vld [vmem:[%s5 + $0x208] sm:$0xff]
        %v8607 = vld [vmem:[%s5 + $0x210] sm:$0xff]
        %v8608 = vld [vmem:[%s5 + $0x218] sm:$0xff]
        %v8609 = vld [vmem:[%s5 + $0x220] sm:$0xff]
        %v8610 = vld [vmem:[%s5 + $0x228] sm:$0xff]
        %v8611 = vld [vmem:[%s5 + $0x230] sm:$0xff]
        %v8612 = vld [vmem:[%s5 + $0x238] sm:$0xff]
        %v8613 = vld [vmem:[%s5 + $0x240] sm:$0xff]
        %v8614 = vld [vmem:[%s5 + $0x248] sm:$0xff]
        %v8615 = vld [vmem:[%s5 + $0x250] sm:$0xff]
        %v8616 = vld [vmem:[%s5 + $0x258] sm:$0xff]
        %v8617 = vld [vmem:[%s5 + $0x260] sm:$0xff]
        %v8618 = vld [vmem:[%s5 + $0x268] sm:$0xff]
        %v8619 = vld [vmem:[%s5 + $0x270] sm:$0xff]
        %v8620 = vld [vmem:[%s5 + $0x278] sm:$0xff]
        %v8621 = vld [vmem:[%s5 + $0x280] sm:$0xff]
        %v8622 = vld [vmem:[%s5 + $0x288] sm:$0xff]
        %v8623 = vld [vmem:[%s5 + $0x290] sm:$0xff]
        %v8624 = vld [vmem:[%s5 + $0x298] sm:$0xff]
        %v8625 = vld [vmem:[%s5 + $0x2a0] sm:$0xff]
        %v8626 = vld [vmem:[%s5 + $0x2a8] sm:$0xff]
        %v8627 = vld [vmem:[%s5 + $0x2b0] sm:$0xff]
        %v8628 = vld [vmem:[%s5 + $0x2b8] sm:$0xff]
        %v8629 = vld [vmem:[%s5 + $0x2c0] sm:$0xff]
        %v8630 = vld [vmem:[%s5 + $0x2c8] sm:$0xff]
        %v8631 = vld [vmem:[%s5 + $0x2d0] sm:$0xff]
        %v8632 = vld [vmem:[%s5 + $0x2d8] sm:$0xff]
        %v8633 = vld [vmem:[%s5 + $0x2e0] sm:$0xff]
        %v8634 = vld [vmem:[%s5 + $0x2e8] sm:$0xff]
        %v8635 = vld [vmem:[%s5 + $0x2f0] sm:$0xff]
        %v8636 = vld [vmem:[%s5 + $0x2f8] sm:$0xff]
        %v8637 = vld [vmem:[%s5 + $0x300] sm:$0xff]
        %v8638 = vld [vmem:[%s5 + $0x308] sm:$0xff]
        %v8639 = vld [vmem:[%s5 + $0x310] sm:$0xff]
        %v8640 = vld [vmem:[%s5 + $0x318] sm:$0xff]
        %v8641 = vld [vmem:[%s5 + $0x320] sm:$0xff]
        %v8642 = vld [vmem:[%s5 + $0x328] sm:$0xff]
        %v8643 = vld [vmem:[%s5 + $0x330] sm:$0xff]
        %v8644 = vld [vmem:[%s5 + $0x338] sm:$0xff]
        %v8645 = vld [vmem:[%s5 + $0x340] sm:$0xff]
        %v8646 = vld [vmem:[%s5 + $0x348] sm:$0xff]
        %v8647 = vld [vmem:[%s5 + $0x350] sm:$0xff]
        %v8648 = vld [vmem:[%s5 + $0x358] sm:$0xff]
        %v8649 = vld [vmem:[%s5 + $0x360] sm:$0xff]
        %v8650 = vld [vmem:[%s5 + $0x368] sm:$0xff]
        %v8651 = vld [vmem:[%s5 + $0x370] sm:$0xff]
        %v8652 = vld [vmem:[%s5 + $0x378] sm:$0xff]
        %v8653 = vld [vmem:[%s5 + $0x380] sm:$0xff]
        %v8654 = vld [vmem:[%s5 + $0x388] sm:$0xff]
        %v8655 = vld [vmem:[%s5 + $0x390] sm:$0xff]
        %v8656 = vld [vmem:[%s5 + $0x398] sm:$0xff]
        %v8657 = vld [vmem:[%s5 + $0x3a0] sm:$0xff]
        %v8658 = vld [vmem:[%s5 + $0x3a8] sm:$0xff]
        %v8659 = vld [vmem:[%s5 + $0x3b0] sm:$0xff]
        %v8660 = vld [vmem:[%s5 + $0x3b8] sm:$0xff]
        %v8661 = vld [vmem:[%s5 + $0x3c0] sm:$0xff]
        %v8662 = vld [vmem:[%s5 + $0x3c8] sm:$0xff]
        %v8663 = vld [vmem:[%s5 + $0x3d0] sm:$0xff]
        %v8664 = vld [vmem:[%s5 + $0x3d8] sm:$0xff]
        %v8665 = vld [vmem:[%s5 + $0x3e0] sm:$0xff]
        %v8666 = vld [vmem:[%s5 + $0x3e8] sm:$0xff]
        %v8667 = vld [vmem:[%s5 + $0x3f0] sm:$0xff]
        %v8668 = vld [vmem:[%s5 + $0x3f8] sm:$0xff]
        %v8669 = vld [vmem:[%s5 + $0x400] sm:$0xff]
        %v8670 = vld [vmem:[%s5 + $0x408] sm:$0xff]
        %v8671 = vld [vmem:[%s5 + $0x410] sm:$0xff]
        %v8672 = vld [vmem:[%s5 + $0x418] sm:$0xff]
        %v8673 = vld [vmem:[%s5 + $0x420] sm:$0xff]
        %v8674 = vld [vmem:[%s5 + $0x428] sm:$0xff]
        %v8675 = vld [vmem:[%s5 + $0x430] sm:$0xff]
        %v8676 = vld [vmem:[%s5 + $0x438] sm:$0xff]
        %v8677 = vld [vmem:[%s5 + $0x440] sm:$0xff]
        %v8678 = vld [vmem:[%s5 + $0x448] sm:$0xff]
        %v8679 = vld [vmem:[%s5 + $0x450] sm:$0xff]
        %v8680 = vld [vmem:[%s5 + $0x458] sm:$0xff]
        %v8681 = vld [vmem:[%s5 + $0x460] sm:$0xff]
        %v8682 = vld [vmem:[%s5 + $0x468] sm:$0xff]
        %v8683 = vld [vmem:[%s5 + $0x470] sm:$0xff]
        %v8684 = vld [vmem:[%s5 + $0x478] sm:$0xff]
        %v8685 = vld [vmem:[%s5 + $0x480] sm:$0xff]
        %v8686 = vld [vmem:[%s5 + $0x488] sm:$0xff]
        %v8687 = vld [vmem:[%s5 + $0x490] sm:$0xff]
        %v8688 = vld [vmem:[%s5 + $0x498] sm:$0xff]
        %v8689 = vld [vmem:[%s5 + $0x4a0] sm:$0xff]
        %v8690 = vld [vmem:[%s5 + $0x4a8] sm:$0xff]
        %v8691 = vld [vmem:[%s5 + $0x4b0] sm:$0xff]
        %v8692 = vld [vmem:[%s5 + $0x4b8] sm:$0xff]
        %v8693 = vld [vmem:[%s5 + $0x4c0] sm:$0xff]
        %v8694 = vld [vmem:[%s5 + $0x4c8] sm:$0xff]
        %v8695 = vld [vmem:[%s5 + $0x4d0] sm:$0xff]
        %v8696 = vld [vmem:[%s5 + $0x4d8] sm:$0xff]
        %v8697 = vld [vmem:[%s5 + $0x4e0] sm:$0xff]
        %v8698 = vld [vmem:[%s5 + $0x4e8] sm:$0xff]
        %v8699 = vld [vmem:[%s5 + $0x4f0] sm:$0xff]
        %v8700 = vld [vmem:[%s5 + $0x4f8] sm:$0xff]
        %v8701 = vld [vmem:[%s5 + $0x500] sm:$0xff]
        %v8702 = vld [vmem:[%s5 + $0x508] sm:$0xff]
        %v8703 = vld [vmem:[%s5 + $0x510] sm:$0xff]
        %v8704 = vld [vmem:[%s5 + $0x518] sm:$0xff]
        %v8705 = vld [vmem:[%s5 + $0x520] sm:$0xff]
        %v8706 = vld [vmem:[%s5 + $0x528] sm:$0xff]
        %v8707 = vld [vmem:[%s5 + $0x530] sm:$0xff]
        %v8708 = vld [vmem:[%s5 + $0x538] sm:$0xff]
        %v8709 = vld [vmem:[%s5 + $0x540] sm:$0xff]
        %v8710 = vld [vmem:[%s5 + $0x548] sm:$0xff]
        %v8711 = vld [vmem:[%s5 + $0x550] sm:$0xff]
        %v8712 = vld [vmem:[%s5 + $0x558] sm:$0xff]
        %v8713 = vld [vmem:[%s5 + $0x560] sm:$0xff]
        %v8714 = vld [vmem:[%s5 + $0x568] sm:$0xff]
        %v8715 = vld [vmem:[%s5 + $0x570] sm:$0xff]
        %v8716 = vld [vmem:[%s5 + $0x578] sm:$0xff]
        %v8717 = vld [vmem:[%s5 + $0x580] sm:$0xff]
        %v8718 = vld [vmem:[%s5 + $0x588] sm:$0xff]
        %v8719 = vld [vmem:[%s5 + $0x590] sm:$0xff]
        %v8720 = vld [vmem:[%s5 + $0x598] sm:$0xff]
        %v8721 = vld [vmem:[%s5 + $0x5a0] sm:$0xff]
        %v8722 = vld [vmem:[%s5 + $0x5a8] sm:$0xff]
        %v8723 = vld [vmem:[%s5 + $0x5b0] sm:$0xff]
        %v8724 = vld [vmem:[%s5 + $0x5b8] sm:$0xff]
        %v8725 = vld [vmem:[%s5 + $0x5c0] sm:$0xff]
        %v8726 = vld [vmem:[%s5 + $0x5c8] sm:$0xff]
        %v8727 = vld [vmem:[%s5 + $0x5d0] sm:$0xff]
        %v8728 = vld [vmem:[%s5 + $0x5d8] sm:$0xff]
        %v8729 = vld [vmem:[%s5 + $0x5e0] sm:$0xff]
        %v8730 = vld [vmem:[%s5 + $0x5e8] sm:$0xff]
        %v8731 = vld [vmem:[%s5 + $0x5f0] sm:$0xff]
        %v8732 = vld [vmem:[%s5 + $0x5f8] sm:$0xff]
        %v8733 = vld [vmem:[%s5 + $0x600] sm:$0xff]
        %v8734 = vld [vmem:[%s5 + $0x608] sm:$0xff]
        %v8735 = vld [vmem:[%s5 + $0x610] sm:$0xff]
        %v8736 = vld [vmem:[%s5 + $0x618] sm:$0xff]
        %v8737 = vld [vmem:[%s5 + $0x620] sm:$0xff]
        %v8738 = vld [vmem:[%s5 + $0x628] sm:$0xff]
        %v8739 = vld [vmem:[%s5 + $0x630] sm:$0xff]
        %v8740 = vld [vmem:[%s5 + $0x638] sm:$0xff]
        %v8741 = vld [vmem:[%s6] sm:$0x1]
        %v8744 = vlaneseq
        %v8745 = vshrl.u32 %v8744, 7
        %v8746 = vsub.s32 0, %v8745
        %v8747 = vrot.slane %v8539, %v8746
        %v8748 = vlaneseq
        %v8749 = vshrl.u32 %v8748, 7
        %v8750 = vsub.s32 1, %v8749
        %v8751 = vrot.slane %v8539, %v8750
        %v8752 = vlaneseq
        %v8753 = vshrl.u32 %v8752, 7
        %v8754 = vsub.s32 2, %v8753
        %v8755 = vrot.slane %v8539, %v8754
        %v8756 = vlaneseq
        %v8757 = vshrl.u32 %v8756, 7
        %v8758 = vsub.s32 3, %v8757
        %v8759 = vrot.slane %v8539, %v8758
        %v8760 = vlaneseq
        %v8761 = vshrl.u32 %v8760, 7
        %v8762 = vsub.s32 4, %v8761
        %v8763 = vrot.slane %v8539, %v8762
        %v8764 = vlaneseq
        %v8765 = vshrl.u32 %v8764, 7
        %v8766 = vsub.s32 5, %v8765
        %v8767 = vrot.slane %v8539, %v8766
        %v8768 = vlaneseq
        %v8769 = vshrl.u32 %v8768, 7
        %v8770 = vsub.s32 6, %v8769
        %v8771 = vrot.slane %v8539, %v8770
        %v8772 = vlaneseq
        %v8773 = vshrl.u32 %v8772, 7
        %v8774 = vsub.s32 7, %v8773
        %v8775 = vrot.slane %v8539, %v8774
        %v8776 = vlaneseq
        %v8777 = vshrl.u32 %v8776, 7
        %v8778 = vsub.s32 0, %v8777
        %v8779 = vrot.slane %v8540, %v8778
        %v8780 = vlaneseq
        %v8781 = vshrl.u32 %v8780, 7
        %v8782 = vsub.s32 1, %v8781
        %v8783 = vrot.slane %v8540, %v8782
        %v8784 = vlaneseq
        %v8785 = vshrl.u32 %v8784, 7
        %v8786 = vsub.s32 2, %v8785
        %v8787 = vrot.slane %v8540, %v8786
        %v8788 = vlaneseq
        %v8789 = vshrl.u32 %v8788, 7
        %v8790 = vsub.s32 3, %v8789
        %v8791 = vrot.slane %v8540, %v8790
        %v8792 = vlaneseq
        %v8793 = vshrl.u32 %v8792, 7
        %v8794 = vsub.s32 4, %v8793
        %v8795 = vrot.slane %v8540, %v8794
        %vm8808 = vcmask 523264
        %v8809 = vsel %vm8808, %v8795, 0
        %8811 = vmatprep.subr.mxu0 0.0
        %8812 = vmatpush1.msra.mxu0 %v8541
        %8813 = vmatprep.subr.mxu0 0.0
        %8814 = vmatpush1.msra.mxu0 %v8542
        %8815 = vmatprep.subr.mxu0 0.0
        %8816 = vmatpush1.msra.mxu0 %v8543
        %8817 = vmatprep.subr.mxu0 0.0
        %8818 = vmatpush1.msra.mxu0 %v8544
        %8819 = vmatprep.subr.mxu0 0.0
        %8820 = vmatpush1.msra.mxu0 %v8545
        %8821 = vmatprep.subr.mxu0 0.0
        %8822 = vmatpush1.msra.mxu0 %v8546
        %8823 = vmatprep.subr.mxu0 0.0
        %8824 = vmatpush1.msra.mxu0 %v8547
        %8825 = vmatprep.subr.mxu0 0.0
        %8826 = vmatpush1.msra.mxu0 %v8548
        %8827 = vmatprep.subr.mxu0 0.0
        %8828 = vmatpush1.msra.mxu0 %v8549
        %8829 = vmatprep.subr.mxu0 0.0
        %8830 = vmatpush1.msra.mxu0 %v8550
        %8831 = vmatprep.subr.mxu0 0.0
        %8832 = vmatpush1.msra.mxu0 %v8551
        %8833 = vmatprep.subr.mxu0 0.0
        %8834 = vmatpush1.msra.mxu0 %v8552
        %8835 = vmatprep.subr.mxu0 0.0
        %8836 = vmatpush1.msra.mxu0 %v8553
        %8837 = vmatprep.subr.mxu0 0.0
        %8838 = vmatpush1.msra.mxu0 %v8554
        %8839 = vmatprep.subr.mxu0 0.0
        %8840 = vmatpush1.msra.mxu0 %v8555
        %8841 = vmatprep.subr.mxu0 0.0
        %8842 = vmatpush1.msra.mxu0 %v8556
        %8843 = vmatprep.subr.mxu0 0.0
        %8844 = vmatpush1.msra.mxu0 %v8557
        %8845 = vmatprep.subr.mxu0 0.0
        %8846 = vmatpush1.msra.mxu0 %v8558
        %8847 = vmatprep.subr.mxu0 0.0
        %8848 = vmatpush1.msra.mxu0 %v8559
        %8849 = vmatprep.subr.mxu0 0.0
        %8850 = vmatpush1.msra.mxu0 %v8560
        %8851 = vmatprep.subr.mxu0 0.0
        %8852 = vmatpush1.msra.mxu0 %v8561
        %8853 = vmatprep.subr.mxu0 0.0
        %8854 = vmatpush1.msra.mxu0 %v8562
        %8855 = vmatprep.subr.mxu0 0.0
        %8856 = vmatpush1.msra.mxu0 %v8563
        %8857 = vmatprep.subr.mxu0 0.0
        %8858 = vmatpush1.msra.mxu0 %v8564
        %8859 = vmatprep.subr.mxu0 0.0
        %8860 = vmatpush1.msra.mxu0 %v8565
        %8861 = vmatprep.subr.mxu0 0.0
        %8862 = vmatpush1.msra.mxu0 %v8566
        %8863 = vmatprep.subr.mxu0 0.0
        %8864 = vmatpush1.msra.mxu0 %v8567
        %8865 = vmatprep.subr.mxu0 0.0
        %8866 = vmatpush1.msra.mxu0 %v8568
        %8867 = vmatprep.subr.mxu0 0.0
        %8868 = vmatpush1.msra.mxu0 %v8569
        %8869 = vmatprep.subr.mxu0 0.0
        %8870 = vmatpush1.msra.mxu0 %v8570
        %8871 = vmatprep.subr.mxu0 0.0
        %8872 = vmatpush1.msra.mxu0 %v8571
        %8873 = vmatprep.subr.mxu0 0.0
        %8874 = vmatpush1.msra.mxu0 %v8572
        %8875 = vmatprep.mubr.f32.mxu0 %v8751
        %8876 = vmatmul.mubr.f32.gmra.mrb[0].mxu0 %v8747
        %v8877 = vpop.f32.mrb[0].mxu0
        %v8878 = vadd.f32 %v8741, %v8877
        %v8879 = vpop.f32.mrb[0].mxu0
        %8880 = vdwg.mxu0
        %8881 = vmatprep.subr.mxu0 0.0
        %8882 = vmatpush1.msra.mxu0 %v8573
        %8883 = vmatprep.subr.mxu0 0.0
        %8884 = vmatpush1.msra.mxu0 %v8574
        %8885 = vmatprep.subr.mxu0 0.0
        %8886 = vmatpush1.msra.mxu0 %v8575
        %8887 = vmatprep.subr.mxu0 0.0
        %8888 = vmatpush1.msra.mxu0 %v8576
        %8889 = vmatprep.subr.mxu0 0.0
        %8890 = vmatpush1.msra.mxu0 %v8577
        %8891 = vmatprep.subr.mxu0 0.0
        %8892 = vmatpush1.msra.mxu0 %v8578
        %8893 = vmatprep.subr.mxu0 0.0
        %8894 = vmatpush1.msra.mxu0 %v8579
        %8895 = vmatprep.subr.mxu0 0.0
        %8896 = vmatpush1.msra.mxu0 %v8580
        %8897 = vmatprep.subr.mxu0 0.0
        %8898 = vmatpush1.msra.mxu0 %v8581
        %8899 = vmatprep.subr.mxu0 0.0
        %8900 = vmatpush1.msra.mxu0 %v8582
        %8901 = vmatprep.subr.mxu0 0.0
        %8902 = vmatpush1.msra.mxu0 %v8583
        %8903 = vmatprep.subr.mxu0 0.0
        %8904 = vmatpush1.msra.mxu0 %v8584
        %8905 = vmatprep.subr.mxu0 0.0
        %8906 = vmatpush1.msra.mxu0 %v8585
        %8907 = vmatprep.subr.mxu0 0.0
        %8908 = vmatpush1.msra.mxu0 %v8586
        %8909 = vmatprep.subr.mxu0 0.0
        %8910 = vmatpush1.msra.mxu0 %v8587
        %8911 = vmatprep.subr.mxu0 0.0
        %8912 = vmatpush1.msra.mxu0 %v8588
        %8913 = vmatprep.subr.mxu0 0.0
        %8914 = vmatpush1.msra.mxu0 %v8589
        %8915 = vmatprep.subr.mxu0 0.0
        %8916 = vmatpush1.msra.mxu0 %v8590
        %8917 = vmatprep.subr.mxu0 0.0
        %8918 = vmatpush1.msra.mxu0 %v8591
        %8919 = vmatprep.subr.mxu0 0.0
        %8920 = vmatpush1.msra.mxu0 %v8592
        %8921 = vmatprep.subr.mxu0 0.0
        %8922 = vmatpush1.msra.mxu0 %v8593
        %8923 = vmatprep.subr.mxu0 0.0
        %8924 = vmatpush1.msra.mxu0 %v8594
        %8925 = vmatprep.subr.mxu0 0.0
        %8926 = vmatpush1.msra.mxu0 %v8595
        %8927 = vmatprep.subr.mxu0 0.0
        %8928 = vmatpush1.msra.mxu0 %v8596
        %8929 = vmatprep.subr.mxu0 0.0
        %8930 = vmatpush1.msra.mxu0 %v8597
        %8931 = vmatprep.subr.mxu0 0.0
        %8932 = vmatpush1.msra.mxu0 %v8598
        %8933 = vmatprep.subr.mxu0 0.0
        %8934 = vmatpush1.msra.mxu0 %v8599
        %8935 = vmatprep.subr.mxu0 0.0
        %8936 = vmatpush1.msra.mxu0 %v8600
        %8937 = vmatprep.subr.mxu0 0.0
        %8938 = vmatpush1.msra.mxu0 %v8601
        %8939 = vmatprep.subr.mxu0 0.0
        %8940 = vmatpush1.msra.mxu0 %v8602
        %8941 = vmatprep.subr.mxu0 0.0
        %8942 = vmatpush1.msra.mxu0 %v8603
        %8943 = vmatprep.subr.mxu0 0.0
        %8944 = vmatpush1.msra.mxu0 %v8604
        %8945 = vmatprep.mubr.f32.mxu0 %v8759
        %8946 = vmatmul.mubr.f32.gmra.mrb[0].mxu0 %v8755
        %v8947 = vpop.f32.mrb[0].mxu0
        %v8948 = vadd.f32 %v8878, %v8947
        %v8949 = vpop.f32.mrb[0].mxu0
        %8950 = vdwg.mxu0
        %8951 = vmatprep.subr.mxu0 0.0
        %8952 = vmatpush1.msra.mxu0 %v8605
        %8953 = vmatprep.subr.mxu0 0.0
        %8954 = vmatpush1.msra.mxu0 %v8606
        %8955 = vmatprep.subr.mxu0 0.0
        %8956 = vmatpush1.msra.mxu0 %v8607
        %8957 = vmatprep.subr.mxu0 0.0
        %8958 = vmatpush1.msra.mxu0 %v8608
        %8959 = vmatprep.subr.mxu0 0.0
        %8960 = vmatpush1.msra.mxu0 %v8609
        %8961 = vmatprep.subr.mxu0 0.0
        %8962 = vmatpush1.msra.mxu0 %v8610
        %8963 = vmatprep.subr.mxu0 0.0
        %8964 = vmatpush1.msra.mxu0 %v8611
        %8965 = vmatprep.subr.mxu0 0.0
        %8966 = vmatpush1.msra.mxu0 %v8612
        %8967 = vmatprep.subr.mxu0 0.0
        %8968 = vmatpush1.msra.mxu0 %v8613
        %8969 = vmatprep.subr.mxu0 0.0
        %8970 = vmatpush1.msra.mxu0 %v8614
        %8971 = vmatprep.subr.mxu0 0.0
        %8972 = vmatpush1.msra.mxu0 %v8615
        %8973 = vmatprep.subr.mxu0 0.0
        %8974 = vmatpush1.msra.mxu0 %v8616
        %8975 = vmatprep.subr.mxu0 0.0
        %8976 = vmatpush1.msra.mxu0 %v8617
        %8977 = vmatprep.subr.mxu0 0.0
        %8978 = vmatpush1.msra.mxu0 %v8618
        %8979 = vmatprep.subr.mxu0 0.0
        %8980 = vmatpush1.msra.mxu0 %v8619
        %8981 = vmatprep.subr.mxu0 0.0
        %8982 = vmatpush1.msra.mxu0 %v8620
        %8983 = vmatprep.subr.mxu0 0.0
        %8984 = vmatpush1.msra.mxu0 %v8621
        %8985 = vmatprep.subr.mxu0 0.0
        %8986 = vmatpush1.msra.mxu0 %v8622
        %8987 = vmatprep.subr.mxu0 0.0
        %8988 = vmatpush1.msra.mxu0 %v8623
        %8989 = vmatprep.subr.mxu0 0.0
        %8990 = vmatpush1.msra.mxu0 %v8624
        %8991 = vmatprep.subr.mxu0 0.0
        %8992 = vmatpush1.msra.mxu0 %v8625
        %8993 = vmatprep.subr.mxu0 0.0
        %8994 = vmatpush1.msra.mxu0 %v8626
        %8995 = vmatprep.subr.mxu0 0.0
        %8996 = vmatpush1.msra.mxu0 %v8627
        %8997 = vmatprep.subr.mxu0 0.0
        %8998 = vmatpush1.msra.mxu0 %v8628
        %8999 = vmatprep.subr.mxu0 0.0
        %9000 = vmatpush1.msra.mxu0 %v8629
        %9001 = vmatprep.subr.mxu0 0.0
        %9002 = vmatpush1.msra.mxu0 %v8630
        %9003 = vmatprep.subr.mxu0 0.0
        %9004 = vmatpush1.msra.mxu0 %v8631
        %9005 = vmatprep.subr.mxu0 0.0
        %9006 = vmatpush1.msra.mxu0 %v8632
        %9007 = vmatprep.subr.mxu0 0.0
        %9008 = vmatpush1.msra.mxu0 %v8633
        %9009 = vmatprep.subr.mxu0 0.0
        %9010 = vmatpush1.msra.mxu0 %v8634
        %9011 = vmatprep.subr.mxu0 0.0
        %9012 = vmatpush1.msra.mxu0 %v8635
        %9013 = vmatprep.subr.mxu0 0.0
        %9014 = vmatpush1.msra.mxu0 %v8636
        %9015 = vmatprep.mubr.f32.mxu0 %v8767
        %9016 = vmatmul.mubr.f32.gmra.mrb[0].mxu0 %v8763
        %v9017 = vpop.f32.mrb[0].mxu0
        %v9018 = vadd.f32 %v8948, %v9017
        %v9019 = vpop.f32.mrb[0].mxu0
        %9020 = vdwg.mxu0
        %9021 = vmatprep.subr.mxu0 0.0
        %9022 = vmatpush1.msra.mxu0 %v8637
        %9023 = vmatprep.subr.mxu0 0.0
        %9024 = vmatpush1.msra.mxu0 %v8638
        %9025 = vmatprep.subr.mxu0 0.0
        %9026 = vmatpush1.msra.mxu0 %v8639
        %9027 = vmatprep.subr.mxu0 0.0
        %9028 = vmatpush1.msra.mxu0 %v8640
        %9029 = vmatprep.subr.mxu0 0.0
        %9030 = vmatpush1.msra.mxu0 %v8641
        %9031 = vmatprep.subr.mxu0 0.0
        %9032 = vmatpush1.msra.mxu0 %v8642
        %9033 = vmatprep.subr.mxu0 0.0
        %9034 = vmatpush1.msra.mxu0 %v8643
        %9035 = vmatprep.subr.mxu0 0.0
        %9036 = vmatpush1.msra.mxu0 %v8644
        %9037 = vmatprep.subr.mxu0 0.0
        %9038 = vmatpush1.msra.mxu0 %v8645
        %9039 = vmatprep.subr.mxu0 0.0
        %9040 = vmatpush1.msra.mxu0 %v8646
        %9041 = vmatprep.subr.mxu0 0.0
        %9042 = vmatpush1.msra.mxu0 %v8647
        %9043 = vmatprep.subr.mxu0 0.0
        %9044 = vmatpush1.msra.mxu0 %v8648
        %9045 = vmatprep.subr.mxu0 0.0
        %9046 = vmatpush1.msra.mxu0 %v8649
        %9047 = vmatprep.subr.mxu0 0.0
        %9048 = vmatpush1.msra.mxu0 %v8650
        %9049 = vmatprep.subr.mxu0 0.0
        %9050 = vmatpush1.msra.mxu0 %v8651
        %9051 = vmatprep.subr.mxu0 0.0
        %9052 = vmatpush1.msra.mxu0 %v8652
        %9053 = vmatprep.subr.mxu0 0.0
        %9054 = vmatpush1.msra.mxu0 %v8653
        %9055 = vmatprep.subr.mxu0 0.0
        %9056 = vmatpush1.msra.mxu0 %v8654
        %9057 = vmatprep.subr.mxu0 0.0
        %9058 = vmatpush1.msra.mxu0 %v8655
        %9059 = vmatprep.subr.mxu0 0.0
        %9060 = vmatpush1.msra.mxu0 %v8656
        %9061 = vmatprep.subr.mxu0 0.0
        %9062 = vmatpush1.msra.mxu0 %v8657
        %9063 = vmatprep.subr.mxu0 0.0
        %9064 = vmatpush1.msra.mxu0 %v8658
        %9065 = vmatprep.subr.mxu0 0.0
        %9066 = vmatpush1.msra.mxu0 %v8659
        %9067 = vmatprep.subr.mxu0 0.0
        %9068 = vmatpush1.msra.mxu0 %v8660
        %9069 = vmatprep.subr.mxu0 0.0
        %9070 = vmatpush1.msra.mxu0 %v8661
        %9071 = vmatprep.subr.mxu0 0.0
        %9072 = vmatpush1.msra.mxu0 %v8662
        %9073 = vmatprep.subr.mxu0 0.0
        %9074 = vmatpush1.msra.mxu0 %v8663
        %9075 = vmatprep.subr.mxu0 0.0
        %9076 = vmatpush1.msra.mxu0 %v8664
        %9077 = vmatprep.subr.mxu0 0.0
        %9078 = vmatpush1.msra.mxu0 %v8665
        %9079 = vmatprep.subr.mxu0 0.0
        %9080 = vmatpush1.msra.mxu0 %v8666
        %9081 = vmatprep.subr.mxu0 0.0
        %9082 = vmatpush1.msra.mxu0 %v8667
        %9083 = vmatprep.subr.mxu0 0.0
        %9084 = vmatpush1.msra.mxu0 %v8668
        %9085 = vmatprep.mubr.f32.mxu0 %v8775
        %9086 = vmatmul.mubr.f32.gmra.mrb[0].mxu0 %v8771
        %v9087 = vpop.f32.mrb[0].mxu0
        %v9088 = vadd.f32 %v9018, %v9087
        %v9089 = vpop.f32.mrb[0].mxu0
        %9090 = vdwg.mxu0
        %9091 = vmatprep.subr.mxu0 0.0
        %9092 = vmatpush1.msra.mxu0 %v8669
        %9093 = vmatprep.subr.mxu0 0.0
        %9094 = vmatpush1.msra.mxu0 %v8670
        %9095 = vmatprep.subr.mxu0 0.0
        %9096 = vmatpush1.msra.mxu0 %v8671
        %9097 = vmatprep.subr.mxu0 0.0
        %9098 = vmatpush1.msra.mxu0 %v8672
        %9099 = vmatprep.subr.mxu0 0.0
        %9100 = vmatpush1.msra.mxu0 %v8673
        %9101 = vmatprep.subr.mxu0 0.0
        %9102 = vmatpush1.msra.mxu0 %v8674
        %9103 = vmatprep.subr.mxu0 0.0
        %9104 = vmatpush1.msra.mxu0 %v8675
        %9105 = vmatprep.subr.mxu0 0.0
        %9106 = vmatpush1.msra.mxu0 %v8676
        %9107 = vmatprep.subr.mxu0 0.0
        %9108 = vmatpush1.msra.mxu0 %v8677
        %9109 = vmatprep.subr.mxu0 0.0
        %9110 = vmatpush1.msra.mxu0 %v8678
        %9111 = vmatprep.subr.mxu0 0.0
        %9112 = vmatpush1.msra.mxu0 %v8679
        %9113 = vmatprep.subr.mxu0 0.0
        %9114 = vmatpush1.msra.mxu0 %v8680
        %9115 = vmatprep.subr.mxu0 0.0
        %9116 = vmatpush1.msra.mxu0 %v8681
        %9117 = vmatprep.subr.mxu0 0.0
        %9118 = vmatpush1.msra.mxu0 %v8682
        %9119 = vmatprep.subr.mxu0 0.0
        %9120 = vmatpush1.msra.mxu0 %v8683
        %9121 = vmatprep.subr.mxu0 0.0
        %9122 = vmatpush1.msra.mxu0 %v8684
        %9123 = vmatprep.subr.mxu0 0.0
        %9124 = vmatpush1.msra.mxu0 %v8685
        %9125 = vmatprep.subr.mxu0 0.0
        %9126 = vmatpush1.msra.mxu0 %v8686
        %9127 = vmatprep.subr.mxu0 0.0
        %9128 = vmatpush1.msra.mxu0 %v8687
        %9129 = vmatprep.subr.mxu0 0.0
        %9130 = vmatpush1.msra.mxu0 %v8688
        %9131 = vmatprep.subr.mxu0 0.0
        %9132 = vmatpush1.msra.mxu0 %v8689
        %9133 = vmatprep.subr.mxu0 0.0
        %9134 = vmatpush1.msra.mxu0 %v8690
        %9135 = vmatprep.subr.mxu0 0.0
        %9136 = vmatpush1.msra.mxu0 %v8691
        %9137 = vmatprep.subr.mxu0 0.0
        %9138 = vmatpush1.msra.mxu0 %v8692
        %9139 = vmatprep.subr.mxu0 0.0
        %9140 = vmatpush1.msra.mxu0 %v8693
        %9141 = vmatprep.subr.mxu0 0.0
        %9142 = vmatpush1.msra.mxu0 %v8694
        %9143 = vmatprep.subr.mxu0 0.0
        %9144 = vmatpush1.msra.mxu0 %v8695
        %9145 = vmatprep.subr.mxu0 0.0
        %9146 = vmatpush1.msra.mxu0 %v8696
        %9147 = vmatprep.subr.mxu0 0.0
        %9148 = vmatpush1.msra.mxu0 %v8697
        %9149 = vmatprep.subr.mxu0 0.0
        %9150 = vmatpush1.msra.mxu0 %v8698
        %9151 = vmatprep.subr.mxu0 0.0
        %9152 = vmatpush1.msra.mxu0 %v8699
        %9153 = vmatprep.subr.mxu0 0.0
        %9154 = vmatpush1.msra.mxu0 %v8700
        %9155 = vmatprep.mubr.f32.mxu0 %v8783
        %9156 = vmatmul.mubr.f32.gmra.mrb[0].mxu0 %v8779
        %v9157 = vpop.f32.mrb[0].mxu0
        %v9158 = vadd.f32 %v9088, %v9157
        %v9159 = vpop.f32.mrb[0].mxu0
        %9160 = vdwg.mxu0
        %9161 = vmatprep.subr.mxu0 0.0
        %9162 = vmatpush1.msra.mxu0 %v8701
        %9163 = vmatprep.subr.mxu0 0.0
        %9164 = vmatpush1.msra.mxu0 %v8702
        %9165 = vmatprep.subr.mxu0 0.0
        %9166 = vmatpush1.msra.mxu0 %v8703
        %9167 = vmatprep.subr.mxu0 0.0
        %9168 = vmatpush1.msra.mxu0 %v8704
        %9169 = vmatprep.subr.mxu0 0.0
        %9170 = vmatpush1.msra.mxu0 %v8705
        %9171 = vmatprep.subr.mxu0 0.0
        %9172 = vmatpush1.msra.mxu0 %v8706
        %9173 = vmatprep.subr.mxu0 0.0
        %9174 = vmatpush1.msra.mxu0 %v8707
        %9175 = vmatprep.subr.mxu0 0.0
        %9176 = vmatpush1.msra.mxu0 %v8708
        %9177 = vmatprep.subr.mxu0 0.0
        %9178 = vmatpush1.msra.mxu0 %v8709
        %9179 = vmatprep.subr.mxu0 0.0
        %9180 = vmatpush1.msra.mxu0 %v8710
        %9181 = vmatprep.subr.mxu0 0.0
        %9182 = vmatpush1.msra.mxu0 %v8711
        %9183 = vmatprep.subr.mxu0 0.0
        %9184 = vmatpush1.msra.mxu0 %v8712
        %9185 = vmatprep.subr.mxu0 0.0
        %9186 = vmatpush1.msra.mxu0 %v8713
        %9187 = vmatprep.subr.mxu0 0.0
        %9188 = vmatpush1.msra.mxu0 %v8714
        %9189 = vmatprep.subr.mxu0 0.0
        %9190 = vmatpush1.msra.mxu0 %v8715
        %9191 = vmatprep.subr.mxu0 0.0
        %9192 = vmatpush1.msra.mxu0 %v8716
        %9193 = vmatprep.subr.mxu0 0.0
        %9194 = vmatpush1.msra.mxu0 %v8717
        %9195 = vmatprep.subr.mxu0 0.0
        %9196 = vmatpush1.msra.mxu0 %v8718
        %9197 = vmatprep.subr.mxu0 0.0
        %9198 = vmatpush1.msra.mxu0 %v8719
        %9199 = vmatprep.subr.mxu0 0.0
        %9200 = vmatpush1.msra.mxu0 %v8720
        %9201 = vmatprep.subr.mxu0 0.0
        %9202 = vmatpush1.msra.mxu0 %v8721
        %9203 = vmatprep.subr.mxu0 0.0
        %9204 = vmatpush1.msra.mxu0 %v8722
        %9205 = vmatprep.subr.mxu0 0.0
        %9206 = vmatpush1.msra.mxu0 %v8723
        %9207 = vmatprep.subr.mxu0 0.0
        %9208 = vmatpush1.msra.mxu0 %v8724
        %9209 = vmatprep.subr.mxu0 0.0
        %9210 = vmatpush1.msra.mxu0 %v8725
        %9211 = vmatprep.subr.mxu0 0.0
        %9212 = vmatpush1.msra.mxu0 %v8726
        %9213 = vmatprep.subr.mxu0 0.0
        %9214 = vmatpush1.msra.mxu0 %v8727
        %9215 = vmatprep.subr.mxu0 0.0
        %9216 = vmatpush1.msra.mxu0 %v8728
        %9217 = vmatprep.subr.mxu0 0.0
        %9218 = vmatpush1.msra.mxu0 %v8729
        %9219 = vmatprep.subr.mxu0 0.0
        %9220 = vmatpush1.msra.mxu0 %v8730
        %9221 = vmatprep.subr.mxu0 0.0
        %9222 = vmatpush1.msra.mxu0 %v8731
        %9223 = vmatprep.subr.mxu0 0.0
        %9224 = vmatpush1.msra.mxu0 %v8732
        %9225 = vmatprep.mubr.f32.mxu0 %v8791
        %9226 = vmatmul.mubr.f32.gmra.mrb[0].mxu0 %v8787
        %v9227 = vpop.f32.mrb[0].mxu0
        %v9228 = vadd.f32 %v9158, %v9227
        %v9229 = vpop.f32.mrb[0].mxu0
        %9230 = vdwg.mxu0
        %9231 = vmatprep.subr.mxu0 0.0
        %9232 = vmatpush1.msra.mxu0 %v8733
        %9233 = vmatprep.subr.mxu0 0.0
        %9234 = vmatpush1.msra.mxu0 %v8734
        %9235 = vmatprep.subr.mxu0 0.0
        %9236 = vmatpush1.msra.mxu0 %v8735
        %9237 = vmatprep.subr.mxu0 0.0
        %9238 = vmatpush1.msra.mxu0 %v8736
        %9239 = vmatprep.subr.mxu0 0.0
        %9240 = vmatpush1.msra.mxu0 %v8737
        %9241 = vmatprep.subr.mxu0 0.0
        %9242 = vmatpush1.msra.mxu0 %v8738
        %9243 = vmatprep.subr.mxu0 0.0
        %9244 = vmatpush1.msra.mxu0 %v8739
        %9245 = vmatprep.subr.mxu0 0.0
        %9246 = vmatpush1.msra.mxu0 %v8740
        %9247 = vmatprep.subr.mxu0 0.0
        %9248 = vmatpush1.msra.mxu0 0.0
        %9249 = vmatprep.subr.mxu0 0.0
        %9250 = vmatpush1.msra.mxu0 0.0
        %9251 = vmatprep.subr.mxu0 0.0
        %9252 = vmatpush1.msra.mxu0 0.0
        %9253 = vmatprep.subr.mxu0 0.0
        %9254 = vmatpush1.msra.mxu0 0.0
        %9255 = vmatprep.subr.mxu0 0.0
        %9256 = vmatpush1.msra.mxu0 0.0
        %9257 = vmatprep.subr.mxu0 0.0
        %9258 = vmatpush1.msra.mxu0 0.0
        %9259 = vmatprep.subr.mxu0 0.0
        %9260 = vmatpush1.msra.mxu0 0.0
        %9261 = vmatprep.subr.mxu0 0.0
        %9262 = vmatpush1.msra.mxu0 0.0
        %9263 = vmatprep.subr.mxu0 0.0
        %9264 = vmatpush1.msra.mxu0 0.0
        %9265 = vmatprep.subr.mxu0 0.0
        %9266 = vmatpush1.msra.mxu0 0.0
        %9267 = vmatprep.subr.mxu0 0.0
        %9268 = vmatpush1.msra.mxu0 0.0
        %9269 = vmatprep.subr.mxu0 0.0
        %9270 = vmatpush1.msra.mxu0 0.0
        %9271 = vmatprep.subr.mxu0 0.0
        %9272 = vmatpush1.msra.mxu0 0.0
        %9273 = vmatprep.subr.mxu0 0.0
        %9274 = vmatpush1.msra.mxu0 0.0
        %9275 = vmatprep.subr.mxu0 0.0
        %9276 = vmatpush1.msra.mxu0 0.0
        %9277 = vmatprep.subr.mxu0 0.0
        %9278 = vmatpush1.msra.mxu0 0.0
        %9279 = vmatprep.subr.mxu0 0.0
        %9280 = vmatpush1.msra.mxu0 0.0
        %9281 = vmatprep.subr.mxu0 0.0
        %9282 = vmatpush1.msra.mxu0 0.0
        %9283 = vmatprep.subr.mxu0 0.0
        %9284 = vmatpush1.msra.mxu0 0.0
        %9285 = vmatprep.subr.mxu0 0.0
        %9286 = vmatpush1.msra.mxu0 0.0
        %9287 = vmatprep.subr.mxu0 0.0
        %9288 = vmatpush1.msra.mxu0 0.0
        %9289 = vmatprep.subr.mxu0 0.0
        %9290 = vmatpush1.msra.mxu0 0.0
        %9291 = vmatprep.subr.mxu0 0.0
        %9292 = vmatpush1.msra.mxu0 0.0
        %9293 = vmatprep.subr.mxu0 0.0
        %9294 = vmatpush1.msra.mxu0 0.0
        %9295 = vmatprep.mubr.f32.mxu0 0.0
        %9296 = vmatmul.mubr.f32.gmra.mrb[0].mxu0 %v8809
        %v9297 = vpop.f32.mrb[0].mxu0
        %v9298 = vadd.f32 %v9228, %v9297
        %v9299 = vpop.f32.mrb[0].mxu0
        %9300 = vdwg.mxu0
        %9301 = vst [vmem:[%s270] sm:$0x1] %v9298
        %s9302 = sand.u32 %s181, 1
        %s9303 = scalar_lea.sflag [#allocation6], %s9302
        %s9304 = sand.u32 %s181, 1
        %s9305 = scalar_lea.vmem [#allocation5], %s9304
        // Predicated region
        $region49: #{classifier_forward.1} parent=47 // pred_check
          %p9306 = pneg %p191
        $region50: #{classifier_forward.1} parent=47 // pred_check_branch
          %9308 = sbr.rel (%p9306) target = $region52
        $region51: #{classifier_forward.1} parent=47 // pred_region
          %s9310 = ssub.s32 16, 16
          %9311 = vsyncadd %s9303, %s9310
          %s9312 = smul.addr %s21, 16
          %s9313 = scalar_lea.hbm %s7, %s9312
          %s9315 = sshll.u32 %s9305, 4
          %s9316 = int_to_ptr.vmem [resolvable:$true] %s9315
          %9318 = dma.vmem_to_hbm [thread:$0]  %s9316, 16, %s9313, %s9303
        $region52: #{classifier_forward.1} parent=47 // pred_fallthru
          _
      $region48: #{classifier_forward.1} parent=5 // pred_fallthru
        _
      %p9319 = scmp.le.s32.totalorder 2, %s16
      // Predicated region
      $region53: #{classifier_forward.1} parent=5 // pred_check
        %p9320 = pneg %p9319
      $region54: #{classifier_forward.1} parent=5 // pred_check_branch
        %9322 = sbr.rel (%p9320) target = $region56
      $region55: #{classifier_forward.1} parent=5 // pred_region
        %s9323 = ssub.s32 %s16, 2
        // Predicated region
        $region57: #{classifier_forward.1} parent=55 // pred_check
          %p9324 = pneg %p197
        $region58: #{classifier_forward.1} parent=55 // pred_check_branch
          %9326 = sbr.rel (%p9324) target = $region60
        $region59: #{classifier_forward.1} parent=55 // pred_region
          %s9327 = sand.u32 %s182, 1
          %s9328 = scalar_lea.sflag [#allocation6], %s9327
          %s9329 = sand.u32 %s182, 1
          %s9330 = scalar_lea.vmem [#allocation5], %s9329
          %9331 = dma.done %s9328, 16
        $region60: #{classifier_forward.1} parent=55 // pred_fallthru
          _
      $region56: #{classifier_forward.1} parent=5 // pred_fallthru
        _
    $region6: #{classifier_forward.1} parent=1 // loop_footer
      %s20 = sadd.s32 1, %s16
    $region7: #{classifier_forward.1} parent=1 // loop_footer_branch
      %15 = sbr.rel target = $region3
    $region8: #{classifier_forward.1} parent=1 // loop_exit
      _
    %9332 = vsyncpa [#allocation6], 1
    %s9333 = scalar_lea.sflag [#allocation6], 1
    %9334 = vsyncpa %s9333, 1

</llo_original>
